<compile_context>
chip_gen: v7x
topology: tpu7x:2x2x1
jax: 0.10.0
libtpu: 0.0.40
codegen_flags: <defaults>
</compile_context>

<pallas_src>
import numpy as np
import jax
import jax.numpy as jnp
from jax.experimental import pallas as pl
from jax.experimental.pallas import tpu as pltpu


# ----------------------------------------------------------------------------
# Host-side folding of conv weights into per-tap matmul operands
# ----------------------------------------------------------------------------
_T1, _Q1 = 4, 16            # conv1: 4 output-W bands of 16 pooled columns each
_BAND = 4 * _Q1 + 3         # 67 padded input columns per band (overlap of 3)


def _fold_conv1_g(w):
    """Band-local folded G for conv1 (identical for every W band).

    LHS lane layout   : j*3 + ci      (j = band-local padded input column 0..66)
    output col layout : b*96 + q*6 + co   with ow = 2*(16*t + q) + b
    """
    w = np.asarray(w, np.float32)                    # (6, 3, 5, 5)
    Cout, Cin, k = 6, 3, 5
    G = np.zeros((k, _BAND * Cin, 2 * _Q1 * Cout), np.float32)
    for ki in range(k):
        for b in range(2):
            for q in range(_Q1):
                for kj in range(k):
                    j = 4 * q + 2 * b + kj           # 0..66 inside the band
                    col = b * _Q1 * Cout + q * Cout
                    G[ki, j * Cin:(j + 1) * Cin, col:col + Cout] += w[:, :, ki, kj].T
    return G                                          # (5, 201, 192)


def _fold_conv_g(w, W_in, stride, pad, pool):
    """Generic folded G for conv2/3/4.  Input lanes = w*Cin + ci (no W pad in
    the activation; W zero-padding is expressed as missing entries in G)."""
    w = np.asarray(w, np.float32)
    Cout, Cin, k = w.shape[0], w.shape[1], w.shape[2]
    OW = (W_in + 2 * pad - k) // stride + 1
    if pool:
        Q = OW // 2
        G = np.zeros((k, W_in * Cin, 2 * Q * Cout), np.float32)
        for ki in range(k):
            for b in range(2):
                for q in range(Q):
                    for kj in range(k):
                        wi = stride * (2 * q + b) + kj - pad
                        if 0 <= wi < W_in:
                            col = b * Q * Cout + q * Cout
                            G[ki, wi * Cin:(wi + 1) * Cin, col:col + Cout] += \
                                w[:, :, ki, kj].T
    else:
        G = np.zeros((k, W_in * Cin, OW * Cout), np.float32)
        for ki in range(k):
            for ow in range(OW):
                for kj in range(k):
                    wi = stride * ow + kj - pad
                    if 0 <= wi < W_in:
                        G[ki, wi * Cin:(wi + 1) * Cin, ow * Cout:(ow + 1) * Cout] += \
                            w[:, :, ki, kj].T
    return G


def _fold_pool_p(OH, pad_next, split):
    """0/1 selection matrices implementing MaxPool2x2 over H (max of the two
    matmul results), the next layer's H zero padding (zero rows), and -- when
    the next conv has stride 2 -- the even/odd row split of its padded input."""
    PH = OH // 2
    Hp = pad_next + PH + pad_next
    n_even = (Hp + 1) // 2
    P = np.zeros((2, Hp, OH), np.float32)
    for a in range(2):
        for t in range(Hp):
            h = (2 * t if t < n_even else 2 * (t - n_even) + 1) if split else t
            ph = h - pad_next
            if 0 <= ph < PH:
                P[a, t, 2 * ph + a] = 1.0
    return P


def prepare_operands(params):
    """Fold PyTorch-layout parameters into the fused kernel's operands."""
    w1, b1 = params["conv1"]
    w2, b2 = params["conv2"]
    w3, b3 = params["conv3"]
    w4, b4 = params["conv4"]
    wfc, bfc = params["fc"]
    bf16 = jnp.bfloat16

    def bias_row(b, reps):
        return jnp.asarray(np.tile(np.asarray(b, np.float32), reps).reshape(1, -1))

    return {
        "g1": jnp.asarray(_fold_conv1_g(w1), bf16),                  # (5,201,192)
        "b1": bias_row(b1, _Q1),                                     # (1, 96)
        "p1": jnp.asarray(_fold_pool_p(128, 1, True), bf16),         # (2, 66,128)
        "g2": jnp.asarray(_fold_conv_g(w2, 64, 2, 1, True), bf16),   # (3,384,384)
        "b2": bias_row(b2, 16),                                      # (1,192)
        "p2": jnp.asarray(_fold_pool_p(32, 2, True), bf16),          # (2, 20, 32)
        "g3": jnp.asarray(_fold_conv_g(w3, 16, 2, 2, True), bf16),   # (5,192, 48)
        "b3": bias_row(b3, 4),                                       # (1, 24)
        "p3": jnp.asarray(_fold_pool_p(8, 1, False), bf16),          # (2,  6,  8)
        "g4": jnp.asarray(_fold_conv_g(w4, 4, 1, 1, False), bf16),   # (3, 24,  4)
        "b4": bias_row(b4, 4),                                       # (1,  4)
        "fc_w": jnp.asarray(np.asarray(wfc, np.float32).T.reshape(4, 4, 2)),
        "fc_b": jnp.asarray(np.asarray(bfc, np.float32).reshape(1, 2)),
    }


# ----------------------------------------------------------------------------
# Fused Pallas kernel: whole forward pass for one image, entirely in VMEM
# ----------------------------------------------------------------------------
def _m_model_kernel(x_ref,
                    g1_ref, b1_ref, p1_ref,
                    g2_ref, b2_ref, p2_ref,
                    g3_ref, b3_ref, p3_ref,
                    g4_ref, b4_ref,
                    wfc_ref, bfc_ref,
                    o_ref):
    f32, bf16 = jnp.float32, jnp.bfloat16

    def hpool(z, p_ref):
        # MaxPool2x2 over H + next layer's H zero padding (+ even/odd split),
        # as two bf16 0/1 selection matmuls (exact copies of z's bf16 values).
        r = jnp.maximum(
            jnp.dot(p_ref[0], z, preferred_element_type=f32),
            jnp.dot(p_ref[1], z, preferred_element_type=f32))
        return r.astype(bf16)

    # ---- conv1: 5x5 s2 p2 + MaxPool2x2 + ReLU ------------------------------
    # 4 output-W bands; H stride-2 folded via the even(rows 0..129)/odd(130..)
    # row split of x.  Per band: per-tap matmuls -> W-pool -> +bias -> ReLU.
    tiles = []
    for t in range(4):
        acc = jnp.dot(x_ref[0, t, 0:128, :], g1_ref[0],
                      preferred_element_type=f32)
        for ki in range(1, 5):
            r0 = (ki % 2) * 130 + ki // 2
            acc = acc + jnp.dot(x_ref[0, t, r0:r0 + 128, :], g1_ref[ki],
                                preferred_element_type=f32)
        wpool = jnp.maximum(acc[:, :96], acc[:, 96:])          # W max-pool
        tiles.append(jnp.maximum(wpool + b1_ref[...], 0.0).astype(bf16))
    a = hpool(jnp.concatenate(tiles, axis=1), p1_ref)          # (66, 384) bf16

    # ---- conv2: 3x3 s2 p1 + MaxPool2x2 + ReLU ------------------------------
    acc = jnp.dot(a[0:32, :], g2_ref[0], preferred_element_type=f32)
    acc = acc + jnp.dot(a[33:65, :], g2_ref[1], preferred_element_type=f32)
    acc = acc + jnp.dot(a[1:33, :], g2_ref[2], preferred_element_type=f32)
    wpool = jnp.maximum(acc[:, :192], acc[:, 192:])
    a = hpool(jnp.maximum(wpool + b2_ref[...], 0.0).astype(bf16), p2_ref)  # (20,192)

    # ---- conv3: 5x5 s2 p2 + MaxPool2x2 + ReLU ------------------------------
    acc = jnp.dot(a[0:8, :], g3_ref[0], preferred_element_type=f32)
    for ki in range(1, 5):
        r0 = (ki % 2) * 10 + ki // 2
        acc = acc + jnp.dot(a[r0:r0 + 8, :], g3_ref[ki],
                            preferred_element_type=f32)
    wpool = jnp.maximum(acc[:, :24], acc[:, 24:])
    a = hpool(jnp.maximum(wpool + b3_ref[...], 0.0).astype(bf16), p3_ref)  # (6, 24)

    # ---- conv4: 3x3 s1 p1 + ReLU --------------------------------------------
    acc = jnp.dot(a[0:4, :], g4_ref[0], preferred_element_type=f32)
    for ki in range(1, 3):
        acc = acc + jnp.dot(a[ki:ki + 4, :], g4_ref[ki],
                            preferred_element_type=f32)
    y = jnp.maximum(acc + b4_ref[...], 0.0)                    # (4, 4) f32

    # ---- Flatten ((c=1,h,w) row-major) + Linear(16, 2) + ReLU ---------------
    o = jnp.dot(y[0:1, :], wfc_ref[0], preferred_element_type=f32)
    for h in range(1, 4):
        o = o + jnp.dot(y[h:h + 1, :], wfc_ref[h],
                        preferred_element_type=f32)
    o_ref[0] = jnp.maximum(o + bfc_ref[...], 0.0)              # (1, 2)


# ----------------------------------------------------------------------------
# Wrapper
# ----------------------------------------------------------------------------
def _relayout_input(x):
    """NCHW f32 -> (B, 4 W-bands, 130 even + 130 odd padded rows, 67*3) bf16.
    Conv1's zero padding (2 in H and W) is applied here; rows are split by H
    parity so the kernel only computes the stride-2 rows the pool reads."""
    B = x.shape[0]
    xp = jnp.pad(x, ((0, 0), (0, 0), (2, 2), (2, 2)))           # (B,3,260,260)
    xt = jnp.transpose(xp, (0, 2, 3, 1))                        # (B,260,260,3)
    xs = jnp.concatenate([xt[:, 0::2], xt[:, 1::2]], axis=1)    # even | odd rows
    bands = jnp.stack([xs[:, :, 64 * t:64 * t + _BAND, :] for t in range(_T1)],
                      axis=1)                                   # (B,4,260,67,3)
    return bands.reshape(B, _T1, 260, _BAND * 3).astype(jnp.bfloat16)


def m_model_forward_fn(ops, x):
    B = x.shape[0]
    xb = _relayout_input(x)                                     # (B,4,260,201)

    operands = (xb,
                ops["g1"], ops["b1"], ops["p1"],
                ops["g2"], ops["b2"], ops["p2"],
                ops["g3"], ops["b3"], ops["p3"],
                ops["g4"], ops["b4"],
                ops["fc_w"], ops["fc_b"])

    def const_spec(a):  # whole array resident in VMEM, fetched once
        nd = a.ndim
        return pl.BlockSpec(a.shape, lambda i, _nd=nd: (0,) * _nd)

    in_specs = [pl.BlockSpec((1,) + xb.shape[1:], lambda i: (i, 0, 0, 0))]
    in_specs += [const_spec(a) for a in operands[1:]]

    out = pl.pallas_call(
        _m_model_kernel,
        out_shape=jax.ShapeDtypeStruct((B, 1, 2), jnp.float32),
        grid=(B,),
        in_specs=in_specs,
        out_specs=pl.BlockSpec((1, 1, 2), lambda i: (i, 0, 0)),
        compiler_params=pltpu.CompilerParams(
            dimension_semantics=("parallel",),        # v7x: 1 image / TensorCore
            vmem_limit_bytes=32 * 1024 * 1024),
    )(*operands)
    return out[:, 0, :]


m_model_forward = jax.jit(m_model_forward_fn)


# ----------------------------------------------------------------------------
# Parameters (PyTorch default-style init, PyTorch layouts) and f32 reference
# ----------------------------------------------------------------------------
def init_params(key):
    def conv_p(key, cout, cin, k):
        k1, k2 = jax.random.split(key)
        bound = 1.0 / float(cin * k * k) ** 0.5
        w = jax.random.uniform(k1, (cout, cin, k, k), jnp.float32, -bound, bound)
        b = jax.random.uniform(k2, (cout,), jnp.float32, -bound, bound)
        return w, b

    def lin_p(key, out_f, in_f):
        k1, k2 = jax.random.split(key)
        bound = 1.0 / float(in_f) ** 0.5
        w = jax.random.uniform(k1, (out_f, in_f), jnp.float32, -bound, bound)
        b = jax.random.uniform(k2, (out_f,), jnp.float32, -bound, bound)
        return w, b

    ks = jax.random.split(key, 5)
    return {
        "conv1": conv_p(ks[0], 6, 3, 5),
        "conv2": conv_p(ks[1], 12, 6, 3),
        "conv3": conv_p(ks[2], 6, 12, 5),
        "conv4": conv_p(ks[3], 1, 6, 3),
        "fc": lin_p(ks[4], 2, 16),
    }


def _reference_forward(params, x):
    """Pure-JAX f32 reference of the PyTorch module (for a loose check)."""
    def conv(v, w, b, stride, pad):
        y = jax.lax.conv_general_dilated(
            v, w, window_strides=(stride, stride),
            padding=[(pad, pad), (pad, pad)],
            dimension_numbers=("NCHW", "OIHW", "NCHW"))
        return y + b[None, :, None, None]

    def maxpool(v):
        return jax.lax.reduce_window(v, -jnp.inf, jax.lax.max,
                                     (1, 1, 2, 2), (1, 1, 2, 2), "VALID")

    relu = lambda v: jnp.maximum(v, 0.0)
    y = relu(maxpool(conv(x, *params["conv1"], 2, 2)))
    y = relu(maxpool(conv(y, *params["conv2"], 2, 1)))
    y = relu(maxpool(conv(y, *params["conv3"], 2, 2)))
    y = relu(conv(y, *params["conv4"], 1, 1))
    y = y.reshape(y.shape[0], -1)
    wfc, bfc = params["fc"]
    return relu(y @ wfc.T + bfc[None, :])


if __name__ == "__main__":
    key = jax.random.PRNGKey(0)
    k_param, k_x = jax.random.split(key)
    params = init_params(k_param)
    ops = prepare_operands(params)
    # Linear(16, 2) after Flatten forces a 1x4x4 feature map, i.e. the module
    # only works on 256x256 RGB inputs (batch = 2 here).
    x = jax.random.normal(k_x, (2, 3, 256, 256), jnp.float32)

    out = jax.block_until_ready(m_model_forward(ops, x))
    assert out.shape == (2, 2), out.shape
    assert out.dtype == jnp.float32
    assert bool(jnp.all(jnp.isfinite(out)))

    ref = jax.block_until_ready(_reference_forward(params, x))
    err = float(jnp.max(jnp.abs(out - ref)))
    assert err < 4e-2, f"max abs error vs f32 reference: {err}"

    print("KERNEL_OK")
</pallas_src>

<mosaic_0001>
module attributes {stable_mosaic.version = 11 : i64} {
  func.func @_m_model_kernel(%arg0: i32, %arg1: memref<1x4x260x201xbf16, #tpu.memory_space<vmem>>, %arg2: memref<5x201x192xbf16, #tpu.memory_space<vmem>>, %arg3: memref<1x96xf32, #tpu.memory_space<vmem>>, %arg4: memref<2x66x128xbf16, #tpu.memory_space<vmem>>, %arg5: memref<3x384x384xbf16, #tpu.memory_space<vmem>>, %arg6: memref<1x192xf32, #tpu.memory_space<vmem>>, %arg7: memref<2x20x32xbf16, #tpu.memory_space<vmem>>, %arg8: memref<5x192x48xbf16, #tpu.memory_space<vmem>>, %arg9: memref<1x24xf32, #tpu.memory_space<vmem>>, %arg10: memref<2x6x8xbf16, #tpu.memory_space<vmem>>, %arg11: memref<3x24x4xbf16, #tpu.memory_space<vmem>>, %arg12: memref<1x4xf32, #tpu.memory_space<vmem>>, %arg13: memref<4x4x2xf32, #tpu.memory_space<vmem>>, %arg14: memref<1x2xf32, #tpu.memory_space<vmem>>, %arg15: memref<1x1x2xf32, #tpu.memory_space<vmem>>) attributes {dimension_semantics = [#tpu.dimension_semantics<parallel>], iteration_bounds = array<i64: 2>, scalar_prefetch = 0 : i64, scratch_operands = 0 : i64, tpu.core_type = #tpu.core_type<tc>, window_params = [{transform_indices = @transform_0, window_bounds = array<i64: 1, 4, 260, 201>}, {pipeline_mode = #tpu.pipeline_mode<synchronous>, transform_indices = @transform_1, window_bounds = array<i64: 5, 201, 192>}, {pipeline_mode = #tpu.pipeline_mode<synchronous>, transform_indices = @transform_2, window_bounds = array<i64: 1, 96>}, {pipeline_mode = #tpu.pipeline_mode<synchronous>, transform_indices = @transform_3, window_bounds = array<i64: 2, 66, 128>}, {pipeline_mode = #tpu.pipeline_mode<synchronous>, transform_indices = @transform_4, window_bounds = array<i64: 3, 384, 384>}, {pipeline_mode = #tpu.pipeline_mode<synchronous>, transform_indices = @transform_5, window_bounds = array<i64: 1, 192>}, {pipeline_mode = #tpu.pipeline_mode<synchronous>, transform_indices = @transform_6, window_bounds = array<i64: 2, 20, 32>}, {pipeline_mode = #tpu.pipeline_mode<synchronous>, transform_indices = @transform_7, window_bounds = array<i64: 5, 192, 48>}, {pipeline_mode = #tpu.pipeline_mode<synchronous>, transform_indices = @transform_8, window_bounds = array<i64: 1, 24>}, {pipeline_mode = #tpu.pipeline_mode<synchronous>, transform_indices = @transform_9, window_bounds = array<i64: 2, 6, 8>}, {pipeline_mode = #tpu.pipeline_mode<synchronous>, transform_indices = @transform_10, window_bounds = array<i64: 3, 24, 4>}, {pipeline_mode = #tpu.pipeline_mode<synchronous>, transform_indices = @transform_11, window_bounds = array<i64: 1, 4>}, {pipeline_mode = #tpu.pipeline_mode<synchronous>, transform_indices = @transform_12, window_bounds = array<i64: 4, 4, 2>}, {pipeline_mode = #tpu.pipeline_mode<synchronous>, transform_indices = @transform_13, window_bounds = array<i64: 1, 2>}, {transform_indices = @transform_14, window_bounds = array<i64: 1, 1, 2>}]} {
    %c0 = arith.constant 0 : index
    %c0_0 = arith.constant 0 : index
    %c0_1 = arith.constant 0 : index
    %c0_2 = arith.constant 0 : index
    %0 = vector.load %arg1[%c0, %c0_0, %c0_1, %c0_2] : memref<1x4x260x201xbf16, #tpu.memory_space<vmem>>, vector<1x1x128x201xbf16>
    %1 = vector.shape_cast %0 : vector<1x1x128x201xbf16> to vector<128x201xbf16>
    %c0_3 = arith.constant 0 : index
    %c0_4 = arith.constant 0 : index
    %c0_5 = arith.constant 0 : index
    %2 = vector.load %arg2[%c0_3, %c0_4, %c0_5] : memref<5x201x192xbf16, #tpu.memory_space<vmem>>, vector<1x201x192xbf16>
    %3 = vector.shape_cast %2 : vector<1x201x192xbf16> to vector<201x192xbf16>
    %cst = arith.constant dense<0.000000e+00> : vector<128x192xf32>
    %4 = tpu.matmul %1, %3, %cst {dimension_numbers = #tpu.dot_dimension_numbers<[1], [0], [0], [1], [0, 0, 1, 1], [], []>} : vector<128x201xbf16>, vector<201x192xbf16>, vector<128x192xf32> -> vector<128x192xf32>
    %c0_6 = arith.constant 0 : index
    %c0_7 = arith.constant 0 : index
    %c130 = arith.constant 130 : index
    %c0_8 = arith.constant 0 : index
    %5 = vector.load %arg1[%c0_6, %c0_7, %c130, %c0_8] : memref<1x4x260x201xbf16, #tpu.memory_space<vmem>>, vector<1x1x128x201xbf16>
    %6 = vector.shape_cast %5 : vector<1x1x128x201xbf16> to vector<128x201xbf16>
    %c1 = arith.constant 1 : index
    %c0_9 = arith.constant 0 : index
    %c0_10 = arith.constant 0 : index
    %7 = vector.load %arg2[%c1, %c0_9, %c0_10] : memref<5x201x192xbf16, #tpu.memory_space<vmem>>, vector<1x201x192xbf16>
    %8 = vector.shape_cast %7 : vector<1x201x192xbf16> to vector<201x192xbf16>
    %cst_11 = arith.constant dense<0.000000e+00> : vector<128x192xf32>
    %9 = tpu.matmul %6, %8, %cst_11 {dimension_numbers = #tpu.dot_dimension_numbers<[1], [0], [0], [1], [0, 0, 1, 1], [], []>} : vector<128x201xbf16>, vector<201x192xbf16>, vector<128x192xf32> -> vector<128x192xf32>
    %10 = arith.addf %4, %9 : vector<128x192xf32>
    %c0_12 = arith.constant 0 : index
    %c0_13 = arith.constant 0 : index
    %c1_14 = arith.constant 1 : index
    %c0_15 = arith.constant 0 : index
    %11 = vector.load %arg1[%c0_12, %c0_13, %c1_14, %c0_15] : memref<1x4x260x201xbf16, #tpu.memory_space<vmem>>, vector<1x1x128x201xbf16>
    %12 = vector.shape_cast %11 : vector<1x1x128x201xbf16> to vector<128x201xbf16>
    %c2 = arith.constant 2 : index
    %c0_16 = arith.constant 0 : index
    %c0_17 = arith.constant 0 : index
    %13 = vector.load %arg2[%c2, %c0_16, %c0_17] : memref<5x201x192xbf16, #tpu.memory_space<vmem>>, vector<1x201x192xbf16>
    %14 = vector.shape_cast %13 : vector<1x201x192xbf16> to vector<201x192xbf16>
    %cst_18 = arith.constant dense<0.000000e+00> : vector<128x192xf32>
    %15 = tpu.matmul %12, %14, %cst_18 {dimension_numbers = #tpu.dot_dimension_numbers<[1], [0], [0], [1], [0, 0, 1, 1], [], []>} : vector<128x201xbf16>, vector<201x192xbf16>, vector<128x192xf32> -> vector<128x192xf32>
    %16 = arith.addf %10, %15 : vector<128x192xf32>
    %c0_19 = arith.constant 0 : index
    %c0_20 = arith.constant 0 : index
    %c131 = arith.constant 131 : index
    %c0_21 = arith.constant 0 : index
    %17 = vector.load %arg1[%c0_19, %c0_20, %c131, %c0_21] : memref<1x4x260x201xbf16, #tpu.memory_space<vmem>>, vector<1x1x128x201xbf16>
    %18 = vector.shape_cast %17 : vector<1x1x128x201xbf16> to vector<128x201xbf16>
    %c3 = arith.constant 3 : index
    %c0_22 = arith.constant 0 : index
    %c0_23 = arith.constant 0 : index
    %19 = vector.load %arg2[%c3, %c0_22, %c0_23] : memref<5x201x192xbf16, #tpu.memory_space<vmem>>, vector<1x201x192xbf16>
    %20 = vector.shape_cast %19 : vector<1x201x192xbf16> to vector<201x192xbf16>
    %cst_24 = arith.constant dense<0.000000e+00> : vector<128x192xf32>
    %21 = tpu.matmul %18, %20, %cst_24 {dimension_numbers = #tpu.dot_dimension_numbers<[1], [0], [0], [1], [0, 0, 1, 1], [], []>} : vector<128x201xbf16>, vector<201x192xbf16>, vector<128x192xf32> -> vector<128x192xf32>
    %22 = arith.addf %16, %21 : vector<128x192xf32>
    %c0_25 = arith.constant 0 : index
    %c0_26 = arith.constant 0 : index
    %c2_27 = arith.constant 2 : index
    %c0_28 = arith.constant 0 : index
    %23 = vector.load %arg1[%c0_25, %c0_26, %c2_27, %c0_28] : memref<1x4x260x201xbf16, #tpu.memory_space<vmem>>, vector<1x1x128x201xbf16>
    %24 = vector.shape_cast %23 : vector<1x1x128x201xbf16> to vector<128x201xbf16>
    %c4 = arith.constant 4 : index
    %c0_29 = arith.constant 0 : index
    %c0_30 = arith.constant 0 : index
    %25 = vector.load %arg2[%c4, %c0_29, %c0_30] : memref<5x201x192xbf16, #tpu.memory_space<vmem>>, vector<1x201x192xbf16>
    %26 = vector.shape_cast %25 : vector<1x201x192xbf16> to vector<201x192xbf16>
    %cst_31 = arith.constant dense<0.000000e+00> : vector<128x192xf32>
    %27 = tpu.matmul %24, %26, %cst_31 {dimension_numbers = #tpu.dot_dimension_numbers<[1], [0], [0], [1], [0, 0, 1, 1], [], []>} : vector<128x201xbf16>, vector<201x192xbf16>, vector<128x192xf32> -> vector<128x192xf32>
    %28 = arith.addf %22, %27 : vector<128x192xf32>
    %29 = vector.extract_strided_slice %28 {offsets = [0, 0], sizes = [128, 96], strides = [1, 1]} : vector<128x192xf32> to vector<128x96xf32>
    %30 = vector.extract_strided_slice %28 {offsets = [0, 96], sizes = [128, 96], strides = [1, 1]} : vector<128x192xf32> to vector<128x96xf32>
    %31 = arith.maximumf %29, %30 : vector<128x96xf32>
    %c0_32 = arith.constant 0 : index
    %c0_33 = arith.constant 0 : index
    %32 = vector.load %arg3[%c0_32, %c0_33] : memref<1x96xf32, #tpu.memory_space<vmem>>, vector<1x96xf32>
    %33 = vector.broadcast %32 : vector<1x96xf32> to vector<128x96xf32>
    %34 = arith.addf %31, %33 : vector<128x96xf32>
    %cst_34 = arith.constant 0.000000e+00 : f32
    %35 = vector.broadcast %cst_34 : f32 to vector<128x96xf32>
    %36 = arith.maximumf %34, %35 : vector<128x96xf32>
    %37 = arith.truncf %36 : vector<128x96xf32> to vector<128x96xbf16>
    %c0_35 = arith.constant 0 : index
    %c1_36 = arith.constant 1 : index
    %c0_37 = arith.constant 0 : index
    %c0_38 = arith.constant 0 : index
    %38 = vector.load %arg1[%c0_35, %c1_36, %c0_37, %c0_38] : memref<1x4x260x201xbf16, #tpu.memory_space<vmem>>, vector<1x1x128x201xbf16>
    %39 = vector.shape_cast %38 : vector<1x1x128x201xbf16> to vector<128x201xbf16>
    %c0_39 = arith.constant 0 : index
    %c0_40 = arith.constant 0 : index
    %c0_41 = arith.constant 0 : index
    %40 = vector.load %arg2[%c0_39, %c0_40, %c0_41] : memref<5x201x192xbf16, #tpu.memory_space<vmem>>, vector<1x201x192xbf16>
    %41 = vector.shape_cast %40 : vector<1x201x192xbf16> to vector<201x192xbf16>
    %cst_42 = arith.constant dense<0.000000e+00> : vector<128x192xf32>
    %42 = tpu.matmul %39, %41, %cst_42 {dimension_numbers = #tpu.dot_dimension_numbers<[1], [0], [0], [1], [0, 0, 1, 1], [], []>} : vector<128x201xbf16>, vector<201x192xbf16>, vector<128x192xf32> -> vector<128x192xf32>
    %c0_43 = arith.constant 0 : index
    %c1_44 = arith.constant 1 : index
    %c130_45 = arith.constant 130 : index
    %c0_46 = arith.constant 0 : index
    %43 = vector.load %arg1[%c0_43, %c1_44, %c130_45, %c0_46] : memref<1x4x260x201xbf16, #tpu.memory_space<vmem>>, vector<1x1x128x201xbf16>
    %44 = vector.shape_cast %43 : vector<1x1x128x201xbf16> to vector<128x201xbf16>
    %c1_47 = arith.constant 1 : index
    %c0_48 = arith.constant 0 : index
    %c0_49 = arith.constant 0 : index
    %45 = vector.load %arg2[%c1_47, %c0_48, %c0_49] : memref<5x201x192xbf16, #tpu.memory_space<vmem>>, vector<1x201x192xbf16>
    %46 = vector.shape_cast %45 : vector<1x201x192xbf16> to vector<201x192xbf16>
    %cst_50 = arith.constant dense<0.000000e+00> : vector<128x192xf32>
    %47 = tpu.matmul %44, %46, %cst_50 {dimension_numbers = #tpu.dot_dimension_numbers<[1], [0], [0], [1], [0, 0, 1, 1], [], []>} : vector<128x201xbf16>, vector<201x192xbf16>, vector<128x192xf32> -> vector<128x192xf32>
    %48 = arith.addf %42, %47 : vector<128x192xf32>
    %c0_51 = arith.constant 0 : index
    %c1_52 = arith.constant 1 : index
    %c1_53 = arith.constant 1 : index
    %c0_54 = arith.constant 0 : index
    %49 = vector.load %arg1[%c0_51, %c1_52, %c1_53, %c0_54] : memref<1x4x260x201xbf16, #tpu.memory_space<vmem>>, vector<1x1x128x201xbf16>
    %50 = vector.shape_cast %49 : vector<1x1x128x201xbf16> to vector<128x201xbf16>
    %c2_55 = arith.constant 2 : index
    %c0_56 = arith.constant 0 : index
    %c0_57 = arith.constant 0 : index
    %51 = vector.load %arg2[%c2_55, %c0_56, %c0_57] : memref<5x201x192xbf16, #tpu.memory_space<vmem>>, vector<1x201x192xbf16>
    %52 = vector.shape_cast %51 : vector<1x201x192xbf16> to vector<201x192xbf16>
    %cst_58 = arith.constant dense<0.000000e+00> : vector<128x192xf32>
    %53 = tpu.matmul %50, %52, %cst_58 {dimension_numbers = #tpu.dot_dimension_numbers<[1], [0], [0], [1], [0, 0, 1, 1], [], []>} : vector<128x201xbf16>, vector<201x192xbf16>, vector<128x192xf32> -> vector<128x192xf32>
    %54 = arith.addf %48, %53 : vector<128x192xf32>
    %c0_59 = arith.constant 0 : index
    %c1_60 = arith.constant 1 : index
    %c131_61 = arith.constant 131 : index
    %c0_62 = arith.constant 0 : index
    %55 = vector.load %arg1[%c0_59, %c1_60, %c131_61, %c0_62] : memref<1x4x260x201xbf16, #tpu.memory_space<vmem>>, vector<1x1x128x201xbf16>
    %56 = vector.shape_cast %55 : vector<1x1x128x201xbf16> to vector<128x201xbf16>
    %c3_63 = arith.constant 3 : index
    %c0_64 = arith.constant 0 : index
    %c0_65 = arith.constant 0 : index
    %57 = vector.load %arg2[%c3_63, %c0_64, %c0_65] : memref<5x201x192xbf16, #tpu.memory_space<vmem>>, vector<1x201x192xbf16>
    %58 = vector.shape_cast %57 : vector<1x201x192xbf16> to vector<201x192xbf16>
    %cst_66 = arith.constant dense<0.000000e+00> : vector<128x192xf32>
    %59 = tpu.matmul %56, %58, %cst_66 {dimension_numbers = #tpu.dot_dimension_numbers<[1], [0], [0], [1], [0, 0, 1, 1], [], []>} : vector<128x201xbf16>, vector<201x192xbf16>, vector<128x192xf32> -> vector<128x192xf32>
    %60 = arith.addf %54, %59 : vector<128x192xf32>
    %c0_67 = arith.constant 0 : index
    %c1_68 = arith.constant 1 : index
    %c2_69 = arith.constant 2 : index
    %c0_70 = arith.constant 0 : index
    %61 = vector.load %arg1[%c0_67, %c1_68, %c2_69, %c0_70] : memref<1x4x260x201xbf16, #tpu.memory_space<vmem>>, vector<1x1x128x201xbf16>
    %62 = vector.shape_cast %61 : vector<1x1x128x201xbf16> to vector<128x201xbf16>
    %c4_71 = arith.constant 4 : index
    %c0_72 = arith.constant 0 : index
    %c0_73 = arith.constant 0 : index
    %63 = vector.load %arg2[%c4_71, %c0_72, %c0_73] : memref<5x201x192xbf16, #tpu.memory_space<vmem>>, vector<1x201x192xbf16>
    %64 = vector.shape_cast %63 : vector<1x201x192xbf16> to vector<201x192xbf16>
    %cst_74 = arith.constant dense<0.000000e+00> : vector<128x192xf32>
    %65 = tpu.matmul %62, %64, %cst_74 {dimension_numbers = #tpu.dot_dimension_numbers<[1], [0], [0], [1], [0, 0, 1, 1], [], []>} : vector<128x201xbf16>, vector<201x192xbf16>, vector<128x192xf32> -> vector<128x192xf32>
    %66 = arith.addf %60, %65 : vector<128x192xf32>
    %67 = vector.extract_strided_slice %66 {offsets = [0, 0], sizes = [128, 96], strides = [1, 1]} : vector<128x192xf32> to vector<128x96xf32>
    %68 = vector.extract_strided_slice %66 {offsets = [0, 96], sizes = [128, 96], strides = [1, 1]} : vector<128x192xf32> to vector<128x96xf32>
    %69 = arith.maximumf %67, %68 : vector<128x96xf32>
    %c0_75 = arith.constant 0 : index
    %c0_76 = arith.constant 0 : index
    %70 = vector.load %arg3[%c0_75, %c0_76] : memref<1x96xf32, #tpu.memory_space<vmem>>, vector<1x96xf32>
    %71 = vector.broadcast %70 : vector<1x96xf32> to vector<128x96xf32>
    %72 = arith.addf %69, %71 : vector<128x96xf32>
    %cst_77 = arith.constant 0.000000e+00 : f32
    %73 = vector.broadcast %cst_77 : f32 to vector<128x96xf32>
    %74 = arith.maximumf %72, %73 : vector<128x96xf32>
    %75 = arith.truncf %74 : vector<128x96xf32> to vector<128x96xbf16>
    %c0_78 = arith.constant 0 : index
    %c2_79 = arith.constant 2 : index
    %c0_80 = arith.constant 0 : index
    %c0_81 = arith.constant 0 : index
    %76 = vector.load %arg1[%c0_78, %c2_79, %c0_80, %c0_81] : memref<1x4x260x201xbf16, #tpu.memory_space<vmem>>, vector<1x1x128x201xbf16>
    %77 = vector.shape_cast %76 : vector<1x1x128x201xbf16> to vector<128x201xbf16>
    %c0_82 = arith.constant 0 : index
    %c0_83 = arith.constant 0 : index
    %c0_84 = arith.constant 0 : index
    %78 = vector.load %arg2[%c0_82, %c0_83, %c0_84] : memref<5x201x192xbf16, #tpu.memory_space<vmem>>, vector<1x201x192xbf16>
    %79 = vector.shape_cast %78 : vector<1x201x192xbf16> to vector<201x192xbf16>
    %cst_85 = arith.constant dense<0.000000e+00> : vector<128x192xf32>
    %80 = tpu.matmul %77, %79, %cst_85 {dimension_numbers = #tpu.dot_dimension_numbers<[1], [0], [0], [1], [0, 0, 1, 1], [], []>} : vector<128x201xbf16>, vector<201x192xbf16>, vector<128x192xf32> -> vector<128x192xf32>
    %c0_86 = arith.constant 0 : index
    %c2_87 = arith.constant 2 : index
    %c130_88 = arith.constant 130 : index
    %c0_89 = arith.constant 0 : index
    %81 = vector.load %arg1[%c0_86, %c2_87, %c130_88, %c0_89] : memref<1x4x260x201xbf16, #tpu.memory_space<vmem>>, vector<1x1x128x201xbf16>
    %82 = vector.shape_cast %81 : vector<1x1x128x201xbf16> to vector<128x201xbf16>
    %c1_90 = arith.constant 1 : index
    %c0_91 = arith.constant 0 : index
    %c0_92 = arith.constant 0 : index
    %83 = vector.load %arg2[%c1_90, %c0_91, %c0_92] : memref<5x201x192xbf16, #tpu.memory_space<vmem>>, vector<1x201x192xbf16>
    %84 = vector.shape_cast %83 : vector<1x201x192xbf16> to vector<201x192xbf16>
    %cst_93 = arith.constant dense<0.000000e+00> : vector<128x192xf32>
    %85 = tpu.matmul %82, %84, %cst_93 {dimension_numbers = #tpu.dot_dimension_numbers<[1], [0], [0], [1], [0, 0, 1, 1], [], []>} : vector<128x201xbf16>, vector<201x192xbf16>, vector<128x192xf32> -> vector<128x192xf32>
    %86 = arith.addf %80, %85 : vector<128x192xf32>
    %c0_94 = arith.constant 0 : index
    %c2_95 = arith.constant 2 : index
    %c1_96 = arith.constant 1 : index
    %c0_97 = arith.constant 0 : index
    %87 = vector.load %arg1[%c0_94, %c2_95, %c1_96, %c0_97] : memref<1x4x260x201xbf16, #tpu.memory_space<vmem>>, vector<1x1x128x201xbf16>
    %88 = vector.shape_cast %87 : vector<1x1x128x201xbf16> to vector<128x201xbf16>
    %c2_98 = arith.constant 2 : index
    %c0_99 = arith.constant 0 : index
    %c0_100 = arith.constant 0 : index
    %89 = vector.load %arg2[%c2_98, %c0_99, %c0_100] : memref<5x201x192xbf16, #tpu.memory_space<vmem>>, vector<1x201x192xbf16>
    %90 = vector.shape_cast %89 : vector<1x201x192xbf16> to vector<201x192xbf16>
    %cst_101 = arith.constant dense<0.000000e+00> : vector<128x192xf32>
    %91 = tpu.matmul %88, %90, %cst_101 {dimension_numbers = #tpu.dot_dimension_numbers<[1], [0], [0], [1], [0, 0, 1, 1], [], []>} : vector<128x201xbf16>, vector<201x192xbf16>, vector<128x192xf32> -> vector<128x192xf32>
    %92 = arith.addf %86, %91 : vector<128x192xf32>
    %c0_102 = arith.constant 0 : index
    %c2_103 = arith.constant 2 : index
    %c131_104 = arith.constant 131 : index
    %c0_105 = arith.constant 0 : index
    %93 = vector.load %arg1[%c0_102, %c2_103, %c131_104, %c0_105] : memref<1x4x260x201xbf16, #tpu.memory_space<vmem>>, vector<1x1x128x201xbf16>
    %94 = vector.shape_cast %93 : vector<1x1x128x201xbf16> to vector<128x201xbf16>
    %c3_106 = arith.constant 3 : index
    %c0_107 = arith.constant 0 : index
    %c0_108 = arith.constant 0 : index
    %95 = vector.load %arg2[%c3_106, %c0_107, %c0_108] : memref<5x201x192xbf16, #tpu.memory_space<vmem>>, vector<1x201x192xbf16>
    %96 = vector.shape_cast %95 : vector<1x201x192xbf16> to vector<201x192xbf16>
    %cst_109 = arith.constant dense<0.000000e+00> : vector<128x192xf32>
    %97 = tpu.matmul %94, %96, %cst_109 {dimension_numbers = #tpu.dot_dimension_numbers<[1], [0], [0], [1], [0, 0, 1, 1], [], []>} : vector<128x201xbf16>, vector<201x192xbf16>, vector<128x192xf32> -> vector<128x192xf32>
    %98 = arith.addf %92, %97 : vector<128x192xf32>
    %c0_110 = arith.constant 0 : index
    %c2_111 = arith.constant 2 : index
    %c2_112 = arith.constant 2 : index
    %c0_113 = arith.constant 0 : index
    %99 = vector.load %arg1[%c0_110, %c2_111, %c2_112, %c0_113] : memref<1x4x260x201xbf16, #tpu.memory_space<vmem>>, vector<1x1x128x201xbf16>
    %100 = vector.shape_cast %99 : vector<1x1x128x201xbf16> to vector<128x201xbf16>
    %c4_114 = arith.constant 4 : index
    %c0_115 = arith.constant 0 : index
    %c0_116 = arith.constant 0 : index
    %101 = vector.load %arg2[%c4_114, %c0_115, %c0_116] : memref<5x201x192xbf16, #tpu.memory_space<vmem>>, vector<1x201x192xbf16>
    %102 = vector.shape_cast %101 : vector<1x201x192xbf16> to vector<201x192xbf16>
    %cst_117 = arith.constant dense<0.000000e+00> : vector<128x192xf32>
    %103 = tpu.matmul %100, %102, %cst_117 {dimension_numbers = #tpu.dot_dimension_numbers<[1], [0], [0], [1], [0, 0, 1, 1], [], []>} : vector<128x201xbf16>, vector<201x192xbf16>, vector<128x192xf32> -> vector<128x192xf32>
    %104 = arith.addf %98, %103 : vector<128x192xf32>
    %105 = vector.extract_strided_slice %104 {offsets = [0, 0], sizes = [128, 96], strides = [1, 1]} : vector<128x192xf32> to vector<128x96xf32>
    %106 = vector.extract_strided_slice %104 {offsets = [0, 96], sizes = [128, 96], strides = [1, 1]} : vector<128x192xf32> to vector<128x96xf32>
    %107 = arith.maximumf %105, %106 : vector<128x96xf32>
    %c0_118 = arith.constant 0 : index
    %c0_119 = arith.constant 0 : index
    %108 = vector.load %arg3[%c0_118, %c0_119] : memref<1x96xf32, #tpu.memory_space<vmem>>, vector<1x96xf32>
    %109 = vector.broadcast %108 : vector<1x96xf32> to vector<128x96xf32>
    %110 = arith.addf %107, %109 : vector<128x96xf32>
    %cst_120 = arith.constant 0.000000e+00 : f32
    %111 = vector.broadcast %cst_120 : f32 to vector<128x96xf32>
    %112 = arith.maximumf %110, %111 : vector<128x96xf32>
    %113 = arith.truncf %112 : vector<128x96xf32> to vector<128x96xbf16>
    %c0_121 = arith.constant 0 : index
    %c3_122 = arith.constant 3 : index
    %c0_123 = arith.constant 0 : index
    %c0_124 = arith.constant 0 : index
    %114 = vector.load %arg1[%c0_121, %c3_122, %c0_123, %c0_124] : memref<1x4x260x201xbf16, #tpu.memory_space<vmem>>, vector<1x1x128x201xbf16>
    %115 = vector.shape_cast %114 : vector<1x1x128x201xbf16> to vector<128x201xbf16>
    %c0_125 = arith.constant 0 : index
    %c0_126 = arith.constant 0 : index
    %c0_127 = arith.constant 0 : index
    %116 = vector.load %arg2[%c0_125, %c0_126, %c0_127] : memref<5x201x192xbf16, #tpu.memory_space<vmem>>, vector<1x201x192xbf16>
    %117 = vector.shape_cast %116 : vector<1x201x192xbf16> to vector<201x192xbf16>
    %cst_128 = arith.constant dense<0.000000e+00> : vector<128x192xf32>
    %118 = tpu.matmul %115, %117, %cst_128 {dimension_numbers = #tpu.dot_dimension_numbers<[1], [0], [0], [1], [0, 0, 1, 1], [], []>} : vector<128x201xbf16>, vector<201x192xbf16>, vector<128x192xf32> -> vector<128x192xf32>
    %c0_129 = arith.constant 0 : index
    %c3_130 = arith.constant 3 : index
    %c130_131 = arith.constant 130 : index
    %c0_132 = arith.constant 0 : index
    %119 = vector.load %arg1[%c0_129, %c3_130, %c130_131, %c0_132] : memref<1x4x260x201xbf16, #tpu.memory_space<vmem>>, vector<1x1x128x201xbf16>
    %120 = vector.shape_cast %119 : vector<1x1x128x201xbf16> to vector<128x201xbf16>
    %c1_133 = arith.constant 1 : index
    %c0_134 = arith.constant 0 : index
    %c0_135 = arith.constant 0 : index
    %121 = vector.load %arg2[%c1_133, %c0_134, %c0_135] : memref<5x201x192xbf16, #tpu.memory_space<vmem>>, vector<1x201x192xbf16>
    %122 = vector.shape_cast %121 : vector<1x201x192xbf16> to vector<201x192xbf16>
    %cst_136 = arith.constant dense<0.000000e+00> : vector<128x192xf32>
    %123 = tpu.matmul %120, %122, %cst_136 {dimension_numbers = #tpu.dot_dimension_numbers<[1], [0], [0], [1], [0, 0, 1, 1], [], []>} : vector<128x201xbf16>, vector<201x192xbf16>, vector<128x192xf32> -> vector<128x192xf32>
    %124 = arith.addf %118, %123 : vector<128x192xf32>
    %c0_137 = arith.constant 0 : index
    %c3_138 = arith.constant 3 : index
    %c1_139 = arith.constant 1 : index
    %c0_140 = arith.constant 0 : index
    %125 = vector.load %arg1[%c0_137, %c3_138, %c1_139, %c0_140] : memref<1x4x260x201xbf16, #tpu.memory_space<vmem>>, vector<1x1x128x201xbf16>
    %126 = vector.shape_cast %125 : vector<1x1x128x201xbf16> to vector<128x201xbf16>
    %c2_141 = arith.constant 2 : index
    %c0_142 = arith.constant 0 : index
    %c0_143 = arith.constant 0 : index
    %127 = vector.load %arg2[%c2_141, %c0_142, %c0_143] : memref<5x201x192xbf16, #tpu.memory_space<vmem>>, vector<1x201x192xbf16>
    %128 = vector.shape_cast %127 : vector<1x201x192xbf16> to vector<201x192xbf16>
    %cst_144 = arith.constant dense<0.000000e+00> : vector<128x192xf32>
    %129 = tpu.matmul %126, %128, %cst_144 {dimension_numbers = #tpu.dot_dimension_numbers<[1], [0], [0], [1], [0, 0, 1, 1], [], []>} : vector<128x201xbf16>, vector<201x192xbf16>, vector<128x192xf32> -> vector<128x192xf32>
    %130 = arith.addf %124, %129 : vector<128x192xf32>
    %c0_145 = arith.constant 0 : index
    %c3_146 = arith.constant 3 : index
    %c131_147 = arith.constant 131 : index
    %c0_148 = arith.constant 0 : index
    %131 = vector.load %arg1[%c0_145, %c3_146, %c131_147, %c0_148] : memref<1x4x260x201xbf16, #tpu.memory_space<vmem>>, vector<1x1x128x201xbf16>
    %132 = vector.shape_cast %131 : vector<1x1x128x201xbf16> to vector<128x201xbf16>
    %c3_149 = arith.constant 3 : index
    %c0_150 = arith.constant 0 : index
    %c0_151 = arith.constant 0 : index
    %133 = vector.load %arg2[%c3_149, %c0_150, %c0_151] : memref<5x201x192xbf16, #tpu.memory_space<vmem>>, vector<1x201x192xbf16>
    %134 = vector.shape_cast %133 : vector<1x201x192xbf16> to vector<201x192xbf16>
    %cst_152 = arith.constant dense<0.000000e+00> : vector<128x192xf32>
    %135 = tpu.matmul %132, %134, %cst_152 {dimension_numbers = #tpu.dot_dimension_numbers<[1], [0], [0], [1], [0, 0, 1, 1], [], []>} : vector<128x201xbf16>, vector<201x192xbf16>, vector<128x192xf32> -> vector<128x192xf32>
    %136 = arith.addf %130, %135 : vector<128x192xf32>
    %c0_153 = arith.constant 0 : index
    %c3_154 = arith.constant 3 : index
    %c2_155 = arith.constant 2 : index
    %c0_156 = arith.constant 0 : index
    %137 = vector.load %arg1[%c0_153, %c3_154, %c2_155, %c0_156] : memref<1x4x260x201xbf16, #tpu.memory_space<vmem>>, vector<1x1x128x201xbf16>
    %138 = vector.shape_cast %137 : vector<1x1x128x201xbf16> to vector<128x201xbf16>
    %c4_157 = arith.constant 4 : index
    %c0_158 = arith.constant 0 : index
    %c0_159 = arith.constant 0 : index
    %139 = vector.load %arg2[%c4_157, %c0_158, %c0_159] : memref<5x201x192xbf16, #tpu.memory_space<vmem>>, vector<1x201x192xbf16>
    %140 = vector.shape_cast %139 : vector<1x201x192xbf16> to vector<201x192xbf16>
    %cst_160 = arith.constant dense<0.000000e+00> : vector<128x192xf32>
    %141 = tpu.matmul %138, %140, %cst_160 {dimension_numbers = #tpu.dot_dimension_numbers<[1], [0], [0], [1], [0, 0, 1, 1], [], []>} : vector<128x201xbf16>, vector<201x192xbf16>, vector<128x192xf32> -> vector<128x192xf32>
    %142 = arith.addf %136, %141 : vector<128x192xf32>
    %143 = vector.extract_strided_slice %142 {offsets = [0, 0], sizes = [128, 96], strides = [1, 1]} : vector<128x192xf32> to vector<128x96xf32>
    %144 = vector.extract_strided_slice %142 {offsets = [0, 96], sizes = [128, 96], strides = [1, 1]} : vector<128x192xf32> to vector<128x96xf32>
    %145 = arith.maximumf %143, %144 : vector<128x96xf32>
    %c0_161 = arith.constant 0 : index
    %c0_162 = arith.constant 0 : index
    %146 = vector.load %arg3[%c0_161, %c0_162] : memref<1x96xf32, #tpu.memory_space<vmem>>, vector<1x96xf32>
    %147 = vector.broadcast %146 : vector<1x96xf32> to vector<128x96xf32>
    %148 = arith.addf %145, %147 : vector<128x96xf32>
    %cst_163 = arith.constant 0.000000e+00 : f32
    %149 = vector.broadcast %cst_163 : f32 to vector<128x96xf32>
    %150 = arith.maximumf %148, %149 : vector<128x96xf32>
    %151 = arith.truncf %150 : vector<128x96xf32> to vector<128x96xbf16>
    %152 = tpu.concatenate %37, %75, %113, %151 in 1 : vector<128x96xbf16>, vector<128x96xbf16>, vector<128x96xbf16>, vector<128x96xbf16> -> vector<128x384xbf16>
    %c0_164 = arith.constant 0 : index
    %c0_165 = arith.constant 0 : index
    %c0_166 = arith.constant 0 : index
    %153 = vector.load %arg4[%c0_164, %c0_165, %c0_166] : memref<2x66x128xbf16, #tpu.memory_space<vmem>>, vector<1x66x128xbf16>
    %154 = vector.shape_cast %153 : vector<1x66x128xbf16> to vector<66x128xbf16>
    %cst_167 = arith.constant dense<0.000000e+00> : vector<66x384xf32>
    %155 = tpu.matmul %154, %152, %cst_167 {dimension_numbers = #tpu.dot_dimension_numbers<[1], [0], [0], [1], [0, 0, 1, 1], [], []>} : vector<66x128xbf16>, vector<128x384xbf16>, vector<66x384xf32> -> vector<66x384xf32>
    %c1_168 = arith.constant 1 : index
    %c0_169 = arith.constant 0 : index
    %c0_170 = arith.constant 0 : index
    %156 = vector.load %arg4[%c1_168, %c0_169, %c0_170] : memref<2x66x128xbf16, #tpu.memory_space<vmem>>, vector<1x66x128xbf16>
    %157 = vector.shape_cast %156 : vector<1x66x128xbf16> to vector<66x128xbf16>
    %cst_171 = arith.constant dense<0.000000e+00> : vector<66x384xf32>
    %158 = tpu.matmul %157, %152, %cst_171 {dimension_numbers = #tpu.dot_dimension_numbers<[1], [0], [0], [1], [0, 0, 1, 1], [], []>} : vector<66x128xbf16>, vector<128x384xbf16>, vector<66x384xf32> -> vector<66x384xf32>
    %159 = arith.maximumf %155, %158 : vector<66x384xf32>
    %160 = arith.truncf %159 : vector<66x384xf32> to vector<66x384xbf16>
    %161 = vector.extract_strided_slice %160 {offsets = [0, 0], sizes = [32, 384], strides = [1, 1]} : vector<66x384xbf16> to vector<32x384xbf16>
    %c0_172 = arith.constant 0 : index
    %c0_173 = arith.constant 0 : index
    %c0_174 = arith.constant 0 : index
    %162 = vector.load %arg5[%c0_172, %c0_173, %c0_174] : memref<3x384x384xbf16, #tpu.memory_space<vmem>>, vector<1x384x384xbf16>
    %163 = vector.shape_cast %162 : vector<1x384x384xbf16> to vector<384x384xbf16>
    %cst_175 = arith.constant dense<0.000000e+00> : vector<32x384xf32>
    %164 = tpu.matmul %161, %163, %cst_175 {dimension_numbers = #tpu.dot_dimension_numbers<[1], [0], [0], [1], [0, 0, 1, 1], [], []>} : vector<32x384xbf16>, vector<384x384xbf16>, vector<32x384xf32> -> vector<32x384xf32>
    %165 = vector.extract_strided_slice %160 {offsets = [33, 0], sizes = [32, 384], strides = [1, 1]} : vector<66x384xbf16> to vector<32x384xbf16>
    %c1_176 = arith.constant 1 : index
    %c0_177 = arith.constant 0 : index
    %c0_178 = arith.constant 0 : index
    %166 = vector.load %arg5[%c1_176, %c0_177, %c0_178] : memref<3x384x384xbf16, #tpu.memory_space<vmem>>, vector<1x384x384xbf16>
    %167 = vector.shape_cast %166 : vector<1x384x384xbf16> to vector<384x384xbf16>
    %cst_179 = arith.constant dense<0.000000e+00> : vector<32x384xf32>
    %168 = tpu.matmul %165, %167, %cst_179 {dimension_numbers = #tpu.dot_dimension_numbers<[1], [0], [0], [1], [0, 0, 1, 1], [], []>} : vector<32x384xbf16>, vector<384x384xbf16>, vector<32x384xf32> -> vector<32x384xf32>
    %169 = arith.addf %164, %168 : vector<32x384xf32>
    %170 = vector.extract_strided_slice %160 {offsets = [1, 0], sizes = [32, 384], strides = [1, 1]} : vector<66x384xbf16> to vector<32x384xbf16>
    %c2_180 = arith.constant 2 : index
    %c0_181 = arith.constant 0 : index
    %c0_182 = arith.constant 0 : index
    %171 = vector.load %arg5[%c2_180, %c0_181, %c0_182] : memref<3x384x384xbf16, #tpu.memory_space<vmem>>, vector<1x384x384xbf16>
    %172 = vector.shape_cast %171 : vector<1x384x384xbf16> to vector<384x384xbf16>
    %cst_183 = arith.constant dense<0.000000e+00> : vector<32x384xf32>
    %173 = tpu.matmul %170, %172, %cst_183 {dimension_numbers = #tpu.dot_dimension_numbers<[1], [0], [0], [1], [0, 0, 1, 1], [], []>} : vector<32x384xbf16>, vector<384x384xbf16>, vector<32x384xf32> -> vector<32x384xf32>
    %174 = arith.addf %169, %173 : vector<32x384xf32>
    %175 = vector.extract_strided_slice %174 {offsets = [0, 0], sizes = [32, 192], strides = [1, 1]} : vector<32x384xf32> to vector<32x192xf32>
    %176 = vector.extract_strided_slice %174 {offsets = [0, 192], sizes = [32, 192], strides = [1, 1]} : vector<32x384xf32> to vector<32x192xf32>
    %177 = arith.maximumf %175, %176 : vector<32x192xf32>
    %c0_184 = arith.constant 0 : index
    %c0_185 = arith.constant 0 : index
    %178 = vector.load %arg6[%c0_184, %c0_185] : memref<1x192xf32, #tpu.memory_space<vmem>>, vector<1x192xf32>
    %179 = vector.broadcast %178 : vector<1x192xf32> to vector<32x192xf32>
    %180 = arith.addf %177, %179 : vector<32x192xf32>
    %cst_186 = arith.constant 0.000000e+00 : f32
    %181 = vector.broadcast %cst_186 : f32 to vector<32x192xf32>
    %182 = arith.maximumf %180, %181 : vector<32x192xf32>
    %183 = arith.truncf %182 : vector<32x192xf32> to vector<32x192xbf16>
    %c0_187 = arith.constant 0 : index
    %c0_188 = arith.constant 0 : index
    %c0_189 = arith.constant 0 : index
    %184 = vector.load %arg7[%c0_187, %c0_188, %c0_189] : memref<2x20x32xbf16, #tpu.memory_space<vmem>>, vector<1x20x32xbf16>
    %185 = vector.shape_cast %184 : vector<1x20x32xbf16> to vector<20x32xbf16>
    %cst_190 = arith.constant dense<0.000000e+00> : vector<20x192xf32>
    %186 = tpu.matmul %185, %183, %cst_190 {dimension_numbers = #tpu.dot_dimension_numbers<[1], [0], [0], [1], [0, 0, 1, 1], [], []>} : vector<20x32xbf16>, vector<32x192xbf16>, vector<20x192xf32> -> vector<20x192xf32>
    %c1_191 = arith.constant 1 : index
    %c0_192 = arith.constant 0 : index
    %c0_193 = arith.constant 0 : index
    %187 = vector.load %arg7[%c1_191, %c0_192, %c0_193] : memref<2x20x32xbf16, #tpu.memory_space<vmem>>, vector<1x20x32xbf16>
    %188 = vector.shape_cast %187 : vector<1x20x32xbf16> to vector<20x32xbf16>
    %cst_194 = arith.constant dense<0.000000e+00> : vector<20x192xf32>
    %189 = tpu.matmul %188, %183, %cst_194 {dimension_numbers = #tpu.dot_dimension_numbers<[1], [0], [0], [1], [0, 0, 1, 1], [], []>} : vector<20x32xbf16>, vector<32x192xbf16>, vector<20x192xf32> -> vector<20x192xf32>
    %190 = arith.maximumf %186, %189 : vector<20x192xf32>
    %191 = arith.truncf %190 : vector<20x192xf32> to vector<20x192xbf16>
    %192 = vector.extract_strided_slice %191 {offsets = [0, 0], sizes = [8, 192], strides = [1, 1]} : vector<20x192xbf16> to vector<8x192xbf16>
    %c0_195 = arith.constant 0 : index
    %c0_196 = arith.constant 0 : index
    %c0_197 = arith.constant 0 : index
    %193 = vector.load %arg8[%c0_195, %c0_196, %c0_197] : memref<5x192x48xbf16, #tpu.memory_space<vmem>>, vector<1x192x48xbf16>
    %194 = vector.shape_cast %193 : vector<1x192x48xbf16> to vector<192x48xbf16>
    %cst_198 = arith.constant dense<0.000000e+00> : vector<8x48xf32>
    %195 = tpu.matmul %192, %194, %cst_198 {dimension_numbers = #tpu.dot_dimension_numbers<[1], [0], [0], [1], [0, 0, 1, 1], [], []>} : vector<8x192xbf16>, vector<192x48xbf16>, vector<8x48xf32> -> vector<8x48xf32>
    %196 = vector.extract_strided_slice %191 {offsets = [10, 0], sizes = [8, 192], strides = [1, 1]} : vector<20x192xbf16> to vector<8x192xbf16>
    %c1_199 = arith.constant 1 : index
    %c0_200 = arith.constant 0 : index
    %c0_201 = arith.constant 0 : index
    %197 = vector.load %arg8[%c1_199, %c0_200, %c0_201] : memref<5x192x48xbf16, #tpu.memory_space<vmem>>, vector<1x192x48xbf16>
    %198 = vector.shape_cast %197 : vector<1x192x48xbf16> to vector<192x48xbf16>
    %cst_202 = arith.constant dense<0.000000e+00> : vector<8x48xf32>
    %199 = tpu.matmul %196, %198, %cst_202 {dimension_numbers = #tpu.dot_dimension_numbers<[1], [0], [0], [1], [0, 0, 1, 1], [], []>} : vector<8x192xbf16>, vector<192x48xbf16>, vector<8x48xf32> -> vector<8x48xf32>
    %200 = arith.addf %195, %199 : vector<8x48xf32>
    %201 = vector.extract_strided_slice %191 {offsets = [1, 0], sizes = [8, 192], strides = [1, 1]} : vector<20x192xbf16> to vector<8x192xbf16>
    %c2_203 = arith.constant 2 : index
    %c0_204 = arith.constant 0 : index
    %c0_205 = arith.constant 0 : index
    %202 = vector.load %arg8[%c2_203, %c0_204, %c0_205] : memref<5x192x48xbf16, #tpu.memory_space<vmem>>, vector<1x192x48xbf16>
    %203 = vector.shape_cast %202 : vector<1x192x48xbf16> to vector<192x48xbf16>
    %cst_206 = arith.constant dense<0.000000e+00> : vector<8x48xf32>
    %204 = tpu.matmul %201, %203, %cst_206 {dimension_numbers = #tpu.dot_dimension_numbers<[1], [0], [0], [1], [0, 0, 1, 1], [], []>} : vector<8x192xbf16>, vector<192x48xbf16>, vector<8x48xf32> -> vector<8x48xf32>
    %205 = arith.addf %200, %204 : vector<8x48xf32>
    %206 = vector.extract_strided_slice %191 {offsets = [11, 0], sizes = [8, 192], strides = [1, 1]} : vector<20x192xbf16> to vector<8x192xbf16>
    %c3_207 = arith.constant 3 : index
    %c0_208 = arith.constant 0 : index
    %c0_209 = arith.constant 0 : index
    %207 = vector.load %arg8[%c3_207, %c0_208, %c0_209] : memref<5x192x48xbf16, #tpu.memory_space<vmem>>, vector<1x192x48xbf16>
    %208 = vector.shape_cast %207 : vector<1x192x48xbf16> to vector<192x48xbf16>
    %cst_210 = arith.constant dense<0.000000e+00> : vector<8x48xf32>
    %209 = tpu.matmul %206, %208, %cst_210 {dimension_numbers = #tpu.dot_dimension_numbers<[1], [0], [0], [1], [0, 0, 1, 1], [], []>} : vector<8x192xbf16>, vector<192x48xbf16>, vector<8x48xf32> -> vector<8x48xf32>
    %210 = arith.addf %205, %209 : vector<8x48xf32>
    %211 = vector.extract_strided_slice %191 {offsets = [2, 0], sizes = [8, 192], strides = [1, 1]} : vector<20x192xbf16> to vector<8x192xbf16>
    %c4_211 = arith.constant 4 : index
    %c0_212 = arith.constant 0 : index
    %c0_213 = arith.constant 0 : index
    %212 = vector.load %arg8[%c4_211, %c0_212, %c0_213] : memref<5x192x48xbf16, #tpu.memory_space<vmem>>, vector<1x192x48xbf16>
    %213 = vector.shape_cast %212 : vector<1x192x48xbf16> to vector<192x48xbf16>
    %cst_214 = arith.constant dense<0.000000e+00> : vector<8x48xf32>
    %214 = tpu.matmul %211, %213, %cst_214 {dimension_numbers = #tpu.dot_dimension_numbers<[1], [0], [0], [1], [0, 0, 1, 1], [], []>} : vector<8x192xbf16>, vector<192x48xbf16>, vector<8x48xf32> -> vector<8x48xf32>
    %215 = arith.addf %210, %214 : vector<8x48xf32>
    %216 = vector.extract_strided_slice %215 {offsets = [0, 0], sizes = [8, 24], strides = [1, 1]} : vector<8x48xf32> to vector<8x24xf32>
    %217 = vector.extract_strided_slice %215 {offsets = [0, 24], sizes = [8, 24], strides = [1, 1]} : vector<8x48xf32> to vector<8x24xf32>
    %218 = arith.maximumf %216, %217 : vector<8x24xf32>
    %c0_215 = arith.constant 0 : index
    %c0_216 = arith.constant 0 : index
    %219 = vector.load %arg9[%c0_215, %c0_216] : memref<1x24xf32, #tpu.memory_space<vmem>>, vector<1x24xf32>
    %220 = vector.broadcast %219 : vector<1x24xf32> to vector<8x24xf32>
    %221 = arith.addf %218, %220 : vector<8x24xf32>
    %cst_217 = arith.constant 0.000000e+00 : f32
    %222 = vector.broadcast %cst_217 : f32 to vector<8x24xf32>
    %223 = arith.maximumf %221, %222 : vector<8x24xf32>
    %224 = arith.truncf %223 : vector<8x24xf32> to vector<8x24xbf16>
    %c0_218 = arith.constant 0 : index
    %c0_219 = arith.constant 0 : index
    %c0_220 = arith.constant 0 : index
    %225 = vector.load %arg10[%c0_218, %c0_219, %c0_220] : memref<2x6x8xbf16, #tpu.memory_space<vmem>>, vector<1x6x8xbf16>
    %226 = vector.shape_cast %225 : vector<1x6x8xbf16> to vector<6x8xbf16>
    %cst_221 = arith.constant dense<0.000000e+00> : vector<6x24xf32>
    %227 = tpu.matmul %226, %224, %cst_221 {dimension_numbers = #tpu.dot_dimension_numbers<[1], [0], [0], [1], [0, 0, 1, 1], [], []>} : vector<6x8xbf16>, vector<8x24xbf16>, vector<6x24xf32> -> vector<6x24xf32>
    %c1_222 = arith.constant 1 : index
    %c0_223 = arith.constant 0 : index
    %c0_224 = arith.constant 0 : index
    %228 = vector.load %arg10[%c1_222, %c0_223, %c0_224] : memref<2x6x8xbf16, #tpu.memory_space<vmem>>, vector<1x6x8xbf16>
    %229 = vector.shape_cast %228 : vector<1x6x8xbf16> to vector<6x8xbf16>
    %cst_225 = arith.constant dense<0.000000e+00> : vector<6x24xf32>
    %230 = tpu.matmul %229, %224, %cst_225 {dimension_numbers = #tpu.dot_dimension_numbers<[1], [0], [0], [1], [0, 0, 1, 1], [], []>} : vector<6x8xbf16>, vector<8x24xbf16>, vector<6x24xf32> -> vector<6x24xf32>
    %231 = arith.maximumf %227, %230 : vector<6x24xf32>
    %232 = arith.truncf %231 : vector<6x24xf32> to vector<6x24xbf16>
    %233 = vector.extract_strided_slice %232 {offsets = [0, 0], sizes = [4, 24], strides = [1, 1]} : vector<6x24xbf16> to vector<4x24xbf16>
    %c0_226 = arith.constant 0 : index
    %c0_227 = arith.constant 0 : index
    %c0_228 = arith.constant 0 : index
    %234 = vector.load %arg11[%c0_226, %c0_227, %c0_228] : memref<3x24x4xbf16, #tpu.memory_space<vmem>>, vector<1x24x4xbf16>
    %235 = vector.shape_cast %234 : vector<1x24x4xbf16> to vector<24x4xbf16>
    %cst_229 = arith.constant dense<0.000000e+00> : vector<4x4xf32>
    %236 = tpu.matmul %233, %235, %cst_229 {dimension_numbers = #tpu.dot_dimension_numbers<[1], [0], [0], [1], [0, 0, 1, 1], [], []>} : vector<4x24xbf16>, vector<24x4xbf16>, vector<4x4xf32> -> vector<4x4xf32>
    %237 = vector.extract_strided_slice %232 {offsets = [1, 0], sizes = [4, 24], strides = [1, 1]} : vector<6x24xbf16> to vector<4x24xbf16>
    %c1_230 = arith.constant 1 : index
    %c0_231 = arith.constant 0 : index
    %c0_232 = arith.constant 0 : index
    %238 = vector.load %arg11[%c1_230, %c0_231, %c0_232] : memref<3x24x4xbf16, #tpu.memory_space<vmem>>, vector<1x24x4xbf16>
    %239 = vector.shape_cast %238 : vector<1x24x4xbf16> to vector<24x4xbf16>
    %cst_233 = arith.constant dense<0.000000e+00> : vector<4x4xf32>
    %240 = tpu.matmul %237, %239, %cst_233 {dimension_numbers = #tpu.dot_dimension_numbers<[1], [0], [0], [1], [0, 0, 1, 1], [], []>} : vector<4x24xbf16>, vector<24x4xbf16>, vector<4x4xf32> -> vector<4x4xf32>
    %241 = arith.addf %236, %240 : vector<4x4xf32>
    %242 = vector.extract_strided_slice %232 {offsets = [2, 0], sizes = [4, 24], strides = [1, 1]} : vector<6x24xbf16> to vector<4x24xbf16>
    %c2_234 = arith.constant 2 : index
    %c0_235 = arith.constant 0 : index
    %c0_236 = arith.constant 0 : index
    %243 = vector.load %arg11[%c2_234, %c0_235, %c0_236] : memref<3x24x4xbf16, #tpu.memory_space<vmem>>, vector<1x24x4xbf16>
    %244 = vector.shape_cast %243 : vector<1x24x4xbf16> to vector<24x4xbf16>
    %cst_237 = arith.constant dense<0.000000e+00> : vector<4x4xf32>
    %245 = tpu.matmul %242, %244, %cst_237 {dimension_numbers = #tpu.dot_dimension_numbers<[1], [0], [0], [1], [0, 0, 1, 1], [], []>} : vector<4x24xbf16>, vector<24x4xbf16>, vector<4x4xf32> -> vector<4x4xf32>
    %246 = arith.addf %241, %245 : vector<4x4xf32>
    %c0_238 = arith.constant 0 : index
    %c0_239 = arith.constant 0 : index
    %247 = vector.load %arg12[%c0_238, %c0_239] : memref<1x4xf32, #tpu.memory_space<vmem>>, vector<1x4xf32>
    %248 = vector.broadcast %247 : vector<1x4xf32> to vector<4x4xf32>
    %249 = arith.addf %246, %248 : vector<4x4xf32>
    %cst_240 = arith.constant 0.000000e+00 : f32
    %250 = vector.broadcast %cst_240 : f32 to vector<4x4xf32>
    %251 = arith.maximumf %249, %250 : vector<4x4xf32>
    %252 = vector.extract_strided_slice %251 {offsets = [0, 0], sizes = [1, 4], strides = [1, 1]} : vector<4x4xf32> to vector<1x4xf32>
    %c0_241 = arith.constant 0 : index
    %c0_242 = arith.constant 0 : index
    %c0_243 = arith.constant 0 : index
    %253 = vector.load %arg13[%c0_241, %c0_242, %c0_243] : memref<4x4x2xf32, #tpu.memory_space<vmem>>, vector<1x4x2xf32>
    %254 = vector.shape_cast %253 : vector<1x4x2xf32> to vector<4x2xf32>
    %cst_244 = arith.constant dense<0.000000e+00> : vector<1x2xf32>
    %255 = tpu.matmul %252, %254, %cst_244 {dimension_numbers = #tpu.dot_dimension_numbers<[1], [0], [0], [1], [0, 0, 1, 1], [], []>} : vector<1x4xf32>, vector<4x2xf32>, vector<1x2xf32> -> vector<1x2xf32>
    %256 = vector.extract_strided_slice %251 {offsets = [1, 0], sizes = [1, 4], strides = [1, 1]} : vector<4x4xf32> to vector<1x4xf32>
    %c1_245 = arith.constant 1 : index
    %c0_246 = arith.constant 0 : index
    %c0_247 = arith.constant 0 : index
    %257 = vector.load %arg13[%c1_245, %c0_246, %c0_247] : memref<4x4x2xf32, #tpu.memory_space<vmem>>, vector<1x4x2xf32>
    %258 = vector.shape_cast %257 : vector<1x4x2xf32> to vector<4x2xf32>
    %cst_248 = arith.constant dense<0.000000e+00> : vector<1x2xf32>
    %259 = tpu.matmul %256, %258, %cst_248 {dimension_numbers = #tpu.dot_dimension_numbers<[1], [0], [0], [1], [0, 0, 1, 1], [], []>} : vector<1x4xf32>, vector<4x2xf32>, vector<1x2xf32> -> vector<1x2xf32>
    %260 = arith.addf %255, %259 : vector<1x2xf32>
    %261 = vector.extract_strided_slice %251 {offsets = [2, 0], sizes = [1, 4], strides = [1, 1]} : vector<4x4xf32> to vector<1x4xf32>
    %c2_249 = arith.constant 2 : index
    %c0_250 = arith.constant 0 : index
    %c0_251 = arith.constant 0 : index
    %262 = vector.load %arg13[%c2_249, %c0_250, %c0_251] : memref<4x4x2xf32, #tpu.memory_space<vmem>>, vector<1x4x2xf32>
    %263 = vector.shape_cast %262 : vector<1x4x2xf32> to vector<4x2xf32>
    %cst_252 = arith.constant dense<0.000000e+00> : vector<1x2xf32>
    %264 = tpu.matmul %261, %263, %cst_252 {dimension_numbers = #tpu.dot_dimension_numbers<[1], [0], [0], [1], [0, 0, 1, 1], [], []>} : vector<1x4xf32>, vector<4x2xf32>, vector<1x2xf32> -> vector<1x2xf32>
    %265 = arith.addf %260, %264 : vector<1x2xf32>
    %266 = vector.extract_strided_slice %251 {offsets = [3, 0], sizes = [1, 4], strides = [1, 1]} : vector<4x4xf32> to vector<1x4xf32>
    %c3_253 = arith.constant 3 : index
    %c0_254 = arith.constant 0 : index
    %c0_255 = arith.constant 0 : index
    %267 = vector.load %arg13[%c3_253, %c0_254, %c0_255] : memref<4x4x2xf32, #tpu.memory_space<vmem>>, vector<1x4x2xf32>
    %268 = vector.shape_cast %267 : vector<1x4x2xf32> to vector<4x2xf32>
    %cst_256 = arith.constant dense<0.000000e+00> : vector<1x2xf32>
    %269 = tpu.matmul %266, %268, %cst_256 {dimension_numbers = #tpu.dot_dimension_numbers<[1], [0], [0], [1], [0, 0, 1, 1], [], []>} : vector<1x4xf32>, vector<4x2xf32>, vector<1x2xf32> -> vector<1x2xf32>
    %270 = arith.addf %265, %269 : vector<1x2xf32>
    %c0_257 = arith.constant 0 : index
    %c0_258 = arith.constant 0 : index
    %271 = vector.load %arg14[%c0_257, %c0_258] : memref<1x2xf32, #tpu.memory_space<vmem>>, vector<1x2xf32>
    %272 = arith.addf %270, %271 : vector<1x2xf32>
    %cst_259 = arith.constant 0.000000e+00 : f32
    %273 = vector.broadcast %cst_259 : f32 to vector<1x2xf32>
    %274 = arith.maximumf %272, %273 : vector<1x2xf32>
    %c0_260 = arith.constant 0 : index
    %c0_261 = arith.constant 0 : index
    %c0_262 = arith.constant 0 : index
    %275 = vector.load %arg15[%c0_260, %c0_261, %c0_262] : memref<1x1x2xf32, #tpu.memory_space<vmem>>, vector<1x1x2xf32>
    %276 = vector.shape_cast %275 : vector<1x1x2xf32> to vector<1x2xf32>
    %277 = vector.shape_cast %274 : vector<1x2xf32> to vector<1x1x2xf32>
    tpu.vector_store %arg15[%c0_260, %c0_261, %c0_262], %277 {strides = array<i32>} : memref<1x1x2xf32, #tpu.memory_space<vmem>>, vector<1x1x2xf32>,
    return
  }
  func.func @transform_0(%arg0: i32) -> (i32, i32, i32, i32) {
    %c0_i32 = arith.constant 0 : i32
    %c0_i32_0 = arith.constant 0 : i32
    %c0_i32_1 = arith.constant 0 : i32
    %c0_i32_2 = arith.constant 0 : i32
    return %arg0, %c0_i32, %c0_i32_0, %c0_i32_1 : i32, i32, i32, i32
  }
  func.func @transform_1(%arg0: i32) -> (i32, i32, i32) {
    %c0_i32 = arith.constant 0 : i32
    %c0_i32_0 = arith.constant 0 : i32
    %c0_i32_1 = arith.constant 0 : i32
    %c0_i32_2 = arith.constant 0 : i32
    return %c0_i32, %c0_i32_0, %c0_i32_1 : i32, i32, i32
  }
  func.func @transform_2(%arg0: i32) -> (i32, i32) {
    %c0_i32 = arith.constant 0 : i32
    %c0_i32_0 = arith.constant 0 : i32
    %c0_i32_1 = arith.constant 0 : i32
    return %c0_i32, %c0_i32_0 : i32, i32
  }
  func.func @transform_3(%arg0: i32) -> (i32, i32, i32) {
    %c0_i32 = arith.constant 0 : i32
    %c0_i32_0 = arith.constant 0 : i32
    %c0_i32_1 = arith.constant 0 : i32
    %c0_i32_2 = arith.constant 0 : i32
    return %c0_i32, %c0_i32_0, %c0_i32_1 : i32, i32, i32
  }
  func.func @transform_4(%arg0: i32) -> (i32, i32, i32) {
    %c0_i32 = arith.constant 0 : i32
    %c0_i32_0 = arith.constant 0 : i32
    %c0_i32_1 = arith.constant 0 : i32
    %c0_i32_2 = arith.constant 0 : i32
    return %c0_i32, %c0_i32_0, %c0_i32_1 : i32, i32, i32
  }
  func.func @transform_5(%arg0: i32) -> (i32, i32) {
    %c0_i32 = arith.constant 0 : i32
    %c0_i32_0 = arith.constant 0 : i32
    %c0_i32_1 = arith.constant 0 : i32
    return %c0_i32, %c0_i32_0 : i32, i32
  }
  func.func @transform_6(%arg0: i32) -> (i32, i32, i32) {
    %c0_i32 = arith.constant 0 : i32
    %c0_i32_0 = arith.constant 0 : i32
    %c0_i32_1 = arith.constant 0 : i32
    %c0_i32_2 = arith.constant 0 : i32
    return %c0_i32, %c0_i32_0, %c0_i32_1 : i32, i32, i32
  }
  func.func @transform_7(%arg0: i32) -> (i32, i32, i32) {
    %c0_i32 = arith.constant 0 : i32
    %c0_i32_0 = arith.constant 0 : i32
    %c0_i32_1 = arith.constant 0 : i32
    %c0_i32_2 = arith.constant 0 : i32
    return %c0_i32, %c0_i32_0, %c0_i32_1 : i32, i32, i32
  }
  func.func @transform_8(%arg0: i32) -> (i32, i32) {
    %c0_i32 = arith.constant 0 : i32
    %c0_i32_0 = arith.constant 0 : i32
    %c0_i32_1 = arith.constant 0 : i32
    return %c0_i32, %c0_i32_0 : i32, i32
  }
  func.func @transform_9(%arg0: i32) -> (i32, i32, i32) {
    %c0_i32 = arith.constant 0 : i32
    %c0_i32_0 = arith.constant 0 : i32
    %c0_i32_1 = arith.constant 0 : i32
    %c0_i32_2 = arith.constant 0 : i32
    return %c0_i32, %c0_i32_0, %c0_i32_1 : i32, i32, i32
  }
  func.func @transform_10(%arg0: i32) -> (i32, i32, i32) {
    %c0_i32 = arith.constant 0 : i32
    %c0_i32_0 = arith.constant 0 : i32
    %c0_i32_1 = arith.constant 0 : i32
    %c0_i32_2 = arith.constant 0 : i32
    return %c0_i32, %c0_i32_0, %c0_i32_1 : i32, i32, i32
  }
  func.func @transform_11(%arg0: i32) -> (i32, i32) {
    %c0_i32 = arith.constant 0 : i32
    %c0_i32_0 = arith.constant 0 : i32
    %c0_i32_1 = arith.constant 0 : i32
    return %c0_i32, %c0_i32_0 : i32, i32
  }
  func.func @transform_12(%arg0: i32) -> (i32, i32, i32) {
    %c0_i32 = arith.constant 0 : i32
    %c0_i32_0 = arith.constant 0 : i32
    %c0_i32_1 = arith.constant 0 : i32
    %c0_i32_2 = arith.constant 0 : i32
    return %c0_i32, %c0_i32_0, %c0_i32_1 : i32, i32, i32
  }
  func.func @transform_13(%arg0: i32) -> (i32, i32) {
    %c0_i32 = arith.constant 0 : i32
    %c0_i32_0 = arith.constant 0 : i32
    %c0_i32_1 = arith.constant 0 : i32
    return %c0_i32, %c0_i32_0 : i32, i32
  }
  func.func @transform_14(%arg0: i32) -> (i32, i32, i32) {
    %c0_i32 = arith.constant 0 : i32
    %c0_i32_0 = arith.constant 0 : i32
    %c0_i32_1 = arith.constant 0 : i32
    return %arg0, %c0_i32, %c0_i32_0 : i32, i32, i32
  }
}

</mosaic_0001>

<llo_original>
// kernel: m_model_forward_fn.1
$region0: #{m_model_forward_fn.1}
  #allocation0 [shape = 'u32[]', space=smem, size = 0x4, offset = 0x4, fixed_abs, tag = 'smem constant byte address 0x4 - core index']
  #allocation1 [shape = 'u32[144,128]{1,0:T(1,128)}', space=vmem, size = 0x12000, scoped, tag = 'internal scratch']
  %s0 = inlined_call_operand.vmem [shape: bf16[2,4,260,201], index: 0, kind: input, shape index: {}]
  %s1 = inlined_call_operand.vmem [shape: bf16[5,201,192], index: 1, kind: input, shape index: {}]
  %s2 = inlined_call_operand.vmem [shape: f32[1,96], index: 2, kind: input, shape index: {}]
  %s3 = inlined_call_operand.vmem [shape: bf16[2,66,128], index: 3, kind: input, shape index: {}]
  %s4 = inlined_call_operand.vmem [shape: bf16[3,384,384], index: 4, kind: input, shape index: {}]
  %s5 = inlined_call_operand.vmem [shape: f32[1,192], index: 5, kind: input, shape index: {}]
  %s6 = inlined_call_operand.vmem [shape: bf16[2,20,32], index: 6, kind: input, shape index: {}]
  %s7 = inlined_call_operand.vmem [shape: bf16[5,192,48], index: 7, kind: input, shape index: {}]
  %s8 = inlined_call_operand.vmem [shape: f32[1,24], index: 8, kind: input, shape index: {}]
  %s9 = inlined_call_operand.vmem [shape: bf16[2,6,8], index: 9, kind: input, shape index: {}]
  %s10 = inlined_call_operand.vmem [shape: bf16[3,24,4], index: 10, kind: input, shape index: {}]
  %s11 = inlined_call_operand.vmem [shape: f32[1,4], index: 11, kind: input, shape index: {}]
  %s12 = inlined_call_operand.vmem [shape: f32[4,4,2], index: 12, kind: input, shape index: {}]
  %s13 = inlined_call_operand.vmem [shape: f32[1,2], index: 13, kind: input, shape index: {}]
  %s14 = inlined_call_operand.hbm [shape: f32[2,1,2], index: 14, kind: output, shape index: {}]
  %s15 = sld [smem:[#allocation0]]
  $region89: #{m_model_forward_fn.1} parent=0
    _
  %s17 = ssub.s32 1, %s15
  %s18 = scalar_select 0, %s17, %s15
  $region1: #{m_model_forward_fn.1} parent=0
    #allocation2 [shape = 'u8[1024]{0}', space=vmem, size = 0x400, scoped, tag = 'output window, operand 0']
    #allocation3 [shape = 's32[2]{0}', space=sflag, size = 0x8, scoped, tag = 'scoped memory for m_model_forward_fn.1']
    %19 = vsyncpa [#allocation3], 0
    %s20 = scalar_lea.sflag [#allocation3], 1
    %21 = vsyncpa %s20, 0
    loop: start=0, step=1, limit=4
    $region2: #{m_model_forward_fn.1} parent=1 // loop_pre_header
      _
    $region3: #{m_model_forward_fn.1} parent=1 // loop_header
      %s23 = sphi 0, %s27
      %p24 = scmp.ge.s32.totalorder %s23, 4
      %s33 = sphi 0, %s35
      %s36 = sphi 0, %s33
      %s37 = sphi 0, %s36
      %s53 = sphi 0, %s37
      %s57 = sphi 0, %s57
      %s59 = sphi 0, %s57
      %s60 = sphi 0, %s59
      %s74 = sphi 0, %s60
      %s78 = sphi 0, %s78
      %s80 = sphi 0, %s78
      %s81 = sphi 0, %s80
      %s95 = sphi 0, %s81
      %s99 = sphi 0, %s99
      %s101 = sphi 0, %s99
      %s102 = sphi 0, %s101
      %s116 = sphi 0, %s102
      %s120 = sphi 0, %s120
      %s122 = sphi 0, %s120
      %s123 = sphi 0, %s122
      %s137 = sphi 0, %s123
      %s141 = sphi 0, %s141
      %s143 = sphi 0, %s141
      %s144 = sphi 0, %s143
      %s158 = sphi 0, %s144
      %s162 = sphi 0, %s162
      %s164 = sphi 0, %s162
      %s165 = sphi 0, %s164
      %s179 = sphi 0, %s165
      %s183 = sphi 0, %s183
      %s185 = sphi 0, %s183
      %s186 = sphi 0, %s185
      %s200 = sphi 0, %s186
      %s204 = sphi 0, %s204
      %s206 = sphi 0, %s204
      %s207 = sphi 0, %s206
      %s221 = sphi 0, %s207
      %s225 = sphi 0, %s225
      %s227 = sphi 0, %s225
      %s228 = sphi 0, %s227
      %s242 = sphi 0, %s228
      %s246 = sphi 0, %s246
      %s248 = sphi 0, %s246
      %s249 = sphi 0, %s248
      %s263 = sphi 0, %s249
      %s267 = sphi 0, %s267
      %s269 = sphi 0, %s267
      %s270 = sphi 0, %s269
      %s284 = sphi 0, %s270
      %s288 = sphi 0, %s288
      %s290 = sphi 0, %s288
      %s291 = sphi 0, %s290
      %s305 = sphi 0, %s291
      %s309 = sphi 0, %s309
      %s311 = sphi 0, %s309
      %s312 = sphi 0, %s311
      %s326 = sphi 0, %s312
      %s332 = sphi 0, %s334
      %s335 = sphi 0, %s332
      %s336 = sphi 0, %s335
      %s352 = sphi 0, %s336
    $region4: #{m_model_forward_fn.1} parent=1 // loop_header_branch
      %26 = sbr.rel (%p24) target = $region8
    $region5: #{m_model_forward_fn.1} parent=1 // loop_body
      %s28 = ssub.s32 %s23, 1
      %s29 = ssub.s32 %s23, 2
      %s30 = sadd.s32 %s23, 1
      %s31 = ssub.s32 %s23, %s30
      %p32 = scmp.eq.s32.totalorder %s31, 0
      %s34 = sadd.s32 %s33, 1
      %s35 = scalar_select %p32, %s33, %s34
      %p38 = pneg %p32
      %p39 = scmp.eq.s32.totalorder %s23, 1
      %p40 = por %p38, %p39
      %p41 = scmp.ne.s32.totalorder %s33, %s36
      %p42 = scmp.eq.s32.totalorder %s23, 0
      %p43 = por %p41, %p42
      %p44 = scmp.ne.s32.totalorder %s33, %s36
      %p45 = scmp.eq.s32.totalorder %s28, 1
      %p46 = por %p44, %p45
      %p47 = scmp.ne.s32.totalorder %s36, %s37
      %p48 = scmp.eq.s32.totalorder %s28, 0
      %p49 = por %p47, %p48
      %p50 = scmp.ne.s32.totalorder %s36, %s37
      %p51 = scmp.eq.s32.totalorder %s29, 1
      %p52 = por %p50, %p51
      %p54 = scmp.ne.s32.totalorder %s37, %s53
      %p55 = scmp.eq.s32.totalorder %s29, 0
      %p56 = por %p54, %p55
      %s58 = sadd.s32 %s57, 1
      %p61 = scmp.eq.s32.totalorder %s23, 1
      %p62 = scmp.ne.s32.totalorder %s57, %s59
      %p63 = scmp.eq.s32.totalorder %s23, 0
      %p64 = por %p62, %p63
      %p65 = scmp.ne.s32.totalorder %s57, %s59
      %p66 = scmp.eq.s32.totalorder %s28, 1
      %p67 = por %p65, %p66
      %p68 = scmp.ne.s32.totalorder %s59, %s60
      %p69 = scmp.eq.s32.totalorder %s28, 0
      %p70 = por %p68, %p69
      %p71 = scmp.ne.s32.totalorder %s59, %s60
      %p72 = scmp.eq.s32.totalorder %s29, 1
      %p73 = por %p71, %p72
      %p75 = scmp.ne.s32.totalorder %s60, %s74
      %p76 = scmp.eq.s32.totalorder %s29, 0
      %p77 = por %p75, %p76
      %s79 = sadd.s32 %s78, 1
      %p82 = scmp.eq.s32.totalorder %s23, 1
      %p83 = scmp.ne.s32.totalorder %s78, %s80
      %p84 = scmp.eq.s32.totalorder %s23, 0
      %p85 = por %p83, %p84
      %p86 = scmp.ne.s32.totalorder %s78, %s80
      %p87 = scmp.eq.s32.totalorder %s28, 1
      %p88 = por %p86, %p87
      %p89 = scmp.ne.s32.totalorder %s80, %s81
      %p90 = scmp.eq.s32.totalorder %s28, 0
      %p91 = por %p89, %p90
      %p92 = scmp.ne.s32.totalorder %s80, %s81
      %p93 = scmp.eq.s32.totalorder %s29, 1
      %p94 = por %p92, %p93
      %p96 = scmp.ne.s32.totalorder %s81, %s95
      %p97 = scmp.eq.s32.totalorder %s29, 0
      %p98 = por %p96, %p97
      %s100 = sadd.s32 %s99, 1
      %p103 = scmp.eq.s32.totalorder %s23, 1
      %p104 = scmp.ne.s32.totalorder %s99, %s101
      %p105 = scmp.eq.s32.totalorder %s23, 0
      %p106 = por %p104, %p105
      %p107 = scmp.ne.s32.totalorder %s99, %s101
      %p108 = scmp.eq.s32.totalorder %s28, 1
      %p109 = por %p107, %p108
      %p110 = scmp.ne.s32.totalorder %s101, %s102
      %p111 = scmp.eq.s32.totalorder %s28, 0
      %p112 = por %p110, %p111
      %p113 = scmp.ne.s32.totalorder %s101, %s102
      %p114 = scmp.eq.s32.totalorder %s29, 1
      %p115 = por %p113, %p114
      %p117 = scmp.ne.s32.totalorder %s102, %s116
      %p118 = scmp.eq.s32.totalorder %s29, 0
      %p119 = por %p117, %p118
      %s121 = sadd.s32 %s120, 1
      %p124 = scmp.eq.s32.totalorder %s23, 1
      %p125 = scmp.ne.s32.totalorder %s120, %s122
      %p126 = scmp.eq.s32.totalorder %s23, 0
      %p127 = por %p125, %p126
      %p128 = scmp.ne.s32.totalorder %s120, %s122
      %p129 = scmp.eq.s32.totalorder %s28, 1
      %p130 = por %p128, %p129
      %p131 = scmp.ne.s32.totalorder %s122, %s123
      %p132 = scmp.eq.s32.totalorder %s28, 0
      %p133 = por %p131, %p132
      %p134 = scmp.ne.s32.totalorder %s122, %s123
      %p135 = scmp.eq.s32.totalorder %s29, 1
      %p136 = por %p134, %p135
      %p138 = scmp.ne.s32.totalorder %s123, %s137
      %p139 = scmp.eq.s32.totalorder %s29, 0
      %p140 = por %p138, %p139
      %s142 = sadd.s32 %s141, 1
      %p145 = scmp.eq.s32.totalorder %s23, 1
      %p146 = scmp.ne.s32.totalorder %s141, %s143
      %p147 = scmp.eq.s32.totalorder %s23, 0
      %p148 = por %p146, %p147
      %p149 = scmp.ne.s32.totalorder %s141, %s143
      %p150 = scmp.eq.s32.totalorder %s28, 1
      %p151 = por %p149, %p150
      %p152 = scmp.ne.s32.totalorder %s143, %s144
      %p153 = scmp.eq.s32.totalorder %s28, 0
      %p154 = por %p152, %p153
      %p155 = scmp.ne.s32.totalorder %s143, %s144
      %p156 = scmp.eq.s32.totalorder %s29, 1
      %p157 = por %p155, %p156
      %p159 = scmp.ne.s32.totalorder %s144, %s158
      %p160 = scmp.eq.s32.totalorder %s29, 0
      %p161 = por %p159, %p160
      %s163 = sadd.s32 %s162, 1
      %p166 = scmp.eq.s32.totalorder %s23, 1
      %p167 = scmp.ne.s32.totalorder %s162, %s164
      %p168 = scmp.eq.s32.totalorder %s23, 0
      %p169 = por %p167, %p168
      %p170 = scmp.ne.s32.totalorder %s162, %s164
      %p171 = scmp.eq.s32.totalorder %s28, 1
      %p172 = por %p170, %p171
      %p173 = scmp.ne.s32.totalorder %s164, %s165
      %p174 = scmp.eq.s32.totalorder %s28, 0
      %p175 = por %p173, %p174
      %p176 = scmp.ne.s32.totalorder %s164, %s165
      %p177 = scmp.eq.s32.totalorder %s29, 1
      %p178 = por %p176, %p177
      %p180 = scmp.ne.s32.totalorder %s165, %s179
      %p181 = scmp.eq.s32.totalorder %s29, 0
      %p182 = por %p180, %p181
      %s184 = sadd.s32 %s183, 1
      %p187 = scmp.eq.s32.totalorder %s23, 1
      %p188 = scmp.ne.s32.totalorder %s183, %s185
      %p189 = scmp.eq.s32.totalorder %s23, 0
      %p190 = por %p188, %p189
      %p191 = scmp.ne.s32.totalorder %s183, %s185
      %p192 = scmp.eq.s32.totalorder %s28, 1
      %p193 = por %p191, %p192
      %p194 = scmp.ne.s32.totalorder %s185, %s186
      %p195 = scmp.eq.s32.totalorder %s28, 0
      %p196 = por %p194, %p195
      %p197 = scmp.ne.s32.totalorder %s185, %s186
      %p198 = scmp.eq.s32.totalorder %s29, 1
      %p199 = por %p197, %p198
      %p201 = scmp.ne.s32.totalorder %s186, %s200
      %p202 = scmp.eq.s32.totalorder %s29, 0
      %p203 = por %p201, %p202
      %s205 = sadd.s32 %s204, 1
      %p208 = scmp.eq.s32.totalorder %s23, 1
      %p209 = scmp.ne.s32.totalorder %s204, %s206
      %p210 = scmp.eq.s32.totalorder %s23, 0
      %p211 = por %p209, %p210
      %p212 = scmp.ne.s32.totalorder %s204, %s206
      %p213 = scmp.eq.s32.totalorder %s28, 1
      %p214 = por %p212, %p213
      %p215 = scmp.ne.s32.totalorder %s206, %s207
      %p216 = scmp.eq.s32.totalorder %s28, 0
      %p217 = por %p215, %p216
      %p218 = scmp.ne.s32.totalorder %s206, %s207
      %p219 = scmp.eq.s32.totalorder %s29, 1
      %p220 = por %p218, %p219
      %p222 = scmp.ne.s32.totalorder %s207, %s221
      %p223 = scmp.eq.s32.totalorder %s29, 0
      %p224 = por %p222, %p223
      %s226 = sadd.s32 %s225, 1
      %p229 = scmp.eq.s32.totalorder %s23, 1
      %p230 = scmp.ne.s32.totalorder %s225, %s227
      %p231 = scmp.eq.s32.totalorder %s23, 0
      %p232 = por %p230, %p231
      %p233 = scmp.ne.s32.totalorder %s225, %s227
      %p234 = scmp.eq.s32.totalorder %s28, 1
      %p235 = por %p233, %p234
      %p236 = scmp.ne.s32.totalorder %s227, %s228
      %p237 = scmp.eq.s32.totalorder %s28, 0
      %p238 = por %p236, %p237
      %p239 = scmp.ne.s32.totalorder %s227, %s228
      %p240 = scmp.eq.s32.totalorder %s29, 1
      %p241 = por %p239, %p240
      %p243 = scmp.ne.s32.totalorder %s228, %s242
      %p244 = scmp.eq.s32.totalorder %s29, 0
      %p245 = por %p243, %p244
      %s247 = sadd.s32 %s246, 1
      %p250 = scmp.eq.s32.totalorder %s23, 1
      %p251 = scmp.ne.s32.totalorder %s246, %s248
      %p252 = scmp.eq.s32.totalorder %s23, 0
      %p253 = por %p251, %p252
      %p254 = scmp.ne.s32.totalorder %s246, %s248
      %p255 = scmp.eq.s32.totalorder %s28, 1
      %p256 = por %p254, %p255
      %p257 = scmp.ne.s32.totalorder %s248, %s249
      %p258 = scmp.eq.s32.totalorder %s28, 0
      %p259 = por %p257, %p258
      %p260 = scmp.ne.s32.totalorder %s248, %s249
      %p261 = scmp.eq.s32.totalorder %s29, 1
      %p262 = por %p260, %p261
      %p264 = scmp.ne.s32.totalorder %s249, %s263
      %p265 = scmp.eq.s32.totalorder %s29, 0
      %p266 = por %p264, %p265
      %s268 = sadd.s32 %s267, 1
      %p271 = scmp.eq.s32.totalorder %s23, 1
      %p272 = scmp.ne.s32.totalorder %s267, %s269
      %p273 = scmp.eq.s32.totalorder %s23, 0
      %p274 = por %p272, %p273
      %p275 = scmp.ne.s32.totalorder %s267, %s269
      %p276 = scmp.eq.s32.totalorder %s28, 1
      %p277 = por %p275, %p276
      %p278 = scmp.ne.s32.totalorder %s269, %s270
      %p279 = scmp.eq.s32.totalorder %s28, 0
      %p280 = por %p278, %p279
      %p281 = scmp.ne.s32.totalorder %s269, %s270
      %p282 = scmp.eq.s32.totalorder %s29, 1
      %p283 = por %p281, %p282
      %p285 = scmp.ne.s32.totalorder %s270, %s284
      %p286 = scmp.eq.s32.totalorder %s29, 0
      %p287 = por %p285, %p286
      %s289 = sadd.s32 %s288, 1
      %p292 = scmp.eq.s32.totalorder %s23, 1
      %p293 = scmp.ne.s32.totalorder %s288, %s290
      %p294 = scmp.eq.s32.totalorder %s23, 0
      %p295 = por %p293, %p294
      %p296 = scmp.ne.s32.totalorder %s288, %s290
      %p297 = scmp.eq.s32.totalorder %s28, 1
      %p298 = por %p296, %p297
      %p299 = scmp.ne.s32.totalorder %s290, %s291
      %p300 = scmp.eq.s32.totalorder %s28, 0
      %p301 = por %p299, %p300
      %p302 = scmp.ne.s32.totalorder %s290, %s291
      %p303 = scmp.eq.s32.totalorder %s29, 1
      %p304 = por %p302, %p303
      %p306 = scmp.ne.s32.totalorder %s291, %s305
      %p307 = scmp.eq.s32.totalorder %s29, 0
      %p308 = por %p306, %p307
      %s310 = sadd.s32 %s309, 1
      %p313 = scmp.eq.s32.totalorder %s23, 1
      %p314 = scmp.ne.s32.totalorder %s309, %s311
      %p315 = scmp.eq.s32.totalorder %s23, 0
      %p316 = por %p314, %p315
      %p317 = scmp.ne.s32.totalorder %s309, %s311
      %p318 = scmp.eq.s32.totalorder %s28, 1
      %p319 = por %p317, %p318
      %p320 = scmp.ne.s32.totalorder %s311, %s312
      %p321 = scmp.eq.s32.totalorder %s28, 0
      %p322 = por %p320, %p321
      %p323 = scmp.ne.s32.totalorder %s311, %s312
      %p324 = scmp.eq.s32.totalorder %s29, 1
      %p325 = por %p323, %p324
      %p327 = scmp.ne.s32.totalorder %s312, %s326
      %p328 = scmp.eq.s32.totalorder %s29, 0
      %p329 = por %p327, %p328
      %s330 = ssub.s32 %s23, %s30
      %p331 = scmp.eq.s32.totalorder %s330, 0
      %s333 = sadd.s32 %s332, 1
      %s334 = scalar_select %p331, %s332, %s333
      %p337 = pneg %p331
      %p338 = scmp.eq.s32.totalorder %s23, 1
      %p339 = por %p337, %p338
      %p340 = scmp.ne.s32.totalorder %s332, %s335
      %p341 = scmp.eq.s32.totalorder %s23, 0
      %p342 = por %p340, %p341
      %p343 = scmp.ne.s32.totalorder %s332, %s335
      %p344 = scmp.eq.s32.totalorder %s28, 1
      %p345 = por %p343, %p344
      %p346 = scmp.ne.s32.totalorder %s335, %s336
      %p347 = scmp.eq.s32.totalorder %s28, 0
      %p348 = por %p346, %p347
      %p349 = scmp.ne.s32.totalorder %s335, %s336
      %p350 = scmp.eq.s32.totalorder %s29, 1
      %p351 = por %p349, %p350
      %p353 = scmp.ne.s32.totalorder %s336, %s352
      %p354 = scmp.eq.s32.totalorder %s29, 0
      %p355 = por %p353, %p354
      %p356 = scmp.le.s32.totalorder 1, %s23
      %p357 = scmp.lt.s32.totalorder %s23, 3
      %p358 = pnand %p356, %p357
      %p359 = pneg %p358
      // Predicated region
      $region9: #{m_model_forward_fn.1} parent=5 // pred_check
        _
      $region10: #{m_model_forward_fn.1} parent=5 // pred_check_branch
        %361 = sbr.rel (%p358) target = $region12
      $region11: #{m_model_forward_fn.1} parent=5 // pred_region
        %s362 = ssub.s32 %s23, 1
        // Predicated region
        $region13: #{m_model_forward_fn.1} parent=11 // pred_check
          %p363 = pneg %p70
        $region14: #{m_model_forward_fn.1} parent=11 // pred_check_branch
          %365 = sbr.rel (%p363) target = $region16
        $region15: #{m_model_forward_fn.1} parent=11 // pred_region
          _
        $region16: #{m_model_forward_fn.1} parent=11 // pred_fallthru
          _
        // Predicated region
        $region17: #{m_model_forward_fn.1} parent=11 // pred_check
          %p366 = pneg %p91
        $region18: #{m_model_forward_fn.1} parent=11 // pred_check_branch
          %368 = sbr.rel (%p366) target = $region20
        $region19: #{m_model_forward_fn.1} parent=11 // pred_region
          _
        $region20: #{m_model_forward_fn.1} parent=11 // pred_fallthru
          _
        // Predicated region
        $region21: #{m_model_forward_fn.1} parent=11 // pred_check
          %p369 = pneg %p112
        $region22: #{m_model_forward_fn.1} parent=11 // pred_check_branch
          %371 = sbr.rel (%p369) target = $region24
        $region23: #{m_model_forward_fn.1} parent=11 // pred_region
          _
        $region24: #{m_model_forward_fn.1} parent=11 // pred_fallthru
          _
        // Predicated region
        $region25: #{m_model_forward_fn.1} parent=11 // pred_check
          %p372 = pneg %p133
        $region26: #{m_model_forward_fn.1} parent=11 // pred_check_branch
          %374 = sbr.rel (%p372) target = $region28
        $region27: #{m_model_forward_fn.1} parent=11 // pred_region
          _
        $region28: #{m_model_forward_fn.1} parent=11 // pred_fallthru
          _
        // Predicated region
        $region29: #{m_model_forward_fn.1} parent=11 // pred_check
          %p375 = pneg %p154
        $region30: #{m_model_forward_fn.1} parent=11 // pred_check_branch
          %377 = sbr.rel (%p375) target = $region32
        $region31: #{m_model_forward_fn.1} parent=11 // pred_region
          _
        $region32: #{m_model_forward_fn.1} parent=11 // pred_fallthru
          _
        // Predicated region
        $region33: #{m_model_forward_fn.1} parent=11 // pred_check
          %p378 = pneg %p175
        $region34: #{m_model_forward_fn.1} parent=11 // pred_check_branch
          %380 = sbr.rel (%p378) target = $region36
        $region35: #{m_model_forward_fn.1} parent=11 // pred_region
          _
        $region36: #{m_model_forward_fn.1} parent=11 // pred_fallthru
          _
        // Predicated region
        $region37: #{m_model_forward_fn.1} parent=11 // pred_check
          %p381 = pneg %p196
        $region38: #{m_model_forward_fn.1} parent=11 // pred_check_branch
          %383 = sbr.rel (%p381) target = $region40
        $region39: #{m_model_forward_fn.1} parent=11 // pred_region
          _
        $region40: #{m_model_forward_fn.1} parent=11 // pred_fallthru
          _
        // Predicated region
        $region41: #{m_model_forward_fn.1} parent=11 // pred_check
          %p384 = pneg %p217
        $region42: #{m_model_forward_fn.1} parent=11 // pred_check_branch
          %386 = sbr.rel (%p384) target = $region44
        $region43: #{m_model_forward_fn.1} parent=11 // pred_region
          _
        $region44: #{m_model_forward_fn.1} parent=11 // pred_fallthru
          _
        // Predicated region
        $region45: #{m_model_forward_fn.1} parent=11 // pred_check
          %p387 = pneg %p238
        $region46: #{m_model_forward_fn.1} parent=11 // pred_check_branch
          %389 = sbr.rel (%p387) target = $region48
        $region47: #{m_model_forward_fn.1} parent=11 // pred_region
          _
        $region48: #{m_model_forward_fn.1} parent=11 // pred_fallthru
          _
        // Predicated region
        $region49: #{m_model_forward_fn.1} parent=11 // pred_check
          %p390 = pneg %p259
        $region50: #{m_model_forward_fn.1} parent=11 // pred_check_branch
          %392 = sbr.rel (%p390) target = $region52
        $region51: #{m_model_forward_fn.1} parent=11 // pred_region
          _
        $region52: #{m_model_forward_fn.1} parent=11 // pred_fallthru
          _
        // Predicated region
        $region53: #{m_model_forward_fn.1} parent=11 // pred_check
          %p393 = pneg %p280
        $region54: #{m_model_forward_fn.1} parent=11 // pred_check_branch
          %395 = sbr.rel (%p393) target = $region56
        $region55: #{m_model_forward_fn.1} parent=11 // pred_region
          _
        $region56: #{m_model_forward_fn.1} parent=11 // pred_fallthru
          _
        // Predicated region
        $region57: #{m_model_forward_fn.1} parent=11 // pred_check
          %p396 = pneg %p301
        $region58: #{m_model_forward_fn.1} parent=11 // pred_check_branch
          %398 = sbr.rel (%p396) target = $region60
        $region59: #{m_model_forward_fn.1} parent=11 // pred_region
          _
        $region60: #{m_model_forward_fn.1} parent=11 // pred_fallthru
          _
        // Predicated region
        $region61: #{m_model_forward_fn.1} parent=11 // pred_check
          %p399 = pneg %p322
        $region62: #{m_model_forward_fn.1} parent=11 // pred_check_branch
          %401 = sbr.rel (%p399) target = $region64
        $region63: #{m_model_forward_fn.1} parent=11 // pred_region
          _
        $region64: #{m_model_forward_fn.1} parent=11 // pred_fallthru
          _
      $region12: #{m_model_forward_fn.1} parent=5 // pred_fallthru
        _
      %p402 = scmp.lt.s32.totalorder %s23, 2
      // Predicated region
      $region65: #{m_model_forward_fn.1} parent=5 // pred_check
        %p403 = pneg %p402
      $region66: #{m_model_forward_fn.1} parent=5 // pred_check_branch
        %405 = sbr.rel (%p403) target = $region68
      $region67: #{m_model_forward_fn.1} parent=5 // pred_region
        // Predicated region
        $region69: #{m_model_forward_fn.1} parent=67 // pred_check
          %p406 = pneg %p43
        $region70: #{m_model_forward_fn.1} parent=67 // pred_check_branch
          %408 = sbr.rel (%p406) target = $region72
        $region71: #{m_model_forward_fn.1} parent=67 // pred_region
          %p409 = scmp.lt.s32.totalorder %s23, 1
          %s410 = scalar_select %p409, %s23, 1
          %s411 = smul.addr %s410, 264
          %s412 = smul.addr %s411, 4
          %s413 = scalar_lea.vmem %s0, %s412
        $region72: #{m_model_forward_fn.1} parent=67 // pred_fallthru
          _
      $region68: #{m_model_forward_fn.1} parent=5 // pred_fallthru
        _
      %p414 = scmp.le.s32.totalorder 1, %s23
      %p415 = scmp.lt.s32.totalorder %s23, 3
      %p416 = pnand %p414, %p415
      %p417 = pneg %p416
      // Predicated region
      $region73: #{m_model_forward_fn.1} parent=5 // pred_check
        _
      $region74: #{m_model_forward_fn.1} parent=5 // pred_check_branch
        %419 = sbr.rel (%p416) target = $region76
      $region75: #{m_model_forward_fn.1} parent=5 // pred_region
        %s420 = ssub.s32 %s23, 1
        %p421 = scmp.lt.s32.totalorder %s28, 1
        %s422 = scalar_select %p421, %s28, 1
        %s423 = smul.addr %s422, 264
        %s424 = smul.addr %s423, 4
        %s425 = scalar_lea.vmem %s0, %s424
        %p426 = pneg %p49
        %p427 = pneg %p46
        %p428 = pneg %p70
        %p429 = pneg %p67
        %p430 = pneg %p91
        %p431 = pneg %p88
        %p432 = pneg %p112
        %p433 = pneg %p109
        %p434 = pneg %p133
        %p435 = pneg %p130
        %p436 = pneg %p154
        %p437 = pneg %p151
        %p438 = pneg %p175
        %p439 = pneg %p172
        %p440 = pneg %p196
        %p441 = pneg %p193
        %p442 = pneg %p217
        %p443 = pneg %p214
        %p444 = pneg %p238
        %p445 = pneg %p235
        %p446 = pneg %p259
        %p447 = pneg %p256
        %p448 = pneg %p280
        %p449 = pneg %p277
        %p450 = pneg %p301
        %p451 = pneg %p298
        %p452 = pneg %p322
        %p453 = pneg %p319
        %p454 = pneg %p348
        %p455 = pneg %p345
        %s456 = sand.u32 %s335, 1
        %s457 = scalar_lea.sflag [#allocation3], %s456
        %s458 = sand.u32 %s335, 1
        %s459 = scalar_lea.vmem [#allocation2], %s458
        %p460 = scmp.lt.s32.totalorder %s28, 1
        %s461 = scalar_select %p460, %s28, 1
        %s462 = smul.addr %s461, 264
        %s463 = smul.addr %s462, 4
        %s464 = scalar_lea.vmem %s0, %s463
        %v466 = vld [vmem:[%s464] sm:$0xff]
        %v467 = vld [vmem:[%s464 + $0x8] sm:$0xff]
        %v468 = vld [vmem:[%s464 + $0x10] sm:$0xff]
        %v469 = vld [vmem:[%s464 + $0x18] sm:$0xff]
        %v470 = vld [vmem:[%s464 + $0x20] sm:$0xff]
        %v471 = vld [vmem:[%s464 + $0x28] sm:$0xff]
        %v472 = vld [vmem:[%s464 + $0x30] sm:$0xff]
        %v473 = vld [vmem:[%s464 + $0x38] sm:$0xff]
        %v474 = vld [vmem:[%s464 + $0x40] sm:$0xff]
        %v475 = vld [vmem:[%s464 + $0x48] sm:$0xff]
        %v476 = vld [vmem:[%s464 + $0x50] sm:$0xff]
        %v477 = vld [vmem:[%s464 + $0x58] sm:$0xff]
        %v478 = vld [vmem:[%s464 + $0x60] sm:$0xff]
        %v479 = vld [vmem:[%s464 + $0x68] sm:$0xff]
        %v480 = vld [vmem:[%s464 + $0x70] sm:$0xff]
        %v481 = vld [vmem:[%s464 + $0x78] sm:$0xff]
        %v482 = vld [vmem:[%s1] sm:$0xff]
        %v483 = vld [vmem:[%s1 + $0x8] sm:$0xff]
        %v484 = vld [vmem:[%s1 + $0x10] sm:$0xff]
        %v485 = vld [vmem:[%s1 + $0x18] sm:$0xff]
        %v486 = vld [vmem:[%s1 + $0x20] sm:$0xff]
        %v487 = vld [vmem:[%s1 + $0x28] sm:$0xff]
        %v488 = vld [vmem:[%s1 + $0x30] sm:$0xff]
        %v489 = vld [vmem:[%s1 + $0x38] sm:$0xff]
        %v490 = vld [vmem:[%s1 + $0x40] sm:$0xff]
        %v491 = vld [vmem:[%s1 + $0x48] sm:$0xff]
        %v492 = vld [vmem:[%s1 + $0x50] sm:$0xff]
        %v493 = vld [vmem:[%s1 + $0x58] sm:$0xff]
        %v494 = vld [vmem:[%s1 + $0x60] sm:$0xff]
        %v495 = vld [vmem:[%s1 + $0x68] sm:$0xff]
        %v496 = vld [vmem:[%s1 + $0x70] sm:$0xff]
        %v497 = vld [vmem:[%s1 + $0x78] sm:$0xff]
        %v498 = vld [vmem:[%s1 + $0x80] sm:$0xff]
        %v499 = vld [vmem:[%s1 + $0x88] sm:$0xff]
        %v500 = vld [vmem:[%s1 + $0x90] sm:$0xff]
        %v501 = vld [vmem:[%s1 + $0x98] sm:$0xff]
        %v502 = vld [vmem:[%s1 + $0xa0] sm:$0xff]
        %v503 = vld [vmem:[%s1 + $0xa8] sm:$0xff]
        %v504 = vld [vmem:[%s1 + $0xb0] sm:$0xff]
        %v505 = vld [vmem:[%s1 + $0xb8] sm:$0xff]
        %v506 = vld [vmem:[%s1 + $0xc0] sm:$0xff]
        %v507 = vld [vmem:[%s1 + $0xc8] sm:$0x11]
        %v508 = vld [vmem:[%s464 + $0x80] sm:$0xee]
        %v509 = vld [vmem:[%s464 + $0x88] sm:$0xff]
        %v510 = vld [vmem:[%s464 + $0x90] sm:$0xff]
        %v511 = vld [vmem:[%s464 + $0x98] sm:$0xff]
        %v512 = vld [vmem:[%s464 + $0xa0] sm:$0xff]
        %v513 = vld [vmem:[%s464 + $0xa8] sm:$0xff]
        %v514 = vld [vmem:[%s464 + $0xb0] sm:$0xff]
        %v515 = vld [vmem:[%s464 + $0xb8] sm:$0xff]
        %v516 = vld [vmem:[%s464 + $0xc0] sm:$0xff]
        %v517 = vld [vmem:[%s464 + $0xc8] sm:$0xff]
        %v518 = vld [vmem:[%s464 + $0xd0] sm:$0xff]
        %v519 = vld [vmem:[%s464 + $0xd8] sm:$0xff]
        %v520 = vld [vmem:[%s464 + $0xe0] sm:$0xff]
        %v521 = vld [vmem:[%s464 + $0xe8] sm:$0xff]
        %v522 = vld [vmem:[%s464 + $0xf0] sm:$0xff]
        %v523 = vld [vmem:[%s464 + $0xf8] sm:$0xff]
        %v524 = vld [vmem:[%s464 + $0x100] sm:$0x11]
        %s525 = scalar_lea.vmem %s1, 208
        %v526 = vld [vmem:[%s525] sm:$0xff]
        %v527 = vld [vmem:[%s525 + $0x8] sm:$0xff]
        %v528 = vld [vmem:[%s525 + $0x10] sm:$0xff]
        %v529 = vld [vmem:[%s525 + $0x18] sm:$0xff]
        %v530 = vld [vmem:[%s525 + $0x20] sm:$0xff]
        %v531 = vld [vmem:[%s525 + $0x28] sm:$0xff]
        %v532 = vld [vmem:[%s525 + $0x30] sm:$0xff]
        %v533 = vld [vmem:[%s525 + $0x38] sm:$0xff]
        %v534 = vld [vmem:[%s525 + $0x40] sm:$0xff]
        %v535 = vld [vmem:[%s525 + $0x48] sm:$0xff]
        %v536 = vld [vmem:[%s525 + $0x50] sm:$0xff]
        %v537 = vld [vmem:[%s525 + $0x58] sm:$0xff]
        %v538 = vld [vmem:[%s525 + $0x60] sm:$0xff]
        %v539 = vld [vmem:[%s525 + $0x68] sm:$0xff]
        %v540 = vld [vmem:[%s525 + $0x70] sm:$0xff]
        %v541 = vld [vmem:[%s525 + $0x78] sm:$0xff]
        %v542 = vld [vmem:[%s525 + $0x80] sm:$0xff]
        %v543 = vld [vmem:[%s525 + $0x88] sm:$0xff]
        %v544 = vld [vmem:[%s525 + $0x90] sm:$0xff]
        %v545 = vld [vmem:[%s525 + $0x98] sm:$0xff]
        %v546 = vld [vmem:[%s525 + $0xa0] sm:$0xff]
        %v547 = vld [vmem:[%s525 + $0xa8] sm:$0xff]
        %v548 = vld [vmem:[%s525 + $0xb0] sm:$0xff]
        %v549 = vld [vmem:[%s525 + $0xb8] sm:$0xff]
        %v550 = vld [vmem:[%s525 + $0xc0] sm:$0xff]
        %v551 = vld [vmem:[%s525 + $0xc8] sm:$0x11]
        %v569 = vunpack.c.l.b16 %v508
        %v570 = vunpack.c.h.b16 %v508
        %v571 = vunpack.c.l.b16 %v509
        %v572 = vunpack.c.h.b16 %v509
        %v573 = vunpack.c.l.b16 %v510
        %v574 = vunpack.c.h.b16 %v510
        %v575 = vunpack.c.l.b16 %v511
        %v576 = vunpack.c.h.b16 %v511
        %v577 = vunpack.c.l.b16 %v512
        %v578 = vunpack.c.h.b16 %v512
        %v579 = vunpack.c.l.b16 %v513
        %v580 = vunpack.c.h.b16 %v513
        %v581 = vunpack.c.l.b16 %v514
        %v582 = vunpack.c.h.b16 %v514
        %v583 = vunpack.c.l.b16 %v515
        %v584 = vunpack.c.h.b16 %v515
        %v585 = vunpack.c.l.b16 %v516
        %v586 = vunpack.c.h.b16 %v516
        %v587 = vunpack.c.l.b16 %v517
        %v588 = vunpack.c.h.b16 %v517
        %v589 = vunpack.c.l.b16 %v518
        %v590 = vunpack.c.h.b16 %v518
        %v591 = vunpack.c.l.b16 %v519
        %v592 = vunpack.c.h.b16 %v519
        %v593 = vunpack.c.l.b16 %v520
        %v594 = vunpack.c.h.b16 %v520
        %v595 = vunpack.c.l.b16 %v521
        %v596 = vunpack.c.h.b16 %v521
        %v597 = vunpack.c.l.b16 %v522
        %v598 = vunpack.c.h.b16 %v522
        %v599 = vunpack.c.l.b16 %v523
        %v600 = vunpack.c.h.b16 %v523
        %v601 = vunpack.c.l.b16 %v524
        %v602 = vunpack.c.h.b16 %v524
        %v603 = vpack.c.b16 %v571, %v569
        %v604 = vpack.c.b16 %v572, %v570
        %v605 = vpack.c.b16 %v575, %v573
        %v606 = vpack.c.b16 %v576, %v574
        %v607 = vpack.c.b16 %v579, %v577
        %v608 = vpack.c.b16 %v580, %v578
        %v609 = vpack.c.b16 %v583, %v581
        %v610 = vpack.c.b16 %v584, %v582
        %v611 = vpack.c.b16 %v587, %v585
        %v612 = vpack.c.b16 %v588, %v586
        %v613 = vpack.c.b16 %v591, %v589
        %v614 = vpack.c.b16 %v592, %v590
        %v615 = vpack.c.b16 %v595, %v593
        %v616 = vpack.c.b16 %v596, %v594
        %v617 = vpack.c.b16 %v599, %v597
        %v618 = vpack.c.b16 %v600, %v598
        %v619 = vpack.c.b16 %v601, %v601
        %v620 = vpack.c.b16 %v602, %v602
        %vm621 = vcmask 1046528
        %v622 = vrot.slane %v603, 1
        %v623 = vrot.slane %v605, 1
        %v624 = vsel %vm621, %v622, %v623
        %v625 = vrot.slane %v604, 1
        %v626 = vrot.slane %v606, 1
        %v627 = vsel %vm621, %v625, %v626
        %v628 = vrot.slane %v607, 1
        %v629 = vsel %vm621, %v623, %v628
        %v630 = vrot.slane %v608, 1
        %v631 = vsel %vm621, %v626, %v630
        %v632 = vrot.slane %v609, 1
        %v633 = vsel %vm621, %v628, %v632
        %v634 = vrot.slane %v610, 1
        %v635 = vsel %vm621, %v630, %v634
        %v636 = vrot.slane %v611, 1
        %v637 = vsel %vm621, %v632, %v636
        %v638 = vrot.slane %v612, 1
        %v639 = vsel %vm621, %v634, %v638
        %v640 = vrot.slane %v613, 1
        %v641 = vsel %vm621, %v636, %v640
        %v642 = vrot.slane %v614, 1
        %v643 = vsel %vm621, %v638, %v642
        %v644 = vrot.slane %v615, 1
        %v645 = vsel %vm621, %v640, %v644
        %v646 = vrot.slane %v616, 1
        %v647 = vsel %vm621, %v642, %v646
        %v648 = vrot.slane %v617, 1
        %v649 = vsel %vm621, %v644, %v648
        %v650 = vrot.slane %v618, 1
        %v651 = vsel %vm621, %v646, %v650
        %v652 = vrot.slane %v619, 1
        %v653 = vsel %vm621, %v648, %v652
        %v654 = vrot.slane %v620, 1
        %v655 = vsel %vm621, %v650, %v654
        %v690 = vunpack.c.l.b16 %v526
        %v691 = vunpack.c.h.b16 %v526
        %v692 = vunpack.c.l.b16 %v527
        %v693 = vunpack.c.h.b16 %v527
        %v694 = vunpack.c.l.b16 %v528
        %v695 = vunpack.c.h.b16 %v528
        %v696 = vunpack.c.l.b16 %v529
        %v697 = vunpack.c.h.b16 %v529
        %v698 = vunpack.c.l.b16 %v530
        %v699 = vunpack.c.h.b16 %v530
        %v700 = vunpack.c.l.b16 %v531
        %v701 = vunpack.c.h.b16 %v531
        %v702 = vunpack.c.l.b16 %v532
        %v703 = vunpack.c.h.b16 %v532
        %v704 = vunpack.c.l.b16 %v533
        %v705 = vunpack.c.h.b16 %v533
        %v706 = vunpack.c.l.b16 %v534
        %v707 = vunpack.c.h.b16 %v534
        %v708 = vunpack.c.l.b16 %v535
        %v709 = vunpack.c.h.b16 %v535
        %v710 = vunpack.c.l.b16 %v536
        %v711 = vunpack.c.h.b16 %v536
        %v712 = vunpack.c.l.b16 %v537
        %v713 = vunpack.c.h.b16 %v537
        %v714 = vunpack.c.l.b16 %v538
        %v715 = vunpack.c.h.b16 %v538
        %v716 = vunpack.c.l.b16 %v539
        %v717 = vunpack.c.h.b16 %v539
        %v718 = vunpack.c.l.b16 %v540
        %v719 = vunpack.c.h.b16 %v540
        %v720 = vunpack.c.l.b16 %v541
        %v721 = vunpack.c.h.b16 %v541
        %v722 = vunpack.c.l.b16 %v542
        %v723 = vunpack.c.h.b16 %v542
        %v724 = vunpack.c.l.b16 %v543
        %v725 = vunpack.c.h.b16 %v543
        %v726 = vunpack.c.l.b16 %v544
        %v727 = vunpack.c.h.b16 %v544
        %v728 = vunpack.c.l.b16 %v545
        %v729 = vunpack.c.h.b16 %v545
        %v730 = vunpack.c.l.b16 %v546
        %v731 = vunpack.c.h.b16 %v546
        %v732 = vunpack.c.l.b16 %v547
        %v733 = vunpack.c.h.b16 %v547
        %v734 = vunpack.c.l.b16 %v548
        %v735 = vunpack.c.h.b16 %v548
        %v736 = vunpack.c.l.b16 %v549
        %v737 = vunpack.c.h.b16 %v549
        %v738 = vunpack.c.l.b16 %v550
        %v739 = vunpack.c.h.b16 %v550
        %v740 = vunpack.c.l.b16 %v551
        %v741 = vunpack.c.h.b16 %v551
        %v742 = vpack.c.b16 %v692, %v690
        %v743 = vpack.c.b16 %v693, %v691
        %v744 = vpack.c.b16 %v696, %v694
        %v745 = vpack.c.b16 %v697, %v695
        %v746 = vpack.c.b16 %v700, %v698
        %v747 = vpack.c.b16 %v701, %v699
        %v748 = vpack.c.b16 %v704, %v702
        %v749 = vpack.c.b16 %v705, %v703
        %v750 = vpack.c.b16 %v708, %v706
        %v751 = vpack.c.b16 %v709, %v707
        %v752 = vpack.c.b16 %v712, %v710
        %v753 = vpack.c.b16 %v713, %v711
        %v754 = vpack.c.b16 %v716, %v714
        %v755 = vpack.c.b16 %v717, %v715
        %v756 = vpack.c.b16 %v720, %v718
        %v757 = vpack.c.b16 %v721, %v719
        %v758 = vpack.c.b16 %v724, %v722
        %v759 = vpack.c.b16 %v725, %v723
        %v760 = vpack.c.b16 %v728, %v726
        %v761 = vpack.c.b16 %v729, %v727
        %v762 = vpack.c.b16 %v732, %v730
        %v763 = vpack.c.b16 %v733, %v731
        %v764 = vpack.c.b16 %v736, %v734
        %v765 = vpack.c.b16 %v737, %v735
        %v766 = vpack.c.b16 %v740, %v738
        %v767 = vpack.c.b16 %v741, %v739
        %vm792 = vcmask 596992
        %v794 = vsel %vm792, %v627, 0
        %v797 = vsel %vm792, %v631, 0
        %v800 = vsel %vm792, %v635, 0
        %v803 = vsel %vm792, %v639, 0
        %v806 = vsel %vm792, %v643, 0
        %v809 = vsel %vm792, %v647, 0
        %v812 = vsel %vm792, %v651, 0
        %v815 = vsel %vm792, %v655, 0
        %vm817 = vcmask 1043456
        %vm818 = vcmask 1044480
        %v819 = vsel %vm817, 4294967295, 65535
        %v820 = vsel %vm818, %v819, 0
        %v822 = vand.u32 %v766, %v820
        %v825 = vand.u32 %v767, %v820
        %827 = vmatprep.subr.bf16.mxu0 %v743
        %828 = vmatpush1.bf16.msra.mxu0 %v742
        %829 = vmatprep.subr.bf16.mxu0 %v745
        %830 = vmatpush1.bf16.msra.mxu0 %v744
        %831 = vmatprep.subr.bf16.mxu0 %v747
        %832 = vmatpush1.bf16.msra.mxu0 %v746
        %833 = vmatprep.subr.bf16.mxu0 %v749
        %834 = vmatpush1.bf16.msra.mxu0 %v748
        %835 = vmatprep.subr.bf16.mxu0 %v751
        %836 = vmatpush1.bf16.msra.mxu0 %v750
        %837 = vmatprep.subr.bf16.mxu0 %v753
        %838 = vmatpush1.bf16.msra.mxu0 %v752
        %839 = vmatprep.subr.bf16.mxu0 %v755
        %840 = vmatpush1.bf16.msra.mxu0 %v754
        %841 = vmatprep.subr.bf16.mxu0 %v757
        %842 = vmatpush1.bf16.msra.mxu0 %v756
        %843 = vmatprep.subr.bf16.mxu0 %v759
        %844 = vmatpush1.bf16.msra.mxu0 %v758
        %845 = vmatprep.subr.bf16.mxu0 %v761
        %846 = vmatpush1.bf16.msra.mxu0 %v760
        %847 = vmatprep.subr.bf16.mxu0 %v763
        %848 = vmatpush1.bf16.msra.mxu0 %v762
        %849 = vmatprep.subr.bf16.mxu0 %v765
        %850 = vmatpush1.bf16.msra.mxu0 %v764
        %851 = vmatprep.subr.bf16.mxu0 %v825
        %852 = vmatpush1.bf16.msra.mxu0 %v822
        %853 = vmatprep.subr.bf16.mxu0 0
        %854 = vmatpush1.bf16.msra.mxu0 0
        %855 = vmatprep.subr.bf16.mxu0 0
        %856 = vmatpush1.bf16.msra.mxu0 0
        %857 = vmatprep.subr.bf16.mxu0 0
        %858 = vmatpush1.bf16.msra.mxu0 0
        %859 = vmatprep.mubr.bf16.mxu0 %v794
        %860 = vmatmul.mubr.bf16.gmra.mrb[0].mxu0 %v624
        %v861 = vpop.f32.mrb[0].mxu0
        %v862 = vadd.f32 0.0, %v861
        %v863 = vpop.f32.mrb[0].mxu0
        %v864 = vadd.f32 0.0, %v863
        %v865 = vpop.f32.mrb[0].mxu0
        %v866 = vadd.f32 0.0, %v865
        %v867 = vpop.f32.mrb[0].mxu0
        %v868 = vadd.f32 0.0, %v867
        %869 = vmatprep.mubr.bf16.mxu0 %v797
        %870 = vmatmul.mubr.bf16.gmra.mrb[0].mxu0 %v629
        %v871 = vpop.f32.mrb[0].mxu0
        %v872 = vadd.f32 0.0, %v871
        %v873 = vpop.f32.mrb[0].mxu0
        %v874 = vadd.f32 0.0, %v873
        %v875 = vpop.f32.mrb[0].mxu0
        %v876 = vadd.f32 0.0, %v875
        %v877 = vpop.f32.mrb[0].mxu0
        %v878 = vadd.f32 0.0, %v877
        %879 = vmatprep.mubr.bf16.mxu0 %v800
        %880 = vmatmul.mubr.bf16.gmra.mrb[0].mxu0 %v633
        %v881 = vpop.f32.mrb[0].mxu0
        %v882 = vadd.f32 0.0, %v881
        %v883 = vpop.f32.mrb[0].mxu0
        %v884 = vadd.f32 0.0, %v883
        %v885 = vpop.f32.mrb[0].mxu0
        %v886 = vadd.f32 0.0, %v885
        %v887 = vpop.f32.mrb[0].mxu0
        %v888 = vadd.f32 0.0, %v887
        %889 = vmatprep.mubr.bf16.mxu0 %v803
        %890 = vmatmul.mubr.bf16.gmra.mrb[0].mxu0 %v637
        %v891 = vpop.f32.mrb[0].mxu0
        %v892 = vadd.f32 0.0, %v891
        %v893 = vpop.f32.mrb[0].mxu0
        %v894 = vadd.f32 0.0, %v893
        %v895 = vpop.f32.mrb[0].mxu0
        %v896 = vadd.f32 0.0, %v895
        %v897 = vpop.f32.mrb[0].mxu0
        %v898 = vadd.f32 0.0, %v897
        %899 = vmatprep.mubr.bf16.mxu0 %v806
        %900 = vmatmul.mubr.bf16.gmra.mrb[0].mxu0 %v641
        %v901 = vpop.f32.mrb[0].mxu0
        %v902 = vadd.f32 0.0, %v901
        %v903 = vpop.f32.mrb[0].mxu0
        %v904 = vadd.f32 0.0, %v903
        %v905 = vpop.f32.mrb[0].mxu0
        %v906 = vadd.f32 0.0, %v905
        %v907 = vpop.f32.mrb[0].mxu0
        %v908 = vadd.f32 0.0, %v907
        %909 = vmatprep.mubr.bf16.mxu0 %v809
        %910 = vmatmul.mubr.bf16.gmra.mrb[0].mxu0 %v645
        %v911 = vpop.f32.mrb[0].mxu0
        %v912 = vadd.f32 0.0, %v911
        %v913 = vpop.f32.mrb[0].mxu0
        %v914 = vadd.f32 0.0, %v913
        %v915 = vpop.f32.mrb[0].mxu0
        %v916 = vadd.f32 0.0, %v915
        %v917 = vpop.f32.mrb[0].mxu0
        %v918 = vadd.f32 0.0, %v917
        %919 = vmatprep.mubr.bf16.mxu0 %v812
        %920 = vmatmul.mubr.bf16.gmra.mrb[0].mxu0 %v649
        %v921 = vpop.f32.mrb[0].mxu0
        %v922 = vadd.f32 0.0, %v921
        %v923 = vpop.f32.mrb[0].mxu0
        %v924 = vadd.f32 0.0, %v923
        %v925 = vpop.f32.mrb[0].mxu0
        %v926 = vadd.f32 0.0, %v925
        %v927 = vpop.f32.mrb[0].mxu0
        %v928 = vadd.f32 0.0, %v927
        %929 = vmatprep.mubr.bf16.mxu0 %v815
        %930 = vmatmul.mubr.bf16.gmra.mrb[0].mxu0 %v653
        %v931 = vpop.f32.mrb[0].mxu0
        %v932 = vadd.f32 0.0, %v931
        %v933 = vpop.f32.mrb[0].mxu0
        %v934 = vadd.f32 0.0, %v933
        %v935 = vpop.f32.mrb[0].mxu0
        %v936 = vadd.f32 0.0, %v935
        %v937 = vpop.f32.mrb[0].mxu0
        %v938 = vadd.f32 0.0, %v937
        %939 = vdwg.mxu0
        %v956 = vunpack.c.l.b16 %v466
        %v957 = vunpack.c.h.b16 %v466
        %v958 = vunpack.c.l.b16 %v467
        %v959 = vunpack.c.h.b16 %v467
        %v960 = vunpack.c.l.b16 %v468
        %v961 = vunpack.c.h.b16 %v468
        %v962 = vunpack.c.l.b16 %v469
        %v963 = vunpack.c.h.b16 %v469
        %v964 = vunpack.c.l.b16 %v470
        %v965 = vunpack.c.h.b16 %v470
        %v966 = vunpack.c.l.b16 %v471
        %v967 = vunpack.c.h.b16 %v471
        %v968 = vunpack.c.l.b16 %v472
        %v969 = vunpack.c.h.b16 %v472
        %v970 = vunpack.c.l.b16 %v473
        %v971 = vunpack.c.h.b16 %v473
        %v972 = vunpack.c.l.b16 %v474
        %v973 = vunpack.c.h.b16 %v474
        %v974 = vunpack.c.l.b16 %v475
        %v975 = vunpack.c.h.b16 %v475
        %v976 = vunpack.c.l.b16 %v476
        %v977 = vunpack.c.h.b16 %v476
        %v978 = vunpack.c.l.b16 %v477
        %v979 = vunpack.c.h.b16 %v477
        %v980 = vunpack.c.l.b16 %v478
        %v981 = vunpack.c.h.b16 %v478
        %v982 = vunpack.c.l.b16 %v479
        %v983 = vunpack.c.h.b16 %v479
        %v984 = vunpack.c.l.b16 %v480
        %v985 = vunpack.c.h.b16 %v480
        %v986 = vunpack.c.l.b16 %v481
        %v987 = vunpack.c.h.b16 %v481
        %v988 = vpack.c.b16 %v958, %v956
        %v989 = vpack.c.b16 %v959, %v957
        %v990 = vpack.c.b16 %v962, %v960
        %v991 = vpack.c.b16 %v963, %v961
        %v992 = vpack.c.b16 %v966, %v964
        %v993 = vpack.c.b16 %v967, %v965
        %v994 = vpack.c.b16 %v970, %v968
        %v995 = vpack.c.b16 %v971, %v969
        %v996 = vpack.c.b16 %v974, %v972
        %v997 = vpack.c.b16 %v975, %v973
        %v998 = vpack.c.b16 %v978, %v976
        %v999 = vpack.c.b16 %v979, %v977
        %v1000 = vpack.c.b16 %v982, %v980
        %v1001 = vpack.c.b16 %v983, %v981
        %v1002 = vpack.c.b16 %v986, %v984
        %v1003 = vpack.c.b16 %v987, %v985
        %v1038 = vunpack.c.l.b16 %v482
        %v1039 = vunpack.c.h.b16 %v482
        %v1040 = vunpack.c.l.b16 %v483
        %v1041 = vunpack.c.h.b16 %v483
        %v1042 = vunpack.c.l.b16 %v484
        %v1043 = vunpack.c.h.b16 %v484
        %v1044 = vunpack.c.l.b16 %v485
        %v1045 = vunpack.c.h.b16 %v485
        %v1046 = vunpack.c.l.b16 %v486
        %v1047 = vunpack.c.h.b16 %v486
        %v1048 = vunpack.c.l.b16 %v487
        %v1049 = vunpack.c.h.b16 %v487
        %v1050 = vunpack.c.l.b16 %v488
        %v1051 = vunpack.c.h.b16 %v488
        %v1052 = vunpack.c.l.b16 %v489
        %v1053 = vunpack.c.h.b16 %v489
        %v1054 = vunpack.c.l.b16 %v490
        %v1055 = vunpack.c.h.b16 %v490
        %v1056 = vunpack.c.l.b16 %v491
        %v1057 = vunpack.c.h.b16 %v491
        %v1058 = vunpack.c.l.b16 %v492
        %v1059 = vunpack.c.h.b16 %v492
        %v1060 = vunpack.c.l.b16 %v493
        %v1061 = vunpack.c.h.b16 %v493
        %v1062 = vunpack.c.l.b16 %v494
        %v1063 = vunpack.c.h.b16 %v494
        %v1064 = vunpack.c.l.b16 %v495
        %v1065 = vunpack.c.h.b16 %v495
        %v1066 = vunpack.c.l.b16 %v496
        %v1067 = vunpack.c.h.b16 %v496
        %v1068 = vunpack.c.l.b16 %v497
        %v1069 = vunpack.c.h.b16 %v497
        %v1070 = vunpack.c.l.b16 %v498
        %v1071 = vunpack.c.h.b16 %v498
        %v1072 = vunpack.c.l.b16 %v499
        %v1073 = vunpack.c.h.b16 %v499
        %v1074 = vunpack.c.l.b16 %v500
        %v1075 = vunpack.c.h.b16 %v500
        %v1076 = vunpack.c.l.b16 %v501
        %v1077 = vunpack.c.h.b16 %v501
        %v1078 = vunpack.c.l.b16 %v502
        %v1079 = vunpack.c.h.b16 %v502
        %v1080 = vunpack.c.l.b16 %v503
        %v1081 = vunpack.c.h.b16 %v503
        %v1082 = vunpack.c.l.b16 %v504
        %v1083 = vunpack.c.h.b16 %v504
        %v1084 = vunpack.c.l.b16 %v505
        %v1085 = vunpack.c.h.b16 %v505
        %v1086 = vunpack.c.l.b16 %v506
        %v1087 = vunpack.c.h.b16 %v506
        %v1088 = vunpack.c.l.b16 %v507
        %v1089 = vunpack.c.h.b16 %v507
        %v1090 = vpack.c.b16 %v1040, %v1038
        %v1091 = vpack.c.b16 %v1041, %v1039
        %v1092 = vpack.c.b16 %v1044, %v1042
        %v1093 = vpack.c.b16 %v1045, %v1043
        %v1094 = vpack.c.b16 %v1048, %v1046
        %v1095 = vpack.c.b16 %v1049, %v1047
        %v1096 = vpack.c.b16 %v1052, %v1050
        %v1097 = vpack.c.b16 %v1053, %v1051
        %v1098 = vpack.c.b16 %v1056, %v1054
        %v1099 = vpack.c.b16 %v1057, %v1055
        %v1100 = vpack.c.b16 %v1060, %v1058
        %v1101 = vpack.c.b16 %v1061, %v1059
        %v1102 = vpack.c.b16 %v1064, %v1062
        %v1103 = vpack.c.b16 %v1065, %v1063
        %v1104 = vpack.c.b16 %v1068, %v1066
        %v1105 = vpack.c.b16 %v1069, %v1067
        %v1106 = vpack.c.b16 %v1072, %v1070
        %v1107 = vpack.c.b16 %v1073, %v1071
        %v1108 = vpack.c.b16 %v1076, %v1074
        %v1109 = vpack.c.b16 %v1077, %v1075
        %v1110 = vpack.c.b16 %v1080, %v1078
        %v1111 = vpack.c.b16 %v1081, %v1079
        %v1112 = vpack.c.b16 %v1084, %v1082
        %v1113 = vpack.c.b16 %v1085, %v1083
        %v1114 = vpack.c.b16 %v1088, %v1086
        %v1115 = vpack.c.b16 %v1089, %v1087
        %v1141 = vsel %vm792, %v989, 0
        %v1144 = vsel %vm792, %v991, 0
        %v1147 = vsel %vm792, %v993, 0
        %v1150 = vsel %vm792, %v995, 0
        %v1153 = vsel %vm792, %v997, 0
        %v1156 = vsel %vm792, %v999, 0
        %v1159 = vsel %vm792, %v1001, 0
        %v1162 = vsel %vm792, %v1003, 0
        %v1165 = vand.u32 %v1114, %v820
        %v1168 = vand.u32 %v1115, %v820
        %1170 = vmatprep.subr.bf16.mxu0 %v1091
        %1171 = vmatpush1.bf16.msra.mxu0 %v1090
        %1172 = vmatprep.subr.bf16.mxu0 %v1093
        %1173 = vmatpush1.bf16.msra.mxu0 %v1092
        %1174 = vmatprep.subr.bf16.mxu0 %v1095
        %1175 = vmatpush1.bf16.msra.mxu0 %v1094
        %1176 = vmatprep.subr.bf16.mxu0 %v1097
        %1177 = vmatpush1.bf16.msra.mxu0 %v1096
        %1178 = vmatprep.subr.bf16.mxu0 %v1099
        %1179 = vmatpush1.bf16.msra.mxu0 %v1098
        %1180 = vmatprep.subr.bf16.mxu0 %v1101
        %1181 = vmatpush1.bf16.msra.mxu0 %v1100
        %1182 = vmatprep.subr.bf16.mxu0 %v1103
        %1183 = vmatpush1.bf16.msra.mxu0 %v1102
        %1184 = vmatprep.subr.bf16.mxu0 %v1105
        %1185 = vmatpush1.bf16.msra.mxu0 %v1104
        %1186 = vmatprep.subr.bf16.mxu0 %v1107
        %1187 = vmatpush1.bf16.msra.mxu0 %v1106
        %1188 = vmatprep.subr.bf16.mxu0 %v1109
        %1189 = vmatpush1.bf16.msra.mxu0 %v1108
        %1190 = vmatprep.subr.bf16.mxu0 %v1111
        %1191 = vmatpush1.bf16.msra.mxu0 %v1110
        %1192 = vmatprep.subr.bf16.mxu0 %v1113
        %1193 = vmatpush1.bf16.msra.mxu0 %v1112
        %1194 = vmatprep.subr.bf16.mxu0 %v1168
        %1195 = vmatpush1.bf16.msra.mxu0 %v1165
        %1196 = vmatprep.subr.bf16.mxu0 0
        %1197 = vmatpush1.bf16.msra.mxu0 0
        %1198 = vmatprep.subr.bf16.mxu0 0
        %1199 = vmatpush1.bf16.msra.mxu0 0
        %1200 = vmatprep.subr.bf16.mxu0 0
        %1201 = vmatpush1.bf16.msra.mxu0 0
        %1202 = vmatprep.mubr.bf16.mxu0 %v1141
        %1203 = vmatmul.mubr.bf16.gmra.mrb[0].mxu0 %v988
        %v1204 = vpop.f32.mrb[0].mxu0
        %v1205 = vadd.f32 %v862, %v1204
        %v1206 = vpop.f32.mrb[0].mxu0
        %v1207 = vadd.f32 %v864, %v1206
        %v1208 = vpop.f32.mrb[0].mxu0
        %v1209 = vadd.f32 %v866, %v1208
        %v1210 = vpop.f32.mrb[0].mxu0
        %v1211 = vadd.f32 %v868, %v1210
        %1212 = vmatprep.mubr.bf16.mxu0 %v1144
        %1213 = vmatmul.mubr.bf16.gmra.mrb[0].mxu0 %v990
        %v1214 = vpop.f32.mrb[0].mxu0
        %v1215 = vadd.f32 %v872, %v1214
        %v1216 = vpop.f32.mrb[0].mxu0
        %v1217 = vadd.f32 %v874, %v1216
        %v1218 = vpop.f32.mrb[0].mxu0
        %v1219 = vadd.f32 %v876, %v1218
        %v1220 = vpop.f32.mrb[0].mxu0
        %v1221 = vadd.f32 %v878, %v1220
        %1222 = vmatprep.mubr.bf16.mxu0 %v1147
        %1223 = vmatmul.mubr.bf16.gmra.mrb[0].mxu0 %v992
        %v1224 = vpop.f32.mrb[0].mxu0
        %v1225 = vadd.f32 %v882, %v1224
        %v1226 = vpop.f32.mrb[0].mxu0
        %v1227 = vadd.f32 %v884, %v1226
        %v1228 = vpop.f32.mrb[0].mxu0
        %v1229 = vadd.f32 %v886, %v1228
        %v1230 = vpop.f32.mrb[0].mxu0
        %v1231 = vadd.f32 %v888, %v1230
        %1232 = vmatprep.mubr.bf16.mxu0 %v1150
        %1233 = vmatmul.mubr.bf16.gmra.mrb[0].mxu0 %v994
        %v1234 = vpop.f32.mrb[0].mxu0
        %v1235 = vadd.f32 %v892, %v1234
        %v1236 = vpop.f32.mrb[0].mxu0
        %v1237 = vadd.f32 %v894, %v1236
        %v1238 = vpop.f32.mrb[0].mxu0
        %v1239 = vadd.f32 %v896, %v1238
        %v1240 = vpop.f32.mrb[0].mxu0
        %v1241 = vadd.f32 %v898, %v1240
        %1242 = vmatprep.mubr.bf16.mxu0 %v1153
        %1243 = vmatmul.mubr.bf16.gmra.mrb[0].mxu0 %v996
        %v1244 = vpop.f32.mrb[0].mxu0
        %v1245 = vadd.f32 %v902, %v1244
        %v1246 = vpop.f32.mrb[0].mxu0
        %v1247 = vadd.f32 %v904, %v1246
        %v1248 = vpop.f32.mrb[0].mxu0
        %v1249 = vadd.f32 %v906, %v1248
        %v1250 = vpop.f32.mrb[0].mxu0
        %v1251 = vadd.f32 %v908, %v1250
        %1252 = vmatprep.mubr.bf16.mxu0 %v1156
        %1253 = vmatmul.mubr.bf16.gmra.mrb[0].mxu0 %v998
        %v1254 = vpop.f32.mrb[0].mxu0
        %v1255 = vadd.f32 %v912, %v1254
        %v1256 = vpop.f32.mrb[0].mxu0
        %v1257 = vadd.f32 %v914, %v1256
        %v1258 = vpop.f32.mrb[0].mxu0
        %v1259 = vadd.f32 %v916, %v1258
        %v1260 = vpop.f32.mrb[0].mxu0
        %v1261 = vadd.f32 %v918, %v1260
        %1262 = vmatprep.mubr.bf16.mxu0 %v1159
        %1263 = vmatmul.mubr.bf16.gmra.mrb[0].mxu0 %v1000
        %v1264 = vpop.f32.mrb[0].mxu0
        %v1265 = vadd.f32 %v922, %v1264
        %v1266 = vpop.f32.mrb[0].mxu0
        %v1267 = vadd.f32 %v924, %v1266
        %v1268 = vpop.f32.mrb[0].mxu0
        %v1269 = vadd.f32 %v926, %v1268
        %v1270 = vpop.f32.mrb[0].mxu0
        %v1271 = vadd.f32 %v928, %v1270
        %1272 = vmatprep.mubr.bf16.mxu0 %v1162
        %1273 = vmatmul.mubr.bf16.gmra.mrb[0].mxu0 %v1002
        %v1274 = vpop.f32.mrb[0].mxu0
        %v1275 = vadd.f32 %v932, %v1274
        %v1276 = vpop.f32.mrb[0].mxu0
        %v1277 = vadd.f32 %v934, %v1276
        %v1278 = vpop.f32.mrb[0].mxu0
        %v1279 = vadd.f32 %v936, %v1278
        %v1280 = vpop.f32.mrb[0].mxu0
        %v1281 = vadd.f32 %v938, %v1280
        %1282 = vdwg.mxu0
        %v1283 = vld [vmem:[%s464] sm:$0xff]
        %v1284 = vld [vmem:[%s464 + $0x8] sm:$0xff]
        %v1285 = vld [vmem:[%s464 + $0x10] sm:$0xff]
        %v1286 = vld [vmem:[%s464 + $0x18] sm:$0xff]
        %v1287 = vld [vmem:[%s464 + $0x20] sm:$0xff]
        %v1288 = vld [vmem:[%s464 + $0x28] sm:$0xff]
        %v1289 = vld [vmem:[%s464 + $0x30] sm:$0xff]
        %v1290 = vld [vmem:[%s464 + $0x38] sm:$0xff]
        %v1291 = vld [vmem:[%s464 + $0x40] sm:$0xff]
        %v1292 = vld [vmem:[%s464 + $0x48] sm:$0xff]
        %v1293 = vld [vmem:[%s464 + $0x50] sm:$0xff]
        %v1294 = vld [vmem:[%s464 + $0x58] sm:$0xff]
        %v1295 = vld [vmem:[%s464 + $0x60] sm:$0xff]
        %v1296 = vld [vmem:[%s464 + $0x68] sm:$0xff]
        %v1297 = vld [vmem:[%s464 + $0x70] sm:$0xff]
        %v1298 = vld [vmem:[%s464 + $0x78] sm:$0xff]
        %v1299 = vld [vmem:[%s464 + $0x80] sm:$0x11]
        %s1300 = scalar_lea.vmem %s1, 416
        %v1301 = vld [vmem:[%s1300] sm:$0xff]
        %v1302 = vld [vmem:[%s1300 + $0x8] sm:$0xff]
        %v1303 = vld [vmem:[%s1300 + $0x10] sm:$0xff]
        %v1304 = vld [vmem:[%s1300 + $0x18] sm:$0xff]
        %v1305 = vld [vmem:[%s1300 + $0x20] sm:$0xff]
        %v1306 = vld [vmem:[%s1300 + $0x28] sm:$0xff]
        %v1307 = vld [vmem:[%s1300 + $0x30] sm:$0xff]
        %v1308 = vld [vmem:[%s1300 + $0x38] sm:$0xff]
        %v1309 = vld [vmem:[%s1300 + $0x40] sm:$0xff]
        %v1310 = vld [vmem:[%s1300 + $0x48] sm:$0xff]
        %v1311 = vld [vmem:[%s1300 + $0x50] sm:$0xff]
        %v1312 = vld [vmem:[%s1300 + $0x58] sm:$0xff]
        %v1313 = vld [vmem:[%s1300 + $0x60] sm:$0xff]
        %v1314 = vld [vmem:[%s1300 + $0x68] sm:$0xff]
        %v1315 = vld [vmem:[%s1300 + $0x70] sm:$0xff]
        %v1316 = vld [vmem:[%s1300 + $0x78] sm:$0xff]
        %v1317 = vld [vmem:[%s1300 + $0x80] sm:$0xff]
        %v1318 = vld [vmem:[%s1300 + $0x88] sm:$0xff]
        %v1319 = vld [vmem:[%s1300 + $0x90] sm:$0xff]
        %v1320 = vld [vmem:[%s1300 + $0x98] sm:$0xff]
        %v1321 = vld [vmem:[%s1300 + $0xa0] sm:$0xff]
        %v1322 = vld [vmem:[%s1300 + $0xa8] sm:$0xff]
        %v1323 = vld [vmem:[%s1300 + $0xb0] sm:$0xff]
        %v1324 = vld [vmem:[%s1300 + $0xb8] sm:$0xff]
        %v1325 = vld [vmem:[%s1300 + $0xc0] sm:$0xff]
        %v1326 = vld [vmem:[%s1300 + $0xc8] sm:$0x11]
        %v1344 = vunpack.c.l.b16 %v1283
        %v1345 = vunpack.c.h.b16 %v1283
        %v1346 = vunpack.c.l.b16 %v1284
        %v1347 = vunpack.c.h.b16 %v1284
        %v1348 = vunpack.c.l.b16 %v1285
        %v1349 = vunpack.c.h.b16 %v1285
        %v1350 = vunpack.c.l.b16 %v1286
        %v1351 = vunpack.c.h.b16 %v1286
        %v1352 = vunpack.c.l.b16 %v1287
        %v1353 = vunpack.c.h.b16 %v1287
        %v1354 = vunpack.c.l.b16 %v1288
        %v1355 = vunpack.c.h.b16 %v1288
        %v1356 = vunpack.c.l.b16 %v1289
        %v1357 = vunpack.c.h.b16 %v1289
        %v1358 = vunpack.c.l.b16 %v1290
        %v1359 = vunpack.c.h.b16 %v1290
        %v1360 = vunpack.c.l.b16 %v1291
        %v1361 = vunpack.c.h.b16 %v1291
        %v1362 = vunpack.c.l.b16 %v1292
        %v1363 = vunpack.c.h.b16 %v1292
        %v1364 = vunpack.c.l.b16 %v1293
        %v1365 = vunpack.c.h.b16 %v1293
        %v1366 = vunpack.c.l.b16 %v1294
        %v1367 = vunpack.c.h.b16 %v1294
        %v1368 = vunpack.c.l.b16 %v1295
        %v1369 = vunpack.c.h.b16 %v1295
        %v1370 = vunpack.c.l.b16 %v1296
        %v1371 = vunpack.c.h.b16 %v1296
        %v1372 = vunpack.c.l.b16 %v1297
        %v1373 = vunpack.c.h.b16 %v1297
        %v1374 = vunpack.c.l.b16 %v1298
        %v1375 = vunpack.c.h.b16 %v1298
        %v1376 = vunpack.c.l.b16 %v1299
        %v1377 = vunpack.c.h.b16 %v1299
        %v1378 = vpack.c.b16 %v1346, %v1344
        %v1379 = vpack.c.b16 %v1347, %v1345
        %v1380 = vpack.c.b16 %v1350, %v1348
        %v1381 = vpack.c.b16 %v1351, %v1349
        %v1382 = vpack.c.b16 %v1354, %v1352
        %v1383 = vpack.c.b16 %v1355, %v1353
        %v1384 = vpack.c.b16 %v1358, %v1356
        %v1385 = vpack.c.b16 %v1359, %v1357
        %v1386 = vpack.c.b16 %v1362, %v1360
        %v1387 = vpack.c.b16 %v1363, %v1361
        %v1388 = vpack.c.b16 %v1366, %v1364
        %v1389 = vpack.c.b16 %v1367, %v1365
        %v1390 = vpack.c.b16 %v1370, %v1368
        %v1391 = vpack.c.b16 %v1371, %v1369
        %v1392 = vpack.c.b16 %v1374, %v1372
        %v1393 = vpack.c.b16 %v1375, %v1373
        %v1394 = vpack.c.b16 %v1376, %v1376
        %v1395 = vpack.c.b16 %v1377, %v1377
        %vm1396 = vsmask.f32 7424
        %v1398 = vshrl.u32 %v1378, 16
        %v1400 = vshll.u32 %v1378, 16
        %v1402 = vrot.slane %v1400, 1
        %v1403 = vor.u32 %v1398, %v1402
        %v1405 = vshll.u32 %v1380, 16
        %v1407 = vrot.slane %v1405, 1
        %v1408 = vsel %vm1396, %v1403, %v1407
        %v1410 = vshrl.u32 %v1379, 16
        %v1412 = vshll.u32 %v1379, 16
        %v1414 = vrot.slane %v1412, 1
        %v1415 = vor.u32 %v1410, %v1414
        %v1417 = vshll.u32 %v1381, 16
        %v1419 = vrot.slane %v1417, 1
        %v1420 = vsel %vm1396, %v1415, %v1419
        %v1421 = vshrl.u32 %v1380, 16
        %v1423 = vor.u32 %v1421, %v1407
        %v1425 = vshll.u32 %v1382, 16
        %v1427 = vrot.slane %v1425, 1
        %v1428 = vsel %vm1396, %v1423, %v1427
        %v1429 = vshrl.u32 %v1381, 16
        %v1431 = vor.u32 %v1429, %v1419
        %v1433 = vshll.u32 %v1383, 16
        %v1435 = vrot.slane %v1433, 1
        %v1436 = vsel %vm1396, %v1431, %v1435
        %v1437 = vshrl.u32 %v1382, 16
        %v1439 = vor.u32 %v1437, %v1427
        %v1441 = vshll.u32 %v1384, 16
        %v1443 = vrot.slane %v1441, 1
        %v1444 = vsel %vm1396, %v1439, %v1443
        %v1445 = vshrl.u32 %v1383, 16
        %v1447 = vor.u32 %v1445, %v1435
        %v1449 = vshll.u32 %v1385, 16
        %v1451 = vrot.slane %v1449, 1
        %v1452 = vsel %vm1396, %v1447, %v1451
        %v1453 = vshrl.u32 %v1384, 16
        %v1455 = vor.u32 %v1453, %v1443
        %v1457 = vshll.u32 %v1386, 16
        %v1459 = vrot.slane %v1457, 1
        %v1460 = vsel %vm1396, %v1455, %v1459
        %v1461 = vshrl.u32 %v1385, 16
        %v1463 = vor.u32 %v1461, %v1451
        %v1465 = vshll.u32 %v1387, 16
        %v1467 = vrot.slane %v1465, 1
        %v1468 = vsel %vm1396, %v1463, %v1467
        %v1469 = vshrl.u32 %v1386, 16
        %v1471 = vor.u32 %v1469, %v1459
        %v1473 = vshll.u32 %v1388, 16
        %v1475 = vrot.slane %v1473, 1
        %v1476 = vsel %vm1396, %v1471, %v1475
        %v1477 = vshrl.u32 %v1387, 16
        %v1479 = vor.u32 %v1477, %v1467
        %v1481 = vshll.u32 %v1389, 16
        %v1483 = vrot.slane %v1481, 1
        %v1484 = vsel %vm1396, %v1479, %v1483
        %v1485 = vshrl.u32 %v1388, 16
        %v1487 = vor.u32 %v1485, %v1475
        %v1489 = vshll.u32 %v1390, 16
        %v1491 = vrot.slane %v1489, 1
        %v1492 = vsel %vm1396, %v1487, %v1491
        %v1493 = vshrl.u32 %v1389, 16
        %v1495 = vor.u32 %v1493, %v1483
        %v1497 = vshll.u32 %v1391, 16
        %v1499 = vrot.slane %v1497, 1
        %v1500 = vsel %vm1396, %v1495, %v1499
        %v1501 = vshrl.u32 %v1390, 16
        %v1503 = vor.u32 %v1501, %v1491
        %v1505 = vshll.u32 %v1392, 16
        %v1507 = vrot.slane %v1505, 1
        %v1508 = vsel %vm1396, %v1503, %v1507
        %v1509 = vshrl.u32 %v1391, 16
        %v1511 = vor.u32 %v1509, %v1499
        %v1513 = vshll.u32 %v1393, 16
        %v1515 = vrot.slane %v1513, 1
        %v1516 = vsel %vm1396, %v1511, %v1515
        %v1517 = vshrl.u32 %v1392, 16
        %v1519 = vor.u32 %v1517, %v1507
        %v1521 = vshll.u32 %v1394, 16
        %v1523 = vrot.slane %v1521, 1
        %v1524 = vsel %vm1396, %v1519, %v1523
        %v1525 = vshrl.u32 %v1393, 16
        %v1527 = vor.u32 %v1525, %v1515
        %v1529 = vshll.u32 %v1395, 16
        %v1531 = vrot.slane %v1529, 1
        %v1532 = vsel %vm1396, %v1527, %v1531
        %v1567 = vunpack.c.l.b16 %v1301
        %v1568 = vunpack.c.h.b16 %v1301
        %v1569 = vunpack.c.l.b16 %v1302
        %v1570 = vunpack.c.h.b16 %v1302
        %v1571 = vunpack.c.l.b16 %v1303
        %v1572 = vunpack.c.h.b16 %v1303
        %v1573 = vunpack.c.l.b16 %v1304
        %v1574 = vunpack.c.h.b16 %v1304
        %v1575 = vunpack.c.l.b16 %v1305
        %v1576 = vunpack.c.h.b16 %v1305
        %v1577 = vunpack.c.l.b16 %v1306
        %v1578 = vunpack.c.h.b16 %v1306
        %v1579 = vunpack.c.l.b16 %v1307
        %v1580 = vunpack.c.h.b16 %v1307
        %v1581 = vunpack.c.l.b16 %v1308
        %v1582 = vunpack.c.h.b16 %v1308
        %v1583 = vunpack.c.l.b16 %v1309
        %v1584 = vunpack.c.h.b16 %v1309
        %v1585 = vunpack.c.l.b16 %v1310
        %v1586 = vunpack.c.h.b16 %v1310
        %v1587 = vunpack.c.l.b16 %v1311
        %v1588 = vunpack.c.h.b16 %v1311
        %v1589 = vunpack.c.l.b16 %v1312
        %v1590 = vunpack.c.h.b16 %v1312
        %v1591 = vunpack.c.l.b16 %v1313
        %v1592 = vunpack.c.h.b16 %v1313
        %v1593 = vunpack.c.l.b16 %v1314
        %v1594 = vunpack.c.h.b16 %v1314
        %v1595 = vunpack.c.l.b16 %v1315
        %v1596 = vunpack.c.h.b16 %v1315
        %v1597 = vunpack.c.l.b16 %v1316
        %v1598 = vunpack.c.h.b16 %v1316
        %v1599 = vunpack.c.l.b16 %v1317
        %v1600 = vunpack.c.h.b16 %v1317
        %v1601 = vunpack.c.l.b16 %v1318
        %v1602 = vunpack.c.h.b16 %v1318
        %v1603 = vunpack.c.l.b16 %v1319
        %v1604 = vunpack.c.h.b16 %v1319
        %v1605 = vunpack.c.l.b16 %v1320
        %v1606 = vunpack.c.h.b16 %v1320
        %v1607 = vunpack.c.l.b16 %v1321
        %v1608 = vunpack.c.h.b16 %v1321
        %v1609 = vunpack.c.l.b16 %v1322
        %v1610 = vunpack.c.h.b16 %v1322
        %v1611 = vunpack.c.l.b16 %v1323
        %v1612 = vunpack.c.h.b16 %v1323
        %v1613 = vunpack.c.l.b16 %v1324
        %v1614 = vunpack.c.h.b16 %v1324
        %v1615 = vunpack.c.l.b16 %v1325
        %v1616 = vunpack.c.h.b16 %v1325
        %v1617 = vunpack.c.l.b16 %v1326
        %v1618 = vunpack.c.h.b16 %v1326
        %v1619 = vpack.c.b16 %v1569, %v1567
        %v1620 = vpack.c.b16 %v1570, %v1568
        %v1621 = vpack.c.b16 %v1573, %v1571
        %v1622 = vpack.c.b16 %v1574, %v1572
        %v1623 = vpack.c.b16 %v1577, %v1575
        %v1624 = vpack.c.b16 %v1578, %v1576
        %v1625 = vpack.c.b16 %v1581, %v1579
        %v1626 = vpack.c.b16 %v1582, %v1580
        %v1627 = vpack.c.b16 %v1585, %v1583
        %v1628 = vpack.c.b16 %v1586, %v1584
        %v1629 = vpack.c.b16 %v1589, %v1587
        %v1630 = vpack.c.b16 %v1590, %v1588
        %v1631 = vpack.c.b16 %v1593, %v1591
        %v1632 = vpack.c.b16 %v1594, %v1592
        %v1633 = vpack.c.b16 %v1597, %v1595
        %v1634 = vpack.c.b16 %v1598, %v1596
        %v1635 = vpack.c.b16 %v1601, %v1599
        %v1636 = vpack.c.b16 %v1602, %v1600
        %v1637 = vpack.c.b16 %v1605, %v1603
        %v1638 = vpack.c.b16 %v1606, %v1604
        %v1639 = vpack.c.b16 %v1609, %v1607
        %v1640 = vpack.c.b16 %v1610, %v1608
        %v1641 = vpack.c.b16 %v1613, %v1611
        %v1642 = vpack.c.b16 %v1614, %v1612
        %v1643 = vpack.c.b16 %v1617, %v1615
        %v1644 = vpack.c.b16 %v1618, %v1616
        %v1670 = vsel %vm792, %v1420, 0
        %v1673 = vsel %vm792, %v1436, 0
        %v1676 = vsel %vm792, %v1452, 0
        %v1679 = vsel %vm792, %v1468, 0
        %v1682 = vsel %vm792, %v1484, 0
        %v1685 = vsel %vm792, %v1500, 0
        %v1688 = vsel %vm792, %v1516, 0
        %v1691 = vsel %vm792, %v1532, 0
        %v1694 = vand.u32 %v1643, %v820
        %v1697 = vand.u32 %v1644, %v820
        %1699 = vmatprep.subr.bf16.mxu0 %v1620
        %1700 = vmatpush1.bf16.msra.mxu0 %v1619
        %1701 = vmatprep.subr.bf16.mxu0 %v1622
        %1702 = vmatpush1.bf16.msra.mxu0 %v1621
        %1703 = vmatprep.subr.bf16.mxu0 %v1624
        %1704 = vmatpush1.bf16.msra.mxu0 %v1623
        %1705 = vmatprep.subr.bf16.mxu0 %v1626
        %1706 = vmatpush1.bf16.msra.mxu0 %v1625
        %1707 = vmatprep.subr.bf16.mxu0 %v1628
        %1708 = vmatpush1.bf16.msra.mxu0 %v1627
        %1709 = vmatprep.subr.bf16.mxu0 %v1630
        %1710 = vmatpush1.bf16.msra.mxu0 %v1629
        %1711 = vmatprep.subr.bf16.mxu0 %v1632
        %1712 = vmatpush1.bf16.msra.mxu0 %v1631
        %1713 = vmatprep.subr.bf16.mxu0 %v1634
        %1714 = vmatpush1.bf16.msra.mxu0 %v1633
        %1715 = vmatprep.subr.bf16.mxu0 %v1636
        %1716 = vmatpush1.bf16.msra.mxu0 %v1635
        %1717 = vmatprep.subr.bf16.mxu0 %v1638
        %1718 = vmatpush1.bf16.msra.mxu0 %v1637
        %1719 = vmatprep.subr.bf16.mxu0 %v1640
        %1720 = vmatpush1.bf16.msra.mxu0 %v1639
        %1721 = vmatprep.subr.bf16.mxu0 %v1642
        %1722 = vmatpush1.bf16.msra.mxu0 %v1641
        %1723 = vmatprep.subr.bf16.mxu0 %v1697
        %1724 = vmatpush1.bf16.msra.mxu0 %v1694
        %1725 = vmatprep.subr.bf16.mxu0 0
        %1726 = vmatpush1.bf16.msra.mxu0 0
        %1727 = vmatprep.subr.bf16.mxu0 0
        %1728 = vmatpush1.bf16.msra.mxu0 0
        %1729 = vmatprep.subr.bf16.mxu0 0
        %1730 = vmatpush1.bf16.msra.mxu0 0
        %1731 = vmatprep.mubr.bf16.mxu0 %v1670
        %1732 = vmatmul.mubr.bf16.gmra.mrb[0].mxu0 %v1408
        %v1733 = vpop.f32.mrb[0].mxu0
        %v1734 = vadd.f32 0.0, %v1733
        %v1735 = vpop.f32.mrb[0].mxu0
        %v1736 = vadd.f32 0.0, %v1735
        %v1737 = vpop.f32.mrb[0].mxu0
        %v1738 = vadd.f32 0.0, %v1737
        %v1739 = vpop.f32.mrb[0].mxu0
        %v1740 = vadd.f32 0.0, %v1739
        %1741 = vmatprep.mubr.bf16.mxu0 %v1673
        %1742 = vmatmul.mubr.bf16.gmra.mrb[0].mxu0 %v1428
        %v1743 = vpop.f32.mrb[0].mxu0
        %v1744 = vadd.f32 0.0, %v1743
        %v1745 = vpop.f32.mrb[0].mxu0
        %v1746 = vadd.f32 0.0, %v1745
        %v1747 = vpop.f32.mrb[0].mxu0
        %v1748 = vadd.f32 0.0, %v1747
        %v1749 = vpop.f32.mrb[0].mxu0
        %v1750 = vadd.f32 0.0, %v1749
        %1751 = vmatprep.mubr.bf16.mxu0 %v1676
        %1752 = vmatmul.mubr.bf16.gmra.mrb[0].mxu0 %v1444
        %v1753 = vpop.f32.mrb[0].mxu0
        %v1754 = vadd.f32 0.0, %v1753
        %v1755 = vpop.f32.mrb[0].mxu0
        %v1756 = vadd.f32 0.0, %v1755
        %v1757 = vpop.f32.mrb[0].mxu0
        %v1758 = vadd.f32 0.0, %v1757
        %v1759 = vpop.f32.mrb[0].mxu0
        %v1760 = vadd.f32 0.0, %v1759
        %1761 = vmatprep.mubr.bf16.mxu0 %v1679
        %1762 = vmatmul.mubr.bf16.gmra.mrb[0].mxu0 %v1460
        %v1763 = vpop.f32.mrb[0].mxu0
        %v1764 = vadd.f32 0.0, %v1763
        %v1765 = vpop.f32.mrb[0].mxu0
        %v1766 = vadd.f32 0.0, %v1765
        %v1767 = vpop.f32.mrb[0].mxu0
        %v1768 = vadd.f32 0.0, %v1767
        %v1769 = vpop.f32.mrb[0].mxu0
        %v1770 = vadd.f32 0.0, %v1769
        %1771 = vmatprep.mubr.bf16.mxu0 %v1682
        %1772 = vmatmul.mubr.bf16.gmra.mrb[0].mxu0 %v1476
        %v1773 = vpop.f32.mrb[0].mxu0
        %v1774 = vadd.f32 0.0, %v1773
        %v1775 = vpop.f32.mrb[0].mxu0
        %v1776 = vadd.f32 0.0, %v1775
        %v1777 = vpop.f32.mrb[0].mxu0
        %v1778 = vadd.f32 0.0, %v1777
        %v1779 = vpop.f32.mrb[0].mxu0
        %v1780 = vadd.f32 0.0, %v1779
        %1781 = vmatprep.mubr.bf16.mxu0 %v1685
        %1782 = vmatmul.mubr.bf16.gmra.mrb[0].mxu0 %v1492
        %v1783 = vpop.f32.mrb[0].mxu0
        %v1784 = vadd.f32 0.0, %v1783
        %v1785 = vpop.f32.mrb[0].mxu0
        %v1786 = vadd.f32 0.0, %v1785
        %v1787 = vpop.f32.mrb[0].mxu0
        %v1788 = vadd.f32 0.0, %v1787
        %v1789 = vpop.f32.mrb[0].mxu0
        %v1790 = vadd.f32 0.0, %v1789
        %1791 = vmatprep.mubr.bf16.mxu0 %v1688
        %1792 = vmatmul.mubr.bf16.gmra.mrb[0].mxu0 %v1508
        %v1793 = vpop.f32.mrb[0].mxu0
        %v1794 = vadd.f32 0.0, %v1793
        %v1795 = vpop.f32.mrb[0].mxu0
        %v1796 = vadd.f32 0.0, %v1795
        %v1797 = vpop.f32.mrb[0].mxu0
        %v1798 = vadd.f32 0.0, %v1797
        %v1799 = vpop.f32.mrb[0].mxu0
        %v1800 = vadd.f32 0.0, %v1799
        %1801 = vmatprep.mubr.bf16.mxu0 %v1691
        %1802 = vmatmul.mubr.bf16.gmra.mrb[0].mxu0 %v1524
        %v1803 = vpop.f32.mrb[0].mxu0
        %v1804 = vadd.f32 0.0, %v1803
        %v1805 = vpop.f32.mrb[0].mxu0
        %v1806 = vadd.f32 0.0, %v1805
        %v1807 = vpop.f32.mrb[0].mxu0
        %v1808 = vadd.f32 0.0, %v1807
        %v1809 = vpop.f32.mrb[0].mxu0
        %v1810 = vadd.f32 0.0, %v1809
        %1811 = vdwg.mxu0
        %v1812 = vadd.f32 %v1205, %v1734
        %v1813 = vadd.f32 %v1207, %v1736
        %v1814 = vadd.f32 %v1209, %v1738
        %v1815 = vadd.f32 %v1211, %v1740
        %v1816 = vadd.f32 %v1215, %v1744
        %v1817 = vadd.f32 %v1217, %v1746
        %v1818 = vadd.f32 %v1219, %v1748
        %v1819 = vadd.f32 %v1221, %v1750
        %v1820 = vadd.f32 %v1225, %v1754
        %v1821 = vadd.f32 %v1227, %v1756
        %v1822 = vadd.f32 %v1229, %v1758
        %v1823 = vadd.f32 %v1231, %v1760
        %v1824 = vadd.f32 %v1235, %v1764
        %v1825 = vadd.f32 %v1237, %v1766
        %v1826 = vadd.f32 %v1239, %v1768
        %v1827 = vadd.f32 %v1241, %v1770
        %v1828 = vadd.f32 %v1245, %v1774
        %v1829 = vadd.f32 %v1247, %v1776
        %v1830 = vadd.f32 %v1249, %v1778
        %v1831 = vadd.f32 %v1251, %v1780
        %v1832 = vadd.f32 %v1255, %v1784
        %v1833 = vadd.f32 %v1257, %v1786
        %v1834 = vadd.f32 %v1259, %v1788
        %v1835 = vadd.f32 %v1261, %v1790
        %v1836 = vadd.f32 %v1265, %v1794
        %v1837 = vadd.f32 %v1267, %v1796
        %v1838 = vadd.f32 %v1269, %v1798
        %v1839 = vadd.f32 %v1271, %v1800
        %v1840 = vadd.f32 %v1275, %v1804
        %v1841 = vadd.f32 %v1277, %v1806
        %v1842 = vadd.f32 %v1279, %v1808
        %v1843 = vadd.f32 %v1281, %v1810
        %v1844 = vld [vmem:[%s464 + $0x100] sm:$0x33]
        %s1845 = scalar_lea.vmem %s1, 624
        %v1846 = vld [vmem:[%s1845] sm:$0xff]
        %v1847 = vld [vmem:[%s1845 + $0x8] sm:$0xff]
        %v1848 = vld [vmem:[%s1845 + $0x10] sm:$0xff]
        %v1849 = vld [vmem:[%s1845 + $0x18] sm:$0xff]
        %v1850 = vld [vmem:[%s1845 + $0x20] sm:$0xff]
        %v1851 = vld [vmem:[%s1845 + $0x28] sm:$0xff]
        %v1852 = vld [vmem:[%s1845 + $0x30] sm:$0xff]
        %v1853 = vld [vmem:[%s1845 + $0x38] sm:$0xff]
        %v1854 = vld [vmem:[%s1845 + $0x40] sm:$0xff]
        %v1855 = vld [vmem:[%s1845 + $0x48] sm:$0xff]
        %v1856 = vld [vmem:[%s1845 + $0x50] sm:$0xff]
        %v1857 = vld [vmem:[%s1845 + $0x58] sm:$0xff]
        %v1858 = vld [vmem:[%s1845 + $0x60] sm:$0xff]
        %v1859 = vld [vmem:[%s1845 + $0x68] sm:$0xff]
        %v1860 = vld [vmem:[%s1845 + $0x70] sm:$0xff]
        %v1861 = vld [vmem:[%s1845 + $0x78] sm:$0xff]
        %v1862 = vld [vmem:[%s1845 + $0x80] sm:$0xff]
        %v1863 = vld [vmem:[%s1845 + $0x88] sm:$0xff]
        %v1864 = vld [vmem:[%s1845 + $0x90] sm:$0xff]
        %v1865 = vld [vmem:[%s1845 + $0x98] sm:$0xff]
        %v1866 = vld [vmem:[%s1845 + $0xa0] sm:$0xff]
        %v1867 = vld [vmem:[%s1845 + $0xa8] sm:$0xff]
        %v1868 = vld [vmem:[%s1845 + $0xb0] sm:$0xff]
        %v1869 = vld [vmem:[%s1845 + $0xb8] sm:$0xff]
        %v1870 = vld [vmem:[%s1845 + $0xc0] sm:$0xff]
        %v1871 = vld [vmem:[%s1845 + $0xc8] sm:$0x11]
        %v1873 = vunpack.c.l.b16 %v1844
        %v1874 = vunpack.c.h.b16 %v1844
        %v1875 = vpack.c.b16 %v1873, %v1873
        %v1876 = vpack.c.b16 %v1874, %v1874
        %vm1877 = vsmask.f32 6400
        %v1879 = vshrl.u32 %v603, 16
        %v1881 = vrot.slane %v1879, 1
        %v1882 = vshll.u32 %v603, 16
        %v1884 = vrot.slane %v1882, 2
        %v1885 = vor.u32 %v1881, %v1884
        %v1887 = vshrl.u32 %v605, 16
        %v1889 = vrot.slane %v1887, 1
        %v1890 = vshll.u32 %v605, 16
        %v1892 = vrot.slane %v1890, 2
        %v1893 = vor.u32 %v1889, %v1892
        %v1894 = vsel %vm1877, %v1885, %v1893
        %v1896 = vshrl.u32 %v604, 16
        %v1898 = vrot.slane %v1896, 1
        %v1899 = vshll.u32 %v604, 16
        %v1901 = vrot.slane %v1899, 2
        %v1902 = vor.u32 %v1898, %v1901
        %v1904 = vshrl.u32 %v606, 16
        %v1906 = vrot.slane %v1904, 1
        %v1907 = vshll.u32 %v606, 16
        %v1909 = vrot.slane %v1907, 2
        %v1910 = vor.u32 %v1906, %v1909
        %v1911 = vsel %vm1877, %v1902, %v1910
        %v1913 = vshrl.u32 %v607, 16
        %v1915 = vrot.slane %v1913, 1
        %v1916 = vshll.u32 %v607, 16
        %v1918 = vrot.slane %v1916, 2
        %v1919 = vor.u32 %v1915, %v1918
        %v1920 = vsel %vm1877, %v1893, %v1919
        %v1922 = vshrl.u32 %v608, 16
        %v1924 = vrot.slane %v1922, 1
        %v1925 = vshll.u32 %v608, 16
        %v1927 = vrot.slane %v1925, 2
        %v1928 = vor.u32 %v1924, %v1927
        %v1929 = vsel %vm1877, %v1910, %v1928
        %v1931 = vshrl.u32 %v609, 16
        %v1933 = vrot.slane %v1931, 1
        %v1934 = vshll.u32 %v609, 16
        %v1936 = vrot.slane %v1934, 2
        %v1937 = vor.u32 %v1933, %v1936
        %v1938 = vsel %vm1877, %v1919, %v1937
        %v1940 = vshrl.u32 %v610, 16
        %v1942 = vrot.slane %v1940, 1
        %v1943 = vshll.u32 %v610, 16
        %v1945 = vrot.slane %v1943, 2
        %v1946 = vor.u32 %v1942, %v1945
        %v1947 = vsel %vm1877, %v1928, %v1946
        %v1949 = vshrl.u32 %v611, 16
        %v1951 = vrot.slane %v1949, 1
        %v1952 = vshll.u32 %v611, 16
        %v1954 = vrot.slane %v1952, 2
        %v1955 = vor.u32 %v1951, %v1954
        %v1956 = vsel %vm1877, %v1937, %v1955
        %v1958 = vshrl.u32 %v612, 16
        %v1960 = vrot.slane %v1958, 1
        %v1961 = vshll.u32 %v612, 16
        %v1963 = vrot.slane %v1961, 2
        %v1964 = vor.u32 %v1960, %v1963
        %v1965 = vsel %vm1877, %v1946, %v1964
        %v1967 = vshrl.u32 %v613, 16
        %v1969 = vrot.slane %v1967, 1
        %v1970 = vshll.u32 %v613, 16
        %v1972 = vrot.slane %v1970, 2
        %v1973 = vor.u32 %v1969, %v1972
        %v1974 = vsel %vm1877, %v1955, %v1973
        %v1976 = vshrl.u32 %v614, 16
        %v1978 = vrot.slane %v1976, 1
        %v1979 = vshll.u32 %v614, 16
        %v1981 = vrot.slane %v1979, 2
        %v1982 = vor.u32 %v1978, %v1981
        %v1983 = vsel %vm1877, %v1964, %v1982
        %v1985 = vshrl.u32 %v615, 16
        %v1987 = vrot.slane %v1985, 1
        %v1988 = vshll.u32 %v615, 16
        %v1990 = vrot.slane %v1988, 2
        %v1991 = vor.u32 %v1987, %v1990
        %v1992 = vsel %vm1877, %v1973, %v1991
        %v1994 = vshrl.u32 %v616, 16
        %v1996 = vrot.slane %v1994, 1
        %v1997 = vshll.u32 %v616, 16
        %v1999 = vrot.slane %v1997, 2
        %v2000 = vor.u32 %v1996, %v1999
        %v2001 = vsel %vm1877, %v1982, %v2000
        %v2003 = vshrl.u32 %v617, 16
        %v2005 = vrot.slane %v2003, 1
        %v2006 = vshll.u32 %v617, 16
        %v2008 = vrot.slane %v2006, 2
        %v2009 = vor.u32 %v2005, %v2008
        %v2010 = vsel %vm1877, %v1991, %v2009
        %v2012 = vshrl.u32 %v618, 16
        %v2014 = vrot.slane %v2012, 1
        %v2015 = vshll.u32 %v618, 16
        %v2017 = vrot.slane %v2015, 2
        %v2018 = vor.u32 %v2014, %v2017
        %v2019 = vsel %vm1877, %v2000, %v2018
        %v2021 = vshrl.u32 %v1875, 16
        %v2023 = vrot.slane %v2021, 1
        %v2024 = vshll.u32 %v1875, 16
        %v2026 = vrot.slane %v2024, 2
        %v2027 = vor.u32 %v2023, %v2026
        %v2028 = vsel %vm1877, %v2009, %v2027
        %v2030 = vshrl.u32 %v1876, 16
        %v2032 = vrot.slane %v2030, 1
        %v2033 = vshll.u32 %v1876, 16
        %v2035 = vrot.slane %v2033, 2
        %v2036 = vor.u32 %v2032, %v2035
        %v2037 = vsel %vm1877, %v2018, %v2036
        %v2072 = vunpack.c.l.b16 %v1846
        %v2073 = vunpack.c.h.b16 %v1846
        %v2074 = vunpack.c.l.b16 %v1847
        %v2075 = vunpack.c.h.b16 %v1847
        %v2076 = vunpack.c.l.b16 %v1848
        %v2077 = vunpack.c.h.b16 %v1848
        %v2078 = vunpack.c.l.b16 %v1849
        %v2079 = vunpack.c.h.b16 %v1849
        %v2080 = vunpack.c.l.b16 %v1850
        %v2081 = vunpack.c.h.b16 %v1850
        %v2082 = vunpack.c.l.b16 %v1851
        %v2083 = vunpack.c.h.b16 %v1851
        %v2084 = vunpack.c.l.b16 %v1852
        %v2085 = vunpack.c.h.b16 %v1852
        %v2086 = vunpack.c.l.b16 %v1853
        %v2087 = vunpack.c.h.b16 %v1853
        %v2088 = vunpack.c.l.b16 %v1854
        %v2089 = vunpack.c.h.b16 %v1854
        %v2090 = vunpack.c.l.b16 %v1855
        %v2091 = vunpack.c.h.b16 %v1855
        %v2092 = vunpack.c.l.b16 %v1856
        %v2093 = vunpack.c.h.b16 %v1856
        %v2094 = vunpack.c.l.b16 %v1857
        %v2095 = vunpack.c.h.b16 %v1857
        %v2096 = vunpack.c.l.b16 %v1858
        %v2097 = vunpack.c.h.b16 %v1858
        %v2098 = vunpack.c.l.b16 %v1859
        %v2099 = vunpack.c.h.b16 %v1859
        %v2100 = vunpack.c.l.b16 %v1860
        %v2101 = vunpack.c.h.b16 %v1860
        %v2102 = vunpack.c.l.b16 %v1861
        %v2103 = vunpack.c.h.b16 %v1861
        %v2104 = vunpack.c.l.b16 %v1862
        %v2105 = vunpack.c.h.b16 %v1862
        %v2106 = vunpack.c.l.b16 %v1863
        %v2107 = vunpack.c.h.b16 %v1863
        %v2108 = vunpack.c.l.b16 %v1864
        %v2109 = vunpack.c.h.b16 %v1864
        %v2110 = vunpack.c.l.b16 %v1865
        %v2111 = vunpack.c.h.b16 %v1865
        %v2112 = vunpack.c.l.b16 %v1866
        %v2113 = vunpack.c.h.b16 %v1866
        %v2114 = vunpack.c.l.b16 %v1867
        %v2115 = vunpack.c.h.b16 %v1867
        %v2116 = vunpack.c.l.b16 %v1868
        %v2117 = vunpack.c.h.b16 %v1868
        %v2118 = vunpack.c.l.b16 %v1869
        %v2119 = vunpack.c.h.b16 %v1869
        %v2120 = vunpack.c.l.b16 %v1870
        %v2121 = vunpack.c.h.b16 %v1870
        %v2122 = vunpack.c.l.b16 %v1871
        %v2123 = vunpack.c.h.b16 %v1871
        %v2124 = vpack.c.b16 %v2074, %v2072
        %v2125 = vpack.c.b16 %v2075, %v2073
        %v2126 = vpack.c.b16 %v2078, %v2076
        %v2127 = vpack.c.b16 %v2079, %v2077
        %v2128 = vpack.c.b16 %v2082, %v2080
        %v2129 = vpack.c.b16 %v2083, %v2081
        %v2130 = vpack.c.b16 %v2086, %v2084
        %v2131 = vpack.c.b16 %v2087, %v2085
        %v2132 = vpack.c.b16 %v2090, %v2088
        %v2133 = vpack.c.b16 %v2091, %v2089
        %v2134 = vpack.c.b16 %v2094, %v2092
        %v2135 = vpack.c.b16 %v2095, %v2093
        %v2136 = vpack.c.b16 %v2098, %v2096
        %v2137 = vpack.c.b16 %v2099, %v2097
        %v2138 = vpack.c.b16 %v2102, %v2100
        %v2139 = vpack.c.b16 %v2103, %v2101
        %v2140 = vpack.c.b16 %v2106, %v2104
        %v2141 = vpack.c.b16 %v2107, %v2105
        %v2142 = vpack.c.b16 %v2110, %v2108
        %v2143 = vpack.c.b16 %v2111, %v2109
        %v2144 = vpack.c.b16 %v2114, %v2112
        %v2145 = vpack.c.b16 %v2115, %v2113
        %v2146 = vpack.c.b16 %v2118, %v2116
        %v2147 = vpack.c.b16 %v2119, %v2117
        %v2148 = vpack.c.b16 %v2122, %v2120
        %v2149 = vpack.c.b16 %v2123, %v2121
        %v2175 = vsel %vm792, %v1911, 0
        %v2178 = vsel %vm792, %v1929, 0
        %v2181 = vsel %vm792, %v1947, 0
        %v2184 = vsel %vm792, %v1965, 0
        %v2187 = vsel %vm792, %v1983, 0
        %v2190 = vsel %vm792, %v2001, 0
        %v2193 = vsel %vm792, %v2019, 0
        %v2196 = vsel %vm792, %v2037, 0
        %v2199 = vand.u32 %v2148, %v820
        %v2202 = vand.u32 %v2149, %v820
        %2204 = vmatprep.subr.bf16.mxu0 %v2125
        %2205 = vmatpush1.bf16.msra.mxu0 %v2124
        %2206 = vmatprep.subr.bf16.mxu0 %v2127
        %2207 = vmatpush1.bf16.msra.mxu0 %v2126
        %2208 = vmatprep.subr.bf16.mxu0 %v2129
        %2209 = vmatpush1.bf16.msra.mxu0 %v2128
        %2210 = vmatprep.subr.bf16.mxu0 %v2131
        %2211 = vmatpush1.bf16.msra.mxu0 %v2130
        %2212 = vmatprep.subr.bf16.mxu0 %v2133
        %2213 = vmatpush1.bf16.msra.mxu0 %v2132
        %2214 = vmatprep.subr.bf16.mxu0 %v2135
        %2215 = vmatpush1.bf16.msra.mxu0 %v2134
        %2216 = vmatprep.subr.bf16.mxu0 %v2137
        %2217 = vmatpush1.bf16.msra.mxu0 %v2136
        %2218 = vmatprep.subr.bf16.mxu0 %v2139
        %2219 = vmatpush1.bf16.msra.mxu0 %v2138
        %2220 = vmatprep.subr.bf16.mxu0 %v2141
        %2221 = vmatpush1.bf16.msra.mxu0 %v2140
        %2222 = vmatprep.subr.bf16.mxu0 %v2143
        %2223 = vmatpush1.bf16.msra.mxu0 %v2142
        %2224 = vmatprep.subr.bf16.mxu0 %v2145
        %2225 = vmatpush1.bf16.msra.mxu0 %v2144
        %2226 = vmatprep.subr.bf16.mxu0 %v2147
        %2227 = vmatpush1.bf16.msra.mxu0 %v2146
        %2228 = vmatprep.subr.bf16.mxu0 %v2202
        %2229 = vmatpush1.bf16.msra.mxu0 %v2199
        %2230 = vmatprep.subr.bf16.mxu0 0
        %2231 = vmatpush1.bf16.msra.mxu0 0
        %2232 = vmatprep.subr.bf16.mxu0 0
        %2233 = vmatpush1.bf16.msra.mxu0 0
        %2234 = vmatprep.subr.bf16.mxu0 0
        %2235 = vmatpush1.bf16.msra.mxu0 0
        %2236 = vmatprep.mubr.bf16.mxu0 %v2175
        %2237 = vmatmul.mubr.bf16.gmra.mrb[0].mxu0 %v1894
        %v2238 = vpop.f32.mrb[0].mxu0
        %v2239 = vadd.f32 0.0, %v2238
        %v2240 = vpop.f32.mrb[0].mxu0
        %v2241 = vadd.f32 0.0, %v2240
        %v2242 = vpop.f32.mrb[0].mxu0
        %v2243 = vadd.f32 0.0, %v2242
        %v2244 = vpop.f32.mrb[0].mxu0
        %v2245 = vadd.f32 0.0, %v2244
        %2246 = vmatprep.mubr.bf16.mxu0 %v2178
        %2247 = vmatmul.mubr.bf16.gmra.mrb[0].mxu0 %v1920
        %v2248 = vpop.f32.mrb[0].mxu0
        %v2249 = vadd.f32 0.0, %v2248
        %v2250 = vpop.f32.mrb[0].mxu0
        %v2251 = vadd.f32 0.0, %v2250
        %v2252 = vpop.f32.mrb[0].mxu0
        %v2253 = vadd.f32 0.0, %v2252
        %v2254 = vpop.f32.mrb[0].mxu0
        %v2255 = vadd.f32 0.0, %v2254
        %2256 = vmatprep.mubr.bf16.mxu0 %v2181
        %2257 = vmatmul.mubr.bf16.gmra.mrb[0].mxu0 %v1938
        %v2258 = vpop.f32.mrb[0].mxu0
        %v2259 = vadd.f32 0.0, %v2258
        %v2260 = vpop.f32.mrb[0].mxu0
        %v2261 = vadd.f32 0.0, %v2260
        %v2262 = vpop.f32.mrb[0].mxu0
        %v2263 = vadd.f32 0.0, %v2262
        %v2264 = vpop.f32.mrb[0].mxu0
        %v2265 = vadd.f32 0.0, %v2264
        %2266 = vmatprep.mubr.bf16.mxu0 %v2184
        %2267 = vmatmul.mubr.bf16.gmra.mrb[0].mxu0 %v1956
        %v2268 = vpop.f32.mrb[0].mxu0
        %v2269 = vadd.f32 0.0, %v2268
        %v2270 = vpop.f32.mrb[0].mxu0
        %v2271 = vadd.f32 0.0, %v2270
        %v2272 = vpop.f32.mrb[0].mxu0
        %v2273 = vadd.f32 0.0, %v2272
        %v2274 = vpop.f32.mrb[0].mxu0
        %v2275 = vadd.f32 0.0, %v2274
        %2276 = vmatprep.mubr.bf16.mxu0 %v2187
        %2277 = vmatmul.mubr.bf16.gmra.mrb[0].mxu0 %v1974
        %v2278 = vpop.f32.mrb[0].mxu0
        %v2279 = vadd.f32 0.0, %v2278
        %v2280 = vpop.f32.mrb[0].mxu0
        %v2281 = vadd.f32 0.0, %v2280
        %v2282 = vpop.f32.mrb[0].mxu0
        %v2283 = vadd.f32 0.0, %v2282
        %v2284 = vpop.f32.mrb[0].mxu0
        %v2285 = vadd.f32 0.0, %v2284
        %2286 = vmatprep.mubr.bf16.mxu0 %v2190
        %2287 = vmatmul.mubr.bf16.gmra.mrb[0].mxu0 %v1992
        %v2288 = vpop.f32.mrb[0].mxu0
        %v2289 = vadd.f32 0.0, %v2288
        %v2290 = vpop.f32.mrb[0].mxu0
        %v2291 = vadd.f32 0.0, %v2290
        %v2292 = vpop.f32.mrb[0].mxu0
        %v2293 = vadd.f32 0.0, %v2292
        %v2294 = vpop.f32.mrb[0].mxu0
        %v2295 = vadd.f32 0.0, %v2294
        %2296 = vmatprep.mubr.bf16.mxu0 %v2193
        %2297 = vmatmul.mubr.bf16.gmra.mrb[0].mxu0 %v2010
        %v2298 = vpop.f32.mrb[0].mxu0
        %v2299 = vadd.f32 0.0, %v2298
        %v2300 = vpop.f32.mrb[0].mxu0
        %v2301 = vadd.f32 0.0, %v2300
        %v2302 = vpop.f32.mrb[0].mxu0
        %v2303 = vadd.f32 0.0, %v2302
        %v2304 = vpop.f32.mrb[0].mxu0
        %v2305 = vadd.f32 0.0, %v2304
        %2306 = vmatprep.mubr.bf16.mxu0 %v2196
        %2307 = vmatmul.mubr.bf16.gmra.mrb[0].mxu0 %v2028
        %v2308 = vpop.f32.mrb[0].mxu0
        %v2309 = vadd.f32 0.0, %v2308
        %v2310 = vpop.f32.mrb[0].mxu0
        %v2311 = vadd.f32 0.0, %v2310
        %v2312 = vpop.f32.mrb[0].mxu0
        %v2313 = vadd.f32 0.0, %v2312
        %v2314 = vpop.f32.mrb[0].mxu0
        %v2315 = vadd.f32 0.0, %v2314
        %2316 = vdwg.mxu0
        %v2317 = vadd.f32 %v1812, %v2239
        %v2318 = vadd.f32 %v1813, %v2241
        %v2319 = vadd.f32 %v1814, %v2243
        %v2320 = vadd.f32 %v1815, %v2245
        %v2321 = vadd.f32 %v1816, %v2249
        %v2322 = vadd.f32 %v1817, %v2251
        %v2323 = vadd.f32 %v1818, %v2253
        %v2324 = vadd.f32 %v1819, %v2255
        %v2325 = vadd.f32 %v1820, %v2259
        %v2326 = vadd.f32 %v1821, %v2261
        %v2327 = vadd.f32 %v1822, %v2263
        %v2328 = vadd.f32 %v1823, %v2265
        %v2329 = vadd.f32 %v1824, %v2269
        %v2330 = vadd.f32 %v1825, %v2271
        %v2331 = vadd.f32 %v1826, %v2273
        %v2332 = vadd.f32 %v1827, %v2275
        %v2333 = vadd.f32 %v1828, %v2279
        %v2334 = vadd.f32 %v1829, %v2281
        %v2335 = vadd.f32 %v1830, %v2283
        %v2336 = vadd.f32 %v1831, %v2285
        %v2337 = vadd.f32 %v1832, %v2289
        %v2338 = vadd.f32 %v1833, %v2291
        %v2339 = vadd.f32 %v1834, %v2293
        %v2340 = vadd.f32 %v1835, %v2295
        %v2341 = vadd.f32 %v1836, %v2299
        %v2342 = vadd.f32 %v1837, %v2301
        %v2343 = vadd.f32 %v1838, %v2303
        %v2344 = vadd.f32 %v1839, %v2305
        %v2345 = vadd.f32 %v1840, %v2309
        %v2346 = vadd.f32 %v1841, %v2311
        %v2347 = vadd.f32 %v1842, %v2313
        %v2348 = vadd.f32 %v1843, %v2315
        %v2349 = vld [vmem:[%s464] sm:$0xee]
        %s2350 = scalar_lea.vmem %s1, 832
        %v2351 = vld [vmem:[%s2350] sm:$0xff]
        %v2352 = vld [vmem:[%s2350 + $0x8] sm:$0xff]
        %v2353 = vld [vmem:[%s2350 + $0x10] sm:$0xff]
        %v2354 = vld [vmem:[%s2350 + $0x18] sm:$0xff]
        %v2355 = vld [vmem:[%s2350 + $0x20] sm:$0xff]
        %v2356 = vld [vmem:[%s2350 + $0x28] sm:$0xff]
        %v2357 = vld [vmem:[%s2350 + $0x30] sm:$0xff]
        %v2358 = vld [vmem:[%s2350 + $0x38] sm:$0xff]
        %v2359 = vld [vmem:[%s2350 + $0x40] sm:$0xff]
        %v2360 = vld [vmem:[%s2350 + $0x48] sm:$0xff]
        %v2361 = vld [vmem:[%s2350 + $0x50] sm:$0xff]
        %v2362 = vld [vmem:[%s2350 + $0x58] sm:$0xff]
        %v2363 = vld [vmem:[%s2350 + $0x60] sm:$0xff]
        %v2364 = vld [vmem:[%s2350 + $0x68] sm:$0xff]
        %v2365 = vld [vmem:[%s2350 + $0x70] sm:$0xff]
        %v2366 = vld [vmem:[%s2350 + $0x78] sm:$0xff]
        %v2367 = vld [vmem:[%s2350 + $0x80] sm:$0xff]
        %v2368 = vld [vmem:[%s2350 + $0x88] sm:$0xff]
        %v2369 = vld [vmem:[%s2350 + $0x90] sm:$0xff]
        %v2370 = vld [vmem:[%s2350 + $0x98] sm:$0xff]
        %v2371 = vld [vmem:[%s2350 + $0xa0] sm:$0xff]
        %v2372 = vld [vmem:[%s2350 + $0xa8] sm:$0xff]
        %v2373 = vld [vmem:[%s2350 + $0xb0] sm:$0xff]
        %v2374 = vld [vmem:[%s2350 + $0xb8] sm:$0xff]
        %v2375 = vld [vmem:[%s2350 + $0xc0] sm:$0xff]
        %v2376 = vld [vmem:[%s2350 + $0xc8] sm:$0x11]
        %v2378 = vunpack.c.l.b16 %v2349
        %v2379 = vunpack.c.h.b16 %v2349
        %v2380 = vpack.c.b16 %v1346, %v2378
        %v2381 = vpack.c.b16 %v1347, %v2379
        %v2382 = vrot.slane %v2380, 1
        %v2383 = vrot.slane %v1380, 1
        %v2384 = vsel %vm621, %v2382, %v2383
        %v2385 = vrot.slane %v2381, 1
        %v2386 = vrot.slane %v1381, 1
        %v2387 = vsel %vm621, %v2385, %v2386
        %v2388 = vrot.slane %v1382, 1
        %v2389 = vsel %vm621, %v2383, %v2388
        %v2390 = vrot.slane %v1383, 1
        %v2391 = vsel %vm621, %v2386, %v2390
        %v2392 = vrot.slane %v1384, 1
        %v2393 = vsel %vm621, %v2388, %v2392
        %v2394 = vrot.slane %v1385, 1
        %v2395 = vsel %vm621, %v2390, %v2394
        %v2396 = vrot.slane %v1386, 1
        %v2397 = vsel %vm621, %v2392, %v2396
        %v2398 = vrot.slane %v1387, 1
        %v2399 = vsel %vm621, %v2394, %v2398
        %v2400 = vrot.slane %v1388, 1
        %v2401 = vsel %vm621, %v2396, %v2400
        %v2402 = vrot.slane %v1389, 1
        %v2403 = vsel %vm621, %v2398, %v2402
        %v2404 = vrot.slane %v1390, 1
        %v2405 = vsel %vm621, %v2400, %v2404
        %v2406 = vrot.slane %v1391, 1
        %v2407 = vsel %vm621, %v2402, %v2406
        %v2408 = vrot.slane %v1392, 1
        %v2409 = vsel %vm621, %v2404, %v2408
        %v2410 = vrot.slane %v1393, 1
        %v2411 = vsel %vm621, %v2406, %v2410
        %v2412 = vrot.slane %v1394, 1
        %v2413 = vsel %vm621, %v2408, %v2412
        %v2414 = vrot.slane %v1395, 1
        %v2415 = vsel %vm621, %v2410, %v2414
        %v2450 = vunpack.c.l.b16 %v2351
        %v2451 = vunpack.c.h.b16 %v2351
        %v2452 = vunpack.c.l.b16 %v2352
        %v2453 = vunpack.c.h.b16 %v2352
        %v2454 = vunpack.c.l.b16 %v2353
        %v2455 = vunpack.c.h.b16 %v2353
        %v2456 = vunpack.c.l.b16 %v2354
        %v2457 = vunpack.c.h.b16 %v2354
        %v2458 = vunpack.c.l.b16 %v2355
        %v2459 = vunpack.c.h.b16 %v2355
        %v2460 = vunpack.c.l.b16 %v2356
        %v2461 = vunpack.c.h.b16 %v2356
        %v2462 = vunpack.c.l.b16 %v2357
        %v2463 = vunpack.c.h.b16 %v2357
        %v2464 = vunpack.c.l.b16 %v2358
        %v2465 = vunpack.c.h.b16 %v2358
        %v2466 = vunpack.c.l.b16 %v2359
        %v2467 = vunpack.c.h.b16 %v2359
        %v2468 = vunpack.c.l.b16 %v2360
        %v2469 = vunpack.c.h.b16 %v2360
        %v2470 = vunpack.c.l.b16 %v2361
        %v2471 = vunpack.c.h.b16 %v2361
        %v2472 = vunpack.c.l.b16 %v2362
        %v2473 = vunpack.c.h.b16 %v2362
        %v2474 = vunpack.c.l.b16 %v2363
        %v2475 = vunpack.c.h.b16 %v2363
        %v2476 = vunpack.c.l.b16 %v2364
        %v2477 = vunpack.c.h.b16 %v2364
        %v2478 = vunpack.c.l.b16 %v2365
        %v2479 = vunpack.c.h.b16 %v2365
        %v2480 = vunpack.c.l.b16 %v2366
        %v2481 = vunpack.c.h.b16 %v2366
        %v2482 = vunpack.c.l.b16 %v2367
        %v2483 = vunpack.c.h.b16 %v2367
        %v2484 = vunpack.c.l.b16 %v2368
        %v2485 = vunpack.c.h.b16 %v2368
        %v2486 = vunpack.c.l.b16 %v2369
        %v2487 = vunpack.c.h.b16 %v2369
        %v2488 = vunpack.c.l.b16 %v2370
        %v2489 = vunpack.c.h.b16 %v2370
        %v2490 = vunpack.c.l.b16 %v2371
        %v2491 = vunpack.c.h.b16 %v2371
        %v2492 = vunpack.c.l.b16 %v2372
        %v2493 = vunpack.c.h.b16 %v2372
        %v2494 = vunpack.c.l.b16 %v2373
        %v2495 = vunpack.c.h.b16 %v2373
        %v2496 = vunpack.c.l.b16 %v2374
        %v2497 = vunpack.c.h.b16 %v2374
        %v2498 = vunpack.c.l.b16 %v2375
        %v2499 = vunpack.c.h.b16 %v2375
        %v2500 = vunpack.c.l.b16 %v2376
        %v2501 = vunpack.c.h.b16 %v2376
        %v2502 = vpack.c.b16 %v2452, %v2450
        %v2503 = vpack.c.b16 %v2453, %v2451
        %v2504 = vpack.c.b16 %v2456, %v2454
        %v2505 = vpack.c.b16 %v2457, %v2455
        %v2506 = vpack.c.b16 %v2460, %v2458
        %v2507 = vpack.c.b16 %v2461, %v2459
        %v2508 = vpack.c.b16 %v2464, %v2462
        %v2509 = vpack.c.b16 %v2465, %v2463
        %v2510 = vpack.c.b16 %v2468, %v2466
        %v2511 = vpack.c.b16 %v2469, %v2467
        %v2512 = vpack.c.b16 %v2472, %v2470
        %v2513 = vpack.c.b16 %v2473, %v2471
        %v2514 = vpack.c.b16 %v2476, %v2474
        %v2515 = vpack.c.b16 %v2477, %v2475
        %v2516 = vpack.c.b16 %v2480, %v2478
        %v2517 = vpack.c.b16 %v2481, %v2479
        %v2518 = vpack.c.b16 %v2484, %v2482
        %v2519 = vpack.c.b16 %v2485, %v2483
        %v2520 = vpack.c.b16 %v2488, %v2486
        %v2521 = vpack.c.b16 %v2489, %v2487
        %v2522 = vpack.c.b16 %v2492, %v2490
        %v2523 = vpack.c.b16 %v2493, %v2491
        %v2524 = vpack.c.b16 %v2496, %v2494
        %v2525 = vpack.c.b16 %v2497, %v2495
        %v2526 = vpack.c.b16 %v2500, %v2498
        %v2527 = vpack.c.b16 %v2501, %v2499
        %v2553 = vsel %vm792, %v2387, 0
        %v2556 = vsel %vm792, %v2391, 0
        %v2559 = vsel %vm792, %v2395, 0
        %v2562 = vsel %vm792, %v2399, 0
        %v2565 = vsel %vm792, %v2403, 0
        %v2568 = vsel %vm792, %v2407, 0
        %v2571 = vsel %vm792, %v2411, 0
        %v2574 = vsel %vm792, %v2415, 0
        %v2577 = vand.u32 %v2526, %v820
        %v2580 = vand.u32 %v2527, %v820
        %2582 = vmatprep.subr.bf16.mxu0 %v2503
        %2583 = vmatpush1.bf16.msra.mxu0 %v2502
        %2584 = vmatprep.subr.bf16.mxu0 %v2505
        %2585 = vmatpush1.bf16.msra.mxu0 %v2504
        %2586 = vmatprep.subr.bf16.mxu0 %v2507
        %2587 = vmatpush1.bf16.msra.mxu0 %v2506
        %2588 = vmatprep.subr.bf16.mxu0 %v2509
        %2589 = vmatpush1.bf16.msra.mxu0 %v2508
        %2590 = vmatprep.subr.bf16.mxu0 %v2511
        %2591 = vmatpush1.bf16.msra.mxu0 %v2510
        %2592 = vmatprep.subr.bf16.mxu0 %v2513
        %2593 = vmatpush1.bf16.msra.mxu0 %v2512
        %2594 = vmatprep.subr.bf16.mxu0 %v2515
        %2595 = vmatpush1.bf16.msra.mxu0 %v2514
        %2596 = vmatprep.subr.bf16.mxu0 %v2517
        %2597 = vmatpush1.bf16.msra.mxu0 %v2516
        %2598 = vmatprep.subr.bf16.mxu0 %v2519
        %2599 = vmatpush1.bf16.msra.mxu0 %v2518
        %2600 = vmatprep.subr.bf16.mxu0 %v2521
        %2601 = vmatpush1.bf16.msra.mxu0 %v2520
        %2602 = vmatprep.subr.bf16.mxu0 %v2523
        %2603 = vmatpush1.bf16.msra.mxu0 %v2522
        %2604 = vmatprep.subr.bf16.mxu0 %v2525
        %2605 = vmatpush1.bf16.msra.mxu0 %v2524
        %2606 = vmatprep.subr.bf16.mxu0 %v2580
        %2607 = vmatpush1.bf16.msra.mxu0 %v2577
        %2608 = vmatprep.subr.bf16.mxu0 0
        %2609 = vmatpush1.bf16.msra.mxu0 0
        %2610 = vmatprep.subr.bf16.mxu0 0
        %2611 = vmatpush1.bf16.msra.mxu0 0
        %2612 = vmatprep.subr.bf16.mxu0 0
        %2613 = vmatpush1.bf16.msra.mxu0 0
        %2614 = vmatprep.mubr.bf16.mxu0 %v2553
        %2615 = vmatmul.mubr.bf16.gmra.mrb[0].mxu0 %v2384
        %v2616 = vpop.f32.mrb[0].mxu0
        %v2617 = vadd.f32 0.0, %v2616
        %v2618 = vpop.f32.mrb[0].mxu0
        %v2619 = vadd.f32 0.0, %v2618
        %v2620 = vpop.f32.mrb[0].mxu0
        %v2621 = vadd.f32 0.0, %v2620
        %v2622 = vpop.f32.mrb[0].mxu0
        %v2623 = vadd.f32 0.0, %v2622
        %2624 = vmatprep.mubr.bf16.mxu0 %v2556
        %2625 = vmatmul.mubr.bf16.gmra.mrb[0].mxu0 %v2389
        %v2626 = vpop.f32.mrb[0].mxu0
        %v2627 = vadd.f32 0.0, %v2626
        %v2628 = vpop.f32.mrb[0].mxu0
        %v2629 = vadd.f32 0.0, %v2628
        %v2630 = vpop.f32.mrb[0].mxu0
        %v2631 = vadd.f32 0.0, %v2630
        %v2632 = vpop.f32.mrb[0].mxu0
        %v2633 = vadd.f32 0.0, %v2632
        %2634 = vmatprep.mubr.bf16.mxu0 %v2559
        %2635 = vmatmul.mubr.bf16.gmra.mrb[0].mxu0 %v2393
        %v2636 = vpop.f32.mrb[0].mxu0
        %v2637 = vadd.f32 0.0, %v2636
        %v2638 = vpop.f32.mrb[0].mxu0
        %v2639 = vadd.f32 0.0, %v2638
        %v2640 = vpop.f32.mrb[0].mxu0
        %v2641 = vadd.f32 0.0, %v2640
        %v2642 = vpop.f32.mrb[0].mxu0
        %v2643 = vadd.f32 0.0, %v2642
        %2644 = vmatprep.mubr.bf16.mxu0 %v2562
        %2645 = vmatmul.mubr.bf16.gmra.mrb[0].mxu0 %v2397
        %v2646 = vpop.f32.mrb[0].mxu0
        %v2647 = vadd.f32 0.0, %v2646
        %v2648 = vpop.f32.mrb[0].mxu0
        %v2649 = vadd.f32 0.0, %v2648
        %v2650 = vpop.f32.mrb[0].mxu0
        %v2651 = vadd.f32 0.0, %v2650
        %v2652 = vpop.f32.mrb[0].mxu0
        %v2653 = vadd.f32 0.0, %v2652
        %2654 = vmatprep.mubr.bf16.mxu0 %v2565
        %2655 = vmatmul.mubr.bf16.gmra.mrb[0].mxu0 %v2401
        %v2656 = vpop.f32.mrb[0].mxu0
        %v2657 = vadd.f32 0.0, %v2656
        %v2658 = vpop.f32.mrb[0].mxu0
        %v2659 = vadd.f32 0.0, %v2658
        %v2660 = vpop.f32.mrb[0].mxu0
        %v2661 = vadd.f32 0.0, %v2660
        %v2662 = vpop.f32.mrb[0].mxu0
        %v2663 = vadd.f32 0.0, %v2662
        %2664 = vmatprep.mubr.bf16.mxu0 %v2568
        %2665 = vmatmul.mubr.bf16.gmra.mrb[0].mxu0 %v2405
        %v2666 = vpop.f32.mrb[0].mxu0
        %v2667 = vadd.f32 0.0, %v2666
        %v2668 = vpop.f32.mrb[0].mxu0
        %v2669 = vadd.f32 0.0, %v2668
        %v2670 = vpop.f32.mrb[0].mxu0
        %v2671 = vadd.f32 0.0, %v2670
        %v2672 = vpop.f32.mrb[0].mxu0
        %v2673 = vadd.f32 0.0, %v2672
        %2674 = vmatprep.mubr.bf16.mxu0 %v2571
        %2675 = vmatmul.mubr.bf16.gmra.mrb[0].mxu0 %v2409
        %v2676 = vpop.f32.mrb[0].mxu0
        %v2677 = vadd.f32 0.0, %v2676
        %v2678 = vpop.f32.mrb[0].mxu0
        %v2679 = vadd.f32 0.0, %v2678
        %v2680 = vpop.f32.mrb[0].mxu0
        %v2681 = vadd.f32 0.0, %v2680
        %v2682 = vpop.f32.mrb[0].mxu0
        %v2683 = vadd.f32 0.0, %v2682
        %2684 = vmatprep.mubr.bf16.mxu0 %v2574
        %2685 = vmatmul.mubr.bf16.gmra.mrb[0].mxu0 %v2413
        %v2686 = vpop.f32.mrb[0].mxu0
        %v2687 = vadd.f32 0.0, %v2686
        %v2688 = vpop.f32.mrb[0].mxu0
        %v2689 = vadd.f32 0.0, %v2688
        %v2690 = vpop.f32.mrb[0].mxu0
        %v2691 = vadd.f32 0.0, %v2690
        %v2692 = vpop.f32.mrb[0].mxu0
        %v2693 = vadd.f32 0.0, %v2692
        %2694 = vdwg.mxu0
        %v2695 = vadd.f32 %v2317, %v2617
        %v2696 = vadd.f32 %v2318, %v2619
        %v2697 = vadd.f32 %v2319, %v2621
        %v2698 = vadd.f32 %v2320, %v2623
        %v2699 = vadd.f32 %v2321, %v2627
        %v2700 = vadd.f32 %v2322, %v2629
        %v2701 = vadd.f32 %v2323, %v2631
        %v2702 = vadd.f32 %v2324, %v2633
        %v2703 = vadd.f32 %v2325, %v2637
        %v2704 = vadd.f32 %v2326, %v2639
        %v2705 = vadd.f32 %v2327, %v2641
        %v2706 = vadd.f32 %v2328, %v2643
        %v2707 = vadd.f32 %v2329, %v2647
        %v2708 = vadd.f32 %v2330, %v2649
        %v2709 = vadd.f32 %v2331, %v2651
        %v2710 = vadd.f32 %v2332, %v2653
        %v2711 = vadd.f32 %v2333, %v2657
        %v2712 = vadd.f32 %v2334, %v2659
        %v2713 = vadd.f32 %v2335, %v2661
        %v2714 = vadd.f32 %v2336, %v2663
        %v2715 = vadd.f32 %v2337, %v2667
        %v2716 = vadd.f32 %v2338, %v2669
        %v2717 = vadd.f32 %v2339, %v2671
        %v2718 = vadd.f32 %v2340, %v2673
        %v2719 = vadd.f32 %v2341, %v2677
        %v2720 = vadd.f32 %v2342, %v2679
        %v2721 = vadd.f32 %v2343, %v2681
        %v2722 = vadd.f32 %v2344, %v2683
        %v2723 = vadd.f32 %v2345, %v2687
        %v2724 = vadd.f32 %v2346, %v2689
        %v2725 = vadd.f32 %v2347, %v2691
        %v2726 = vadd.f32 %v2348, %v2693
        %2759 = vrot.lane.b32.xlu0 %v2695, 32
        %v2760 = vpop.permute.xlu0 %2759
        %2761 = vrot.lane.b32.xlu0 %v2696, 32
        %v2762 = vpop.permute.xlu0 %2761
        %2763 = vrot.lane.b32.xlu0 %v2697, 32
        %v2764 = vpop.permute.xlu0 %2763
        %2765 = vrot.lane.b32.xlu0 %v2698, 32
        %v2766 = vpop.permute.xlu0 %2765
        %2767 = vrot.lane.b32.xlu0 %v2699, 32
        %v2768 = vpop.permute.xlu0 %2767
        %2769 = vrot.lane.b32.xlu0 %v2700, 32
        %v2770 = vpop.permute.xlu0 %2769
        %2771 = vrot.lane.b32.xlu0 %v2701, 32
        %v2772 = vpop.permute.xlu0 %2771
        %2773 = vrot.lane.b32.xlu0 %v2702, 32
        %v2774 = vpop.permute.xlu0 %2773
        %2775 = vrot.lane.b32.xlu0 %v2703, 32
        %v2776 = vpop.permute.xlu0 %2775
        %2777 = vrot.lane.b32.xlu0 %v2704, 32
        %v2778 = vpop.permute.xlu0 %2777
        %2779 = vrot.lane.b32.xlu0 %v2705, 32
        %v2780 = vpop.permute.xlu0 %2779
        %2781 = vrot.lane.b32.xlu0 %v2706, 32
        %v2782 = vpop.permute.xlu0 %2781
        %2783 = vrot.lane.b32.xlu0 %v2707, 32
        %v2784 = vpop.permute.xlu0 %2783
        %2785 = vrot.lane.b32.xlu0 %v2708, 32
        %v2786 = vpop.permute.xlu0 %2785
        %2787 = vrot.lane.b32.xlu0 %v2709, 32
        %v2788 = vpop.permute.xlu0 %2787
        %2789 = vrot.lane.b32.xlu0 %v2710, 32
        %v2790 = vpop.permute.xlu0 %2789
        %2791 = vrot.lane.b32.xlu0 %v2711, 32
        %v2792 = vpop.permute.xlu0 %2791
        %2793 = vrot.lane.b32.xlu0 %v2712, 32
        %v2794 = vpop.permute.xlu0 %2793
        %2795 = vrot.lane.b32.xlu0 %v2713, 32
        %v2796 = vpop.permute.xlu0 %2795
        %2797 = vrot.lane.b32.xlu0 %v2714, 32
        %v2798 = vpop.permute.xlu0 %2797
        %2799 = vrot.lane.b32.xlu0 %v2715, 32
        %v2800 = vpop.permute.xlu0 %2799
        %2801 = vrot.lane.b32.xlu0 %v2716, 32
        %v2802 = vpop.permute.xlu0 %2801
        %2803 = vrot.lane.b32.xlu0 %v2717, 32
        %v2804 = vpop.permute.xlu0 %2803
        %2805 = vrot.lane.b32.xlu0 %v2718, 32
        %v2806 = vpop.permute.xlu0 %2805
        %2807 = vrot.lane.b32.xlu0 %v2719, 32
        %v2808 = vpop.permute.xlu0 %2807
        %2809 = vrot.lane.b32.xlu0 %v2720, 32
        %v2810 = vpop.permute.xlu0 %2809
        %2811 = vrot.lane.b32.xlu0 %v2721, 32
        %v2812 = vpop.permute.xlu0 %2811
        %2813 = vrot.lane.b32.xlu0 %v2722, 32
        %v2814 = vpop.permute.xlu0 %2813
        %2815 = vrot.lane.b32.xlu0 %v2723, 32
        %v2816 = vpop.permute.xlu0 %2815
        %2817 = vrot.lane.b32.xlu0 %v2724, 32
        %v2818 = vpop.permute.xlu0 %2817
        %2819 = vrot.lane.b32.xlu0 %v2725, 32
        %v2820 = vpop.permute.xlu0 %2819
        %2821 = vrot.lane.b32.xlu0 %v2726, 32
        %v2822 = vpop.permute.xlu0 %2821
        %vm2823 = vcmask 261120
        %v2824 = vsel %vm2823, %v2760, %v2762
        %v2825 = vsel %vm2823, %v2764, %v2766
        %v2826 = vsel %vm2823, %v2768, %v2770
        %v2827 = vsel %vm2823, %v2772, %v2774
        %v2828 = vsel %vm2823, %v2776, %v2778
        %v2829 = vsel %vm2823, %v2780, %v2782
        %v2830 = vsel %vm2823, %v2784, %v2786
        %v2831 = vsel %vm2823, %v2788, %v2790
        %v2832 = vsel %vm2823, %v2792, %v2794
        %v2833 = vsel %vm2823, %v2796, %v2798
        %v2834 = vsel %vm2823, %v2800, %v2802
        %v2835 = vsel %vm2823, %v2804, %v2806
        %v2836 = vsel %vm2823, %v2808, %v2810
        %v2837 = vsel %vm2823, %v2812, %v2814
        %v2838 = vsel %vm2823, %v2816, %v2818
        %v2839 = vsel %vm2823, %v2820, %v2822
        %v2856 = vmax.f32 %v2695, %v2824
        %v2857 = vmax.f32 %v2697, %v2825
        %v2858 = vmax.f32 %v2699, %v2826
        %v2859 = vmax.f32 %v2701, %v2827
        %v2860 = vmax.f32 %v2703, %v2828
        %v2861 = vmax.f32 %v2705, %v2829
        %v2862 = vmax.f32 %v2707, %v2830
        %v2863 = vmax.f32 %v2709, %v2831
        %v2864 = vmax.f32 %v2711, %v2832
        %v2865 = vmax.f32 %v2713, %v2833
        %v2866 = vmax.f32 %v2715, %v2834
        %v2867 = vmax.f32 %v2717, %v2835
        %v2868 = vmax.f32 %v2719, %v2836
        %v2869 = vmax.f32 %v2721, %v2837
        %v2870 = vmax.f32 %v2723, %v2838
        %v2871 = vmax.f32 %v2725, %v2839
        %v2872 = vld [vmem:[%s2] sm:$0x1]
        %v2874 = vlaneseq
        %v2875 = vshrl.u32 %v2874, 7
        %v2876 = vsub.s32 0, %v2875
        %v2877 = vrot.slane %v2872, %v2876
        %v2879 = vadd.f32 %v2856, %v2877
        %v2880 = vadd.f32 %v2857, %v2877
        %v2881 = vadd.f32 %v2858, %v2877
        %v2882 = vadd.f32 %v2859, %v2877
        %v2883 = vadd.f32 %v2860, %v2877
        %v2884 = vadd.f32 %v2861, %v2877
        %v2885 = vadd.f32 %v2862, %v2877
        %v2886 = vadd.f32 %v2863, %v2877
        %v2887 = vadd.f32 %v2864, %v2877
        %v2888 = vadd.f32 %v2865, %v2877
        %v2889 = vadd.f32 %v2866, %v2877
        %v2890 = vadd.f32 %v2867, %v2877
        %v2891 = vadd.f32 %v2868, %v2877
        %v2892 = vadd.f32 %v2869, %v2877
        %v2893 = vadd.f32 %v2870, %v2877
        %v2894 = vadd.f32 %v2871, %v2877
        %v2895 = vmax.f32 %v2879, 0.0
        %v2896 = vmax.f32 %v2880, 0.0
        %v2897 = vmax.f32 %v2881, 0.0
        %v2898 = vmax.f32 %v2882, 0.0
        %v2899 = vmax.f32 %v2883, 0.0
        %v2900 = vmax.f32 %v2884, 0.0
        %v2901 = vmax.f32 %v2885, 0.0
        %v2902 = vmax.f32 %v2886, 0.0
        %v2903 = vmax.f32 %v2887, 0.0
        %v2904 = vmax.f32 %v2888, 0.0
        %v2905 = vmax.f32 %v2889, 0.0
        %v2906 = vmax.f32 %v2890, 0.0
        %v2907 = vmax.f32 %v2891, 0.0
        %v2908 = vmax.f32 %v2892, 0.0
        %v2909 = vmax.f32 %v2893, 0.0
        %v2910 = vmax.f32 %v2894, 0.0
        %v2911 = vpack.c.bf16 %v2896, %v2895
        %v2912 = vpack.c.bf16 %v2898, %v2897
        %v2913 = vpack.c.bf16 %v2900, %v2899
        %v2914 = vpack.c.bf16 %v2902, %v2901
        %v2915 = vpack.c.bf16 %v2904, %v2903
        %v2916 = vpack.c.bf16 %v2906, %v2905
        %v2917 = vpack.c.bf16 %v2908, %v2907
        %v2918 = vpack.c.bf16 %v2910, %v2909
        %s2919 = scalar_lea.vmem %s464, 264
        %v2920 = vld [vmem:[%s2919] sm:$0xff]
        %v2921 = vld [vmem:[%s2919 + $0x8] sm:$0xff]
        %v2922 = vld [vmem:[%s2919 + $0x10] sm:$0xff]
        %v2923 = vld [vmem:[%s2919 + $0x18] sm:$0xff]
        %v2924 = vld [vmem:[%s2919 + $0x20] sm:$0xff]
        %v2925 = vld [vmem:[%s2919 + $0x28] sm:$0xff]
        %v2926 = vld [vmem:[%s2919 + $0x30] sm:$0xff]
        %v2927 = vld [vmem:[%s2919 + $0x38] sm:$0xff]
        %v2928 = vld [vmem:[%s2919 + $0x40] sm:$0xff]
        %v2929 = vld [vmem:[%s2919 + $0x48] sm:$0xff]
        %v2930 = vld [vmem:[%s2919 + $0x50] sm:$0xff]
        %v2931 = vld [vmem:[%s2919 + $0x58] sm:$0xff]
        %v2932 = vld [vmem:[%s2919 + $0x60] sm:$0xff]
        %v2933 = vld [vmem:[%s2919 + $0x68] sm:$0xff]
        %v2934 = vld [vmem:[%s2919 + $0x70] sm:$0xff]
        %v2935 = vld [vmem:[%s2919 + $0x78] sm:$0xff]
        %v2936 = vld [vmem:[%s2919 + $0x80] sm:$0xee]
        %v2937 = vld [vmem:[%s2919 + $0x88] sm:$0xff]
        %v2938 = vld [vmem:[%s2919 + $0x90] sm:$0xff]
        %v2939 = vld [vmem:[%s2919 + $0x98] sm:$0xff]
        %v2940 = vld [vmem:[%s2919 + $0xa0] sm:$0xff]
        %v2941 = vld [vmem:[%s2919 + $0xa8] sm:$0xff]
        %v2942 = vld [vmem:[%s2919 + $0xb0] sm:$0xff]
        %v2943 = vld [vmem:[%s2919 + $0xb8] sm:$0xff]
        %v2944 = vld [vmem:[%s2919 + $0xc0] sm:$0xff]
        %v2945 = vld [vmem:[%s2919 + $0xc8] sm:$0xff]
        %v2946 = vld [vmem:[%s2919 + $0xd0] sm:$0xff]
        %v2947 = vld [vmem:[%s2919 + $0xd8] sm:$0xff]
        %v2948 = vld [vmem:[%s2919 + $0xe0] sm:$0xff]
        %v2949 = vld [vmem:[%s2919 + $0xe8] sm:$0xff]
        %v2950 = vld [vmem:[%s2919 + $0xf0] sm:$0xff]
        %v2951 = vld [vmem:[%s2919 + $0xf8] sm:$0xff]
        %v2952 = vld [vmem:[%s2919 + $0x100] sm:$0x11]
        %v2970 = vunpack.c.l.b16 %v2936
        %v2971 = vunpack.c.h.b16 %v2936
        %v2972 = vunpack.c.l.b16 %v2937
        %v2973 = vunpack.c.h.b16 %v2937
        %v2974 = vunpack.c.l.b16 %v2938
        %v2975 = vunpack.c.h.b16 %v2938
        %v2976 = vunpack.c.l.b16 %v2939
        %v2977 = vunpack.c.h.b16 %v2939
        %v2978 = vunpack.c.l.b16 %v2940
        %v2979 = vunpack.c.h.b16 %v2940
        %v2980 = vunpack.c.l.b16 %v2941
        %v2981 = vunpack.c.h.b16 %v2941
        %v2982 = vunpack.c.l.b16 %v2942
        %v2983 = vunpack.c.h.b16 %v2942
        %v2984 = vunpack.c.l.b16 %v2943
        %v2985 = vunpack.c.h.b16 %v2943
        %v2986 = vunpack.c.l.b16 %v2944
        %v2987 = vunpack.c.h.b16 %v2944
        %v2988 = vunpack.c.l.b16 %v2945
        %v2989 = vunpack.c.h.b16 %v2945
        %v2990 = vunpack.c.l.b16 %v2946
        %v2991 = vunpack.c.h.b16 %v2946
        %v2992 = vunpack.c.l.b16 %v2947
        %v2993 = vunpack.c.h.b16 %v2947
        %v2994 = vunpack.c.l.b16 %v2948
        %v2995 = vunpack.c.h.b16 %v2948
        %v2996 = vunpack.c.l.b16 %v2949
        %v2997 = vunpack.c.h.b16 %v2949
        %v2998 = vunpack.c.l.b16 %v2950
        %v2999 = vunpack.c.h.b16 %v2950
        %v3000 = vunpack.c.l.b16 %v2951
        %v3001 = vunpack.c.h.b16 %v2951
        %v3002 = vunpack.c.l.b16 %v2952
        %v3003 = vunpack.c.h.b16 %v2952
        %v3004 = vpack.c.b16 %v2972, %v2970
        %v3005 = vpack.c.b16 %v2973, %v2971
        %v3006 = vpack.c.b16 %v2976, %v2974
        %v3007 = vpack.c.b16 %v2977, %v2975
        %v3008 = vpack.c.b16 %v2980, %v2978
        %v3009 = vpack.c.b16 %v2981, %v2979
        %v3010 = vpack.c.b16 %v2984, %v2982
        %v3011 = vpack.c.b16 %v2985, %v2983
        %v3012 = vpack.c.b16 %v2988, %v2986
        %v3013 = vpack.c.b16 %v2989, %v2987
        %v3014 = vpack.c.b16 %v2992, %v2990
        %v3015 = vpack.c.b16 %v2993, %v2991
        %v3016 = vpack.c.b16 %v2996, %v2994
        %v3017 = vpack.c.b16 %v2997, %v2995
        %v3018 = vpack.c.b16 %v3000, %v2998
        %v3019 = vpack.c.b16 %v3001, %v2999
        %v3020 = vpack.c.b16 %v3002, %v3002
        %v3021 = vpack.c.b16 %v3003, %v3003
        %v3022 = vrot.slane %v3004, 1
        %v3023 = vrot.slane %v3006, 1
        %v3024 = vsel %vm621, %v3022, %v3023
        %v3025 = vrot.slane %v3005, 1
        %v3026 = vrot.slane %v3007, 1
        %v3027 = vsel %vm621, %v3025, %v3026
        %v3028 = vrot.slane %v3008, 1
        %v3029 = vsel %vm621, %v3023, %v3028
        %v3030 = vrot.slane %v3009, 1
        %v3031 = vsel %vm621, %v3026, %v3030
        %v3032 = vrot.slane %v3010, 1
        %v3033 = vsel %vm621, %v3028, %v3032
        %v3034 = vrot.slane %v3011, 1
        %v3035 = vsel %vm621, %v3030, %v3034
        %v3036 = vrot.slane %v3012, 1
        %v3037 = vsel %vm621, %v3032, %v3036
        %v3038 = vrot.slane %v3013, 1
        %v3039 = vsel %vm621, %v3034, %v3038
        %v3040 = vrot.slane %v3014, 1
        %v3041 = vsel %vm621, %v3036, %v3040
        %v3042 = vrot.slane %v3015, 1
        %v3043 = vsel %vm621, %v3038, %v3042
        %v3044 = vrot.slane %v3016, 1
        %v3045 = vsel %vm621, %v3040, %v3044
        %v3046 = vrot.slane %v3017, 1
        %v3047 = vsel %vm621, %v3042, %v3046
        %v3048 = vrot.slane %v3018, 1
        %v3049 = vsel %vm621, %v3044, %v3048
        %v3050 = vrot.slane %v3019, 1
        %v3051 = vsel %vm621, %v3046, %v3050
        %v3052 = vrot.slane %v3020, 1
        %v3053 = vsel %vm621, %v3048, %v3052
        %v3054 = vrot.slane %v3021, 1
        %v3055 = vsel %vm621, %v3050, %v3054
        %v3065 = vsel %vm792, %v3027, 0
        %v3068 = vsel %vm792, %v3031, 0
        %v3071 = vsel %vm792, %v3035, 0
        %v3074 = vsel %vm792, %v3039, 0
        %v3077 = vsel %vm792, %v3043, 0
        %v3080 = vsel %vm792, %v3047, 0
        %v3083 = vsel %vm792, %v3051, 0
        %v3086 = vsel %vm792, %v3055, 0
        %3088 = vmatprep.subr.bf16.mxu0 %v743
        %3089 = vmatpush1.bf16.msra.mxu0 %v742
        %3090 = vmatprep.subr.bf16.mxu0 %v745
        %3091 = vmatpush1.bf16.msra.mxu0 %v744
        %3092 = vmatprep.subr.bf16.mxu0 %v747
        %3093 = vmatpush1.bf16.msra.mxu0 %v746
        %3094 = vmatprep.subr.bf16.mxu0 %v749
        %3095 = vmatpush1.bf16.msra.mxu0 %v748
        %3096 = vmatprep.subr.bf16.mxu0 %v751
        %3097 = vmatpush1.bf16.msra.mxu0 %v750
        %3098 = vmatprep.subr.bf16.mxu0 %v753
        %3099 = vmatpush1.bf16.msra.mxu0 %v752
        %3100 = vmatprep.subr.bf16.mxu0 %v755
        %3101 = vmatpush1.bf16.msra.mxu0 %v754
        %3102 = vmatprep.subr.bf16.mxu0 %v757
        %3103 = vmatpush1.bf16.msra.mxu0 %v756
        %3104 = vmatprep.subr.bf16.mxu0 %v759
        %3105 = vmatpush1.bf16.msra.mxu0 %v758
        %3106 = vmatprep.subr.bf16.mxu0 %v761
        %3107 = vmatpush1.bf16.msra.mxu0 %v760
        %3108 = vmatprep.subr.bf16.mxu0 %v763
        %3109 = vmatpush1.bf16.msra.mxu0 %v762
        %3110 = vmatprep.subr.bf16.mxu0 %v765
        %3111 = vmatpush1.bf16.msra.mxu0 %v764
        %3112 = vmatprep.subr.bf16.mxu0 %v825
        %3113 = vmatpush1.bf16.msra.mxu0 %v822
        %3114 = vmatprep.subr.bf16.mxu0 0
        %3115 = vmatpush1.bf16.msra.mxu0 0
        %3116 = vmatprep.subr.bf16.mxu0 0
        %3117 = vmatpush1.bf16.msra.mxu0 0
        %3118 = vmatprep.subr.bf16.mxu0 0
        %3119 = vmatpush1.bf16.msra.mxu0 0
        %3120 = vmatprep.mubr.bf16.mxu0 %v3065
        %3121 = vmatmul.mubr.bf16.gmra.mrb[0].mxu0 %v3024
        %v3122 = vpop.f32.mrb[0].mxu0
        %v3123 = vadd.f32 0.0, %v3122
        %v3124 = vpop.f32.mrb[0].mxu0
        %v3125 = vadd.f32 0.0, %v3124
        %v3126 = vpop.f32.mrb[0].mxu0
        %v3127 = vadd.f32 0.0, %v3126
        %v3128 = vpop.f32.mrb[0].mxu0
        %v3129 = vadd.f32 0.0, %v3128
        %3130 = vmatprep.mubr.bf16.mxu0 %v3068
        %3131 = vmatmul.mubr.bf16.gmra.mrb[0].mxu0 %v3029
        %v3132 = vpop.f32.mrb[0].mxu0
        %v3133 = vadd.f32 0.0, %v3132
        %v3134 = vpop.f32.mrb[0].mxu0
        %v3135 = vadd.f32 0.0, %v3134
        %v3136 = vpop.f32.mrb[0].mxu0
        %v3137 = vadd.f32 0.0, %v3136
        %v3138 = vpop.f32.mrb[0].mxu0
        %v3139 = vadd.f32 0.0, %v3138
        %3140 = vmatprep.mubr.bf16.mxu0 %v3071
        %3141 = vmatmul.mubr.bf16.gmra.mrb[0].mxu0 %v3033
        %v3142 = vpop.f32.mrb[0].mxu0
        %v3143 = vadd.f32 0.0, %v3142
        %v3144 = vpop.f32.mrb[0].mxu0
        %v3145 = vadd.f32 0.0, %v3144
        %v3146 = vpop.f32.mrb[0].mxu0
        %v3147 = vadd.f32 0.0, %v3146
        %v3148 = vpop.f32.mrb[0].mxu0
        %v3149 = vadd.f32 0.0, %v3148
        %3150 = vmatprep.mubr.bf16.mxu0 %v3074
        %3151 = vmatmul.mubr.bf16.gmra.mrb[0].mxu0 %v3037
        %v3152 = vpop.f32.mrb[0].mxu0
        %v3153 = vadd.f32 0.0, %v3152
        %v3154 = vpop.f32.mrb[0].mxu0
        %v3155 = vadd.f32 0.0, %v3154
        %v3156 = vpop.f32.mrb[0].mxu0
        %v3157 = vadd.f32 0.0, %v3156
        %v3158 = vpop.f32.mrb[0].mxu0
        %v3159 = vadd.f32 0.0, %v3158
        %3160 = vmatprep.mubr.bf16.mxu0 %v3077
        %3161 = vmatmul.mubr.bf16.gmra.mrb[0].mxu0 %v3041
        %v3162 = vpop.f32.mrb[0].mxu0
        %v3163 = vadd.f32 0.0, %v3162
        %v3164 = vpop.f32.mrb[0].mxu0
        %v3165 = vadd.f32 0.0, %v3164
        %v3166 = vpop.f32.mrb[0].mxu0
        %v3167 = vadd.f32 0.0, %v3166
        %v3168 = vpop.f32.mrb[0].mxu0
        %v3169 = vadd.f32 0.0, %v3168
        %3170 = vmatprep.mubr.bf16.mxu0 %v3080
        %3171 = vmatmul.mubr.bf16.gmra.mrb[0].mxu0 %v3045
        %v3172 = vpop.f32.mrb[0].mxu0
        %v3173 = vadd.f32 0.0, %v3172
        %v3174 = vpop.f32.mrb[0].mxu0
        %v3175 = vadd.f32 0.0, %v3174
        %v3176 = vpop.f32.mrb[0].mxu0
        %v3177 = vadd.f32 0.0, %v3176
        %v3178 = vpop.f32.mrb[0].mxu0
        %v3179 = vadd.f32 0.0, %v3178
        %3180 = vmatprep.mubr.bf16.mxu0 %v3083
        %3181 = vmatmul.mubr.bf16.gmra.mrb[0].mxu0 %v3049
        %v3182 = vpop.f32.mrb[0].mxu0
        %v3183 = vadd.f32 0.0, %v3182
        %v3184 = vpop.f32.mrb[0].mxu0
        %v3185 = vadd.f32 0.0, %v3184
        %v3186 = vpop.f32.mrb[0].mxu0
        %v3187 = vadd.f32 0.0, %v3186
        %v3188 = vpop.f32.mrb[0].mxu0
        %v3189 = vadd.f32 0.0, %v3188
        %3190 = vmatprep.mubr.bf16.mxu0 %v3086
        %3191 = vmatmul.mubr.bf16.gmra.mrb[0].mxu0 %v3053
        %v3192 = vpop.f32.mrb[0].mxu0
        %v3193 = vadd.f32 0.0, %v3192
        %v3194 = vpop.f32.mrb[0].mxu0
        %v3195 = vadd.f32 0.0, %v3194
        %v3196 = vpop.f32.mrb[0].mxu0
        %v3197 = vadd.f32 0.0, %v3196
        %v3198 = vpop.f32.mrb[0].mxu0
        %v3199 = vadd.f32 0.0, %v3198
        %3200 = vdwg.mxu0
        %v3217 = vunpack.c.l.b16 %v2920
        %v3218 = vunpack.c.h.b16 %v2920
        %v3219 = vunpack.c.l.b16 %v2921
        %v3220 = vunpack.c.h.b16 %v2921
        %v3221 = vunpack.c.l.b16 %v2922
        %v3222 = vunpack.c.h.b16 %v2922
        %v3223 = vunpack.c.l.b16 %v2923
        %v3224 = vunpack.c.h.b16 %v2923
        %v3225 = vunpack.c.l.b16 %v2924
        %v3226 = vunpack.c.h.b16 %v2924
        %v3227 = vunpack.c.l.b16 %v2925
        %v3228 = vunpack.c.h.b16 %v2925
        %v3229 = vunpack.c.l.b16 %v2926
        %v3230 = vunpack.c.h.b16 %v2926
        %v3231 = vunpack.c.l.b16 %v2927
        %v3232 = vunpack.c.h.b16 %v2927
        %v3233 = vunpack.c.l.b16 %v2928
        %v3234 = vunpack.c.h.b16 %v2928
        %v3235 = vunpack.c.l.b16 %v2929
        %v3236 = vunpack.c.h.b16 %v2929
        %v3237 = vunpack.c.l.b16 %v2930
        %v3238 = vunpack.c.h.b16 %v2930
        %v3239 = vunpack.c.l.b16 %v2931
        %v3240 = vunpack.c.h.b16 %v2931
        %v3241 = vunpack.c.l.b16 %v2932
        %v3242 = vunpack.c.h.b16 %v2932
        %v3243 = vunpack.c.l.b16 %v2933
        %v3244 = vunpack.c.h.b16 %v2933
        %v3245 = vunpack.c.l.b16 %v2934
        %v3246 = vunpack.c.h.b16 %v2934
        %v3247 = vunpack.c.l.b16 %v2935
        %v3248 = vunpack.c.h.b16 %v2935
        %v3249 = vpack.c.b16 %v3219, %v3217
        %v3250 = vpack.c.b16 %v3220, %v3218
        %v3251 = vpack.c.b16 %v3223, %v3221
        %v3252 = vpack.c.b16 %v3224, %v3222
        %v3253 = vpack.c.b16 %v3227, %v3225
        %v3254 = vpack.c.b16 %v3228, %v3226
        %v3255 = vpack.c.b16 %v3231, %v3229
        %v3256 = vpack.c.b16 %v3232, %v3230
        %v3257 = vpack.c.b16 %v3235, %v3233
        %v3258 = vpack.c.b16 %v3236, %v3234
        %v3259 = vpack.c.b16 %v3239, %v3237
        %v3260 = vpack.c.b16 %v3240, %v3238
        %v3261 = vpack.c.b16 %v3243, %v3241
        %v3262 = vpack.c.b16 %v3244, %v3242
        %v3263 = vpack.c.b16 %v3247, %v3245
        %v3264 = vpack.c.b16 %v3248, %v3246
        %v3274 = vsel %vm792, %v3250, 0
        %v3277 = vsel %vm792, %v3252, 0
        %v3280 = vsel %vm792, %v3254, 0
        %v3283 = vsel %vm792, %v3256, 0
        %v3286 = vsel %vm792, %v3258, 0
        %v3289 = vsel %vm792, %v3260, 0
        %v3292 = vsel %vm792, %v3262, 0
        %v3295 = vsel %vm792, %v3264, 0
        %3297 = vmatprep.subr.bf16.mxu0 %v1091
        %3298 = vmatpush1.bf16.msra.mxu0 %v1090
        %3299 = vmatprep.subr.bf16.mxu0 %v1093
        %3300 = vmatpush1.bf16.msra.mxu0 %v1092
        %3301 = vmatprep.subr.bf16.mxu0 %v1095
        %3302 = vmatpush1.bf16.msra.mxu0 %v1094
        %3303 = vmatprep.subr.bf16.mxu0 %v1097
        %3304 = vmatpush1.bf16.msra.mxu0 %v1096
        %3305 = vmatprep.subr.bf16.mxu0 %v1099
        %3306 = vmatpush1.bf16.msra.mxu0 %v1098
        %3307 = vmatprep.subr.bf16.mxu0 %v1101
        %3308 = vmatpush1.bf16.msra.mxu0 %v1100
        %3309 = vmatprep.subr.bf16.mxu0 %v1103
        %3310 = vmatpush1.bf16.msra.mxu0 %v1102
        %3311 = vmatprep.subr.bf16.mxu0 %v1105
        %3312 = vmatpush1.bf16.msra.mxu0 %v1104
        %3313 = vmatprep.subr.bf16.mxu0 %v1107
        %3314 = vmatpush1.bf16.msra.mxu0 %v1106
        %3315 = vmatprep.subr.bf16.mxu0 %v1109
        %3316 = vmatpush1.bf16.msra.mxu0 %v1108
        %3317 = vmatprep.subr.bf16.mxu0 %v1111
        %3318 = vmatpush1.bf16.msra.mxu0 %v1110
        %3319 = vmatprep.subr.bf16.mxu0 %v1113
        %3320 = vmatpush1.bf16.msra.mxu0 %v1112
        %3321 = vmatprep.subr.bf16.mxu0 %v1168
        %3322 = vmatpush1.bf16.msra.mxu0 %v1165
        %3323 = vmatprep.subr.bf16.mxu0 0
        %3324 = vmatpush1.bf16.msra.mxu0 0
        %3325 = vmatprep.subr.bf16.mxu0 0
        %3326 = vmatpush1.bf16.msra.mxu0 0
        %3327 = vmatprep.subr.bf16.mxu0 0
        %3328 = vmatpush1.bf16.msra.mxu0 0
        %3329 = vmatprep.mubr.bf16.mxu0 %v3274
        %3330 = vmatmul.mubr.bf16.gmra.mrb[0].mxu0 %v3249
        %v3331 = vpop.f32.mrb[0].mxu0
        %v3332 = vadd.f32 %v3123, %v3331
        %v3333 = vpop.f32.mrb[0].mxu0
        %v3334 = vadd.f32 %v3125, %v3333
        %v3335 = vpop.f32.mrb[0].mxu0
        %v3336 = vadd.f32 %v3127, %v3335
        %v3337 = vpop.f32.mrb[0].mxu0
        %v3338 = vadd.f32 %v3129, %v3337
        %3339 = vmatprep.mubr.bf16.mxu0 %v3277
        %3340 = vmatmul.mubr.bf16.gmra.mrb[0].mxu0 %v3251
        %v3341 = vpop.f32.mrb[0].mxu0
        %v3342 = vadd.f32 %v3133, %v3341
        %v3343 = vpop.f32.mrb[0].mxu0
        %v3344 = vadd.f32 %v3135, %v3343
        %v3345 = vpop.f32.mrb[0].mxu0
        %v3346 = vadd.f32 %v3137, %v3345
        %v3347 = vpop.f32.mrb[0].mxu0
        %v3348 = vadd.f32 %v3139, %v3347
        %3349 = vmatprep.mubr.bf16.mxu0 %v3280
        %3350 = vmatmul.mubr.bf16.gmra.mrb[0].mxu0 %v3253
        %v3351 = vpop.f32.mrb[0].mxu0
        %v3352 = vadd.f32 %v3143, %v3351
        %v3353 = vpop.f32.mrb[0].mxu0
        %v3354 = vadd.f32 %v3145, %v3353
        %v3355 = vpop.f32.mrb[0].mxu0
        %v3356 = vadd.f32 %v3147, %v3355
        %v3357 = vpop.f32.mrb[0].mxu0
        %v3358 = vadd.f32 %v3149, %v3357
        %3359 = vmatprep.mubr.bf16.mxu0 %v3283
        %3360 = vmatmul.mubr.bf16.gmra.mrb[0].mxu0 %v3255
        %v3361 = vpop.f32.mrb[0].mxu0
        %v3362 = vadd.f32 %v3153, %v3361
        %v3363 = vpop.f32.mrb[0].mxu0
        %v3364 = vadd.f32 %v3155, %v3363
        %v3365 = vpop.f32.mrb[0].mxu0
        %v3366 = vadd.f32 %v3157, %v3365
        %v3367 = vpop.f32.mrb[0].mxu0
        %v3368 = vadd.f32 %v3159, %v3367
        %3369 = vmatprep.mubr.bf16.mxu0 %v3286
        %3370 = vmatmul.mubr.bf16.gmra.mrb[0].mxu0 %v3257
        %v3371 = vpop.f32.mrb[0].mxu0
        %v3372 = vadd.f32 %v3163, %v3371
        %v3373 = vpop.f32.mrb[0].mxu0
        %v3374 = vadd.f32 %v3165, %v3373
        %v3375 = vpop.f32.mrb[0].mxu0
        %v3376 = vadd.f32 %v3167, %v3375
        %v3377 = vpop.f32.mrb[0].mxu0
        %v3378 = vadd.f32 %v3169, %v3377
        %3379 = vmatprep.mubr.bf16.mxu0 %v3289
        %3380 = vmatmul.mubr.bf16.gmra.mrb[0].mxu0 %v3259
        %v3381 = vpop.f32.mrb[0].mxu0
        %v3382 = vadd.f32 %v3173, %v3381
        %v3383 = vpop.f32.mrb[0].mxu0
        %v3384 = vadd.f32 %v3175, %v3383
        %v3385 = vpop.f32.mrb[0].mxu0
        %v3386 = vadd.f32 %v3177, %v3385
        %v3387 = vpop.f32.mrb[0].mxu0
        %v3388 = vadd.f32 %v3179, %v3387
        %3389 = vmatprep.mubr.bf16.mxu0 %v3292
        %3390 = vmatmul.mubr.bf16.gmra.mrb[0].mxu0 %v3261
        %v3391 = vpop.f32.mrb[0].mxu0
        %v3392 = vadd.f32 %v3183, %v3391
        %v3393 = vpop.f32.mrb[0].mxu0
        %v3394 = vadd.f32 %v3185, %v3393
        %v3395 = vpop.f32.mrb[0].mxu0
        %v3396 = vadd.f32 %v3187, %v3395
        %v3397 = vpop.f32.mrb[0].mxu0
        %v3398 = vadd.f32 %v3189, %v3397
        %3399 = vmatprep.mubr.bf16.mxu0 %v3295
        %3400 = vmatmul.mubr.bf16.gmra.mrb[0].mxu0 %v3263
        %v3401 = vpop.f32.mrb[0].mxu0
        %v3402 = vadd.f32 %v3193, %v3401
        %v3403 = vpop.f32.mrb[0].mxu0
        %v3404 = vadd.f32 %v3195, %v3403
        %v3405 = vpop.f32.mrb[0].mxu0
        %v3406 = vadd.f32 %v3197, %v3405
        %v3407 = vpop.f32.mrb[0].mxu0
        %v3408 = vadd.f32 %v3199, %v3407
        %3409 = vdwg.mxu0
        %v3410 = vld [vmem:[%s2919] sm:$0xff]
        %v3411 = vld [vmem:[%s2919 + $0x8] sm:$0xff]
        %v3412 = vld [vmem:[%s2919 + $0x10] sm:$0xff]
        %v3413 = vld [vmem:[%s2919 + $0x18] sm:$0xff]
        %v3414 = vld [vmem:[%s2919 + $0x20] sm:$0xff]
        %v3415 = vld [vmem:[%s2919 + $0x28] sm:$0xff]
        %v3416 = vld [vmem:[%s2919 + $0x30] sm:$0xff]
        %v3417 = vld [vmem:[%s2919 + $0x38] sm:$0xff]
        %v3418 = vld [vmem:[%s2919 + $0x40] sm:$0xff]
        %v3419 = vld [vmem:[%s2919 + $0x48] sm:$0xff]
        %v3420 = vld [vmem:[%s2919 + $0x50] sm:$0xff]
        %v3421 = vld [vmem:[%s2919 + $0x58] sm:$0xff]
        %v3422 = vld [vmem:[%s2919 + $0x60] sm:$0xff]
        %v3423 = vld [vmem:[%s2919 + $0x68] sm:$0xff]
        %v3424 = vld [vmem:[%s2919 + $0x70] sm:$0xff]
        %v3425 = vld [vmem:[%s2919 + $0x78] sm:$0xff]
        %v3426 = vld [vmem:[%s2919 + $0x80] sm:$0x11]
        %v3444 = vunpack.c.l.b16 %v3410
        %v3445 = vunpack.c.h.b16 %v3410
        %v3446 = vunpack.c.l.b16 %v3411
        %v3447 = vunpack.c.h.b16 %v3411
        %v3448 = vunpack.c.l.b16 %v3412
        %v3449 = vunpack.c.h.b16 %v3412
        %v3450 = vunpack.c.l.b16 %v3413
        %v3451 = vunpack.c.h.b16 %v3413
        %v3452 = vunpack.c.l.b16 %v3414
        %v3453 = vunpack.c.h.b16 %v3414
        %v3454 = vunpack.c.l.b16 %v3415
        %v3455 = vunpack.c.h.b16 %v3415
        %v3456 = vunpack.c.l.b16 %v3416
        %v3457 = vunpack.c.h.b16 %v3416
        %v3458 = vunpack.c.l.b16 %v3417
        %v3459 = vunpack.c.h.b16 %v3417
        %v3460 = vunpack.c.l.b16 %v3418
        %v3461 = vunpack.c.h.b16 %v3418
        %v3462 = vunpack.c.l.b16 %v3419
        %v3463 = vunpack.c.h.b16 %v3419
        %v3464 = vunpack.c.l.b16 %v3420
        %v3465 = vunpack.c.h.b16 %v3420
        %v3466 = vunpack.c.l.b16 %v3421
        %v3467 = vunpack.c.h.b16 %v3421
        %v3468 = vunpack.c.l.b16 %v3422
        %v3469 = vunpack.c.h.b16 %v3422
        %v3470 = vunpack.c.l.b16 %v3423
        %v3471 = vunpack.c.h.b16 %v3423
        %v3472 = vunpack.c.l.b16 %v3424
        %v3473 = vunpack.c.h.b16 %v3424
        %v3474 = vunpack.c.l.b16 %v3425
        %v3475 = vunpack.c.h.b16 %v3425
        %v3476 = vunpack.c.l.b16 %v3426
        %v3477 = vunpack.c.h.b16 %v3426
        %v3478 = vpack.c.b16 %v3446, %v3444
        %v3479 = vpack.c.b16 %v3447, %v3445
        %v3480 = vpack.c.b16 %v3450, %v3448
        %v3481 = vpack.c.b16 %v3451, %v3449
        %v3482 = vpack.c.b16 %v3454, %v3452
        %v3483 = vpack.c.b16 %v3455, %v3453
        %v3484 = vpack.c.b16 %v3458, %v3456
        %v3485 = vpack.c.b16 %v3459, %v3457
        %v3486 = vpack.c.b16 %v3462, %v3460
        %v3487 = vpack.c.b16 %v3463, %v3461
        %v3488 = vpack.c.b16 %v3466, %v3464
        %v3489 = vpack.c.b16 %v3467, %v3465
        %v3490 = vpack.c.b16 %v3470, %v3468
        %v3491 = vpack.c.b16 %v3471, %v3469
        %v3492 = vpack.c.b16 %v3474, %v3472
        %v3493 = vpack.c.b16 %v3475, %v3473
        %v3494 = vpack.c.b16 %v3476, %v3476
        %v3495 = vpack.c.b16 %v3477, %v3477
        %v3497 = vshrl.u32 %v3478, 16
        %v3499 = vshll.u32 %v3478, 16
        %v3501 = vrot.slane %v3499, 1
        %v3502 = vor.u32 %v3497, %v3501
        %v3504 = vshll.u32 %v3480, 16
        %v3506 = vrot.slane %v3504, 1
        %v3507 = vsel %vm1396, %v3502, %v3506
        %v3509 = vshrl.u32 %v3479, 16
        %v3511 = vshll.u32 %v3479, 16
        %v3513 = vrot.slane %v3511, 1
        %v3514 = vor.u32 %v3509, %v3513
        %v3516 = vshll.u32 %v3481, 16
        %v3518 = vrot.slane %v3516, 1
        %v3519 = vsel %vm1396, %v3514, %v3518
        %v3520 = vshrl.u32 %v3480, 16
        %v3522 = vor.u32 %v3520, %v3506
        %v3524 = vshll.u32 %v3482, 16
        %v3526 = vrot.slane %v3524, 1
        %v3527 = vsel %vm1396, %v3522, %v3526
        %v3528 = vshrl.u32 %v3481, 16
        %v3530 = vor.u32 %v3528, %v3518
        %v3532 = vshll.u32 %v3483, 16
        %v3534 = vrot.slane %v3532, 1
        %v3535 = vsel %vm1396, %v3530, %v3534
        %v3536 = vshrl.u32 %v3482, 16
        %v3538 = vor.u32 %v3536, %v3526
        %v3540 = vshll.u32 %v3484, 16
        %v3542 = vrot.slane %v3540, 1
        %v3543 = vsel %vm1396, %v3538, %v3542
        %v3544 = vshrl.u32 %v3483, 16
        %v3546 = vor.u32 %v3544, %v3534
        %v3548 = vshll.u32 %v3485, 16
        %v3550 = vrot.slane %v3548, 1
        %v3551 = vsel %vm1396, %v3546, %v3550
        %v3552 = vshrl.u32 %v3484, 16
        %v3554 = vor.u32 %v3552, %v3542
        %v3556 = vshll.u32 %v3486, 16
        %v3558 = vrot.slane %v3556, 1
        %v3559 = vsel %vm1396, %v3554, %v3558
        %v3560 = vshrl.u32 %v3485, 16
        %v3562 = vor.u32 %v3560, %v3550
        %v3564 = vshll.u32 %v3487, 16
        %v3566 = vrot.slane %v3564, 1
        %v3567 = vsel %vm1396, %v3562, %v3566
        %v3568 = vshrl.u32 %v3486, 16
        %v3570 = vor.u32 %v3568, %v3558
        %v3572 = vshll.u32 %v3488, 16
        %v3574 = vrot.slane %v3572, 1
        %v3575 = vsel %vm1396, %v3570, %v3574
        %v3576 = vshrl.u32 %v3487, 16
        %v3578 = vor.u32 %v3576, %v3566
        %v3580 = vshll.u32 %v3489, 16
        %v3582 = vrot.slane %v3580, 1
        %v3583 = vsel %vm1396, %v3578, %v3582
        %v3584 = vshrl.u32 %v3488, 16
        %v3586 = vor.u32 %v3584, %v3574
        %v3588 = vshll.u32 %v3490, 16
        %v3590 = vrot.slane %v3588, 1
        %v3591 = vsel %vm1396, %v3586, %v3590
        %v3592 = vshrl.u32 %v3489, 16
        %v3594 = vor.u32 %v3592, %v3582
        %v3596 = vshll.u32 %v3491, 16
        %v3598 = vrot.slane %v3596, 1
        %v3599 = vsel %vm1396, %v3594, %v3598
        %v3600 = vshrl.u32 %v3490, 16
        %v3602 = vor.u32 %v3600, %v3590
        %v3604 = vshll.u32 %v3492, 16
        %v3606 = vrot.slane %v3604, 1
        %v3607 = vsel %vm1396, %v3602, %v3606
        %v3608 = vshrl.u32 %v3491, 16
        %v3610 = vor.u32 %v3608, %v3598
        %v3612 = vshll.u32 %v3493, 16
        %v3614 = vrot.slane %v3612, 1
        %v3615 = vsel %vm1396, %v3610, %v3614
        %v3616 = vshrl.u32 %v3492, 16
        %v3618 = vor.u32 %v3616, %v3606
        %v3620 = vshll.u32 %v3494, 16
        %v3622 = vrot.slane %v3620, 1
        %v3623 = vsel %vm1396, %v3618, %v3622
        %v3624 = vshrl.u32 %v3493, 16
        %v3626 = vor.u32 %v3624, %v3614
        %v3628 = vshll.u32 %v3495, 16
        %v3630 = vrot.slane %v3628, 1
        %v3631 = vsel %vm1396, %v3626, %v3630
        %v3641 = vsel %vm792, %v3519, 0
        %v3644 = vsel %vm792, %v3535, 0
        %v3647 = vsel %vm792, %v3551, 0
        %v3650 = vsel %vm792, %v3567, 0
        %v3653 = vsel %vm792, %v3583, 0
        %v3656 = vsel %vm792, %v3599, 0
        %v3659 = vsel %vm792, %v3615, 0
        %v3662 = vsel %vm792, %v3631, 0
        %3664 = vmatprep.subr.bf16.mxu0 %v1620
        %3665 = vmatpush1.bf16.msra.mxu0 %v1619
        %3666 = vmatprep.subr.bf16.mxu0 %v1622
        %3667 = vmatpush1.bf16.msra.mxu0 %v1621
        %3668 = vmatprep.subr.bf16.mxu0 %v1624
        %3669 = vmatpush1.bf16.msra.mxu0 %v1623
        %3670 = vmatprep.subr.bf16.mxu0 %v1626
        %3671 = vmatpush1.bf16.msra.mxu0 %v1625
        %3672 = vmatprep.subr.bf16.mxu0 %v1628
        %3673 = vmatpush1.bf16.msra.mxu0 %v1627
        %3674 = vmatprep.subr.bf16.mxu0 %v1630
        %3675 = vmatpush1.bf16.msra.mxu0 %v1629
        %3676 = vmatprep.subr.bf16.mxu0 %v1632
        %3677 = vmatpush1.bf16.msra.mxu0 %v1631
        %3678 = vmatprep.subr.bf16.mxu0 %v1634
        %3679 = vmatpush1.bf16.msra.mxu0 %v1633
        %3680 = vmatprep.subr.bf16.mxu0 %v1636
        %3681 = vmatpush1.bf16.msra.mxu0 %v1635
        %3682 = vmatprep.subr.bf16.mxu0 %v1638
        %3683 = vmatpush1.bf16.msra.mxu0 %v1637
        %3684 = vmatprep.subr.bf16.mxu0 %v1640
        %3685 = vmatpush1.bf16.msra.mxu0 %v1639
        %3686 = vmatprep.subr.bf16.mxu0 %v1642
        %3687 = vmatpush1.bf16.msra.mxu0 %v1641
        %3688 = vmatprep.subr.bf16.mxu0 %v1697
        %3689 = vmatpush1.bf16.msra.mxu0 %v1694
        %3690 = vmatprep.subr.bf16.mxu0 0
        %3691 = vmatpush1.bf16.msra.mxu0 0
        %3692 = vmatprep.subr.bf16.mxu0 0
        %3693 = vmatpush1.bf16.msra.mxu0 0
        %3694 = vmatprep.subr.bf16.mxu0 0
        %3695 = vmatpush1.bf16.msra.mxu0 0
        %3696 = vmatprep.mubr.bf16.mxu0 %v3641
        %3697 = vmatmul.mubr.bf16.gmra.mrb[0].mxu0 %v3507
        %v3698 = vpop.f32.mrb[0].mxu0
        %v3699 = vadd.f32 0.0, %v3698
        %v3700 = vpop.f32.mrb[0].mxu0
        %v3701 = vadd.f32 0.0, %v3700
        %v3702 = vpop.f32.mrb[0].mxu0
        %v3703 = vadd.f32 0.0, %v3702
        %v3704 = vpop.f32.mrb[0].mxu0
        %v3705 = vadd.f32 0.0, %v3704
        %3706 = vmatprep.mubr.bf16.mxu0 %v3644
        %3707 = vmatmul.mubr.bf16.gmra.mrb[0].mxu0 %v3527
        %v3708 = vpop.f32.mrb[0].mxu0
        %v3709 = vadd.f32 0.0, %v3708
        %v3710 = vpop.f32.mrb[0].mxu0
        %v3711 = vadd.f32 0.0, %v3710
        %v3712 = vpop.f32.mrb[0].mxu0
        %v3713 = vadd.f32 0.0, %v3712
        %v3714 = vpop.f32.mrb[0].mxu0
        %v3715 = vadd.f32 0.0, %v3714
        %3716 = vmatprep.mubr.bf16.mxu0 %v3647
        %3717 = vmatmul.mubr.bf16.gmra.mrb[0].mxu0 %v3543
        %v3718 = vpop.f32.mrb[0].mxu0
        %v3719 = vadd.f32 0.0, %v3718
        %v3720 = vpop.f32.mrb[0].mxu0
        %v3721 = vadd.f32 0.0, %v3720
        %v3722 = vpop.f32.mrb[0].mxu0
        %v3723 = vadd.f32 0.0, %v3722
        %v3724 = vpop.f32.mrb[0].mxu0
        %v3725 = vadd.f32 0.0, %v3724
        %3726 = vmatprep.mubr.bf16.mxu0 %v3650
        %3727 = vmatmul.mubr.bf16.gmra.mrb[0].mxu0 %v3559
        %v3728 = vpop.f32.mrb[0].mxu0
        %v3729 = vadd.f32 0.0, %v3728
        %v3730 = vpop.f32.mrb[0].mxu0
        %v3731 = vadd.f32 0.0, %v3730
        %v3732 = vpop.f32.mrb[0].mxu0
        %v3733 = vadd.f32 0.0, %v3732
        %v3734 = vpop.f32.mrb[0].mxu0
        %v3735 = vadd.f32 0.0, %v3734
        %3736 = vmatprep.mubr.bf16.mxu0 %v3653
        %3737 = vmatmul.mubr.bf16.gmra.mrb[0].mxu0 %v3575
        %v3738 = vpop.f32.mrb[0].mxu0
        %v3739 = vadd.f32 0.0, %v3738
        %v3740 = vpop.f32.mrb[0].mxu0
        %v3741 = vadd.f32 0.0, %v3740
        %v3742 = vpop.f32.mrb[0].mxu0
        %v3743 = vadd.f32 0.0, %v3742
        %v3744 = vpop.f32.mrb[0].mxu0
        %v3745 = vadd.f32 0.0, %v3744
        %3746 = vmatprep.mubr.bf16.mxu0 %v3656
        %3747 = vmatmul.mubr.bf16.gmra.mrb[0].mxu0 %v3591
        %v3748 = vpop.f32.mrb[0].mxu0
        %v3749 = vadd.f32 0.0, %v3748
        %v3750 = vpop.f32.mrb[0].mxu0
        %v3751 = vadd.f32 0.0, %v3750
        %v3752 = vpop.f32.mrb[0].mxu0
        %v3753 = vadd.f32 0.0, %v3752
        %v3754 = vpop.f32.mrb[0].mxu0
        %v3755 = vadd.f32 0.0, %v3754
        %3756 = vmatprep.mubr.bf16.mxu0 %v3659
        %3757 = vmatmul.mubr.bf16.gmra.mrb[0].mxu0 %v3607
        %v3758 = vpop.f32.mrb[0].mxu0
        %v3759 = vadd.f32 0.0, %v3758
        %v3760 = vpop.f32.mrb[0].mxu0
        %v3761 = vadd.f32 0.0, %v3760
        %v3762 = vpop.f32.mrb[0].mxu0
        %v3763 = vadd.f32 0.0, %v3762
        %v3764 = vpop.f32.mrb[0].mxu0
        %v3765 = vadd.f32 0.0, %v3764
        %3766 = vmatprep.mubr.bf16.mxu0 %v3662
        %3767 = vmatmul.mubr.bf16.gmra.mrb[0].mxu0 %v3623
        %v3768 = vpop.f32.mrb[0].mxu0
        %v3769 = vadd.f32 0.0, %v3768
        %v3770 = vpop.f32.mrb[0].mxu0
        %v3771 = vadd.f32 0.0, %v3770
        %v3772 = vpop.f32.mrb[0].mxu0
        %v3773 = vadd.f32 0.0, %v3772
        %v3774 = vpop.f32.mrb[0].mxu0
        %v3775 = vadd.f32 0.0, %v3774
        %3776 = vdwg.mxu0
        %v3777 = vadd.f32 %v3332, %v3699
        %v3778 = vadd.f32 %v3334, %v3701
        %v3779 = vadd.f32 %v3336, %v3703
        %v3780 = vadd.f32 %v3338, %v3705
        %v3781 = vadd.f32 %v3342, %v3709
        %v3782 = vadd.f32 %v3344, %v3711
        %v3783 = vadd.f32 %v3346, %v3713
        %v3784 = vadd.f32 %v3348, %v3715
        %v3785 = vadd.f32 %v3352, %v3719
        %v3786 = vadd.f32 %v3354, %v3721
        %v3787 = vadd.f32 %v3356, %v3723
        %v3788 = vadd.f32 %v3358, %v3725
        %v3789 = vadd.f32 %v3362, %v3729
        %v3790 = vadd.f32 %v3364, %v3731
        %v3791 = vadd.f32 %v3366, %v3733
        %v3792 = vadd.f32 %v3368, %v3735
        %v3793 = vadd.f32 %v3372, %v3739
        %v3794 = vadd.f32 %v3374, %v3741
        %v3795 = vadd.f32 %v3376, %v3743
        %v3796 = vadd.f32 %v3378, %v3745
        %v3797 = vadd.f32 %v3382, %v3749
        %v3798 = vadd.f32 %v3384, %v3751
        %v3799 = vadd.f32 %v3386, %v3753
        %v3800 = vadd.f32 %v3388, %v3755
        %v3801 = vadd.f32 %v3392, %v3759
        %v3802 = vadd.f32 %v3394, %v3761
        %v3803 = vadd.f32 %v3396, %v3763
        %v3804 = vadd.f32 %v3398, %v3765
        %v3805 = vadd.f32 %v3402, %v3769
        %v3806 = vadd.f32 %v3404, %v3771
        %v3807 = vadd.f32 %v3406, %v3773
        %v3808 = vadd.f32 %v3408, %v3775
        %v3809 = vld [vmem:[%s2919 + $0x100] sm:$0x33]
        %v3811 = vunpack.c.l.b16 %v3809
        %v3812 = vunpack.c.h.b16 %v3809
        %v3813 = vpack.c.b16 %v3811, %v3811
        %v3814 = vpack.c.b16 %v3812, %v3812
        %v3816 = vshrl.u32 %v3004, 16
        %v3818 = vrot.slane %v3816, 1
        %v3819 = vshll.u32 %v3004, 16
        %v3821 = vrot.slane %v3819, 2
        %v3822 = vor.u32 %v3818, %v3821
        %v3824 = vshrl.u32 %v3006, 16
        %v3826 = vrot.slane %v3824, 1
        %v3827 = vshll.u32 %v3006, 16
        %v3829 = vrot.slane %v3827, 2
        %v3830 = vor.u32 %v3826, %v3829
        %v3831 = vsel %vm1877, %v3822, %v3830
        %v3833 = vshrl.u32 %v3005, 16
        %v3835 = vrot.slane %v3833, 1
        %v3836 = vshll.u32 %v3005, 16
        %v3838 = vrot.slane %v3836, 2
        %v3839 = vor.u32 %v3835, %v3838
        %v3841 = vshrl.u32 %v3007, 16
        %v3843 = vrot.slane %v3841, 1
        %v3844 = vshll.u32 %v3007, 16
        %v3846 = vrot.slane %v3844, 2
        %v3847 = vor.u32 %v3843, %v3846
        %v3848 = vsel %vm1877, %v3839, %v3847
        %v3850 = vshrl.u32 %v3008, 16
        %v3852 = vrot.slane %v3850, 1
        %v3853 = vshll.u32 %v3008, 16
        %v3855 = vrot.slane %v3853, 2
        %v3856 = vor.u32 %v3852, %v3855
        %v3857 = vsel %vm1877, %v3830, %v3856
        %v3859 = vshrl.u32 %v3009, 16
        %v3861 = vrot.slane %v3859, 1
        %v3862 = vshll.u32 %v3009, 16
        %v3864 = vrot.slane %v3862, 2
        %v3865 = vor.u32 %v3861, %v3864
        %v3866 = vsel %vm1877, %v3847, %v3865
        %v3868 = vshrl.u32 %v3010, 16
        %v3870 = vrot.slane %v3868, 1
        %v3871 = vshll.u32 %v3010, 16
        %v3873 = vrot.slane %v3871, 2
        %v3874 = vor.u32 %v3870, %v3873
        %v3875 = vsel %vm1877, %v3856, %v3874
        %v3877 = vshrl.u32 %v3011, 16
        %v3879 = vrot.slane %v3877, 1
        %v3880 = vshll.u32 %v3011, 16
        %v3882 = vrot.slane %v3880, 2
        %v3883 = vor.u32 %v3879, %v3882
        %v3884 = vsel %vm1877, %v3865, %v3883
        %v3886 = vshrl.u32 %v3012, 16
        %v3888 = vrot.slane %v3886, 1
        %v3889 = vshll.u32 %v3012, 16
        %v3891 = vrot.slane %v3889, 2
        %v3892 = vor.u32 %v3888, %v3891
        %v3893 = vsel %vm1877, %v3874, %v3892
        %v3895 = vshrl.u32 %v3013, 16
        %v3897 = vrot.slane %v3895, 1
        %v3898 = vshll.u32 %v3013, 16
        %v3900 = vrot.slane %v3898, 2
        %v3901 = vor.u32 %v3897, %v3900
        %v3902 = vsel %vm1877, %v3883, %v3901
        %v3904 = vshrl.u32 %v3014, 16
        %v3906 = vrot.slane %v3904, 1
        %v3907 = vshll.u32 %v3014, 16
        %v3909 = vrot.slane %v3907, 2
        %v3910 = vor.u32 %v3906, %v3909
        %v3911 = vsel %vm1877, %v3892, %v3910
        %v3913 = vshrl.u32 %v3015, 16
        %v3915 = vrot.slane %v3913, 1
        %v3916 = vshll.u32 %v3015, 16
        %v3918 = vrot.slane %v3916, 2
        %v3919 = vor.u32 %v3915, %v3918
        %v3920 = vsel %vm1877, %v3901, %v3919
        %v3922 = vshrl.u32 %v3016, 16
        %v3924 = vrot.slane %v3922, 1
        %v3925 = vshll.u32 %v3016, 16
        %v3927 = vrot.slane %v3925, 2
        %v3928 = vor.u32 %v3924, %v3927
        %v3929 = vsel %vm1877, %v3910, %v3928
        %v3931 = vshrl.u32 %v3017, 16
        %v3933 = vrot.slane %v3931, 1
        %v3934 = vshll.u32 %v3017, 16
        %v3936 = vrot.slane %v3934, 2
        %v3937 = vor.u32 %v3933, %v3936
        %v3938 = vsel %vm1877, %v3919, %v3937
        %v3940 = vshrl.u32 %v3018, 16
        %v3942 = vrot.slane %v3940, 1
        %v3943 = vshll.u32 %v3018, 16
        %v3945 = vrot.slane %v3943, 2
        %v3946 = vor.u32 %v3942, %v3945
        %v3947 = vsel %vm1877, %v3928, %v3946
        %v3949 = vshrl.u32 %v3019, 16
        %v3951 = vrot.slane %v3949, 1
        %v3952 = vshll.u32 %v3019, 16
        %v3954 = vrot.slane %v3952, 2
        %v3955 = vor.u32 %v3951, %v3954
        %v3956 = vsel %vm1877, %v3937, %v3955
        %v3958 = vshrl.u32 %v3813, 16
        %v3960 = vrot.slane %v3958, 1
        %v3961 = vshll.u32 %v3813, 16
        %v3963 = vrot.slane %v3961, 2
        %v3964 = vor.u32 %v3960, %v3963
        %v3965 = vsel %vm1877, %v3946, %v3964
        %v3967 = vshrl.u32 %v3814, 16
        %v3969 = vrot.slane %v3967, 1
        %v3970 = vshll.u32 %v3814, 16
        %v3972 = vrot.slane %v3970, 2
        %v3973 = vor.u32 %v3969, %v3972
        %v3974 = vsel %vm1877, %v3955, %v3973
        %v3984 = vsel %vm792, %v3848, 0
        %v3987 = vsel %vm792, %v3866, 0
        %v3990 = vsel %vm792, %v3884, 0
        %v3993 = vsel %vm792, %v3902, 0
        %v3996 = vsel %vm792, %v3920, 0
        %v3999 = vsel %vm792, %v3938, 0
        %v4002 = vsel %vm792, %v3956, 0
        %v4005 = vsel %vm792, %v3974, 0
        %4007 = vmatprep.subr.bf16.mxu0 %v2125
        %4008 = vmatpush1.bf16.msra.mxu0 %v2124
        %4009 = vmatprep.subr.bf16.mxu0 %v2127
        %4010 = vmatpush1.bf16.msra.mxu0 %v2126
        %4011 = vmatprep.subr.bf16.mxu0 %v2129
        %4012 = vmatpush1.bf16.msra.mxu0 %v2128
        %4013 = vmatprep.subr.bf16.mxu0 %v2131
        %4014 = vmatpush1.bf16.msra.mxu0 %v2130
        %4015 = vmatprep.subr.bf16.mxu0 %v2133
        %4016 = vmatpush1.bf16.msra.mxu0 %v2132
        %4017 = vmatprep.subr.bf16.mxu0 %v2135
        %4018 = vmatpush1.bf16.msra.mxu0 %v2134
        %4019 = vmatprep.subr.bf16.mxu0 %v2137
        %4020 = vmatpush1.bf16.msra.mxu0 %v2136
        %4021 = vmatprep.subr.bf16.mxu0 %v2139
        %4022 = vmatpush1.bf16.msra.mxu0 %v2138
        %4023 = vmatprep.subr.bf16.mxu0 %v2141
        %4024 = vmatpush1.bf16.msra.mxu0 %v2140
        %4025 = vmatprep.subr.bf16.mxu0 %v2143
        %4026 = vmatpush1.bf16.msra.mxu0 %v2142
        %4027 = vmatprep.subr.bf16.mxu0 %v2145
        %4028 = vmatpush1.bf16.msra.mxu0 %v2144
        %4029 = vmatprep.subr.bf16.mxu0 %v2147
        %4030 = vmatpush1.bf16.msra.mxu0 %v2146
        %4031 = vmatprep.subr.bf16.mxu0 %v2202
        %4032 = vmatpush1.bf16.msra.mxu0 %v2199
        %4033 = vmatprep.subr.bf16.mxu0 0
        %4034 = vmatpush1.bf16.msra.mxu0 0
        %4035 = vmatprep.subr.bf16.mxu0 0
        %4036 = vmatpush1.bf16.msra.mxu0 0
        %4037 = vmatprep.subr.bf16.mxu0 0
        %4038 = vmatpush1.bf16.msra.mxu0 0
        %4039 = vmatprep.mubr.bf16.mxu0 %v3984
        %4040 = vmatmul.mubr.bf16.gmra.mrb[0].mxu0 %v3831
        %v4041 = vpop.f32.mrb[0].mxu0
        %v4042 = vadd.f32 0.0, %v4041
        %v4043 = vpop.f32.mrb[0].mxu0
        %v4044 = vadd.f32 0.0, %v4043
        %v4045 = vpop.f32.mrb[0].mxu0
        %v4046 = vadd.f32 0.0, %v4045
        %v4047 = vpop.f32.mrb[0].mxu0
        %v4048 = vadd.f32 0.0, %v4047
        %4049 = vmatprep.mubr.bf16.mxu0 %v3987
        %4050 = vmatmul.mubr.bf16.gmra.mrb[0].mxu0 %v3857
        %v4051 = vpop.f32.mrb[0].mxu0
        %v4052 = vadd.f32 0.0, %v4051
        %v4053 = vpop.f32.mrb[0].mxu0
        %v4054 = vadd.f32 0.0, %v4053
        %v4055 = vpop.f32.mrb[0].mxu0
        %v4056 = vadd.f32 0.0, %v4055
        %v4057 = vpop.f32.mrb[0].mxu0
        %v4058 = vadd.f32 0.0, %v4057
        %4059 = vmatprep.mubr.bf16.mxu0 %v3990
        %4060 = vmatmul.mubr.bf16.gmra.mrb[0].mxu0 %v3875
        %v4061 = vpop.f32.mrb[0].mxu0
        %v4062 = vadd.f32 0.0, %v4061
        %v4063 = vpop.f32.mrb[0].mxu0
        %v4064 = vadd.f32 0.0, %v4063
        %v4065 = vpop.f32.mrb[0].mxu0
        %v4066 = vadd.f32 0.0, %v4065
        %v4067 = vpop.f32.mrb[0].mxu0
        %v4068 = vadd.f32 0.0, %v4067
        %4069 = vmatprep.mubr.bf16.mxu0 %v3993
        %4070 = vmatmul.mubr.bf16.gmra.mrb[0].mxu0 %v3893
        %v4071 = vpop.f32.mrb[0].mxu0
        %v4072 = vadd.f32 0.0, %v4071
        %v4073 = vpop.f32.mrb[0].mxu0
        %v4074 = vadd.f32 0.0, %v4073
        %v4075 = vpop.f32.mrb[0].mxu0
        %v4076 = vadd.f32 0.0, %v4075
        %v4077 = vpop.f32.mrb[0].mxu0
        %v4078 = vadd.f32 0.0, %v4077
        %4079 = vmatprep.mubr.bf16.mxu0 %v3996
        %4080 = vmatmul.mubr.bf16.gmra.mrb[0].mxu0 %v3911
        %v4081 = vpop.f32.mrb[0].mxu0
        %v4082 = vadd.f32 0.0, %v4081
        %v4083 = vpop.f32.mrb[0].mxu0
        %v4084 = vadd.f32 0.0, %v4083
        %v4085 = vpop.f32.mrb[0].mxu0
        %v4086 = vadd.f32 0.0, %v4085
        %v4087 = vpop.f32.mrb[0].mxu0
        %v4088 = vadd.f32 0.0, %v4087
        %4089 = vmatprep.mubr.bf16.mxu0 %v3999
        %4090 = vmatmul.mubr.bf16.gmra.mrb[0].mxu0 %v3929
        %v4091 = vpop.f32.mrb[0].mxu0
        %v4092 = vadd.f32 0.0, %v4091
        %v4093 = vpop.f32.mrb[0].mxu0
        %v4094 = vadd.f32 0.0, %v4093
        %v4095 = vpop.f32.mrb[0].mxu0
        %v4096 = vadd.f32 0.0, %v4095
        %v4097 = vpop.f32.mrb[0].mxu0
        %v4098 = vadd.f32 0.0, %v4097
        %4099 = vmatprep.mubr.bf16.mxu0 %v4002
        %4100 = vmatmul.mubr.bf16.gmra.mrb[0].mxu0 %v3947
        %v4101 = vpop.f32.mrb[0].mxu0
        %v4102 = vadd.f32 0.0, %v4101
        %v4103 = vpop.f32.mrb[0].mxu0
        %v4104 = vadd.f32 0.0, %v4103
        %v4105 = vpop.f32.mrb[0].mxu0
        %v4106 = vadd.f32 0.0, %v4105
        %v4107 = vpop.f32.mrb[0].mxu0
        %v4108 = vadd.f32 0.0, %v4107
        %4109 = vmatprep.mubr.bf16.mxu0 %v4005
        %4110 = vmatmul.mubr.bf16.gmra.mrb[0].mxu0 %v3965
        %v4111 = vpop.f32.mrb[0].mxu0
        %v4112 = vadd.f32 0.0, %v4111
        %v4113 = vpop.f32.mrb[0].mxu0
        %v4114 = vadd.f32 0.0, %v4113
        %v4115 = vpop.f32.mrb[0].mxu0
        %v4116 = vadd.f32 0.0, %v4115
        %v4117 = vpop.f32.mrb[0].mxu0
        %v4118 = vadd.f32 0.0, %v4117
        %4119 = vdwg.mxu0
        %v4120 = vadd.f32 %v3777, %v4042
        %v4121 = vadd.f32 %v3778, %v4044
        %v4122 = vadd.f32 %v3779, %v4046
        %v4123 = vadd.f32 %v3780, %v4048
        %v4124 = vadd.f32 %v3781, %v4052
        %v4125 = vadd.f32 %v3782, %v4054
        %v4126 = vadd.f32 %v3783, %v4056
        %v4127 = vadd.f32 %v3784, %v4058
        %v4128 = vadd.f32 %v3785, %v4062
        %v4129 = vadd.f32 %v3786, %v4064
        %v4130 = vadd.f32 %v3787, %v4066
        %v4131 = vadd.f32 %v3788, %v4068
        %v4132 = vadd.f32 %v3789, %v4072
        %v4133 = vadd.f32 %v3790, %v4074
        %v4134 = vadd.f32 %v3791, %v4076
        %v4135 = vadd.f32 %v3792, %v4078
        %v4136 = vadd.f32 %v3793, %v4082
        %v4137 = vadd.f32 %v3794, %v4084
        %v4138 = vadd.f32 %v3795, %v4086
        %v4139 = vadd.f32 %v3796, %v4088
        %v4140 = vadd.f32 %v3797, %v4092
        %v4141 = vadd.f32 %v3798, %v4094
        %v4142 = vadd.f32 %v3799, %v4096
        %v4143 = vadd.f32 %v3800, %v4098
        %v4144 = vadd.f32 %v3801, %v4102
        %v4145 = vadd.f32 %v3802, %v4104
        %v4146 = vadd.f32 %v3803, %v4106
        %v4147 = vadd.f32 %v3804, %v4108
        %v4148 = vadd.f32 %v3805, %v4112
        %v4149 = vadd.f32 %v3806, %v4114
        %v4150 = vadd.f32 %v3807, %v4116
        %v4151 = vadd.f32 %v3808, %v4118
        %v4152 = vld [vmem:[%s2919] sm:$0xee]
        %v4154 = vunpack.c.l.b16 %v4152
        %v4155 = vunpack.c.h.b16 %v4152
        %v4156 = vpack.c.b16 %v3446, %v4154
        %v4157 = vpack.c.b16 %v3447, %v4155
        %v4158 = vrot.slane %v4156, 1
        %v4159 = vrot.slane %v3480, 1
        %v4160 = vsel %vm621, %v4158, %v4159
        %v4161 = vrot.slane %v4157, 1
        %v4162 = vrot.slane %v3481, 1
        %v4163 = vsel %vm621, %v4161, %v4162
        %v4164 = vrot.slane %v3482, 1
        %v4165 = vsel %vm621, %v4159, %v4164
        %v4166 = vrot.slane %v3483, 1
        %v4167 = vsel %vm621, %v4162, %v4166
        %v4168 = vrot.slane %v3484, 1
        %v4169 = vsel %vm621, %v4164, %v4168
        %v4170 = vrot.slane %v3485, 1
        %v4171 = vsel %vm621, %v4166, %v4170
        %v4172 = vrot.slane %v3486, 1
        %v4173 = vsel %vm621, %v4168, %v4172
        %v4174 = vrot.slane %v3487, 1
        %v4175 = vsel %vm621, %v4170, %v4174
        %v4176 = vrot.slane %v3488, 1
        %v4177 = vsel %vm621, %v4172, %v4176
        %v4178 = vrot.slane %v3489, 1
        %v4179 = vsel %vm621, %v4174, %v4178
        %v4180 = vrot.slane %v3490, 1
        %v4181 = vsel %vm621, %v4176, %v4180
        %v4182 = vrot.slane %v3491, 1
        %v4183 = vsel %vm621, %v4178, %v4182
        %v4184 = vrot.slane %v3492, 1
        %v4185 = vsel %vm621, %v4180, %v4184
        %v4186 = vrot.slane %v3493, 1
        %v4187 = vsel %vm621, %v4182, %v4186
        %v4188 = vrot.slane %v3494, 1
        %v4189 = vsel %vm621, %v4184, %v4188
        %v4190 = vrot.slane %v3495, 1
        %v4191 = vsel %vm621, %v4186, %v4190
        %v4201 = vsel %vm792, %v4163, 0
        %v4204 = vsel %vm792, %v4167, 0
        %v4207 = vsel %vm792, %v4171, 0
        %v4210 = vsel %vm792, %v4175, 0
        %v4213 = vsel %vm792, %v4179, 0
        %v4216 = vsel %vm792, %v4183, 0
        %v4219 = vsel %vm792, %v4187, 0
        %v4222 = vsel %vm792, %v4191, 0
        %4224 = vmatprep.subr.bf16.mxu0 %v2503
        %4225 = vmatpush1.bf16.msra.mxu0 %v2502
        %4226 = vmatprep.subr.bf16.mxu0 %v2505
        %4227 = vmatpush1.bf16.msra.mxu0 %v2504
        %4228 = vmatprep.subr.bf16.mxu0 %v2507
        %4229 = vmatpush1.bf16.msra.mxu0 %v2506
        %4230 = vmatprep.subr.bf16.mxu0 %v2509
        %4231 = vmatpush1.bf16.msra.mxu0 %v2508
        %4232 = vmatprep.subr.bf16.mxu0 %v2511
        %4233 = vmatpush1.bf16.msra.mxu0 %v2510
        %4234 = vmatprep.subr.bf16.mxu0 %v2513
        %4235 = vmatpush1.bf16.msra.mxu0 %v2512
        %4236 = vmatprep.subr.bf16.mxu0 %v2515
        %4237 = vmatpush1.bf16.msra.mxu0 %v2514
        %4238 = vmatprep.subr.bf16.mxu0 %v2517
        %4239 = vmatpush1.bf16.msra.mxu0 %v2516
        %4240 = vmatprep.subr.bf16.mxu0 %v2519
        %4241 = vmatpush1.bf16.msra.mxu0 %v2518
        %4242 = vmatprep.subr.bf16.mxu0 %v2521
        %4243 = vmatpush1.bf16.msra.mxu0 %v2520
        %4244 = vmatprep.subr.bf16.mxu0 %v2523
        %4245 = vmatpush1.bf16.msra.mxu0 %v2522
        %4246 = vmatprep.subr.bf16.mxu0 %v2525
        %4247 = vmatpush1.bf16.msra.mxu0 %v2524
        %4248 = vmatprep.subr.bf16.mxu0 %v2580
        %4249 = vmatpush1.bf16.msra.mxu0 %v2577
        %4250 = vmatprep.subr.bf16.mxu0 0
        %4251 = vmatpush1.bf16.msra.mxu0 0
        %4252 = vmatprep.subr.bf16.mxu0 0
        %4253 = vmatpush1.bf16.msra.mxu0 0
        %4254 = vmatprep.subr.bf16.mxu0 0
        %4255 = vmatpush1.bf16.msra.mxu0 0
        %4256 = vmatprep.mubr.bf16.mxu0 %v4201
        %4257 = vmatmul.mubr.bf16.gmra.mrb[0].mxu0 %v4160
        %v4258 = vpop.f32.mrb[0].mxu0
        %v4259 = vadd.f32 0.0, %v4258
        %v4260 = vpop.f32.mrb[0].mxu0
        %v4261 = vadd.f32 0.0, %v4260
        %v4262 = vpop.f32.mrb[0].mxu0
        %v4263 = vadd.f32 0.0, %v4262
        %v4264 = vpop.f32.mrb[0].mxu0
        %v4265 = vadd.f32 0.0, %v4264
        %4266 = vmatprep.mubr.bf16.mxu0 %v4204
        %4267 = vmatmul.mubr.bf16.gmra.mrb[0].mxu0 %v4165
        %v4268 = vpop.f32.mrb[0].mxu0
        %v4269 = vadd.f32 0.0, %v4268
        %v4270 = vpop.f32.mrb[0].mxu0
        %v4271 = vadd.f32 0.0, %v4270
        %v4272 = vpop.f32.mrb[0].mxu0
        %v4273 = vadd.f32 0.0, %v4272
        %v4274 = vpop.f32.mrb[0].mxu0
        %v4275 = vadd.f32 0.0, %v4274
        %4276 = vmatprep.mubr.bf16.mxu0 %v4207
        %4277 = vmatmul.mubr.bf16.gmra.mrb[0].mxu0 %v4169
        %v4278 = vpop.f32.mrb[0].mxu0
        %v4279 = vadd.f32 0.0, %v4278
        %v4280 = vpop.f32.mrb[0].mxu0
        %v4281 = vadd.f32 0.0, %v4280
        %v4282 = vpop.f32.mrb[0].mxu0
        %v4283 = vadd.f32 0.0, %v4282
        %v4284 = vpop.f32.mrb[0].mxu0
        %v4285 = vadd.f32 0.0, %v4284
        %4286 = vmatprep.mubr.bf16.mxu0 %v4210
        %4287 = vmatmul.mubr.bf16.gmra.mrb[0].mxu0 %v4173
        %v4288 = vpop.f32.mrb[0].mxu0
        %v4289 = vadd.f32 0.0, %v4288
        %v4290 = vpop.f32.mrb[0].mxu0
        %v4291 = vadd.f32 0.0, %v4290
        %v4292 = vpop.f32.mrb[0].mxu0
        %v4293 = vadd.f32 0.0, %v4292
        %v4294 = vpop.f32.mrb[0].mxu0
        %v4295 = vadd.f32 0.0, %v4294
        %4296 = vmatprep.mubr.bf16.mxu0 %v4213
        %4297 = vmatmul.mubr.bf16.gmra.mrb[0].mxu0 %v4177
        %v4298 = vpop.f32.mrb[0].mxu0
        %v4299 = vadd.f32 0.0, %v4298
        %v4300 = vpop.f32.mrb[0].mxu0
        %v4301 = vadd.f32 0.0, %v4300
        %v4302 = vpop.f32.mrb[0].mxu0
        %v4303 = vadd.f32 0.0, %v4302
        %v4304 = vpop.f32.mrb[0].mxu0
        %v4305 = vadd.f32 0.0, %v4304
        %4306 = vmatprep.mubr.bf16.mxu0 %v4216
        %4307 = vmatmul.mubr.bf16.gmra.mrb[0].mxu0 %v4181
        %v4308 = vpop.f32.mrb[0].mxu0
        %v4309 = vadd.f32 0.0, %v4308
        %v4310 = vpop.f32.mrb[0].mxu0
        %v4311 = vadd.f32 0.0, %v4310
        %v4312 = vpop.f32.mrb[0].mxu0
        %v4313 = vadd.f32 0.0, %v4312
        %v4314 = vpop.f32.mrb[0].mxu0
        %v4315 = vadd.f32 0.0, %v4314
        %4316 = vmatprep.mubr.bf16.mxu0 %v4219
        %4317 = vmatmul.mubr.bf16.gmra.mrb[0].mxu0 %v4185
        %v4318 = vpop.f32.mrb[0].mxu0
        %v4319 = vadd.f32 0.0, %v4318
        %v4320 = vpop.f32.mrb[0].mxu0
        %v4321 = vadd.f32 0.0, %v4320
        %v4322 = vpop.f32.mrb[0].mxu0
        %v4323 = vadd.f32 0.0, %v4322
        %v4324 = vpop.f32.mrb[0].mxu0
        %v4325 = vadd.f32 0.0, %v4324
        %4326 = vmatprep.mubr.bf16.mxu0 %v4222
        %4327 = vmatmul.mubr.bf16.gmra.mrb[0].mxu0 %v4189
        %v4328 = vpop.f32.mrb[0].mxu0
        %v4329 = vadd.f32 0.0, %v4328
        %v4330 = vpop.f32.mrb[0].mxu0
        %v4331 = vadd.f32 0.0, %v4330
        %v4332 = vpop.f32.mrb[0].mxu0
        %v4333 = vadd.f32 0.0, %v4332
        %v4334 = vpop.f32.mrb[0].mxu0
        %v4335 = vadd.f32 0.0, %v4334
        %4336 = vdwg.mxu0
        %v4337 = vadd.f32 %v4120, %v4259
        %v4338 = vadd.f32 %v4121, %v4261
        %v4339 = vadd.f32 %v4122, %v4263
        %v4340 = vadd.f32 %v4123, %v4265
        %v4341 = vadd.f32 %v4124, %v4269
        %v4342 = vadd.f32 %v4125, %v4271
        %v4343 = vadd.f32 %v4126, %v4273
        %v4344 = vadd.f32 %v4127, %v4275
        %v4345 = vadd.f32 %v4128, %v4279
        %v4346 = vadd.f32 %v4129, %v4281
        %v4347 = vadd.f32 %v4130, %v4283
        %v4348 = vadd.f32 %v4131, %v4285
        %v4349 = vadd.f32 %v4132, %v4289
        %v4350 = vadd.f32 %v4133, %v4291
        %v4351 = vadd.f32 %v4134, %v4293
        %v4352 = vadd.f32 %v4135, %v4295
        %v4353 = vadd.f32 %v4136, %v4299
        %v4354 = vadd.f32 %v4137, %v4301
        %v4355 = vadd.f32 %v4138, %v4303
        %v4356 = vadd.f32 %v4139, %v4305
        %v4357 = vadd.f32 %v4140, %v4309
        %v4358 = vadd.f32 %v4141, %v4311
        %v4359 = vadd.f32 %v4142, %v4313
        %v4360 = vadd.f32 %v4143, %v4315
        %v4361 = vadd.f32 %v4144, %v4319
        %v4362 = vadd.f32 %v4145, %v4321
        %v4363 = vadd.f32 %v4146, %v4323
        %v4364 = vadd.f32 %v4147, %v4325
        %v4365 = vadd.f32 %v4148, %v4329
        %v4366 = vadd.f32 %v4149, %v4331
        %v4367 = vadd.f32 %v4150, %v4333
        %v4368 = vadd.f32 %v4151, %v4335
        %4401 = vrot.lane.b32.xlu0 %v4337, 32
        %v4402 = vpop.permute.xlu0 %4401
        %4403 = vrot.lane.b32.xlu0 %v4338, 32
        %v4404 = vpop.permute.xlu0 %4403
        %4405 = vrot.lane.b32.xlu0 %v4339, 32
        %v4406 = vpop.permute.xlu0 %4405
        %4407 = vrot.lane.b32.xlu0 %v4340, 32
        %v4408 = vpop.permute.xlu0 %4407
        %4409 = vrot.lane.b32.xlu0 %v4341, 32
        %v4410 = vpop.permute.xlu0 %4409
        %4411 = vrot.lane.b32.xlu0 %v4342, 32
        %v4412 = vpop.permute.xlu0 %4411
        %4413 = vrot.lane.b32.xlu0 %v4343, 32
        %v4414 = vpop.permute.xlu0 %4413
        %4415 = vrot.lane.b32.xlu0 %v4344, 32
        %v4416 = vpop.permute.xlu0 %4415
        %4417 = vrot.lane.b32.xlu0 %v4345, 32
        %v4418 = vpop.permute.xlu0 %4417
        %4419 = vrot.lane.b32.xlu0 %v4346, 32
        %v4420 = vpop.permute.xlu0 %4419
        %4421 = vrot.lane.b32.xlu0 %v4347, 32
        %v4422 = vpop.permute.xlu0 %4421
        %4423 = vrot.lane.b32.xlu0 %v4348, 32
        %v4424 = vpop.permute.xlu0 %4423
        %4425 = vrot.lane.b32.xlu0 %v4349, 32
        %v4426 = vpop.permute.xlu0 %4425
        %4427 = vrot.lane.b32.xlu0 %v4350, 32
        %v4428 = vpop.permute.xlu0 %4427
        %4429 = vrot.lane.b32.xlu0 %v4351, 32
        %v4430 = vpop.permute.xlu0 %4429
        %4431 = vrot.lane.b32.xlu0 %v4352, 32
        %v4432 = vpop.permute.xlu0 %4431
        %4433 = vrot.lane.b32.xlu0 %v4353, 32
        %v4434 = vpop.permute.xlu0 %4433
        %4435 = vrot.lane.b32.xlu0 %v4354, 32
        %v4436 = vpop.permute.xlu0 %4435
        %4437 = vrot.lane.b32.xlu0 %v4355, 32
        %v4438 = vpop.permute.xlu0 %4437
        %4439 = vrot.lane.b32.xlu0 %v4356, 32
        %v4440 = vpop.permute.xlu0 %4439
        %4441 = vrot.lane.b32.xlu0 %v4357, 32
        %v4442 = vpop.permute.xlu0 %4441
        %4443 = vrot.lane.b32.xlu0 %v4358, 32
        %v4444 = vpop.permute.xlu0 %4443
        %4445 = vrot.lane.b32.xlu0 %v4359, 32
        %v4446 = vpop.permute.xlu0 %4445
        %4447 = vrot.lane.b32.xlu0 %v4360, 32
        %v4448 = vpop.permute.xlu0 %4447
        %4449 = vrot.lane.b32.xlu0 %v4361, 32
        %v4450 = vpop.permute.xlu0 %4449
        %4451 = vrot.lane.b32.xlu0 %v4362, 32
        %v4452 = vpop.permute.xlu0 %4451
        %4453 = vrot.lane.b32.xlu0 %v4363, 32
        %v4454 = vpop.permute.xlu0 %4453
        %4455 = vrot.lane.b32.xlu0 %v4364, 32
        %v4456 = vpop.permute.xlu0 %4455
        %4457 = vrot.lane.b32.xlu0 %v4365, 32
        %v4458 = vpop.permute.xlu0 %4457
        %4459 = vrot.lane.b32.xlu0 %v4366, 32
        %v4460 = vpop.permute.xlu0 %4459
        %4461 = vrot.lane.b32.xlu0 %v4367, 32
        %v4462 = vpop.permute.xlu0 %4461
        %4463 = vrot.lane.b32.xlu0 %v4368, 32
        %v4464 = vpop.permute.xlu0 %4463
        %v4465 = vsel %vm2823, %v4402, %v4404
        %v4466 = vsel %vm2823, %v4406, %v4408
        %v4467 = vsel %vm2823, %v4410, %v4412
        %v4468 = vsel %vm2823, %v4414, %v4416
        %v4469 = vsel %vm2823, %v4418, %v4420
        %v4470 = vsel %vm2823, %v4422, %v4424
        %v4471 = vsel %vm2823, %v4426, %v4428
        %v4472 = vsel %vm2823, %v4430, %v4432
        %v4473 = vsel %vm2823, %v4434, %v4436
        %v4474 = vsel %vm2823, %v4438, %v4440
        %v4475 = vsel %vm2823, %v4442, %v4444
        %v4476 = vsel %vm2823, %v4446, %v4448
        %v4477 = vsel %vm2823, %v4450, %v4452
        %v4478 = vsel %vm2823, %v4454, %v4456
        %v4479 = vsel %vm2823, %v4458, %v4460
        %v4480 = vsel %vm2823, %v4462, %v4464
        %v4497 = vmax.f32 %v4337, %v4465
        %v4498 = vmax.f32 %v4339, %v4466
        %v4499 = vmax.f32 %v4341, %v4467
        %v4500 = vmax.f32 %v4343, %v4468
        %v4501 = vmax.f32 %v4345, %v4469
        %v4502 = vmax.f32 %v4347, %v4470
        %v4503 = vmax.f32 %v4349, %v4471
        %v4504 = vmax.f32 %v4351, %v4472
        %v4505 = vmax.f32 %v4353, %v4473
        %v4506 = vmax.f32 %v4355, %v4474
        %v4507 = vmax.f32 %v4357, %v4475
        %v4508 = vmax.f32 %v4359, %v4476
        %v4509 = vmax.f32 %v4361, %v4477
        %v4510 = vmax.f32 %v4363, %v4478
        %v4511 = vmax.f32 %v4365, %v4479
        %v4512 = vmax.f32 %v4367, %v4480
        %v4513 = vadd.f32 %v4497, %v2877
        %v4514 = vadd.f32 %v4498, %v2877
        %v4515 = vadd.f32 %v4499, %v2877
        %v4516 = vadd.f32 %v4500, %v2877
        %v4517 = vadd.f32 %v4501, %v2877
        %v4518 = vadd.f32 %v4502, %v2877
        %v4519 = vadd.f32 %v4503, %v2877
        %v4520 = vadd.f32 %v4504, %v2877
        %v4521 = vadd.f32 %v4505, %v2877
        %v4522 = vadd.f32 %v4506, %v2877
        %v4523 = vadd.f32 %v4507, %v2877
        %v4524 = vadd.f32 %v4508, %v2877
        %v4525 = vadd.f32 %v4509, %v2877
        %v4526 = vadd.f32 %v4510, %v2877
        %v4527 = vadd.f32 %v4511, %v2877
        %v4528 = vadd.f32 %v4512, %v2877
        %v4529 = vmax.f32 %v4513, 0.0
        %v4530 = vmax.f32 %v4514, 0.0
        %v4531 = vmax.f32 %v4515, 0.0
        %v4532 = vmax.f32 %v4516, 0.0
        %v4533 = vmax.f32 %v4517, 0.0
        %v4534 = vmax.f32 %v4518, 0.0
        %v4535 = vmax.f32 %v4519, 0.0
        %v4536 = vmax.f32 %v4520, 0.0
        %v4537 = vmax.f32 %v4521, 0.0
        %v4538 = vmax.f32 %v4522, 0.0
        %v4539 = vmax.f32 %v4523, 0.0
        %v4540 = vmax.f32 %v4524, 0.0
        %v4541 = vmax.f32 %v4525, 0.0
        %v4542 = vmax.f32 %v4526, 0.0
        %v4543 = vmax.f32 %v4527, 0.0
        %v4544 = vmax.f32 %v4528, 0.0
        %v4545 = vpack.c.bf16 %v4530, %v4529
        %v4546 = vpack.c.bf16 %v4532, %v4531
        %v4547 = vpack.c.bf16 %v4534, %v4533
        %v4548 = vpack.c.bf16 %v4536, %v4535
        %v4549 = vpack.c.bf16 %v4538, %v4537
        %v4550 = vpack.c.bf16 %v4540, %v4539
        %v4551 = vpack.c.bf16 %v4542, %v4541
        %v4552 = vpack.c.bf16 %v4544, %v4543
        %s4553 = scalar_lea.vmem %s464, 528
        %v4554 = vld [vmem:[%s4553] sm:$0xff]
        %v4555 = vld [vmem:[%s4553 + $0x8] sm:$0xff]
        %v4556 = vld [vmem:[%s4553 + $0x10] sm:$0xff]
        %v4557 = vld [vmem:[%s4553 + $0x18] sm:$0xff]
        %v4558 = vld [vmem:[%s4553 + $0x20] sm:$0xff]
        %v4559 = vld [vmem:[%s4553 + $0x28] sm:$0xff]
        %v4560 = vld [vmem:[%s4553 + $0x30] sm:$0xff]
        %v4561 = vld [vmem:[%s4553 + $0x38] sm:$0xff]
        %v4562 = vld [vmem:[%s4553 + $0x40] sm:$0xff]
        %v4563 = vld [vmem:[%s4553 + $0x48] sm:$0xff]
        %v4564 = vld [vmem:[%s4553 + $0x50] sm:$0xff]
        %v4565 = vld [vmem:[%s4553 + $0x58] sm:$0xff]
        %v4566 = vld [vmem:[%s4553 + $0x60] sm:$0xff]
        %v4567 = vld [vmem:[%s4553 + $0x68] sm:$0xff]
        %v4568 = vld [vmem:[%s4553 + $0x70] sm:$0xff]
        %v4569 = vld [vmem:[%s4553 + $0x78] sm:$0xff]
        %v4570 = vld [vmem:[%s4553 + $0x80] sm:$0xee]
        %v4571 = vld [vmem:[%s4553 + $0x88] sm:$0xff]
        %v4572 = vld [vmem:[%s4553 + $0x90] sm:$0xff]
        %v4573 = vld [vmem:[%s4553 + $0x98] sm:$0xff]
        %v4574 = vld [vmem:[%s4553 + $0xa0] sm:$0xff]
        %v4575 = vld [vmem:[%s4553 + $0xa8] sm:$0xff]
        %v4576 = vld [vmem:[%s4553 + $0xb0] sm:$0xff]
        %v4577 = vld [vmem:[%s4553 + $0xb8] sm:$0xff]
        %v4578 = vld [vmem:[%s4553 + $0xc0] sm:$0xff]
        %v4579 = vld [vmem:[%s4553 + $0xc8] sm:$0xff]
        %v4580 = vld [vmem:[%s4553 + $0xd0] sm:$0xff]
        %v4581 = vld [vmem:[%s4553 + $0xd8] sm:$0xff]
        %v4582 = vld [vmem:[%s4553 + $0xe0] sm:$0xff]
        %v4583 = vld [vmem:[%s4553 + $0xe8] sm:$0xff]
        %v4584 = vld [vmem:[%s4553 + $0xf0] sm:$0xff]
        %v4585 = vld [vmem:[%s4553 + $0xf8] sm:$0xff]
        %v4586 = vld [vmem:[%s4553 + $0x100] sm:$0x11]
        %v4604 = vunpack.c.l.b16 %v4570
        %v4605 = vunpack.c.h.b16 %v4570
        %v4606 = vunpack.c.l.b16 %v4571
        %v4607 = vunpack.c.h.b16 %v4571
        %v4608 = vunpack.c.l.b16 %v4572
        %v4609 = vunpack.c.h.b16 %v4572
        %v4610 = vunpack.c.l.b16 %v4573
        %v4611 = vunpack.c.h.b16 %v4573
        %v4612 = vunpack.c.l.b16 %v4574
        %v4613 = vunpack.c.h.b16 %v4574
        %v4614 = vunpack.c.l.b16 %v4575
        %v4615 = vunpack.c.h.b16 %v4575
        %v4616 = vunpack.c.l.b16 %v4576
        %v4617 = vunpack.c.h.b16 %v4576
        %v4618 = vunpack.c.l.b16 %v4577
        %v4619 = vunpack.c.h.b16 %v4577
        %v4620 = vunpack.c.l.b16 %v4578
        %v4621 = vunpack.c.h.b16 %v4578
        %v4622 = vunpack.c.l.b16 %v4579
        %v4623 = vunpack.c.h.b16 %v4579
        %v4624 = vunpack.c.l.b16 %v4580
        %v4625 = vunpack.c.h.b16 %v4580
        %v4626 = vunpack.c.l.b16 %v4581
        %v4627 = vunpack.c.h.b16 %v4581
        %v4628 = vunpack.c.l.b16 %v4582
        %v4629 = vunpack.c.h.b16 %v4582
        %v4630 = vunpack.c.l.b16 %v4583
        %v4631 = vunpack.c.h.b16 %v4583
        %v4632 = vunpack.c.l.b16 %v4584
        %v4633 = vunpack.c.h.b16 %v4584
        %v4634 = vunpack.c.l.b16 %v4585
        %v4635 = vunpack.c.h.b16 %v4585
        %v4636 = vunpack.c.l.b16 %v4586
        %v4637 = vunpack.c.h.b16 %v4586
        %v4638 = vpack.c.b16 %v4606, %v4604
        %v4639 = vpack.c.b16 %v4607, %v4605
        %v4640 = vpack.c.b16 %v4610, %v4608
        %v4641 = vpack.c.b16 %v4611, %v4609
        %v4642 = vpack.c.b16 %v4614, %v4612
        %v4643 = vpack.c.b16 %v4615, %v4613
        %v4644 = vpack.c.b16 %v4618, %v4616
        %v4645 = vpack.c.b16 %v4619, %v4617
        %v4646 = vpack.c.b16 %v4622, %v4620
        %v4647 = vpack.c.b16 %v4623, %v4621
        %v4648 = vpack.c.b16 %v4626, %v4624
        %v4649 = vpack.c.b16 %v4627, %v4625
        %v4650 = vpack.c.b16 %v4630, %v4628
        %v4651 = vpack.c.b16 %v4631, %v4629
        %v4652 = vpack.c.b16 %v4634, %v4632
        %v4653 = vpack.c.b16 %v4635, %v4633
        %v4654 = vpack.c.b16 %v4636, %v4636
        %v4655 = vpack.c.b16 %v4637, %v4637
        %v4656 = vrot.slane %v4638, 1
        %v4657 = vrot.slane %v4640, 1
        %v4658 = vsel %vm621, %v4656, %v4657
        %v4659 = vrot.slane %v4639, 1
        %v4660 = vrot.slane %v4641, 1
        %v4661 = vsel %vm621, %v4659, %v4660
        %v4662 = vrot.slane %v4642, 1
        %v4663 = vsel %vm621, %v4657, %v4662
        %v4664 = vrot.slane %v4643, 1
        %v4665 = vsel %vm621, %v4660, %v4664
        %v4666 = vrot.slane %v4644, 1
        %v4667 = vsel %vm621, %v4662, %v4666
        %v4668 = vrot.slane %v4645, 1
        %v4669 = vsel %vm621, %v4664, %v4668
        %v4670 = vrot.slane %v4646, 1
        %v4671 = vsel %vm621, %v4666, %v4670
        %v4672 = vrot.slane %v4647, 1
        %v4673 = vsel %vm621, %v4668, %v4672
        %v4674 = vrot.slane %v4648, 1
        %v4675 = vsel %vm621, %v4670, %v4674
        %v4676 = vrot.slane %v4649, 1
        %v4677 = vsel %vm621, %v4672, %v4676
        %v4678 = vrot.slane %v4650, 1
        %v4679 = vsel %vm621, %v4674, %v4678
        %v4680 = vrot.slane %v4651, 1
        %v4681 = vsel %vm621, %v4676, %v4680
        %v4682 = vrot.slane %v4652, 1
        %v4683 = vsel %vm621, %v4678, %v4682
        %v4684 = vrot.slane %v4653, 1
        %v4685 = vsel %vm621, %v4680, %v4684
        %v4686 = vrot.slane %v4654, 1
        %v4687 = vsel %vm621, %v4682, %v4686
        %v4688 = vrot.slane %v4655, 1
        %v4689 = vsel %vm621, %v4684, %v4688
        %v4699 = vsel %vm792, %v4661, 0
        %v4702 = vsel %vm792, %v4665, 0
        %v4705 = vsel %vm792, %v4669, 0
        %v4708 = vsel %vm792, %v4673, 0
        %v4711 = vsel %vm792, %v4677, 0
        %v4714 = vsel %vm792, %v4681, 0
        %v4717 = vsel %vm792, %v4685, 0
        %v4720 = vsel %vm792, %v4689, 0
        %4722 = vmatprep.subr.bf16.mxu0 %v743
        %4723 = vmatpush1.bf16.msra.mxu0 %v742
        %4724 = vmatprep.subr.bf16.mxu0 %v745
        %4725 = vmatpush1.bf16.msra.mxu0 %v744
        %4726 = vmatprep.subr.bf16.mxu0 %v747
        %4727 = vmatpush1.bf16.msra.mxu0 %v746
        %4728 = vmatprep.subr.bf16.mxu0 %v749
        %4729 = vmatpush1.bf16.msra.mxu0 %v748
        %4730 = vmatprep.subr.bf16.mxu0 %v751
        %4731 = vmatpush1.bf16.msra.mxu0 %v750
        %4732 = vmatprep.subr.bf16.mxu0 %v753
        %4733 = vmatpush1.bf16.msra.mxu0 %v752
        %4734 = vmatprep.subr.bf16.mxu0 %v755
        %4735 = vmatpush1.bf16.msra.mxu0 %v754
        %4736 = vmatprep.subr.bf16.mxu0 %v757
        %4737 = vmatpush1.bf16.msra.mxu0 %v756
        %4738 = vmatprep.subr.bf16.mxu0 %v759
        %4739 = vmatpush1.bf16.msra.mxu0 %v758
        %4740 = vmatprep.subr.bf16.mxu0 %v761
        %4741 = vmatpush1.bf16.msra.mxu0 %v760
        %4742 = vmatprep.subr.bf16.mxu0 %v763
        %4743 = vmatpush1.bf16.msra.mxu0 %v762
        %4744 = vmatprep.subr.bf16.mxu0 %v765
        %4745 = vmatpush1.bf16.msra.mxu0 %v764
        %4746 = vmatprep.subr.bf16.mxu0 %v825
        %4747 = vmatpush1.bf16.msra.mxu0 %v822
        %4748 = vmatprep.subr.bf16.mxu0 0
        %4749 = vmatpush1.bf16.msra.mxu0 0
        %4750 = vmatprep.subr.bf16.mxu0 0
        %4751 = vmatpush1.bf16.msra.mxu0 0
        %4752 = vmatprep.subr.bf16.mxu0 0
        %4753 = vmatpush1.bf16.msra.mxu0 0
        %4754 = vmatprep.mubr.bf16.mxu0 %v4699
        %4755 = vmatmul.mubr.bf16.gmra.mrb[0].mxu0 %v4658
        %v4756 = vpop.f32.mrb[0].mxu0
        %v4757 = vadd.f32 0.0, %v4756
        %v4758 = vpop.f32.mrb[0].mxu0
        %v4759 = vadd.f32 0.0, %v4758
        %v4760 = vpop.f32.mrb[0].mxu0
        %v4761 = vadd.f32 0.0, %v4760
        %v4762 = vpop.f32.mrb[0].mxu0
        %v4763 = vadd.f32 0.0, %v4762
        %4764 = vmatprep.mubr.bf16.mxu0 %v4702
        %4765 = vmatmul.mubr.bf16.gmra.mrb[0].mxu0 %v4663
        %v4766 = vpop.f32.mrb[0].mxu0
        %v4767 = vadd.f32 0.0, %v4766
        %v4768 = vpop.f32.mrb[0].mxu0
        %v4769 = vadd.f32 0.0, %v4768
        %v4770 = vpop.f32.mrb[0].mxu0
        %v4771 = vadd.f32 0.0, %v4770
        %v4772 = vpop.f32.mrb[0].mxu0
        %v4773 = vadd.f32 0.0, %v4772
        %4774 = vmatprep.mubr.bf16.mxu0 %v4705
        %4775 = vmatmul.mubr.bf16.gmra.mrb[0].mxu0 %v4667
        %v4776 = vpop.f32.mrb[0].mxu0
        %v4777 = vadd.f32 0.0, %v4776
        %v4778 = vpop.f32.mrb[0].mxu0
        %v4779 = vadd.f32 0.0, %v4778
        %v4780 = vpop.f32.mrb[0].mxu0
        %v4781 = vadd.f32 0.0, %v4780
        %v4782 = vpop.f32.mrb[0].mxu0
        %v4783 = vadd.f32 0.0, %v4782
        %4784 = vmatprep.mubr.bf16.mxu0 %v4708
        %4785 = vmatmul.mubr.bf16.gmra.mrb[0].mxu0 %v4671
        %v4786 = vpop.f32.mrb[0].mxu0
        %v4787 = vadd.f32 0.0, %v4786
        %v4788 = vpop.f32.mrb[0].mxu0
        %v4789 = vadd.f32 0.0, %v4788
        %v4790 = vpop.f32.mrb[0].mxu0
        %v4791 = vadd.f32 0.0, %v4790
        %v4792 = vpop.f32.mrb[0].mxu0
        %v4793 = vadd.f32 0.0, %v4792
        %4794 = vmatprep.mubr.bf16.mxu0 %v4711
        %4795 = vmatmul.mubr.bf16.gmra.mrb[0].mxu0 %v4675
        %v4796 = vpop.f32.mrb[0].mxu0
        %v4797 = vadd.f32 0.0, %v4796
        %v4798 = vpop.f32.mrb[0].mxu0
        %v4799 = vadd.f32 0.0, %v4798
        %v4800 = vpop.f32.mrb[0].mxu0
        %v4801 = vadd.f32 0.0, %v4800
        %v4802 = vpop.f32.mrb[0].mxu0
        %v4803 = vadd.f32 0.0, %v4802
        %4804 = vmatprep.mubr.bf16.mxu0 %v4714
        %4805 = vmatmul.mubr.bf16.gmra.mrb[0].mxu0 %v4679
        %v4806 = vpop.f32.mrb[0].mxu0
        %v4807 = vadd.f32 0.0, %v4806
        %v4808 = vpop.f32.mrb[0].mxu0
        %v4809 = vadd.f32 0.0, %v4808
        %v4810 = vpop.f32.mrb[0].mxu0
        %v4811 = vadd.f32 0.0, %v4810
        %v4812 = vpop.f32.mrb[0].mxu0
        %v4813 = vadd.f32 0.0, %v4812
        %4814 = vmatprep.mubr.bf16.mxu0 %v4717
        %4815 = vmatmul.mubr.bf16.gmra.mrb[0].mxu0 %v4683
        %v4816 = vpop.f32.mrb[0].mxu0
        %v4817 = vadd.f32 0.0, %v4816
        %v4818 = vpop.f32.mrb[0].mxu0
        %v4819 = vadd.f32 0.0, %v4818
        %v4820 = vpop.f32.mrb[0].mxu0
        %v4821 = vadd.f32 0.0, %v4820
        %v4822 = vpop.f32.mrb[0].mxu0
        %v4823 = vadd.f32 0.0, %v4822
        %4824 = vmatprep.mubr.bf16.mxu0 %v4720
        %4825 = vmatmul.mubr.bf16.gmra.mrb[0].mxu0 %v4687
        %v4826 = vpop.f32.mrb[0].mxu0
        %v4827 = vadd.f32 0.0, %v4826
        %v4828 = vpop.f32.mrb[0].mxu0
        %v4829 = vadd.f32 0.0, %v4828
        %v4830 = vpop.f32.mrb[0].mxu0
        %v4831 = vadd.f32 0.0, %v4830
        %v4832 = vpop.f32.mrb[0].mxu0
        %v4833 = vadd.f32 0.0, %v4832
        %4834 = vdwg.mxu0
        %v4851 = vunpack.c.l.b16 %v4554
        %v4852 = vunpack.c.h.b16 %v4554
        %v4853 = vunpack.c.l.b16 %v4555
        %v4854 = vunpack.c.h.b16 %v4555
        %v4855 = vunpack.c.l.b16 %v4556
        %v4856 = vunpack.c.h.b16 %v4556
        %v4857 = vunpack.c.l.b16 %v4557
        %v4858 = vunpack.c.h.b16 %v4557
        %v4859 = vunpack.c.l.b16 %v4558
        %v4860 = vunpack.c.h.b16 %v4558
        %v4861 = vunpack.c.l.b16 %v4559
        %v4862 = vunpack.c.h.b16 %v4559
        %v4863 = vunpack.c.l.b16 %v4560
        %v4864 = vunpack.c.h.b16 %v4560
        %v4865 = vunpack.c.l.b16 %v4561
        %v4866 = vunpack.c.h.b16 %v4561
        %v4867 = vunpack.c.l.b16 %v4562
        %v4868 = vunpack.c.h.b16 %v4562
        %v4869 = vunpack.c.l.b16 %v4563
        %v4870 = vunpack.c.h.b16 %v4563
        %v4871 = vunpack.c.l.b16 %v4564
        %v4872 = vunpack.c.h.b16 %v4564
        %v4873 = vunpack.c.l.b16 %v4565
        %v4874 = vunpack.c.h.b16 %v4565
        %v4875 = vunpack.c.l.b16 %v4566
        %v4876 = vunpack.c.h.b16 %v4566
        %v4877 = vunpack.c.l.b16 %v4567
        %v4878 = vunpack.c.h.b16 %v4567
        %v4879 = vunpack.c.l.b16 %v4568
        %v4880 = vunpack.c.h.b16 %v4568
        %v4881 = vunpack.c.l.b16 %v4569
        %v4882 = vunpack.c.h.b16 %v4569
        %v4883 = vpack.c.b16 %v4853, %v4851
        %v4884 = vpack.c.b16 %v4854, %v4852
        %v4885 = vpack.c.b16 %v4857, %v4855
        %v4886 = vpack.c.b16 %v4858, %v4856
        %v4887 = vpack.c.b16 %v4861, %v4859
        %v4888 = vpack.c.b16 %v4862, %v4860
        %v4889 = vpack.c.b16 %v4865, %v4863
        %v4890 = vpack.c.b16 %v4866, %v4864
        %v4891 = vpack.c.b16 %v4869, %v4867
        %v4892 = vpack.c.b16 %v4870, %v4868
        %v4893 = vpack.c.b16 %v4873, %v4871
        %v4894 = vpack.c.b16 %v4874, %v4872
        %v4895 = vpack.c.b16 %v4877, %v4875
        %v4896 = vpack.c.b16 %v4878, %v4876
        %v4897 = vpack.c.b16 %v4881, %v4879
        %v4898 = vpack.c.b16 %v4882, %v4880
        %v4908 = vsel %vm792, %v4884, 0
        %v4911 = vsel %vm792, %v4886, 0
        %v4914 = vsel %vm792, %v4888, 0
        %v4917 = vsel %vm792, %v4890, 0
        %v4920 = vsel %vm792, %v4892, 0
        %v4923 = vsel %vm792, %v4894, 0
        %v4926 = vsel %vm792, %v4896, 0
        %v4929 = vsel %vm792, %v4898, 0
        %4931 = vmatprep.subr.bf16.mxu0 %v1091
        %4932 = vmatpush1.bf16.msra.mxu0 %v1090
        %4933 = vmatprep.subr.bf16.mxu0 %v1093
        %4934 = vmatpush1.bf16.msra.mxu0 %v1092
        %4935 = vmatprep.subr.bf16.mxu0 %v1095
        %4936 = vmatpush1.bf16.msra.mxu0 %v1094
        %4937 = vmatprep.subr.bf16.mxu0 %v1097
        %4938 = vmatpush1.bf16.msra.mxu0 %v1096
        %4939 = vmatprep.subr.bf16.mxu0 %v1099
        %4940 = vmatpush1.bf16.msra.mxu0 %v1098
        %4941 = vmatprep.subr.bf16.mxu0 %v1101
        %4942 = vmatpush1.bf16.msra.mxu0 %v1100
        %4943 = vmatprep.subr.bf16.mxu0 %v1103
        %4944 = vmatpush1.bf16.msra.mxu0 %v1102
        %4945 = vmatprep.subr.bf16.mxu0 %v1105
        %4946 = vmatpush1.bf16.msra.mxu0 %v1104
        %4947 = vmatprep.subr.bf16.mxu0 %v1107
        %4948 = vmatpush1.bf16.msra.mxu0 %v1106
        %4949 = vmatprep.subr.bf16.mxu0 %v1109
        %4950 = vmatpush1.bf16.msra.mxu0 %v1108
        %4951 = vmatprep.subr.bf16.mxu0 %v1111
        %4952 = vmatpush1.bf16.msra.mxu0 %v1110
        %4953 = vmatprep.subr.bf16.mxu0 %v1113
        %4954 = vmatpush1.bf16.msra.mxu0 %v1112
        %4955 = vmatprep.subr.bf16.mxu0 %v1168
        %4956 = vmatpush1.bf16.msra.mxu0 %v1165
        %4957 = vmatprep.subr.bf16.mxu0 0
        %4958 = vmatpush1.bf16.msra.mxu0 0
        %4959 = vmatprep.subr.bf16.mxu0 0
        %4960 = vmatpush1.bf16.msra.mxu0 0
        %4961 = vmatprep.subr.bf16.mxu0 0
        %4962 = vmatpush1.bf16.msra.mxu0 0
        %4963 = vmatprep.mubr.bf16.mxu0 %v4908
        %4964 = vmatmul.mubr.bf16.gmra.mrb[0].mxu0 %v4883
        %v4965 = vpop.f32.mrb[0].mxu0
        %v4966 = vadd.f32 %v4757, %v4965
        %v4967 = vpop.f32.mrb[0].mxu0
        %v4968 = vadd.f32 %v4759, %v4967
        %v4969 = vpop.f32.mrb[0].mxu0
        %v4970 = vadd.f32 %v4761, %v4969
        %v4971 = vpop.f32.mrb[0].mxu0
        %v4972 = vadd.f32 %v4763, %v4971
        %4973 = vmatprep.mubr.bf16.mxu0 %v4911
        %4974 = vmatmul.mubr.bf16.gmra.mrb[0].mxu0 %v4885
        %v4975 = vpop.f32.mrb[0].mxu0
        %v4976 = vadd.f32 %v4767, %v4975
        %v4977 = vpop.f32.mrb[0].mxu0
        %v4978 = vadd.f32 %v4769, %v4977
        %v4979 = vpop.f32.mrb[0].mxu0
        %v4980 = vadd.f32 %v4771, %v4979
        %v4981 = vpop.f32.mrb[0].mxu0
        %v4982 = vadd.f32 %v4773, %v4981
        %4983 = vmatprep.mubr.bf16.mxu0 %v4914
        %4984 = vmatmul.mubr.bf16.gmra.mrb[0].mxu0 %v4887
        %v4985 = vpop.f32.mrb[0].mxu0
        %v4986 = vadd.f32 %v4777, %v4985
        %v4987 = vpop.f32.mrb[0].mxu0
        %v4988 = vadd.f32 %v4779, %v4987
        %v4989 = vpop.f32.mrb[0].mxu0
        %v4990 = vadd.f32 %v4781, %v4989
        %v4991 = vpop.f32.mrb[0].mxu0
        %v4992 = vadd.f32 %v4783, %v4991
        %4993 = vmatprep.mubr.bf16.mxu0 %v4917
        %4994 = vmatmul.mubr.bf16.gmra.mrb[0].mxu0 %v4889
        %v4995 = vpop.f32.mrb[0].mxu0
        %v4996 = vadd.f32 %v4787, %v4995
        %v4997 = vpop.f32.mrb[0].mxu0
        %v4998 = vadd.f32 %v4789, %v4997
        %v4999 = vpop.f32.mrb[0].mxu0
        %v5000 = vadd.f32 %v4791, %v4999
        %v5001 = vpop.f32.mrb[0].mxu0
        %v5002 = vadd.f32 %v4793, %v5001
        %5003 = vmatprep.mubr.bf16.mxu0 %v4920
        %5004 = vmatmul.mubr.bf16.gmra.mrb[0].mxu0 %v4891
        %v5005 = vpop.f32.mrb[0].mxu0
        %v5006 = vadd.f32 %v4797, %v5005
        %v5007 = vpop.f32.mrb[0].mxu0
        %v5008 = vadd.f32 %v4799, %v5007
        %v5009 = vpop.f32.mrb[0].mxu0
        %v5010 = vadd.f32 %v4801, %v5009
        %v5011 = vpop.f32.mrb[0].mxu0
        %v5012 = vadd.f32 %v4803, %v5011
        %5013 = vmatprep.mubr.bf16.mxu0 %v4923
        %5014 = vmatmul.mubr.bf16.gmra.mrb[0].mxu0 %v4893
        %v5015 = vpop.f32.mrb[0].mxu0
        %v5016 = vadd.f32 %v4807, %v5015
        %v5017 = vpop.f32.mrb[0].mxu0
        %v5018 = vadd.f32 %v4809, %v5017
        %v5019 = vpop.f32.mrb[0].mxu0
        %v5020 = vadd.f32 %v4811, %v5019
        %v5021 = vpop.f32.mrb[0].mxu0
        %v5022 = vadd.f32 %v4813, %v5021
        %5023 = vmatprep.mubr.bf16.mxu0 %v4926
        %5024 = vmatmul.mubr.bf16.gmra.mrb[0].mxu0 %v4895
        %v5025 = vpop.f32.mrb[0].mxu0
        %v5026 = vadd.f32 %v4817, %v5025
        %v5027 = vpop.f32.mrb[0].mxu0
        %v5028 = vadd.f32 %v4819, %v5027
        %v5029 = vpop.f32.mrb[0].mxu0
        %v5030 = vadd.f32 %v4821, %v5029
        %v5031 = vpop.f32.mrb[0].mxu0
        %v5032 = vadd.f32 %v4823, %v5031
        %5033 = vmatprep.mubr.bf16.mxu0 %v4929
        %5034 = vmatmul.mubr.bf16.gmra.mrb[0].mxu0 %v4897
        %v5035 = vpop.f32.mrb[0].mxu0
        %v5036 = vadd.f32 %v4827, %v5035
        %v5037 = vpop.f32.mrb[0].mxu0
        %v5038 = vadd.f32 %v4829, %v5037
        %v5039 = vpop.f32.mrb[0].mxu0
        %v5040 = vadd.f32 %v4831, %v5039
        %v5041 = vpop.f32.mrb[0].mxu0
        %v5042 = vadd.f32 %v4833, %v5041
        %5043 = vdwg.mxu0
        %v5044 = vld [vmem:[%s4553] sm:$0xff]
        %v5045 = vld [vmem:[%s4553 + $0x8] sm:$0xff]
        %v5046 = vld [vmem:[%s4553 + $0x10] sm:$0xff]
        %v5047 = vld [vmem:[%s4553 + $0x18] sm:$0xff]
        %v5048 = vld [vmem:[%s4553 + $0x20] sm:$0xff]
        %v5049 = vld [vmem:[%s4553 + $0x28] sm:$0xff]
        %v5050 = vld [vmem:[%s4553 + $0x30] sm:$0xff]
        %v5051 = vld [vmem:[%s4553 + $0x38] sm:$0xff]
        %v5052 = vld [vmem:[%s4553 + $0x40] sm:$0xff]
        %v5053 = vld [vmem:[%s4553 + $0x48] sm:$0xff]
        %v5054 = vld [vmem:[%s4553 + $0x50] sm:$0xff]
        %v5055 = vld [vmem:[%s4553 + $0x58] sm:$0xff]
        %v5056 = vld [vmem:[%s4553 + $0x60] sm:$0xff]
        %v5057 = vld [vmem:[%s4553 + $0x68] sm:$0xff]
        %v5058 = vld [vmem:[%s4553 + $0x70] sm:$0xff]
        %v5059 = vld [vmem:[%s4553 + $0x78] sm:$0xff]
        %v5060 = vld [vmem:[%s4553 + $0x80] sm:$0x11]
        %v5078 = vunpack.c.l.b16 %v5044
        %v5079 = vunpack.c.h.b16 %v5044
        %v5080 = vunpack.c.l.b16 %v5045
        %v5081 = vunpack.c.h.b16 %v5045
        %v5082 = vunpack.c.l.b16 %v5046
        %v5083 = vunpack.c.h.b16 %v5046
        %v5084 = vunpack.c.l.b16 %v5047
        %v5085 = vunpack.c.h.b16 %v5047
        %v5086 = vunpack.c.l.b16 %v5048
        %v5087 = vunpack.c.h.b16 %v5048
        %v5088 = vunpack.c.l.b16 %v5049
        %v5089 = vunpack.c.h.b16 %v5049
        %v5090 = vunpack.c.l.b16 %v5050
        %v5091 = vunpack.c.h.b16 %v5050
        %v5092 = vunpack.c.l.b16 %v5051
        %v5093 = vunpack.c.h.b16 %v5051
        %v5094 = vunpack.c.l.b16 %v5052
        %v5095 = vunpack.c.h.b16 %v5052
        %v5096 = vunpack.c.l.b16 %v5053
        %v5097 = vunpack.c.h.b16 %v5053
        %v5098 = vunpack.c.l.b16 %v5054
        %v5099 = vunpack.c.h.b16 %v5054
        %v5100 = vunpack.c.l.b16 %v5055
        %v5101 = vunpack.c.h.b16 %v5055
        %v5102 = vunpack.c.l.b16 %v5056
        %v5103 = vunpack.c.h.b16 %v5056
        %v5104 = vunpack.c.l.b16 %v5057
        %v5105 = vunpack.c.h.b16 %v5057
        %v5106 = vunpack.c.l.b16 %v5058
        %v5107 = vunpack.c.h.b16 %v5058
        %v5108 = vunpack.c.l.b16 %v5059
        %v5109 = vunpack.c.h.b16 %v5059
        %v5110 = vunpack.c.l.b16 %v5060
        %v5111 = vunpack.c.h.b16 %v5060
        %v5112 = vpack.c.b16 %v5080, %v5078
        %v5113 = vpack.c.b16 %v5081, %v5079
        %v5114 = vpack.c.b16 %v5084, %v5082
        %v5115 = vpack.c.b16 %v5085, %v5083
        %v5116 = vpack.c.b16 %v5088, %v5086
        %v5117 = vpack.c.b16 %v5089, %v5087
        %v5118 = vpack.c.b16 %v5092, %v5090
        %v5119 = vpack.c.b16 %v5093, %v5091
        %v5120 = vpack.c.b16 %v5096, %v5094
        %v5121 = vpack.c.b16 %v5097, %v5095
        %v5122 = vpack.c.b16 %v5100, %v5098
        %v5123 = vpack.c.b16 %v5101, %v5099
        %v5124 = vpack.c.b16 %v5104, %v5102
        %v5125 = vpack.c.b16 %v5105, %v5103
        %v5126 = vpack.c.b16 %v5108, %v5106
        %v5127 = vpack.c.b16 %v5109, %v5107
        %v5128 = vpack.c.b16 %v5110, %v5110
        %v5129 = vpack.c.b16 %v5111, %v5111
        %v5131 = vshrl.u32 %v5112, 16
        %v5133 = vshll.u32 %v5112, 16
        %v5135 = vrot.slane %v5133, 1
        %v5136 = vor.u32 %v5131, %v5135
        %v5138 = vshll.u32 %v5114, 16
        %v5140 = vrot.slane %v5138, 1
        %v5141 = vsel %vm1396, %v5136, %v5140
        %v5143 = vshrl.u32 %v5113, 16
        %v5145 = vshll.u32 %v5113, 16
        %v5147 = vrot.slane %v5145, 1
        %v5148 = vor.u32 %v5143, %v5147
        %v5150 = vshll.u32 %v5115, 16
        %v5152 = vrot.slane %v5150, 1
        %v5153 = vsel %vm1396, %v5148, %v5152
        %v5154 = vshrl.u32 %v5114, 16
        %v5156 = vor.u32 %v5154, %v5140
        %v5158 = vshll.u32 %v5116, 16
        %v5160 = vrot.slane %v5158, 1
        %v5161 = vsel %vm1396, %v5156, %v5160
        %v5162 = vshrl.u32 %v5115, 16
        %v5164 = vor.u32 %v5162, %v5152
        %v5166 = vshll.u32 %v5117, 16
        %v5168 = vrot.slane %v5166, 1
        %v5169 = vsel %vm1396, %v5164, %v5168
        %v5170 = vshrl.u32 %v5116, 16
        %v5172 = vor.u32 %v5170, %v5160
        %v5174 = vshll.u32 %v5118, 16
        %v5176 = vrot.slane %v5174, 1
        %v5177 = vsel %vm1396, %v5172, %v5176
        %v5178 = vshrl.u32 %v5117, 16
        %v5180 = vor.u32 %v5178, %v5168
        %v5182 = vshll.u32 %v5119, 16
        %v5184 = vrot.slane %v5182, 1
        %v5185 = vsel %vm1396, %v5180, %v5184
        %v5186 = vshrl.u32 %v5118, 16
        %v5188 = vor.u32 %v5186, %v5176
        %v5190 = vshll.u32 %v5120, 16
        %v5192 = vrot.slane %v5190, 1
        %v5193 = vsel %vm1396, %v5188, %v5192
        %v5194 = vshrl.u32 %v5119, 16
        %v5196 = vor.u32 %v5194, %v5184
        %v5198 = vshll.u32 %v5121, 16
        %v5200 = vrot.slane %v5198, 1
        %v5201 = vsel %vm1396, %v5196, %v5200
        %v5202 = vshrl.u32 %v5120, 16
        %v5204 = vor.u32 %v5202, %v5192
        %v5206 = vshll.u32 %v5122, 16
        %v5208 = vrot.slane %v5206, 1
        %v5209 = vsel %vm1396, %v5204, %v5208
        %v5210 = vshrl.u32 %v5121, 16
        %v5212 = vor.u32 %v5210, %v5200
        %v5214 = vshll.u32 %v5123, 16
        %v5216 = vrot.slane %v5214, 1
        %v5217 = vsel %vm1396, %v5212, %v5216
        %v5218 = vshrl.u32 %v5122, 16
        %v5220 = vor.u32 %v5218, %v5208
        %v5222 = vshll.u32 %v5124, 16
        %v5224 = vrot.slane %v5222, 1
        %v5225 = vsel %vm1396, %v5220, %v5224
        %v5226 = vshrl.u32 %v5123, 16
        %v5228 = vor.u32 %v5226, %v5216
        %v5230 = vshll.u32 %v5125, 16
        %v5232 = vrot.slane %v5230, 1
        %v5233 = vsel %vm1396, %v5228, %v5232
        %v5234 = vshrl.u32 %v5124, 16
        %v5236 = vor.u32 %v5234, %v5224
        %v5238 = vshll.u32 %v5126, 16
        %v5240 = vrot.slane %v5238, 1
        %v5241 = vsel %vm1396, %v5236, %v5240
        %v5242 = vshrl.u32 %v5125, 16
        %v5244 = vor.u32 %v5242, %v5232
        %v5246 = vshll.u32 %v5127, 16
        %v5248 = vrot.slane %v5246, 1
        %v5249 = vsel %vm1396, %v5244, %v5248
        %v5250 = vshrl.u32 %v5126, 16
        %v5252 = vor.u32 %v5250, %v5240
        %v5254 = vshll.u32 %v5128, 16
        %v5256 = vrot.slane %v5254, 1
        %v5257 = vsel %vm1396, %v5252, %v5256
        %v5258 = vshrl.u32 %v5127, 16
        %v5260 = vor.u32 %v5258, %v5248
        %v5262 = vshll.u32 %v5129, 16
        %v5264 = vrot.slane %v5262, 1
        %v5265 = vsel %vm1396, %v5260, %v5264
        %v5275 = vsel %vm792, %v5153, 0
        %v5278 = vsel %vm792, %v5169, 0
        %v5281 = vsel %vm792, %v5185, 0
        %v5284 = vsel %vm792, %v5201, 0
        %v5287 = vsel %vm792, %v5217, 0
        %v5290 = vsel %vm792, %v5233, 0
        %v5293 = vsel %vm792, %v5249, 0
        %v5296 = vsel %vm792, %v5265, 0
        %5298 = vmatprep.subr.bf16.mxu0 %v1620
        %5299 = vmatpush1.bf16.msra.mxu0 %v1619
        %5300 = vmatprep.subr.bf16.mxu0 %v1622
        %5301 = vmatpush1.bf16.msra.mxu0 %v1621
        %5302 = vmatprep.subr.bf16.mxu0 %v1624
        %5303 = vmatpush1.bf16.msra.mxu0 %v1623
        %5304 = vmatprep.subr.bf16.mxu0 %v1626
        %5305 = vmatpush1.bf16.msra.mxu0 %v1625
        %5306 = vmatprep.subr.bf16.mxu0 %v1628
        %5307 = vmatpush1.bf16.msra.mxu0 %v1627
        %5308 = vmatprep.subr.bf16.mxu0 %v1630
        %5309 = vmatpush1.bf16.msra.mxu0 %v1629
        %5310 = vmatprep.subr.bf16.mxu0 %v1632
        %5311 = vmatpush1.bf16.msra.mxu0 %v1631
        %5312 = vmatprep.subr.bf16.mxu0 %v1634
        %5313 = vmatpush1.bf16.msra.mxu0 %v1633
        %5314 = vmatprep.subr.bf16.mxu0 %v1636
        %5315 = vmatpush1.bf16.msra.mxu0 %v1635
        %5316 = vmatprep.subr.bf16.mxu0 %v1638
        %5317 = vmatpush1.bf16.msra.mxu0 %v1637
        %5318 = vmatprep.subr.bf16.mxu0 %v1640
        %5319 = vmatpush1.bf16.msra.mxu0 %v1639
        %5320 = vmatprep.subr.bf16.mxu0 %v1642
        %5321 = vmatpush1.bf16.msra.mxu0 %v1641
        %5322 = vmatprep.subr.bf16.mxu0 %v1697
        %5323 = vmatpush1.bf16.msra.mxu0 %v1694
        %5324 = vmatprep.subr.bf16.mxu0 0
        %5325 = vmatpush1.bf16.msra.mxu0 0
        %5326 = vmatprep.subr.bf16.mxu0 0
        %5327 = vmatpush1.bf16.msra.mxu0 0
        %5328 = vmatprep.subr.bf16.mxu0 0
        %5329 = vmatpush1.bf16.msra.mxu0 0
        %5330 = vmatprep.mubr.bf16.mxu0 %v5275
        %5331 = vmatmul.mubr.bf16.gmra.mrb[0].mxu0 %v5141
        %v5332 = vpop.f32.mrb[0].mxu0
        %v5333 = vadd.f32 0.0, %v5332
        %v5334 = vpop.f32.mrb[0].mxu0
        %v5335 = vadd.f32 0.0, %v5334
        %v5336 = vpop.f32.mrb[0].mxu0
        %v5337 = vadd.f32 0.0, %v5336
        %v5338 = vpop.f32.mrb[0].mxu0
        %v5339 = vadd.f32 0.0, %v5338
        %5340 = vmatprep.mubr.bf16.mxu0 %v5278
        %5341 = vmatmul.mubr.bf16.gmra.mrb[0].mxu0 %v5161
        %v5342 = vpop.f32.mrb[0].mxu0
        %v5343 = vadd.f32 0.0, %v5342
        %v5344 = vpop.f32.mrb[0].mxu0
        %v5345 = vadd.f32 0.0, %v5344
        %v5346 = vpop.f32.mrb[0].mxu0
        %v5347 = vadd.f32 0.0, %v5346
        %v5348 = vpop.f32.mrb[0].mxu0
        %v5349 = vadd.f32 0.0, %v5348
        %5350 = vmatprep.mubr.bf16.mxu0 %v5281
        %5351 = vmatmul.mubr.bf16.gmra.mrb[0].mxu0 %v5177
        %v5352 = vpop.f32.mrb[0].mxu0
        %v5353 = vadd.f32 0.0, %v5352
        %v5354 = vpop.f32.mrb[0].mxu0
        %v5355 = vadd.f32 0.0, %v5354
        %v5356 = vpop.f32.mrb[0].mxu0
        %v5357 = vadd.f32 0.0, %v5356
        %v5358 = vpop.f32.mrb[0].mxu0
        %v5359 = vadd.f32 0.0, %v5358
        %5360 = vmatprep.mubr.bf16.mxu0 %v5284
        %5361 = vmatmul.mubr.bf16.gmra.mrb[0].mxu0 %v5193
        %v5362 = vpop.f32.mrb[0].mxu0
        %v5363 = vadd.f32 0.0, %v5362
        %v5364 = vpop.f32.mrb[0].mxu0
        %v5365 = vadd.f32 0.0, %v5364
        %v5366 = vpop.f32.mrb[0].mxu0
        %v5367 = vadd.f32 0.0, %v5366
        %v5368 = vpop.f32.mrb[0].mxu0
        %v5369 = vadd.f32 0.0, %v5368
        %5370 = vmatprep.mubr.bf16.mxu0 %v5287
        %5371 = vmatmul.mubr.bf16.gmra.mrb[0].mxu0 %v5209
        %v5372 = vpop.f32.mrb[0].mxu0
        %v5373 = vadd.f32 0.0, %v5372
        %v5374 = vpop.f32.mrb[0].mxu0
        %v5375 = vadd.f32 0.0, %v5374
        %v5376 = vpop.f32.mrb[0].mxu0
        %v5377 = vadd.f32 0.0, %v5376
        %v5378 = vpop.f32.mrb[0].mxu0
        %v5379 = vadd.f32 0.0, %v5378
        %5380 = vmatprep.mubr.bf16.mxu0 %v5290
        %5381 = vmatmul.mubr.bf16.gmra.mrb[0].mxu0 %v5225
        %v5382 = vpop.f32.mrb[0].mxu0
        %v5383 = vadd.f32 0.0, %v5382
        %v5384 = vpop.f32.mrb[0].mxu0
        %v5385 = vadd.f32 0.0, %v5384
        %v5386 = vpop.f32.mrb[0].mxu0
        %v5387 = vadd.f32 0.0, %v5386
        %v5388 = vpop.f32.mrb[0].mxu0
        %v5389 = vadd.f32 0.0, %v5388
        %5390 = vmatprep.mubr.bf16.mxu0 %v5293
        %5391 = vmatmul.mubr.bf16.gmra.mrb[0].mxu0 %v5241
        %v5392 = vpop.f32.mrb[0].mxu0
        %v5393 = vadd.f32 0.0, %v5392
        %v5394 = vpop.f32.mrb[0].mxu0
        %v5395 = vadd.f32 0.0, %v5394
        %v5396 = vpop.f32.mrb[0].mxu0
        %v5397 = vadd.f32 0.0, %v5396
        %v5398 = vpop.f32.mrb[0].mxu0
        %v5399 = vadd.f32 0.0, %v5398
        %5400 = vmatprep.mubr.bf16.mxu0 %v5296
        %5401 = vmatmul.mubr.bf16.gmra.mrb[0].mxu0 %v5257
        %v5402 = vpop.f32.mrb[0].mxu0
        %v5403 = vadd.f32 0.0, %v5402
        %v5404 = vpop.f32.mrb[0].mxu0
        %v5405 = vadd.f32 0.0, %v5404
        %v5406 = vpop.f32.mrb[0].mxu0
        %v5407 = vadd.f32 0.0, %v5406
        %v5408 = vpop.f32.mrb[0].mxu0
        %v5409 = vadd.f32 0.0, %v5408
        %5410 = vdwg.mxu0
        %v5411 = vadd.f32 %v4966, %v5333
        %v5412 = vadd.f32 %v4968, %v5335
        %v5413 = vadd.f32 %v4970, %v5337
        %v5414 = vadd.f32 %v4972, %v5339
        %v5415 = vadd.f32 %v4976, %v5343
        %v5416 = vadd.f32 %v4978, %v5345
        %v5417 = vadd.f32 %v4980, %v5347
        %v5418 = vadd.f32 %v4982, %v5349
        %v5419 = vadd.f32 %v4986, %v5353
        %v5420 = vadd.f32 %v4988, %v5355
        %v5421 = vadd.f32 %v4990, %v5357
        %v5422 = vadd.f32 %v4992, %v5359
        %v5423 = vadd.f32 %v4996, %v5363
        %v5424 = vadd.f32 %v4998, %v5365
        %v5425 = vadd.f32 %v5000, %v5367
        %v5426 = vadd.f32 %v5002, %v5369
        %v5427 = vadd.f32 %v5006, %v5373
        %v5428 = vadd.f32 %v5008, %v5375
        %v5429 = vadd.f32 %v5010, %v5377
        %v5430 = vadd.f32 %v5012, %v5379
        %v5431 = vadd.f32 %v5016, %v5383
        %v5432 = vadd.f32 %v5018, %v5385
        %v5433 = vadd.f32 %v5020, %v5387
        %v5434 = vadd.f32 %v5022, %v5389
        %v5435 = vadd.f32 %v5026, %v5393
        %v5436 = vadd.f32 %v5028, %v5395
        %v5437 = vadd.f32 %v5030, %v5397
        %v5438 = vadd.f32 %v5032, %v5399
        %v5439 = vadd.f32 %v5036, %v5403
        %v5440 = vadd.f32 %v5038, %v5405
        %v5441 = vadd.f32 %v5040, %v5407
        %v5442 = vadd.f32 %v5042, %v5409
        %v5443 = vld [vmem:[%s4553 + $0x100] sm:$0x33]
        %v5445 = vunpack.c.l.b16 %v5443
        %v5446 = vunpack.c.h.b16 %v5443
        %v5447 = vpack.c.b16 %v5445, %v5445
        %v5448 = vpack.c.b16 %v5446, %v5446
        %v5450 = vshrl.u32 %v4638, 16
        %v5452 = vrot.slane %v5450, 1
        %v5453 = vshll.u32 %v4638, 16
        %v5455 = vrot.slane %v5453, 2
        %v5456 = vor.u32 %v5452, %v5455
        %v5458 = vshrl.u32 %v4640, 16
        %v5460 = vrot.slane %v5458, 1
        %v5461 = vshll.u32 %v4640, 16
        %v5463 = vrot.slane %v5461, 2
        %v5464 = vor.u32 %v5460, %v5463
        %v5465 = vsel %vm1877, %v5456, %v5464
        %v5467 = vshrl.u32 %v4639, 16
        %v5469 = vrot.slane %v5467, 1
        %v5470 = vshll.u32 %v4639, 16
        %v5472 = vrot.slane %v5470, 2
        %v5473 = vor.u32 %v5469, %v5472
        %v5475 = vshrl.u32 %v4641, 16
        %v5477 = vrot.slane %v5475, 1
        %v5478 = vshll.u32 %v4641, 16
        %v5480 = vrot.slane %v5478, 2
        %v5481 = vor.u32 %v5477, %v5480
        %v5482 = vsel %vm1877, %v5473, %v5481
        %v5484 = vshrl.u32 %v4642, 16
        %v5486 = vrot.slane %v5484, 1
        %v5487 = vshll.u32 %v4642, 16
        %v5489 = vrot.slane %v5487, 2
        %v5490 = vor.u32 %v5486, %v5489
        %v5491 = vsel %vm1877, %v5464, %v5490
        %v5493 = vshrl.u32 %v4643, 16
        %v5495 = vrot.slane %v5493, 1
        %v5496 = vshll.u32 %v4643, 16
        %v5498 = vrot.slane %v5496, 2
        %v5499 = vor.u32 %v5495, %v5498
        %v5500 = vsel %vm1877, %v5481, %v5499
        %v5502 = vshrl.u32 %v4644, 16
        %v5504 = vrot.slane %v5502, 1
        %v5505 = vshll.u32 %v4644, 16
        %v5507 = vrot.slane %v5505, 2
        %v5508 = vor.u32 %v5504, %v5507
        %v5509 = vsel %vm1877, %v5490, %v5508
        %v5511 = vshrl.u32 %v4645, 16
        %v5513 = vrot.slane %v5511, 1
        %v5514 = vshll.u32 %v4645, 16
        %v5516 = vrot.slane %v5514, 2
        %v5517 = vor.u32 %v5513, %v5516
        %v5518 = vsel %vm1877, %v5499, %v5517
        %v5520 = vshrl.u32 %v4646, 16
        %v5522 = vrot.slane %v5520, 1
        %v5523 = vshll.u32 %v4646, 16
        %v5525 = vrot.slane %v5523, 2
        %v5526 = vor.u32 %v5522, %v5525
        %v5527 = vsel %vm1877, %v5508, %v5526
        %v5529 = vshrl.u32 %v4647, 16
        %v5531 = vrot.slane %v5529, 1
        %v5532 = vshll.u32 %v4647, 16
        %v5534 = vrot.slane %v5532, 2
        %v5535 = vor.u32 %v5531, %v5534
        %v5536 = vsel %vm1877, %v5517, %v5535
        %v5538 = vshrl.u32 %v4648, 16
        %v5540 = vrot.slane %v5538, 1
        %v5541 = vshll.u32 %v4648, 16
        %v5543 = vrot.slane %v5541, 2
        %v5544 = vor.u32 %v5540, %v5543
        %v5545 = vsel %vm1877, %v5526, %v5544
        %v5547 = vshrl.u32 %v4649, 16
        %v5549 = vrot.slane %v5547, 1
        %v5550 = vshll.u32 %v4649, 16
        %v5552 = vrot.slane %v5550, 2
        %v5553 = vor.u32 %v5549, %v5552
        %v5554 = vsel %vm1877, %v5535, %v5553
        %v5556 = vshrl.u32 %v4650, 16
        %v5558 = vrot.slane %v5556, 1
        %v5559 = vshll.u32 %v4650, 16
        %v5561 = vrot.slane %v5559, 2
        %v5562 = vor.u32 %v5558, %v5561
        %v5563 = vsel %vm1877, %v5544, %v5562
        %v5565 = vshrl.u32 %v4651, 16
        %v5567 = vrot.slane %v5565, 1
        %v5568 = vshll.u32 %v4651, 16
        %v5570 = vrot.slane %v5568, 2
        %v5571 = vor.u32 %v5567, %v5570
        %v5572 = vsel %vm1877, %v5553, %v5571
        %v5574 = vshrl.u32 %v4652, 16
        %v5576 = vrot.slane %v5574, 1
        %v5577 = vshll.u32 %v4652, 16
        %v5579 = vrot.slane %v5577, 2
        %v5580 = vor.u32 %v5576, %v5579
        %v5581 = vsel %vm1877, %v5562, %v5580
        %v5583 = vshrl.u32 %v4653, 16
        %v5585 = vrot.slane %v5583, 1
        %v5586 = vshll.u32 %v4653, 16
        %v5588 = vrot.slane %v5586, 2
        %v5589 = vor.u32 %v5585, %v5588
        %v5590 = vsel %vm1877, %v5571, %v5589
        %v5592 = vshrl.u32 %v5447, 16
        %v5594 = vrot.slane %v5592, 1
        %v5595 = vshll.u32 %v5447, 16
        %v5597 = vrot.slane %v5595, 2
        %v5598 = vor.u32 %v5594, %v5597
        %v5599 = vsel %vm1877, %v5580, %v5598
        %v5601 = vshrl.u32 %v5448, 16
        %v5603 = vrot.slane %v5601, 1
        %v5604 = vshll.u32 %v5448, 16
        %v5606 = vrot.slane %v5604, 2
        %v5607 = vor.u32 %v5603, %v5606
        %v5608 = vsel %vm1877, %v5589, %v5607
        %v5618 = vsel %vm792, %v5482, 0
        %v5621 = vsel %vm792, %v5500, 0
        %v5624 = vsel %vm792, %v5518, 0
        %v5627 = vsel %vm792, %v5536, 0
        %v5630 = vsel %vm792, %v5554, 0
        %v5633 = vsel %vm792, %v5572, 0
        %v5636 = vsel %vm792, %v5590, 0
        %v5639 = vsel %vm792, %v5608, 0
        %5641 = vmatprep.subr.bf16.mxu0 %v2125
        %5642 = vmatpush1.bf16.msra.mxu0 %v2124
        %5643 = vmatprep.subr.bf16.mxu0 %v2127
        %5644 = vmatpush1.bf16.msra.mxu0 %v2126
        %5645 = vmatprep.subr.bf16.mxu0 %v2129
        %5646 = vmatpush1.bf16.msra.mxu0 %v2128
        %5647 = vmatprep.subr.bf16.mxu0 %v2131
        %5648 = vmatpush1.bf16.msra.mxu0 %v2130
        %5649 = vmatprep.subr.bf16.mxu0 %v2133
        %5650 = vmatpush1.bf16.msra.mxu0 %v2132
        %5651 = vmatprep.subr.bf16.mxu0 %v2135
        %5652 = vmatpush1.bf16.msra.mxu0 %v2134
        %5653 = vmatprep.subr.bf16.mxu0 %v2137
        %5654 = vmatpush1.bf16.msra.mxu0 %v2136
        %5655 = vmatprep.subr.bf16.mxu0 %v2139
        %5656 = vmatpush1.bf16.msra.mxu0 %v2138
        %5657 = vmatprep.subr.bf16.mxu0 %v2141
        %5658 = vmatpush1.bf16.msra.mxu0 %v2140
        %5659 = vmatprep.subr.bf16.mxu0 %v2143
        %5660 = vmatpush1.bf16.msra.mxu0 %v2142
        %5661 = vmatprep.subr.bf16.mxu0 %v2145
        %5662 = vmatpush1.bf16.msra.mxu0 %v2144
        %5663 = vmatprep.subr.bf16.mxu0 %v2147
        %5664 = vmatpush1.bf16.msra.mxu0 %v2146
        %5665 = vmatprep.subr.bf16.mxu0 %v2202
        %5666 = vmatpush1.bf16.msra.mxu0 %v2199
        %5667 = vmatprep.subr.bf16.mxu0 0
        %5668 = vmatpush1.bf16.msra.mxu0 0
        %5669 = vmatprep.subr.bf16.mxu0 0
        %5670 = vmatpush1.bf16.msra.mxu0 0
        %5671 = vmatprep.subr.bf16.mxu0 0
        %5672 = vmatpush1.bf16.msra.mxu0 0
        %5673 = vmatprep.mubr.bf16.mxu0 %v5618
        %5674 = vmatmul.mubr.bf16.gmra.mrb[0].mxu0 %v5465
        %v5675 = vpop.f32.mrb[0].mxu0
        %v5676 = vadd.f32 0.0, %v5675
        %v5677 = vpop.f32.mrb[0].mxu0
        %v5678 = vadd.f32 0.0, %v5677
        %v5679 = vpop.f32.mrb[0].mxu0
        %v5680 = vadd.f32 0.0, %v5679
        %v5681 = vpop.f32.mrb[0].mxu0
        %v5682 = vadd.f32 0.0, %v5681
        %5683 = vmatprep.mubr.bf16.mxu0 %v5621
        %5684 = vmatmul.mubr.bf16.gmra.mrb[0].mxu0 %v5491
        %v5685 = vpop.f32.mrb[0].mxu0
        %v5686 = vadd.f32 0.0, %v5685
        %v5687 = vpop.f32.mrb[0].mxu0
        %v5688 = vadd.f32 0.0, %v5687
        %v5689 = vpop.f32.mrb[0].mxu0
        %v5690 = vadd.f32 0.0, %v5689
        %v5691 = vpop.f32.mrb[0].mxu0
        %v5692 = vadd.f32 0.0, %v5691
        %5693 = vmatprep.mubr.bf16.mxu0 %v5624
        %5694 = vmatmul.mubr.bf16.gmra.mrb[0].mxu0 %v5509
        %v5695 = vpop.f32.mrb[0].mxu0
        %v5696 = vadd.f32 0.0, %v5695
        %v5697 = vpop.f32.mrb[0].mxu0
        %v5698 = vadd.f32 0.0, %v5697
        %v5699 = vpop.f32.mrb[0].mxu0
        %v5700 = vadd.f32 0.0, %v5699
        %v5701 = vpop.f32.mrb[0].mxu0
        %v5702 = vadd.f32 0.0, %v5701
        %5703 = vmatprep.mubr.bf16.mxu0 %v5627
        %5704 = vmatmul.mubr.bf16.gmra.mrb[0].mxu0 %v5527
        %v5705 = vpop.f32.mrb[0].mxu0
        %v5706 = vadd.f32 0.0, %v5705
        %v5707 = vpop.f32.mrb[0].mxu0
        %v5708 = vadd.f32 0.0, %v5707
        %v5709 = vpop.f32.mrb[0].mxu0
        %v5710 = vadd.f32 0.0, %v5709
        %v5711 = vpop.f32.mrb[0].mxu0
        %v5712 = vadd.f32 0.0, %v5711
        %5713 = vmatprep.mubr.bf16.mxu0 %v5630
        %5714 = vmatmul.mubr.bf16.gmra.mrb[0].mxu0 %v5545
        %v5715 = vpop.f32.mrb[0].mxu0
        %v5716 = vadd.f32 0.0, %v5715
        %v5717 = vpop.f32.mrb[0].mxu0
        %v5718 = vadd.f32 0.0, %v5717
        %v5719 = vpop.f32.mrb[0].mxu0
        %v5720 = vadd.f32 0.0, %v5719
        %v5721 = vpop.f32.mrb[0].mxu0
        %v5722 = vadd.f32 0.0, %v5721
        %5723 = vmatprep.mubr.bf16.mxu0 %v5633
        %5724 = vmatmul.mubr.bf16.gmra.mrb[0].mxu0 %v5563
        %v5725 = vpop.f32.mrb[0].mxu0
        %v5726 = vadd.f32 0.0, %v5725
        %v5727 = vpop.f32.mrb[0].mxu0
        %v5728 = vadd.f32 0.0, %v5727
        %v5729 = vpop.f32.mrb[0].mxu0
        %v5730 = vadd.f32 0.0, %v5729
        %v5731 = vpop.f32.mrb[0].mxu0
        %v5732 = vadd.f32 0.0, %v5731
        %5733 = vmatprep.mubr.bf16.mxu0 %v5636
        %5734 = vmatmul.mubr.bf16.gmra.mrb[0].mxu0 %v5581
        %v5735 = vpop.f32.mrb[0].mxu0
        %v5736 = vadd.f32 0.0, %v5735
        %v5737 = vpop.f32.mrb[0].mxu0
        %v5738 = vadd.f32 0.0, %v5737
        %v5739 = vpop.f32.mrb[0].mxu0
        %v5740 = vadd.f32 0.0, %v5739
        %v5741 = vpop.f32.mrb[0].mxu0
        %v5742 = vadd.f32 0.0, %v5741
        %5743 = vmatprep.mubr.bf16.mxu0 %v5639
        %5744 = vmatmul.mubr.bf16.gmra.mrb[0].mxu0 %v5599
        %v5745 = vpop.f32.mrb[0].mxu0
        %v5746 = vadd.f32 0.0, %v5745
        %v5747 = vpop.f32.mrb[0].mxu0
        %v5748 = vadd.f32 0.0, %v5747
        %v5749 = vpop.f32.mrb[0].mxu0
        %v5750 = vadd.f32 0.0, %v5749
        %v5751 = vpop.f32.mrb[0].mxu0
        %v5752 = vadd.f32 0.0, %v5751
        %5753 = vdwg.mxu0
        %v5754 = vadd.f32 %v5411, %v5676
        %v5755 = vadd.f32 %v5412, %v5678
        %v5756 = vadd.f32 %v5413, %v5680
        %v5757 = vadd.f32 %v5414, %v5682
        %v5758 = vadd.f32 %v5415, %v5686
        %v5759 = vadd.f32 %v5416, %v5688
        %v5760 = vadd.f32 %v5417, %v5690
        %v5761 = vadd.f32 %v5418, %v5692
        %v5762 = vadd.f32 %v5419, %v5696
        %v5763 = vadd.f32 %v5420, %v5698
        %v5764 = vadd.f32 %v5421, %v5700
        %v5765 = vadd.f32 %v5422, %v5702
        %v5766 = vadd.f32 %v5423, %v5706
        %v5767 = vadd.f32 %v5424, %v5708
        %v5768 = vadd.f32 %v5425, %v5710
        %v5769 = vadd.f32 %v5426, %v5712
        %v5770 = vadd.f32 %v5427, %v5716
        %v5771 = vadd.f32 %v5428, %v5718
        %v5772 = vadd.f32 %v5429, %v5720
        %v5773 = vadd.f32 %v5430, %v5722
        %v5774 = vadd.f32 %v5431, %v5726
        %v5775 = vadd.f32 %v5432, %v5728
        %v5776 = vadd.f32 %v5433, %v5730
        %v5777 = vadd.f32 %v5434, %v5732
        %v5778 = vadd.f32 %v5435, %v5736
        %v5779 = vadd.f32 %v5436, %v5738
        %v5780 = vadd.f32 %v5437, %v5740
        %v5781 = vadd.f32 %v5438, %v5742
        %v5782 = vadd.f32 %v5439, %v5746
        %v5783 = vadd.f32 %v5440, %v5748
        %v5784 = vadd.f32 %v5441, %v5750
        %v5785 = vadd.f32 %v5442, %v5752
        %v5786 = vld [vmem:[%s4553] sm:$0xee]
        %v5788 = vunpack.c.l.b16 %v5786
        %v5789 = vunpack.c.h.b16 %v5786
        %v5790 = vpack.c.b16 %v5080, %v5788
        %v5791 = vpack.c.b16 %v5081, %v5789
        %v5792 = vrot.slane %v5790, 1
        %v5793 = vrot.slane %v5114, 1
        %v5794 = vsel %vm621, %v5792, %v5793
        %v5795 = vrot.slane %v5791, 1
        %v5796 = vrot.slane %v5115, 1
        %v5797 = vsel %vm621, %v5795, %v5796
        %v5798 = vrot.slane %v5116, 1
        %v5799 = vsel %vm621, %v5793, %v5798
        %v5800 = vrot.slane %v5117, 1
        %v5801 = vsel %vm621, %v5796, %v5800
        %v5802 = vrot.slane %v5118, 1
        %v5803 = vsel %vm621, %v5798, %v5802
        %v5804 = vrot.slane %v5119, 1
        %v5805 = vsel %vm621, %v5800, %v5804
        %v5806 = vrot.slane %v5120, 1
        %v5807 = vsel %vm621, %v5802, %v5806
        %v5808 = vrot.slane %v5121, 1
        %v5809 = vsel %vm621, %v5804, %v5808
        %v5810 = vrot.slane %v5122, 1
        %v5811 = vsel %vm621, %v5806, %v5810
        %v5812 = vrot.slane %v5123, 1
        %v5813 = vsel %vm621, %v5808, %v5812
        %v5814 = vrot.slane %v5124, 1
        %v5815 = vsel %vm621, %v5810, %v5814
        %v5816 = vrot.slane %v5125, 1
        %v5817 = vsel %vm621, %v5812, %v5816
        %v5818 = vrot.slane %v5126, 1
        %v5819 = vsel %vm621, %v5814, %v5818
        %v5820 = vrot.slane %v5127, 1
        %v5821 = vsel %vm621, %v5816, %v5820
        %v5822 = vrot.slane %v5128, 1
        %v5823 = vsel %vm621, %v5818, %v5822
        %v5824 = vrot.slane %v5129, 1
        %v5825 = vsel %vm621, %v5820, %v5824
        %v5835 = vsel %vm792, %v5797, 0
        %v5838 = vsel %vm792, %v5801, 0
        %v5841 = vsel %vm792, %v5805, 0
        %v5844 = vsel %vm792, %v5809, 0
        %v5847 = vsel %vm792, %v5813, 0
        %v5850 = vsel %vm792, %v5817, 0
        %v5853 = vsel %vm792, %v5821, 0
        %v5856 = vsel %vm792, %v5825, 0
        %5858 = vmatprep.subr.bf16.mxu0 %v2503
        %5859 = vmatpush1.bf16.msra.mxu0 %v2502
        %5860 = vmatprep.subr.bf16.mxu0 %v2505
        %5861 = vmatpush1.bf16.msra.mxu0 %v2504
        %5862 = vmatprep.subr.bf16.mxu0 %v2507
        %5863 = vmatpush1.bf16.msra.mxu0 %v2506
        %5864 = vmatprep.subr.bf16.mxu0 %v2509
        %5865 = vmatpush1.bf16.msra.mxu0 %v2508
        %5866 = vmatprep.subr.bf16.mxu0 %v2511
        %5867 = vmatpush1.bf16.msra.mxu0 %v2510
        %5868 = vmatprep.subr.bf16.mxu0 %v2513
        %5869 = vmatpush1.bf16.msra.mxu0 %v2512
        %5870 = vmatprep.subr.bf16.mxu0 %v2515
        %5871 = vmatpush1.bf16.msra.mxu0 %v2514
        %5872 = vmatprep.subr.bf16.mxu0 %v2517
        %5873 = vmatpush1.bf16.msra.mxu0 %v2516
        %5874 = vmatprep.subr.bf16.mxu0 %v2519
        %5875 = vmatpush1.bf16.msra.mxu0 %v2518
        %5876 = vmatprep.subr.bf16.mxu0 %v2521
        %5877 = vmatpush1.bf16.msra.mxu0 %v2520
        %5878 = vmatprep.subr.bf16.mxu0 %v2523
        %5879 = vmatpush1.bf16.msra.mxu0 %v2522
        %5880 = vmatprep.subr.bf16.mxu0 %v2525
        %5881 = vmatpush1.bf16.msra.mxu0 %v2524
        %5882 = vmatprep.subr.bf16.mxu0 %v2580
        %5883 = vmatpush1.bf16.msra.mxu0 %v2577
        %5884 = vmatprep.subr.bf16.mxu0 0
        %5885 = vmatpush1.bf16.msra.mxu0 0
        %5886 = vmatprep.subr.bf16.mxu0 0
        %5887 = vmatpush1.bf16.msra.mxu0 0
        %5888 = vmatprep.subr.bf16.mxu0 0
        %5889 = vmatpush1.bf16.msra.mxu0 0
        %5890 = vmatprep.mubr.bf16.mxu0 %v5835
        %5891 = vmatmul.mubr.bf16.gmra.mrb[0].mxu0 %v5794
        %v5892 = vpop.f32.mrb[0].mxu0
        %v5893 = vadd.f32 0.0, %v5892
        %v5894 = vpop.f32.mrb[0].mxu0
        %v5895 = vadd.f32 0.0, %v5894
        %v5896 = vpop.f32.mrb[0].mxu0
        %v5897 = vadd.f32 0.0, %v5896
        %v5898 = vpop.f32.mrb[0].mxu0
        %v5899 = vadd.f32 0.0, %v5898
        %5900 = vmatprep.mubr.bf16.mxu0 %v5838
        %5901 = vmatmul.mubr.bf16.gmra.mrb[0].mxu0 %v5799
        %v5902 = vpop.f32.mrb[0].mxu0
        %v5903 = vadd.f32 0.0, %v5902
        %v5904 = vpop.f32.mrb[0].mxu0
        %v5905 = vadd.f32 0.0, %v5904
        %v5906 = vpop.f32.mrb[0].mxu0
        %v5907 = vadd.f32 0.0, %v5906
        %v5908 = vpop.f32.mrb[0].mxu0
        %v5909 = vadd.f32 0.0, %v5908
        %5910 = vmatprep.mubr.bf16.mxu0 %v5841
        %5911 = vmatmul.mubr.bf16.gmra.mrb[0].mxu0 %v5803
        %v5912 = vpop.f32.mrb[0].mxu0
        %v5913 = vadd.f32 0.0, %v5912
        %v5914 = vpop.f32.mrb[0].mxu0
        %v5915 = vadd.f32 0.0, %v5914
        %v5916 = vpop.f32.mrb[0].mxu0
        %v5917 = vadd.f32 0.0, %v5916
        %v5918 = vpop.f32.mrb[0].mxu0
        %v5919 = vadd.f32 0.0, %v5918
        %5920 = vmatprep.mubr.bf16.mxu0 %v5844
        %5921 = vmatmul.mubr.bf16.gmra.mrb[0].mxu0 %v5807
        %v5922 = vpop.f32.mrb[0].mxu0
        %v5923 = vadd.f32 0.0, %v5922
        %v5924 = vpop.f32.mrb[0].mxu0
        %v5925 = vadd.f32 0.0, %v5924
        %v5926 = vpop.f32.mrb[0].mxu0
        %v5927 = vadd.f32 0.0, %v5926
        %v5928 = vpop.f32.mrb[0].mxu0
        %v5929 = vadd.f32 0.0, %v5928
        %5930 = vmatprep.mubr.bf16.mxu0 %v5847
        %5931 = vmatmul.mubr.bf16.gmra.mrb[0].mxu0 %v5811
        %v5932 = vpop.f32.mrb[0].mxu0
        %v5933 = vadd.f32 0.0, %v5932
        %v5934 = vpop.f32.mrb[0].mxu0
        %v5935 = vadd.f32 0.0, %v5934
        %v5936 = vpop.f32.mrb[0].mxu0
        %v5937 = vadd.f32 0.0, %v5936
        %v5938 = vpop.f32.mrb[0].mxu0
        %v5939 = vadd.f32 0.0, %v5938
        %5940 = vmatprep.mubr.bf16.mxu0 %v5850
        %5941 = vmatmul.mubr.bf16.gmra.mrb[0].mxu0 %v5815
        %v5942 = vpop.f32.mrb[0].mxu0
        %v5943 = vadd.f32 0.0, %v5942
        %v5944 = vpop.f32.mrb[0].mxu0
        %v5945 = vadd.f32 0.0, %v5944
        %v5946 = vpop.f32.mrb[0].mxu0
        %v5947 = vadd.f32 0.0, %v5946
        %v5948 = vpop.f32.mrb[0].mxu0
        %v5949 = vadd.f32 0.0, %v5948
        %5950 = vmatprep.mubr.bf16.mxu0 %v5853
        %5951 = vmatmul.mubr.bf16.gmra.mrb[0].mxu0 %v5819
        %v5952 = vpop.f32.mrb[0].mxu0
        %v5953 = vadd.f32 0.0, %v5952
        %v5954 = vpop.f32.mrb[0].mxu0
        %v5955 = vadd.f32 0.0, %v5954
        %v5956 = vpop.f32.mrb[0].mxu0
        %v5957 = vadd.f32 0.0, %v5956
        %v5958 = vpop.f32.mrb[0].mxu0
        %v5959 = vadd.f32 0.0, %v5958
        %5960 = vmatprep.mubr.bf16.mxu0 %v5856
        %5961 = vmatmul.mubr.bf16.gmra.mrb[0].mxu0 %v5823
        %v5962 = vpop.f32.mrb[0].mxu0
        %v5963 = vadd.f32 0.0, %v5962
        %v5964 = vpop.f32.mrb[0].mxu0
        %v5965 = vadd.f32 0.0, %v5964
        %v5966 = vpop.f32.mrb[0].mxu0
        %v5967 = vadd.f32 0.0, %v5966
        %v5968 = vpop.f32.mrb[0].mxu0
        %v5969 = vadd.f32 0.0, %v5968
        %5970 = vdwg.mxu0
        %v5971 = vadd.f32 %v5754, %v5893
        %v5972 = vadd.f32 %v5755, %v5895
        %v5973 = vadd.f32 %v5756, %v5897
        %v5974 = vadd.f32 %v5757, %v5899
        %v5975 = vadd.f32 %v5758, %v5903
        %v5976 = vadd.f32 %v5759, %v5905
        %v5977 = vadd.f32 %v5760, %v5907
        %v5978 = vadd.f32 %v5761, %v5909
        %v5979 = vadd.f32 %v5762, %v5913
        %v5980 = vadd.f32 %v5763, %v5915
        %v5981 = vadd.f32 %v5764, %v5917
        %v5982 = vadd.f32 %v5765, %v5919
        %v5983 = vadd.f32 %v5766, %v5923
        %v5984 = vadd.f32 %v5767, %v5925
        %v5985 = vadd.f32 %v5768, %v5927
        %v5986 = vadd.f32 %v5769, %v5929
        %v5987 = vadd.f32 %v5770, %v5933
        %v5988 = vadd.f32 %v5771, %v5935
        %v5989 = vadd.f32 %v5772, %v5937
        %v5990 = vadd.f32 %v5773, %v5939
        %v5991 = vadd.f32 %v5774, %v5943
        %v5992 = vadd.f32 %v5775, %v5945
        %v5993 = vadd.f32 %v5776, %v5947
        %v5994 = vadd.f32 %v5777, %v5949
        %v5995 = vadd.f32 %v5778, %v5953
        %v5996 = vadd.f32 %v5779, %v5955
        %v5997 = vadd.f32 %v5780, %v5957
        %v5998 = vadd.f32 %v5781, %v5959
        %v5999 = vadd.f32 %v5782, %v5963
        %v6000 = vadd.f32 %v5783, %v5965
        %v6001 = vadd.f32 %v5784, %v5967
        %v6002 = vadd.f32 %v5785, %v5969
        %6035 = vrot.lane.b32.xlu0 %v5971, 32
        %v6036 = vpop.permute.xlu0 %6035
        %6037 = vrot.lane.b32.xlu0 %v5972, 32
        %v6038 = vpop.permute.xlu0 %6037
        %6039 = vrot.lane.b32.xlu0 %v5973, 32
        %v6040 = vpop.permute.xlu0 %6039
        %6041 = vrot.lane.b32.xlu0 %v5974, 32
        %v6042 = vpop.permute.xlu0 %6041
        %6043 = vrot.lane.b32.xlu0 %v5975, 32
        %v6044 = vpop.permute.xlu0 %6043
        %6045 = vrot.lane.b32.xlu0 %v5976, 32
        %v6046 = vpop.permute.xlu0 %6045
        %6047 = vrot.lane.b32.xlu0 %v5977, 32
        %v6048 = vpop.permute.xlu0 %6047
        %6049 = vrot.lane.b32.xlu0 %v5978, 32
        %v6050 = vpop.permute.xlu0 %6049
        %6051 = vrot.lane.b32.xlu0 %v5979, 32
        %v6052 = vpop.permute.xlu0 %6051
        %6053 = vrot.lane.b32.xlu0 %v5980, 32
        %v6054 = vpop.permute.xlu0 %6053
        %6055 = vrot.lane.b32.xlu0 %v5981, 32
        %v6056 = vpop.permute.xlu0 %6055
        %6057 = vrot.lane.b32.xlu0 %v5982, 32
        %v6058 = vpop.permute.xlu0 %6057
        %6059 = vrot.lane.b32.xlu0 %v5983, 32
        %v6060 = vpop.permute.xlu0 %6059
        %6061 = vrot.lane.b32.xlu0 %v5984, 32
        %v6062 = vpop.permute.xlu0 %6061
        %6063 = vrot.lane.b32.xlu0 %v5985, 32
        %v6064 = vpop.permute.xlu0 %6063
        %6065 = vrot.lane.b32.xlu0 %v5986, 32
        %v6066 = vpop.permute.xlu0 %6065
        %6067 = vrot.lane.b32.xlu0 %v5987, 32
        %v6068 = vpop.permute.xlu0 %6067
        %6069 = vrot.lane.b32.xlu0 %v5988, 32
        %v6070 = vpop.permute.xlu0 %6069
        %6071 = vrot.lane.b32.xlu0 %v5989, 32
        %v6072 = vpop.permute.xlu0 %6071
        %6073 = vrot.lane.b32.xlu0 %v5990, 32
        %v6074 = vpop.permute.xlu0 %6073
        %6075 = vrot.lane.b32.xlu0 %v5991, 32
        %v6076 = vpop.permute.xlu0 %6075
        %6077 = vrot.lane.b32.xlu0 %v5992, 32
        %v6078 = vpop.permute.xlu0 %6077
        %6079 = vrot.lane.b32.xlu0 %v5993, 32
        %v6080 = vpop.permute.xlu0 %6079
        %6081 = vrot.lane.b32.xlu0 %v5994, 32
        %v6082 = vpop.permute.xlu0 %6081
        %6083 = vrot.lane.b32.xlu0 %v5995, 32
        %v6084 = vpop.permute.xlu0 %6083
        %6085 = vrot.lane.b32.xlu0 %v5996, 32
        %v6086 = vpop.permute.xlu0 %6085
        %6087 = vrot.lane.b32.xlu0 %v5997, 32
        %v6088 = vpop.permute.xlu0 %6087
        %6089 = vrot.lane.b32.xlu0 %v5998, 32
        %v6090 = vpop.permute.xlu0 %6089
        %6091 = vrot.lane.b32.xlu0 %v5999, 32
        %v6092 = vpop.permute.xlu0 %6091
        %6093 = vrot.lane.b32.xlu0 %v6000, 32
        %v6094 = vpop.permute.xlu0 %6093
        %6095 = vrot.lane.b32.xlu0 %v6001, 32
        %v6096 = vpop.permute.xlu0 %6095
        %6097 = vrot.lane.b32.xlu0 %v6002, 32
        %v6098 = vpop.permute.xlu0 %6097
        %v6099 = vsel %vm2823, %v6036, %v6038
        %v6100 = vsel %vm2823, %v6040, %v6042
        %v6101 = vsel %vm2823, %v6044, %v6046
        %v6102 = vsel %vm2823, %v6048, %v6050
        %v6103 = vsel %vm2823, %v6052, %v6054
        %v6104 = vsel %vm2823, %v6056, %v6058
        %v6105 = vsel %vm2823, %v6060, %v6062
        %v6106 = vsel %vm2823, %v6064, %v6066
        %v6107 = vsel %vm2823, %v6068, %v6070
        %v6108 = vsel %vm2823, %v6072, %v6074
        %v6109 = vsel %vm2823, %v6076, %v6078
        %v6110 = vsel %vm2823, %v6080, %v6082
        %v6111 = vsel %vm2823, %v6084, %v6086
        %v6112 = vsel %vm2823, %v6088, %v6090
        %v6113 = vsel %vm2823, %v6092, %v6094
        %v6114 = vsel %vm2823, %v6096, %v6098
        %v6131 = vmax.f32 %v5971, %v6099
        %v6132 = vmax.f32 %v5973, %v6100
        %v6133 = vmax.f32 %v5975, %v6101
        %v6134 = vmax.f32 %v5977, %v6102
        %v6135 = vmax.f32 %v5979, %v6103
        %v6136 = vmax.f32 %v5981, %v6104
        %v6137 = vmax.f32 %v5983, %v6105
        %v6138 = vmax.f32 %v5985, %v6106
        %v6139 = vmax.f32 %v5987, %v6107
        %v6140 = vmax.f32 %v5989, %v6108
        %v6141 = vmax.f32 %v5991, %v6109
        %v6142 = vmax.f32 %v5993, %v6110
        %v6143 = vmax.f32 %v5995, %v6111
        %v6144 = vmax.f32 %v5997, %v6112
        %v6145 = vmax.f32 %v5999, %v6113
        %v6146 = vmax.f32 %v6001, %v6114
        %v6147 = vadd.f32 %v6131, %v2877
        %v6148 = vadd.f32 %v6132, %v2877
        %v6149 = vadd.f32 %v6133, %v2877
        %v6150 = vadd.f32 %v6134, %v2877
        %v6151 = vadd.f32 %v6135, %v2877
        %v6152 = vadd.f32 %v6136, %v2877
        %v6153 = vadd.f32 %v6137, %v2877
        %v6154 = vadd.f32 %v6138, %v2877
        %v6155 = vadd.f32 %v6139, %v2877
        %v6156 = vadd.f32 %v6140, %v2877
        %v6157 = vadd.f32 %v6141, %v2877
        %v6158 = vadd.f32 %v6142, %v2877
        %v6159 = vadd.f32 %v6143, %v2877
        %v6160 = vadd.f32 %v6144, %v2877
        %v6161 = vadd.f32 %v6145, %v2877
        %v6162 = vadd.f32 %v6146, %v2877
        %v6163 = vmax.f32 %v6147, 0.0
        %v6164 = vmax.f32 %v6148, 0.0
        %v6165 = vmax.f32 %v6149, 0.0
        %v6166 = vmax.f32 %v6150, 0.0
        %v6167 = vmax.f32 %v6151, 0.0
        %v6168 = vmax.f32 %v6152, 0.0
        %v6169 = vmax.f32 %v6153, 0.0
        %v6170 = vmax.f32 %v6154, 0.0
        %v6171 = vmax.f32 %v6155, 0.0
        %v6172 = vmax.f32 %v6156, 0.0
        %v6173 = vmax.f32 %v6157, 0.0
        %v6174 = vmax.f32 %v6158, 0.0
        %v6175 = vmax.f32 %v6159, 0.0
        %v6176 = vmax.f32 %v6160, 0.0
        %v6177 = vmax.f32 %v6161, 0.0
        %v6178 = vmax.f32 %v6162, 0.0
        %v6179 = vpack.c.bf16 %v6164, %v6163
        %v6180 = vpack.c.bf16 %v6166, %v6165
        %v6181 = vpack.c.bf16 %v6168, %v6167
        %v6182 = vpack.c.bf16 %v6170, %v6169
        %v6183 = vpack.c.bf16 %v6172, %v6171
        %v6184 = vpack.c.bf16 %v6174, %v6173
        %v6185 = vpack.c.bf16 %v6176, %v6175
        %v6186 = vpack.c.bf16 %v6178, %v6177
        %s6187 = scalar_lea.vmem %s464, 792
        %v6188 = vld [vmem:[%s6187] sm:$0xff]
        %v6189 = vld [vmem:[%s6187 + $0x8] sm:$0xff]
        %v6190 = vld [vmem:[%s6187 + $0x10] sm:$0xff]
        %v6191 = vld [vmem:[%s6187 + $0x18] sm:$0xff]
        %v6192 = vld [vmem:[%s6187 + $0x20] sm:$0xff]
        %v6193 = vld [vmem:[%s6187 + $0x28] sm:$0xff]
        %v6194 = vld [vmem:[%s6187 + $0x30] sm:$0xff]
        %v6195 = vld [vmem:[%s6187 + $0x38] sm:$0xff]
        %v6196 = vld [vmem:[%s6187 + $0x40] sm:$0xff]
        %v6197 = vld [vmem:[%s6187 + $0x48] sm:$0xff]
        %v6198 = vld [vmem:[%s6187 + $0x50] sm:$0xff]
        %v6199 = vld [vmem:[%s6187 + $0x58] sm:$0xff]
        %v6200 = vld [vmem:[%s6187 + $0x60] sm:$0xff]
        %v6201 = vld [vmem:[%s6187 + $0x68] sm:$0xff]
        %v6202 = vld [vmem:[%s6187 + $0x70] sm:$0xff]
        %v6203 = vld [vmem:[%s6187 + $0x78] sm:$0xff]
        %v6204 = vld [vmem:[%s6187 + $0x80] sm:$0xee]
        %v6205 = vld [vmem:[%s6187 + $0x88] sm:$0xff]
        %v6206 = vld [vmem:[%s6187 + $0x90] sm:$0xff]
        %v6207 = vld [vmem:[%s6187 + $0x98] sm:$0xff]
        %v6208 = vld [vmem:[%s6187 + $0xa0] sm:$0xff]
        %v6209 = vld [vmem:[%s6187 + $0xa8] sm:$0xff]
        %v6210 = vld [vmem:[%s6187 + $0xb0] sm:$0xff]
        %v6211 = vld [vmem:[%s6187 + $0xb8] sm:$0xff]
        %v6212 = vld [vmem:[%s6187 + $0xc0] sm:$0xff]
        %v6213 = vld [vmem:[%s6187 + $0xc8] sm:$0xff]
        %v6214 = vld [vmem:[%s6187 + $0xd0] sm:$0xff]
        %v6215 = vld [vmem:[%s6187 + $0xd8] sm:$0xff]
        %v6216 = vld [vmem:[%s6187 + $0xe0] sm:$0xff]
        %v6217 = vld [vmem:[%s6187 + $0xe8] sm:$0xff]
        %v6218 = vld [vmem:[%s6187 + $0xf0] sm:$0xff]
        %v6219 = vld [vmem:[%s6187 + $0xf8] sm:$0xff]
        %v6220 = vld [vmem:[%s6187 + $0x100] sm:$0x11]
        %v6238 = vunpack.c.l.b16 %v6204
        %v6239 = vunpack.c.h.b16 %v6204
        %v6240 = vunpack.c.l.b16 %v6205
        %v6241 = vunpack.c.h.b16 %v6205
        %v6242 = vunpack.c.l.b16 %v6206
        %v6243 = vunpack.c.h.b16 %v6206
        %v6244 = vunpack.c.l.b16 %v6207
        %v6245 = vunpack.c.h.b16 %v6207
        %v6246 = vunpack.c.l.b16 %v6208
        %v6247 = vunpack.c.h.b16 %v6208
        %v6248 = vunpack.c.l.b16 %v6209
        %v6249 = vunpack.c.h.b16 %v6209
        %v6250 = vunpack.c.l.b16 %v6210
        %v6251 = vunpack.c.h.b16 %v6210
        %v6252 = vunpack.c.l.b16 %v6211
        %v6253 = vunpack.c.h.b16 %v6211
        %v6254 = vunpack.c.l.b16 %v6212
        %v6255 = vunpack.c.h.b16 %v6212
        %v6256 = vunpack.c.l.b16 %v6213
        %v6257 = vunpack.c.h.b16 %v6213
        %v6258 = vunpack.c.l.b16 %v6214
        %v6259 = vunpack.c.h.b16 %v6214
        %v6260 = vunpack.c.l.b16 %v6215
        %v6261 = vunpack.c.h.b16 %v6215
        %v6262 = vunpack.c.l.b16 %v6216
        %v6263 = vunpack.c.h.b16 %v6216
        %v6264 = vunpack.c.l.b16 %v6217
        %v6265 = vunpack.c.h.b16 %v6217
        %v6266 = vunpack.c.l.b16 %v6218
        %v6267 = vunpack.c.h.b16 %v6218
        %v6268 = vunpack.c.l.b16 %v6219
        %v6269 = vunpack.c.h.b16 %v6219
        %v6270 = vunpack.c.l.b16 %v6220
        %v6271 = vunpack.c.h.b16 %v6220
        %v6272 = vpack.c.b16 %v6240, %v6238
        %v6273 = vpack.c.b16 %v6241, %v6239
        %v6274 = vpack.c.b16 %v6244, %v6242
        %v6275 = vpack.c.b16 %v6245, %v6243
        %v6276 = vpack.c.b16 %v6248, %v6246
        %v6277 = vpack.c.b16 %v6249, %v6247
        %v6278 = vpack.c.b16 %v6252, %v6250
        %v6279 = vpack.c.b16 %v6253, %v6251
        %v6280 = vpack.c.b16 %v6256, %v6254
        %v6281 = vpack.c.b16 %v6257, %v6255
        %v6282 = vpack.c.b16 %v6260, %v6258
        %v6283 = vpack.c.b16 %v6261, %v6259
        %v6284 = vpack.c.b16 %v6264, %v6262
        %v6285 = vpack.c.b16 %v6265, %v6263
        %v6286 = vpack.c.b16 %v6268, %v6266
        %v6287 = vpack.c.b16 %v6269, %v6267
        %v6288 = vpack.c.b16 %v6270, %v6270
        %v6289 = vpack.c.b16 %v6271, %v6271
        %v6290 = vrot.slane %v6272, 1
        %v6291 = vrot.slane %v6274, 1
        %v6292 = vsel %vm621, %v6290, %v6291
        %v6293 = vrot.slane %v6273, 1
        %v6294 = vrot.slane %v6275, 1
        %v6295 = vsel %vm621, %v6293, %v6294
        %v6296 = vrot.slane %v6276, 1
        %v6297 = vsel %vm621, %v6291, %v6296
        %v6298 = vrot.slane %v6277, 1
        %v6299 = vsel %vm621, %v6294, %v6298
        %v6300 = vrot.slane %v6278, 1
        %v6301 = vsel %vm621, %v6296, %v6300
        %v6302 = vrot.slane %v6279, 1
        %v6303 = vsel %vm621, %v6298, %v6302
        %v6304 = vrot.slane %v6280, 1
        %v6305 = vsel %vm621, %v6300, %v6304
        %v6306 = vrot.slane %v6281, 1
        %v6307 = vsel %vm621, %v6302, %v6306
        %v6308 = vrot.slane %v6282, 1
        %v6309 = vsel %vm621, %v6304, %v6308
        %v6310 = vrot.slane %v6283, 1
        %v6311 = vsel %vm621, %v6306, %v6310
        %v6312 = vrot.slane %v6284, 1
        %v6313 = vsel %vm621, %v6308, %v6312
        %v6314 = vrot.slane %v6285, 1
        %v6315 = vsel %vm621, %v6310, %v6314
        %v6316 = vrot.slane %v6286, 1
        %v6317 = vsel %vm621, %v6312, %v6316
        %v6318 = vrot.slane %v6287, 1
        %v6319 = vsel %vm621, %v6314, %v6318
        %v6320 = vrot.slane %v6288, 1
        %v6321 = vsel %vm621, %v6316, %v6320
        %v6322 = vrot.slane %v6289, 1
        %v6323 = vsel %vm621, %v6318, %v6322
        %v6333 = vsel %vm792, %v6295, 0
        %v6336 = vsel %vm792, %v6299, 0
        %v6339 = vsel %vm792, %v6303, 0
        %v6342 = vsel %vm792, %v6307, 0
        %v6345 = vsel %vm792, %v6311, 0
        %v6348 = vsel %vm792, %v6315, 0
        %v6351 = vsel %vm792, %v6319, 0
        %v6354 = vsel %vm792, %v6323, 0
        %6356 = vmatprep.subr.bf16.mxu0 %v743
        %6357 = vmatpush1.bf16.msra.mxu0 %v742
        %6358 = vmatprep.subr.bf16.mxu0 %v745
        %6359 = vmatpush1.bf16.msra.mxu0 %v744
        %6360 = vmatprep.subr.bf16.mxu0 %v747
        %6361 = vmatpush1.bf16.msra.mxu0 %v746
        %6362 = vmatprep.subr.bf16.mxu0 %v749
        %6363 = vmatpush1.bf16.msra.mxu0 %v748
        %6364 = vmatprep.subr.bf16.mxu0 %v751
        %6365 = vmatpush1.bf16.msra.mxu0 %v750
        %6366 = vmatprep.subr.bf16.mxu0 %v753
        %6367 = vmatpush1.bf16.msra.mxu0 %v752
        %6368 = vmatprep.subr.bf16.mxu0 %v755
        %6369 = vmatpush1.bf16.msra.mxu0 %v754
        %6370 = vmatprep.subr.bf16.mxu0 %v757
        %6371 = vmatpush1.bf16.msra.mxu0 %v756
        %6372 = vmatprep.subr.bf16.mxu0 %v759
        %6373 = vmatpush1.bf16.msra.mxu0 %v758
        %6374 = vmatprep.subr.bf16.mxu0 %v761
        %6375 = vmatpush1.bf16.msra.mxu0 %v760
        %6376 = vmatprep.subr.bf16.mxu0 %v763
        %6377 = vmatpush1.bf16.msra.mxu0 %v762
        %6378 = vmatprep.subr.bf16.mxu0 %v765
        %6379 = vmatpush1.bf16.msra.mxu0 %v764
        %6380 = vmatprep.subr.bf16.mxu0 %v825
        %6381 = vmatpush1.bf16.msra.mxu0 %v822
        %6382 = vmatprep.subr.bf16.mxu0 0
        %6383 = vmatpush1.bf16.msra.mxu0 0
        %6384 = vmatprep.subr.bf16.mxu0 0
        %6385 = vmatpush1.bf16.msra.mxu0 0
        %6386 = vmatprep.subr.bf16.mxu0 0
        %6387 = vmatpush1.bf16.msra.mxu0 0
        %6388 = vmatprep.mubr.bf16.mxu0 %v6333
        %6389 = vmatmul.mubr.bf16.gmra.mrb[0].mxu0 %v6292
        %v6390 = vpop.f32.mrb[0].mxu0
        %v6391 = vadd.f32 0.0, %v6390
        %v6392 = vpop.f32.mrb[0].mxu0
        %v6393 = vadd.f32 0.0, %v6392
        %v6394 = vpop.f32.mrb[0].mxu0
        %v6395 = vadd.f32 0.0, %v6394
        %v6396 = vpop.f32.mrb[0].mxu0
        %v6397 = vadd.f32 0.0, %v6396
        %6398 = vmatprep.mubr.bf16.mxu0 %v6336
        %6399 = vmatmul.mubr.bf16.gmra.mrb[0].mxu0 %v6297
        %v6400 = vpop.f32.mrb[0].mxu0
        %v6401 = vadd.f32 0.0, %v6400
        %v6402 = vpop.f32.mrb[0].mxu0
        %v6403 = vadd.f32 0.0, %v6402
        %v6404 = vpop.f32.mrb[0].mxu0
        %v6405 = vadd.f32 0.0, %v6404
        %v6406 = vpop.f32.mrb[0].mxu0
        %v6407 = vadd.f32 0.0, %v6406
        %6408 = vmatprep.mubr.bf16.mxu0 %v6339
        %6409 = vmatmul.mubr.bf16.gmra.mrb[0].mxu0 %v6301
        %v6410 = vpop.f32.mrb[0].mxu0
        %v6411 = vadd.f32 0.0, %v6410
        %v6412 = vpop.f32.mrb[0].mxu0
        %v6413 = vadd.f32 0.0, %v6412
        %v6414 = vpop.f32.mrb[0].mxu0
        %v6415 = vadd.f32 0.0, %v6414
        %v6416 = vpop.f32.mrb[0].mxu0
        %v6417 = vadd.f32 0.0, %v6416
        %6418 = vmatprep.mubr.bf16.mxu0 %v6342
        %6419 = vmatmul.mubr.bf16.gmra.mrb[0].mxu0 %v6305
        %v6420 = vpop.f32.mrb[0].mxu0
        %v6421 = vadd.f32 0.0, %v6420
        %v6422 = vpop.f32.mrb[0].mxu0
        %v6423 = vadd.f32 0.0, %v6422
        %v6424 = vpop.f32.mrb[0].mxu0
        %v6425 = vadd.f32 0.0, %v6424
        %v6426 = vpop.f32.mrb[0].mxu0
        %v6427 = vadd.f32 0.0, %v6426
        %6428 = vmatprep.mubr.bf16.mxu0 %v6345
        %6429 = vmatmul.mubr.bf16.gmra.mrb[0].mxu0 %v6309
        %v6430 = vpop.f32.mrb[0].mxu0
        %v6431 = vadd.f32 0.0, %v6430
        %v6432 = vpop.f32.mrb[0].mxu0
        %v6433 = vadd.f32 0.0, %v6432
        %v6434 = vpop.f32.mrb[0].mxu0
        %v6435 = vadd.f32 0.0, %v6434
        %v6436 = vpop.f32.mrb[0].mxu0
        %v6437 = vadd.f32 0.0, %v6436
        %6438 = vmatprep.mubr.bf16.mxu0 %v6348
        %6439 = vmatmul.mubr.bf16.gmra.mrb[0].mxu0 %v6313
        %v6440 = vpop.f32.mrb[0].mxu0
        %v6441 = vadd.f32 0.0, %v6440
        %v6442 = vpop.f32.mrb[0].mxu0
        %v6443 = vadd.f32 0.0, %v6442
        %v6444 = vpop.f32.mrb[0].mxu0
        %v6445 = vadd.f32 0.0, %v6444
        %v6446 = vpop.f32.mrb[0].mxu0
        %v6447 = vadd.f32 0.0, %v6446
        %6448 = vmatprep.mubr.bf16.mxu0 %v6351
        %6449 = vmatmul.mubr.bf16.gmra.mrb[0].mxu0 %v6317
        %v6450 = vpop.f32.mrb[0].mxu0
        %v6451 = vadd.f32 0.0, %v6450
        %v6452 = vpop.f32.mrb[0].mxu0
        %v6453 = vadd.f32 0.0, %v6452
        %v6454 = vpop.f32.mrb[0].mxu0
        %v6455 = vadd.f32 0.0, %v6454
        %v6456 = vpop.f32.mrb[0].mxu0
        %v6457 = vadd.f32 0.0, %v6456
        %6458 = vmatprep.mubr.bf16.mxu0 %v6354
        %6459 = vmatmul.mubr.bf16.gmra.mrb[0].mxu0 %v6321
        %v6460 = vpop.f32.mrb[0].mxu0
        %v6461 = vadd.f32 0.0, %v6460
        %v6462 = vpop.f32.mrb[0].mxu0
        %v6463 = vadd.f32 0.0, %v6462
        %v6464 = vpop.f32.mrb[0].mxu0
        %v6465 = vadd.f32 0.0, %v6464
        %v6466 = vpop.f32.mrb[0].mxu0
        %v6467 = vadd.f32 0.0, %v6466
        %6468 = vdwg.mxu0
        %v6485 = vunpack.c.l.b16 %v6188
        %v6486 = vunpack.c.h.b16 %v6188
        %v6487 = vunpack.c.l.b16 %v6189
        %v6488 = vunpack.c.h.b16 %v6189
        %v6489 = vunpack.c.l.b16 %v6190
        %v6490 = vunpack.c.h.b16 %v6190
        %v6491 = vunpack.c.l.b16 %v6191
        %v6492 = vunpack.c.h.b16 %v6191
        %v6493 = vunpack.c.l.b16 %v6192
        %v6494 = vunpack.c.h.b16 %v6192
        %v6495 = vunpack.c.l.b16 %v6193
        %v6496 = vunpack.c.h.b16 %v6193
        %v6497 = vunpack.c.l.b16 %v6194
        %v6498 = vunpack.c.h.b16 %v6194
        %v6499 = vunpack.c.l.b16 %v6195
        %v6500 = vunpack.c.h.b16 %v6195
        %v6501 = vunpack.c.l.b16 %v6196
        %v6502 = vunpack.c.h.b16 %v6196
        %v6503 = vunpack.c.l.b16 %v6197
        %v6504 = vunpack.c.h.b16 %v6197
        %v6505 = vunpack.c.l.b16 %v6198
        %v6506 = vunpack.c.h.b16 %v6198
        %v6507 = vunpack.c.l.b16 %v6199
        %v6508 = vunpack.c.h.b16 %v6199
        %v6509 = vunpack.c.l.b16 %v6200
        %v6510 = vunpack.c.h.b16 %v6200
        %v6511 = vunpack.c.l.b16 %v6201
        %v6512 = vunpack.c.h.b16 %v6201
        %v6513 = vunpack.c.l.b16 %v6202
        %v6514 = vunpack.c.h.b16 %v6202
        %v6515 = vunpack.c.l.b16 %v6203
        %v6516 = vunpack.c.h.b16 %v6203
        %v6517 = vpack.c.b16 %v6487, %v6485
        %v6518 = vpack.c.b16 %v6488, %v6486
        %v6519 = vpack.c.b16 %v6491, %v6489
        %v6520 = vpack.c.b16 %v6492, %v6490
        %v6521 = vpack.c.b16 %v6495, %v6493
        %v6522 = vpack.c.b16 %v6496, %v6494
        %v6523 = vpack.c.b16 %v6499, %v6497
        %v6524 = vpack.c.b16 %v6500, %v6498
        %v6525 = vpack.c.b16 %v6503, %v6501
        %v6526 = vpack.c.b16 %v6504, %v6502
        %v6527 = vpack.c.b16 %v6507, %v6505
        %v6528 = vpack.c.b16 %v6508, %v6506
        %v6529 = vpack.c.b16 %v6511, %v6509
        %v6530 = vpack.c.b16 %v6512, %v6510
        %v6531 = vpack.c.b16 %v6515, %v6513
        %v6532 = vpack.c.b16 %v6516, %v6514
        %v6542 = vsel %vm792, %v6518, 0
        %v6545 = vsel %vm792, %v6520, 0
        %v6548 = vsel %vm792, %v6522, 0
        %v6551 = vsel %vm792, %v6524, 0
        %v6554 = vsel %vm792, %v6526, 0
        %v6557 = vsel %vm792, %v6528, 0
        %v6560 = vsel %vm792, %v6530, 0
        %v6563 = vsel %vm792, %v6532, 0
        %6565 = vmatprep.subr.bf16.mxu0 %v1091
        %6566 = vmatpush1.bf16.msra.mxu0 %v1090
        %6567 = vmatprep.subr.bf16.mxu0 %v1093
        %6568 = vmatpush1.bf16.msra.mxu0 %v1092
        %6569 = vmatprep.subr.bf16.mxu0 %v1095
        %6570 = vmatpush1.bf16.msra.mxu0 %v1094
        %6571 = vmatprep.subr.bf16.mxu0 %v1097
        %6572 = vmatpush1.bf16.msra.mxu0 %v1096
        %6573 = vmatprep.subr.bf16.mxu0 %v1099
        %6574 = vmatpush1.bf16.msra.mxu0 %v1098
        %6575 = vmatprep.subr.bf16.mxu0 %v1101
        %6576 = vmatpush1.bf16.msra.mxu0 %v1100
        %6577 = vmatprep.subr.bf16.mxu0 %v1103
        %6578 = vmatpush1.bf16.msra.mxu0 %v1102
        %6579 = vmatprep.subr.bf16.mxu0 %v1105
        %6580 = vmatpush1.bf16.msra.mxu0 %v1104
        %6581 = vmatprep.subr.bf16.mxu0 %v1107
        %6582 = vmatpush1.bf16.msra.mxu0 %v1106
        %6583 = vmatprep.subr.bf16.mxu0 %v1109
        %6584 = vmatpush1.bf16.msra.mxu0 %v1108
        %6585 = vmatprep.subr.bf16.mxu0 %v1111
        %6586 = vmatpush1.bf16.msra.mxu0 %v1110
        %6587 = vmatprep.subr.bf16.mxu0 %v1113
        %6588 = vmatpush1.bf16.msra.mxu0 %v1112
        %6589 = vmatprep.subr.bf16.mxu0 %v1168
        %6590 = vmatpush1.bf16.msra.mxu0 %v1165
        %6591 = vmatprep.subr.bf16.mxu0 0
        %6592 = vmatpush1.bf16.msra.mxu0 0
        %6593 = vmatprep.subr.bf16.mxu0 0
        %6594 = vmatpush1.bf16.msra.mxu0 0
        %6595 = vmatprep.subr.bf16.mxu0 0
        %6596 = vmatpush1.bf16.msra.mxu0 0
        %6597 = vmatprep.mubr.bf16.mxu0 %v6542
        %6598 = vmatmul.mubr.bf16.gmra.mrb[0].mxu0 %v6517
        %v6599 = vpop.f32.mrb[0].mxu0
        %v6600 = vadd.f32 %v6391, %v6599
        %v6601 = vpop.f32.mrb[0].mxu0
        %v6602 = vadd.f32 %v6393, %v6601
        %v6603 = vpop.f32.mrb[0].mxu0
        %v6604 = vadd.f32 %v6395, %v6603
        %v6605 = vpop.f32.mrb[0].mxu0
        %v6606 = vadd.f32 %v6397, %v6605
        %6607 = vmatprep.mubr.bf16.mxu0 %v6545
        %6608 = vmatmul.mubr.bf16.gmra.mrb[0].mxu0 %v6519
        %v6609 = vpop.f32.mrb[0].mxu0
        %v6610 = vadd.f32 %v6401, %v6609
        %v6611 = vpop.f32.mrb[0].mxu0
        %v6612 = vadd.f32 %v6403, %v6611
        %v6613 = vpop.f32.mrb[0].mxu0
        %v6614 = vadd.f32 %v6405, %v6613
        %v6615 = vpop.f32.mrb[0].mxu0
        %v6616 = vadd.f32 %v6407, %v6615
        %6617 = vmatprep.mubr.bf16.mxu0 %v6548
        %6618 = vmatmul.mubr.bf16.gmra.mrb[0].mxu0 %v6521
        %v6619 = vpop.f32.mrb[0].mxu0
        %v6620 = vadd.f32 %v6411, %v6619
        %v6621 = vpop.f32.mrb[0].mxu0
        %v6622 = vadd.f32 %v6413, %v6621
        %v6623 = vpop.f32.mrb[0].mxu0
        %v6624 = vadd.f32 %v6415, %v6623
        %v6625 = vpop.f32.mrb[0].mxu0
        %v6626 = vadd.f32 %v6417, %v6625
        %6627 = vmatprep.mubr.bf16.mxu0 %v6551
        %6628 = vmatmul.mubr.bf16.gmra.mrb[0].mxu0 %v6523
        %v6629 = vpop.f32.mrb[0].mxu0
        %v6630 = vadd.f32 %v6421, %v6629
        %v6631 = vpop.f32.mrb[0].mxu0
        %v6632 = vadd.f32 %v6423, %v6631
        %v6633 = vpop.f32.mrb[0].mxu0
        %v6634 = vadd.f32 %v6425, %v6633
        %v6635 = vpop.f32.mrb[0].mxu0
        %v6636 = vadd.f32 %v6427, %v6635
        %6637 = vmatprep.mubr.bf16.mxu0 %v6554
        %6638 = vmatmul.mubr.bf16.gmra.mrb[0].mxu0 %v6525
        %v6639 = vpop.f32.mrb[0].mxu0
        %v6640 = vadd.f32 %v6431, %v6639
        %v6641 = vpop.f32.mrb[0].mxu0
        %v6642 = vadd.f32 %v6433, %v6641
        %v6643 = vpop.f32.mrb[0].mxu0
        %v6644 = vadd.f32 %v6435, %v6643
        %v6645 = vpop.f32.mrb[0].mxu0
        %v6646 = vadd.f32 %v6437, %v6645
        %6647 = vmatprep.mubr.bf16.mxu0 %v6557
        %6648 = vmatmul.mubr.bf16.gmra.mrb[0].mxu0 %v6527
        %v6649 = vpop.f32.mrb[0].mxu0
        %v6650 = vadd.f32 %v6441, %v6649
        %v6651 = vpop.f32.mrb[0].mxu0
        %v6652 = vadd.f32 %v6443, %v6651
        %v6653 = vpop.f32.mrb[0].mxu0
        %v6654 = vadd.f32 %v6445, %v6653
        %v6655 = vpop.f32.mrb[0].mxu0
        %v6656 = vadd.f32 %v6447, %v6655
        %6657 = vmatprep.mubr.bf16.mxu0 %v6560
        %6658 = vmatmul.mubr.bf16.gmra.mrb[0].mxu0 %v6529
        %v6659 = vpop.f32.mrb[0].mxu0
        %v6660 = vadd.f32 %v6451, %v6659
        %v6661 = vpop.f32.mrb[0].mxu0
        %v6662 = vadd.f32 %v6453, %v6661
        %v6663 = vpop.f32.mrb[0].mxu0
        %v6664 = vadd.f32 %v6455, %v6663
        %v6665 = vpop.f32.mrb[0].mxu0
        %v6666 = vadd.f32 %v6457, %v6665
        %6667 = vmatprep.mubr.bf16.mxu0 %v6563
        %6668 = vmatmul.mubr.bf16.gmra.mrb[0].mxu0 %v6531
        %v6669 = vpop.f32.mrb[0].mxu0
        %v6670 = vadd.f32 %v6461, %v6669
        %v6671 = vpop.f32.mrb[0].mxu0
        %v6672 = vadd.f32 %v6463, %v6671
        %v6673 = vpop.f32.mrb[0].mxu0
        %v6674 = vadd.f32 %v6465, %v6673
        %v6675 = vpop.f32.mrb[0].mxu0
        %v6676 = vadd.f32 %v6467, %v6675
        %6677 = vdwg.mxu0
        %v6678 = vld [vmem:[%s6187] sm:$0xff]
        %v6679 = vld [vmem:[%s6187 + $0x8] sm:$0xff]
        %v6680 = vld [vmem:[%s6187 + $0x10] sm:$0xff]
        %v6681 = vld [vmem:[%s6187 + $0x18] sm:$0xff]
        %v6682 = vld [vmem:[%s6187 + $0x20] sm:$0xff]
        %v6683 = vld [vmem:[%s6187 + $0x28] sm:$0xff]
        %v6684 = vld [vmem:[%s6187 + $0x30] sm:$0xff]
        %v6685 = vld [vmem:[%s6187 + $0x38] sm:$0xff]
        %v6686 = vld [vmem:[%s6187 + $0x40] sm:$0xff]
        %v6687 = vld [vmem:[%s6187 + $0x48] sm:$0xff]
        %v6688 = vld [vmem:[%s6187 + $0x50] sm:$0xff]
        %v6689 = vld [vmem:[%s6187 + $0x58] sm:$0xff]
        %v6690 = vld [vmem:[%s6187 + $0x60] sm:$0xff]
        %v6691 = vld [vmem:[%s6187 + $0x68] sm:$0xff]
        %v6692 = vld [vmem:[%s6187 + $0x70] sm:$0xff]
        %v6693 = vld [vmem:[%s6187 + $0x78] sm:$0xff]
        %v6694 = vld [vmem:[%s6187 + $0x80] sm:$0x11]
        %v6712 = vunpack.c.l.b16 %v6678
        %v6713 = vunpack.c.h.b16 %v6678
        %v6714 = vunpack.c.l.b16 %v6679
        %v6715 = vunpack.c.h.b16 %v6679
        %v6716 = vunpack.c.l.b16 %v6680
        %v6717 = vunpack.c.h.b16 %v6680
        %v6718 = vunpack.c.l.b16 %v6681
        %v6719 = vunpack.c.h.b16 %v6681
        %v6720 = vunpack.c.l.b16 %v6682
        %v6721 = vunpack.c.h.b16 %v6682
        %v6722 = vunpack.c.l.b16 %v6683
        %v6723 = vunpack.c.h.b16 %v6683
        %v6724 = vunpack.c.l.b16 %v6684
        %v6725 = vunpack.c.h.b16 %v6684
        %v6726 = vunpack.c.l.b16 %v6685
        %v6727 = vunpack.c.h.b16 %v6685
        %v6728 = vunpack.c.l.b16 %v6686
        %v6729 = vunpack.c.h.b16 %v6686
        %v6730 = vunpack.c.l.b16 %v6687
        %v6731 = vunpack.c.h.b16 %v6687
        %v6732 = vunpack.c.l.b16 %v6688
        %v6733 = vunpack.c.h.b16 %v6688
        %v6734 = vunpack.c.l.b16 %v6689
        %v6735 = vunpack.c.h.b16 %v6689
        %v6736 = vunpack.c.l.b16 %v6690
        %v6737 = vunpack.c.h.b16 %v6690
        %v6738 = vunpack.c.l.b16 %v6691
        %v6739 = vunpack.c.h.b16 %v6691
        %v6740 = vunpack.c.l.b16 %v6692
        %v6741 = vunpack.c.h.b16 %v6692
        %v6742 = vunpack.c.l.b16 %v6693
        %v6743 = vunpack.c.h.b16 %v6693
        %v6744 = vunpack.c.l.b16 %v6694
        %v6745 = vunpack.c.h.b16 %v6694
        %v6746 = vpack.c.b16 %v6714, %v6712
        %v6747 = vpack.c.b16 %v6715, %v6713
        %v6748 = vpack.c.b16 %v6718, %v6716
        %v6749 = vpack.c.b16 %v6719, %v6717
        %v6750 = vpack.c.b16 %v6722, %v6720
        %v6751 = vpack.c.b16 %v6723, %v6721
        %v6752 = vpack.c.b16 %v6726, %v6724
        %v6753 = vpack.c.b16 %v6727, %v6725
        %v6754 = vpack.c.b16 %v6730, %v6728
        %v6755 = vpack.c.b16 %v6731, %v6729
        %v6756 = vpack.c.b16 %v6734, %v6732
        %v6757 = vpack.c.b16 %v6735, %v6733
        %v6758 = vpack.c.b16 %v6738, %v6736
        %v6759 = vpack.c.b16 %v6739, %v6737
        %v6760 = vpack.c.b16 %v6742, %v6740
        %v6761 = vpack.c.b16 %v6743, %v6741
        %v6762 = vpack.c.b16 %v6744, %v6744
        %v6763 = vpack.c.b16 %v6745, %v6745
        %v6765 = vshrl.u32 %v6746, 16
        %v6767 = vshll.u32 %v6746, 16
        %v6769 = vrot.slane %v6767, 1
        %v6770 = vor.u32 %v6765, %v6769
        %v6772 = vshll.u32 %v6748, 16
        %v6774 = vrot.slane %v6772, 1
        %v6775 = vsel %vm1396, %v6770, %v6774
        %v6777 = vshrl.u32 %v6747, 16
        %v6779 = vshll.u32 %v6747, 16
        %v6781 = vrot.slane %v6779, 1
        %v6782 = vor.u32 %v6777, %v6781
        %v6784 = vshll.u32 %v6749, 16
        %v6786 = vrot.slane %v6784, 1
        %v6787 = vsel %vm1396, %v6782, %v6786
        %v6788 = vshrl.u32 %v6748, 16
        %v6790 = vor.u32 %v6788, %v6774
        %v6792 = vshll.u32 %v6750, 16
        %v6794 = vrot.slane %v6792, 1
        %v6795 = vsel %vm1396, %v6790, %v6794
        %v6796 = vshrl.u32 %v6749, 16
        %v6798 = vor.u32 %v6796, %v6786
        %v6800 = vshll.u32 %v6751, 16
        %v6802 = vrot.slane %v6800, 1
        %v6803 = vsel %vm1396, %v6798, %v6802
        %v6804 = vshrl.u32 %v6750, 16
        %v6806 = vor.u32 %v6804, %v6794
        %v6808 = vshll.u32 %v6752, 16
        %v6810 = vrot.slane %v6808, 1
        %v6811 = vsel %vm1396, %v6806, %v6810
        %v6812 = vshrl.u32 %v6751, 16
        %v6814 = vor.u32 %v6812, %v6802
        %v6816 = vshll.u32 %v6753, 16
        %v6818 = vrot.slane %v6816, 1
        %v6819 = vsel %vm1396, %v6814, %v6818
        %v6820 = vshrl.u32 %v6752, 16
        %v6822 = vor.u32 %v6820, %v6810
        %v6824 = vshll.u32 %v6754, 16
        %v6826 = vrot.slane %v6824, 1
        %v6827 = vsel %vm1396, %v6822, %v6826
        %v6828 = vshrl.u32 %v6753, 16
        %v6830 = vor.u32 %v6828, %v6818
        %v6832 = vshll.u32 %v6755, 16
        %v6834 = vrot.slane %v6832, 1
        %v6835 = vsel %vm1396, %v6830, %v6834
        %v6836 = vshrl.u32 %v6754, 16
        %v6838 = vor.u32 %v6836, %v6826
        %v6840 = vshll.u32 %v6756, 16
        %v6842 = vrot.slane %v6840, 1
        %v6843 = vsel %vm1396, %v6838, %v6842
        %v6844 = vshrl.u32 %v6755, 16
        %v6846 = vor.u32 %v6844, %v6834
        %v6848 = vshll.u32 %v6757, 16
        %v6850 = vrot.slane %v6848, 1
        %v6851 = vsel %vm1396, %v6846, %v6850
        %v6852 = vshrl.u32 %v6756, 16
        %v6854 = vor.u32 %v6852, %v6842
        %v6856 = vshll.u32 %v6758, 16
        %v6858 = vrot.slane %v6856, 1
        %v6859 = vsel %vm1396, %v6854, %v6858
        %v6860 = vshrl.u32 %v6757, 16
        %v6862 = vor.u32 %v6860, %v6850
        %v6864 = vshll.u32 %v6759, 16
        %v6866 = vrot.slane %v6864, 1
        %v6867 = vsel %vm1396, %v6862, %v6866
        %v6868 = vshrl.u32 %v6758, 16
        %v6870 = vor.u32 %v6868, %v6858
        %v6872 = vshll.u32 %v6760, 16
        %v6874 = vrot.slane %v6872, 1
        %v6875 = vsel %vm1396, %v6870, %v6874
        %v6876 = vshrl.u32 %v6759, 16
        %v6878 = vor.u32 %v6876, %v6866
        %v6880 = vshll.u32 %v6761, 16
        %v6882 = vrot.slane %v6880, 1
        %v6883 = vsel %vm1396, %v6878, %v6882
        %v6884 = vshrl.u32 %v6760, 16
        %v6886 = vor.u32 %v6884, %v6874
        %v6888 = vshll.u32 %v6762, 16
        %v6890 = vrot.slane %v6888, 1
        %v6891 = vsel %vm1396, %v6886, %v6890
        %v6892 = vshrl.u32 %v6761, 16
        %v6894 = vor.u32 %v6892, %v6882
        %v6896 = vshll.u32 %v6763, 16
        %v6898 = vrot.slane %v6896, 1
        %v6899 = vsel %vm1396, %v6894, %v6898
        %v6909 = vsel %vm792, %v6787, 0
        %v6912 = vsel %vm792, %v6803, 0
        %v6915 = vsel %vm792, %v6819, 0
        %v6918 = vsel %vm792, %v6835, 0
        %v6921 = vsel %vm792, %v6851, 0
        %v6924 = vsel %vm792, %v6867, 0
        %v6927 = vsel %vm792, %v6883, 0
        %v6930 = vsel %vm792, %v6899, 0
        %6932 = vmatprep.subr.bf16.mxu0 %v1620
        %6933 = vmatpush1.bf16.msra.mxu0 %v1619
        %6934 = vmatprep.subr.bf16.mxu0 %v1622
        %6935 = vmatpush1.bf16.msra.mxu0 %v1621
        %6936 = vmatprep.subr.bf16.mxu0 %v1624
        %6937 = vmatpush1.bf16.msra.mxu0 %v1623
        %6938 = vmatprep.subr.bf16.mxu0 %v1626
        %6939 = vmatpush1.bf16.msra.mxu0 %v1625
        %6940 = vmatprep.subr.bf16.mxu0 %v1628
        %6941 = vmatpush1.bf16.msra.mxu0 %v1627
        %6942 = vmatprep.subr.bf16.mxu0 %v1630
        %6943 = vmatpush1.bf16.msra.mxu0 %v1629
        %6944 = vmatprep.subr.bf16.mxu0 %v1632
        %6945 = vmatpush1.bf16.msra.mxu0 %v1631
        %6946 = vmatprep.subr.bf16.mxu0 %v1634
        %6947 = vmatpush1.bf16.msra.mxu0 %v1633
        %6948 = vmatprep.subr.bf16.mxu0 %v1636
        %6949 = vmatpush1.bf16.msra.mxu0 %v1635
        %6950 = vmatprep.subr.bf16.mxu0 %v1638
        %6951 = vmatpush1.bf16.msra.mxu0 %v1637
        %6952 = vmatprep.subr.bf16.mxu0 %v1640
        %6953 = vmatpush1.bf16.msra.mxu0 %v1639
        %6954 = vmatprep.subr.bf16.mxu0 %v1642
        %6955 = vmatpush1.bf16.msra.mxu0 %v1641
        %6956 = vmatprep.subr.bf16.mxu0 %v1697
        %6957 = vmatpush1.bf16.msra.mxu0 %v1694
        %6958 = vmatprep.subr.bf16.mxu0 0
        %6959 = vmatpush1.bf16.msra.mxu0 0
        %6960 = vmatprep.subr.bf16.mxu0 0
        %6961 = vmatpush1.bf16.msra.mxu0 0
        %6962 = vmatprep.subr.bf16.mxu0 0
        %6963 = vmatpush1.bf16.msra.mxu0 0
        %6964 = vmatprep.mubr.bf16.mxu0 %v6909
        %6965 = vmatmul.mubr.bf16.gmra.mrb[0].mxu0 %v6775
        %v6966 = vpop.f32.mrb[0].mxu0
        %v6967 = vadd.f32 0.0, %v6966
        %v6968 = vpop.f32.mrb[0].mxu0
        %v6969 = vadd.f32 0.0, %v6968
        %v6970 = vpop.f32.mrb[0].mxu0
        %v6971 = vadd.f32 0.0, %v6970
        %v6972 = vpop.f32.mrb[0].mxu0
        %v6973 = vadd.f32 0.0, %v6972
        %6974 = vmatprep.mubr.bf16.mxu0 %v6912
        %6975 = vmatmul.mubr.bf16.gmra.mrb[0].mxu0 %v6795
        %v6976 = vpop.f32.mrb[0].mxu0
        %v6977 = vadd.f32 0.0, %v6976
        %v6978 = vpop.f32.mrb[0].mxu0
        %v6979 = vadd.f32 0.0, %v6978
        %v6980 = vpop.f32.mrb[0].mxu0
        %v6981 = vadd.f32 0.0, %v6980
        %v6982 = vpop.f32.mrb[0].mxu0
        %v6983 = vadd.f32 0.0, %v6982
        %6984 = vmatprep.mubr.bf16.mxu0 %v6915
        %6985 = vmatmul.mubr.bf16.gmra.mrb[0].mxu0 %v6811
        %v6986 = vpop.f32.mrb[0].mxu0
        %v6987 = vadd.f32 0.0, %v6986
        %v6988 = vpop.f32.mrb[0].mxu0
        %v6989 = vadd.f32 0.0, %v6988
        %v6990 = vpop.f32.mrb[0].mxu0
        %v6991 = vadd.f32 0.0, %v6990
        %v6992 = vpop.f32.mrb[0].mxu0
        %v6993 = vadd.f32 0.0, %v6992
        %6994 = vmatprep.mubr.bf16.mxu0 %v6918
        %6995 = vmatmul.mubr.bf16.gmra.mrb[0].mxu0 %v6827
        %v6996 = vpop.f32.mrb[0].mxu0
        %v6997 = vadd.f32 0.0, %v6996
        %v6998 = vpop.f32.mrb[0].mxu0
        %v6999 = vadd.f32 0.0, %v6998
        %v7000 = vpop.f32.mrb[0].mxu0
        %v7001 = vadd.f32 0.0, %v7000
        %v7002 = vpop.f32.mrb[0].mxu0
        %v7003 = vadd.f32 0.0, %v7002
        %7004 = vmatprep.mubr.bf16.mxu0 %v6921
        %7005 = vmatmul.mubr.bf16.gmra.mrb[0].mxu0 %v6843
        %v7006 = vpop.f32.mrb[0].mxu0
        %v7007 = vadd.f32 0.0, %v7006
        %v7008 = vpop.f32.mrb[0].mxu0
        %v7009 = vadd.f32 0.0, %v7008
        %v7010 = vpop.f32.mrb[0].mxu0
        %v7011 = vadd.f32 0.0, %v7010
        %v7012 = vpop.f32.mrb[0].mxu0
        %v7013 = vadd.f32 0.0, %v7012
        %7014 = vmatprep.mubr.bf16.mxu0 %v6924
        %7015 = vmatmul.mubr.bf16.gmra.mrb[0].mxu0 %v6859
        %v7016 = vpop.f32.mrb[0].mxu0
        %v7017 = vadd.f32 0.0, %v7016
        %v7018 = vpop.f32.mrb[0].mxu0
        %v7019 = vadd.f32 0.0, %v7018
        %v7020 = vpop.f32.mrb[0].mxu0
        %v7021 = vadd.f32 0.0, %v7020
        %v7022 = vpop.f32.mrb[0].mxu0
        %v7023 = vadd.f32 0.0, %v7022
        %7024 = vmatprep.mubr.bf16.mxu0 %v6927
        %7025 = vmatmul.mubr.bf16.gmra.mrb[0].mxu0 %v6875
        %v7026 = vpop.f32.mrb[0].mxu0
        %v7027 = vadd.f32 0.0, %v7026
        %v7028 = vpop.f32.mrb[0].mxu0
        %v7029 = vadd.f32 0.0, %v7028
        %v7030 = vpop.f32.mrb[0].mxu0
        %v7031 = vadd.f32 0.0, %v7030
        %v7032 = vpop.f32.mrb[0].mxu0
        %v7033 = vadd.f32 0.0, %v7032
        %7034 = vmatprep.mubr.bf16.mxu0 %v6930
        %7035 = vmatmul.mubr.bf16.gmra.mrb[0].mxu0 %v6891
        %v7036 = vpop.f32.mrb[0].mxu0
        %v7037 = vadd.f32 0.0, %v7036
        %v7038 = vpop.f32.mrb[0].mxu0
        %v7039 = vadd.f32 0.0, %v7038
        %v7040 = vpop.f32.mrb[0].mxu0
        %v7041 = vadd.f32 0.0, %v7040
        %v7042 = vpop.f32.mrb[0].mxu0
        %v7043 = vadd.f32 0.0, %v7042
        %7044 = vdwg.mxu0
        %v7045 = vadd.f32 %v6600, %v6967
        %v7046 = vadd.f32 %v6602, %v6969
        %v7047 = vadd.f32 %v6604, %v6971
        %v7048 = vadd.f32 %v6606, %v6973
        %v7049 = vadd.f32 %v6610, %v6977
        %v7050 = vadd.f32 %v6612, %v6979
        %v7051 = vadd.f32 %v6614, %v6981
        %v7052 = vadd.f32 %v6616, %v6983
        %v7053 = vadd.f32 %v6620, %v6987
        %v7054 = vadd.f32 %v6622, %v6989
        %v7055 = vadd.f32 %v6624, %v6991
        %v7056 = vadd.f32 %v6626, %v6993
        %v7057 = vadd.f32 %v6630, %v6997
        %v7058 = vadd.f32 %v6632, %v6999
        %v7059 = vadd.f32 %v6634, %v7001
        %v7060 = vadd.f32 %v6636, %v7003
        %v7061 = vadd.f32 %v6640, %v7007
        %v7062 = vadd.f32 %v6642, %v7009
        %v7063 = vadd.f32 %v6644, %v7011
        %v7064 = vadd.f32 %v6646, %v7013
        %v7065 = vadd.f32 %v6650, %v7017
        %v7066 = vadd.f32 %v6652, %v7019
        %v7067 = vadd.f32 %v6654, %v7021
        %v7068 = vadd.f32 %v6656, %v7023
        %v7069 = vadd.f32 %v6660, %v7027
        %v7070 = vadd.f32 %v6662, %v7029
        %v7071 = vadd.f32 %v6664, %v7031
        %v7072 = vadd.f32 %v6666, %v7033
        %v7073 = vadd.f32 %v6670, %v7037
        %v7074 = vadd.f32 %v6672, %v7039
        %v7075 = vadd.f32 %v6674, %v7041
        %v7076 = vadd.f32 %v6676, %v7043
        %v7077 = vld [vmem:[%s6187 + $0x100] sm:$0x33]
        %v7079 = vunpack.c.l.b16 %v7077
        %v7080 = vunpack.c.h.b16 %v7077
        %v7081 = vpack.c.b16 %v7079, %v7079
        %v7082 = vpack.c.b16 %v7080, %v7080
        %v7084 = vshrl.u32 %v6272, 16
        %v7086 = vrot.slane %v7084, 1
        %v7087 = vshll.u32 %v6272, 16
        %v7089 = vrot.slane %v7087, 2
        %v7090 = vor.u32 %v7086, %v7089
        %v7092 = vshrl.u32 %v6274, 16
        %v7094 = vrot.slane %v7092, 1
        %v7095 = vshll.u32 %v6274, 16
        %v7097 = vrot.slane %v7095, 2
        %v7098 = vor.u32 %v7094, %v7097
        %v7099 = vsel %vm1877, %v7090, %v7098
        %v7101 = vshrl.u32 %v6273, 16
        %v7103 = vrot.slane %v7101, 1
        %v7104 = vshll.u32 %v6273, 16
        %v7106 = vrot.slane %v7104, 2
        %v7107 = vor.u32 %v7103, %v7106
        %v7109 = vshrl.u32 %v6275, 16
        %v7111 = vrot.slane %v7109, 1
        %v7112 = vshll.u32 %v6275, 16
        %v7114 = vrot.slane %v7112, 2
        %v7115 = vor.u32 %v7111, %v7114
        %v7116 = vsel %vm1877, %v7107, %v7115
        %v7118 = vshrl.u32 %v6276, 16
        %v7120 = vrot.slane %v7118, 1
        %v7121 = vshll.u32 %v6276, 16
        %v7123 = vrot.slane %v7121, 2
        %v7124 = vor.u32 %v7120, %v7123
        %v7125 = vsel %vm1877, %v7098, %v7124
        %v7127 = vshrl.u32 %v6277, 16
        %v7129 = vrot.slane %v7127, 1
        %v7130 = vshll.u32 %v6277, 16
        %v7132 = vrot.slane %v7130, 2
        %v7133 = vor.u32 %v7129, %v7132
        %v7134 = vsel %vm1877, %v7115, %v7133
        %v7136 = vshrl.u32 %v6278, 16
        %v7138 = vrot.slane %v7136, 1
        %v7139 = vshll.u32 %v6278, 16
        %v7141 = vrot.slane %v7139, 2
        %v7142 = vor.u32 %v7138, %v7141
        %v7143 = vsel %vm1877, %v7124, %v7142
        %v7145 = vshrl.u32 %v6279, 16
        %v7147 = vrot.slane %v7145, 1
        %v7148 = vshll.u32 %v6279, 16
        %v7150 = vrot.slane %v7148, 2
        %v7151 = vor.u32 %v7147, %v7150
        %v7152 = vsel %vm1877, %v7133, %v7151
        %v7154 = vshrl.u32 %v6280, 16
        %v7156 = vrot.slane %v7154, 1
        %v7157 = vshll.u32 %v6280, 16
        %v7159 = vrot.slane %v7157, 2
        %v7160 = vor.u32 %v7156, %v7159
        %v7161 = vsel %vm1877, %v7142, %v7160
        %v7163 = vshrl.u32 %v6281, 16
        %v7165 = vrot.slane %v7163, 1
        %v7166 = vshll.u32 %v6281, 16
        %v7168 = vrot.slane %v7166, 2
        %v7169 = vor.u32 %v7165, %v7168
        %v7170 = vsel %vm1877, %v7151, %v7169
        %v7172 = vshrl.u32 %v6282, 16
        %v7174 = vrot.slane %v7172, 1
        %v7175 = vshll.u32 %v6282, 16
        %v7177 = vrot.slane %v7175, 2
        %v7178 = vor.u32 %v7174, %v7177
        %v7179 = vsel %vm1877, %v7160, %v7178
        %v7181 = vshrl.u32 %v6283, 16
        %v7183 = vrot.slane %v7181, 1
        %v7184 = vshll.u32 %v6283, 16
        %v7186 = vrot.slane %v7184, 2
        %v7187 = vor.u32 %v7183, %v7186
        %v7188 = vsel %vm1877, %v7169, %v7187
        %v7190 = vshrl.u32 %v6284, 16
        %v7192 = vrot.slane %v7190, 1
        %v7193 = vshll.u32 %v6284, 16
        %v7195 = vrot.slane %v7193, 2
        %v7196 = vor.u32 %v7192, %v7195
        %v7197 = vsel %vm1877, %v7178, %v7196
        %v7199 = vshrl.u32 %v6285, 16
        %v7201 = vrot.slane %v7199, 1
        %v7202 = vshll.u32 %v6285, 16
        %v7204 = vrot.slane %v7202, 2
        %v7205 = vor.u32 %v7201, %v7204
        %v7206 = vsel %vm1877, %v7187, %v7205
        %v7208 = vshrl.u32 %v6286, 16
        %v7210 = vrot.slane %v7208, 1
        %v7211 = vshll.u32 %v6286, 16
        %v7213 = vrot.slane %v7211, 2
        %v7214 = vor.u32 %v7210, %v7213
        %v7215 = vsel %vm1877, %v7196, %v7214
        %v7217 = vshrl.u32 %v6287, 16
        %v7219 = vrot.slane %v7217, 1
        %v7220 = vshll.u32 %v6287, 16
        %v7222 = vrot.slane %v7220, 2
        %v7223 = vor.u32 %v7219, %v7222
        %v7224 = vsel %vm1877, %v7205, %v7223
        %v7226 = vshrl.u32 %v7081, 16
        %v7228 = vrot.slane %v7226, 1
        %v7229 = vshll.u32 %v7081, 16
        %v7231 = vrot.slane %v7229, 2
        %v7232 = vor.u32 %v7228, %v7231
        %v7233 = vsel %vm1877, %v7214, %v7232
        %v7235 = vshrl.u32 %v7082, 16
        %v7237 = vrot.slane %v7235, 1
        %v7238 = vshll.u32 %v7082, 16
        %v7240 = vrot.slane %v7238, 2
        %v7241 = vor.u32 %v7237, %v7240
        %v7242 = vsel %vm1877, %v7223, %v7241
        %v7252 = vsel %vm792, %v7116, 0
        %v7255 = vsel %vm792, %v7134, 0
        %v7258 = vsel %vm792, %v7152, 0
        %v7261 = vsel %vm792, %v7170, 0
        %v7264 = vsel %vm792, %v7188, 0
        %v7267 = vsel %vm792, %v7206, 0
        %v7270 = vsel %vm792, %v7224, 0
        %v7273 = vsel %vm792, %v7242, 0
        %7275 = vmatprep.subr.bf16.mxu0 %v2125
        %7276 = vmatpush1.bf16.msra.mxu0 %v2124
        %7277 = vmatprep.subr.bf16.mxu0 %v2127
        %7278 = vmatpush1.bf16.msra.mxu0 %v2126
        %7279 = vmatprep.subr.bf16.mxu0 %v2129
        %7280 = vmatpush1.bf16.msra.mxu0 %v2128
        %7281 = vmatprep.subr.bf16.mxu0 %v2131
        %7282 = vmatpush1.bf16.msra.mxu0 %v2130
        %7283 = vmatprep.subr.bf16.mxu0 %v2133
        %7284 = vmatpush1.bf16.msra.mxu0 %v2132
        %7285 = vmatprep.subr.bf16.mxu0 %v2135
        %7286 = vmatpush1.bf16.msra.mxu0 %v2134
        %7287 = vmatprep.subr.bf16.mxu0 %v2137
        %7288 = vmatpush1.bf16.msra.mxu0 %v2136
        %7289 = vmatprep.subr.bf16.mxu0 %v2139
        %7290 = vmatpush1.bf16.msra.mxu0 %v2138
        %7291 = vmatprep.subr.bf16.mxu0 %v2141
        %7292 = vmatpush1.bf16.msra.mxu0 %v2140
        %7293 = vmatprep.subr.bf16.mxu0 %v2143
        %7294 = vmatpush1.bf16.msra.mxu0 %v2142
        %7295 = vmatprep.subr.bf16.mxu0 %v2145
        %7296 = vmatpush1.bf16.msra.mxu0 %v2144
        %7297 = vmatprep.subr.bf16.mxu0 %v2147
        %7298 = vmatpush1.bf16.msra.mxu0 %v2146
        %7299 = vmatprep.subr.bf16.mxu0 %v2202
        %7300 = vmatpush1.bf16.msra.mxu0 %v2199
        %7301 = vmatprep.subr.bf16.mxu0 0
        %7302 = vmatpush1.bf16.msra.mxu0 0
        %7303 = vmatprep.subr.bf16.mxu0 0
        %7304 = vmatpush1.bf16.msra.mxu0 0
        %7305 = vmatprep.subr.bf16.mxu0 0
        %7306 = vmatpush1.bf16.msra.mxu0 0
        %7307 = vmatprep.mubr.bf16.mxu0 %v7252
        %7308 = vmatmul.mubr.bf16.gmra.mrb[0].mxu0 %v7099
        %v7309 = vpop.f32.mrb[0].mxu0
        %v7310 = vadd.f32 0.0, %v7309
        %v7311 = vpop.f32.mrb[0].mxu0
        %v7312 = vadd.f32 0.0, %v7311
        %v7313 = vpop.f32.mrb[0].mxu0
        %v7314 = vadd.f32 0.0, %v7313
        %v7315 = vpop.f32.mrb[0].mxu0
        %v7316 = vadd.f32 0.0, %v7315
        %7317 = vmatprep.mubr.bf16.mxu0 %v7255
        %7318 = vmatmul.mubr.bf16.gmra.mrb[0].mxu0 %v7125
        %v7319 = vpop.f32.mrb[0].mxu0
        %v7320 = vadd.f32 0.0, %v7319
        %v7321 = vpop.f32.mrb[0].mxu0
        %v7322 = vadd.f32 0.0, %v7321
        %v7323 = vpop.f32.mrb[0].mxu0
        %v7324 = vadd.f32 0.0, %v7323
        %v7325 = vpop.f32.mrb[0].mxu0
        %v7326 = vadd.f32 0.0, %v7325
        %7327 = vmatprep.mubr.bf16.mxu0 %v7258
        %7328 = vmatmul.mubr.bf16.gmra.mrb[0].mxu0 %v7143
        %v7329 = vpop.f32.mrb[0].mxu0
        %v7330 = vadd.f32 0.0, %v7329
        %v7331 = vpop.f32.mrb[0].mxu0
        %v7332 = vadd.f32 0.0, %v7331
        %v7333 = vpop.f32.mrb[0].mxu0
        %v7334 = vadd.f32 0.0, %v7333
        %v7335 = vpop.f32.mrb[0].mxu0
        %v7336 = vadd.f32 0.0, %v7335
        %7337 = vmatprep.mubr.bf16.mxu0 %v7261
        %7338 = vmatmul.mubr.bf16.gmra.mrb[0].mxu0 %v7161
        %v7339 = vpop.f32.mrb[0].mxu0
        %v7340 = vadd.f32 0.0, %v7339
        %v7341 = vpop.f32.mrb[0].mxu0
        %v7342 = vadd.f32 0.0, %v7341
        %v7343 = vpop.f32.mrb[0].mxu0
        %v7344 = vadd.f32 0.0, %v7343
        %v7345 = vpop.f32.mrb[0].mxu0
        %v7346 = vadd.f32 0.0, %v7345
        %7347 = vmatprep.mubr.bf16.mxu0 %v7264
        %7348 = vmatmul.mubr.bf16.gmra.mrb[0].mxu0 %v7179
        %v7349 = vpop.f32.mrb[0].mxu0
        %v7350 = vadd.f32 0.0, %v7349
        %v7351 = vpop.f32.mrb[0].mxu0
        %v7352 = vadd.f32 0.0, %v7351
        %v7353 = vpop.f32.mrb[0].mxu0
        %v7354 = vadd.f32 0.0, %v7353
        %v7355 = vpop.f32.mrb[0].mxu0
        %v7356 = vadd.f32 0.0, %v7355
        %7357 = vmatprep.mubr.bf16.mxu0 %v7267
        %7358 = vmatmul.mubr.bf16.gmra.mrb[0].mxu0 %v7197
        %v7359 = vpop.f32.mrb[0].mxu0
        %v7360 = vadd.f32 0.0, %v7359
        %v7361 = vpop.f32.mrb[0].mxu0
        %v7362 = vadd.f32 0.0, %v7361
        %v7363 = vpop.f32.mrb[0].mxu0
        %v7364 = vadd.f32 0.0, %v7363
        %v7365 = vpop.f32.mrb[0].mxu0
        %v7366 = vadd.f32 0.0, %v7365
        %7367 = vmatprep.mubr.bf16.mxu0 %v7270
        %7368 = vmatmul.mubr.bf16.gmra.mrb[0].mxu0 %v7215
        %v7369 = vpop.f32.mrb[0].mxu0
        %v7370 = vadd.f32 0.0, %v7369
        %v7371 = vpop.f32.mrb[0].mxu0
        %v7372 = vadd.f32 0.0, %v7371
        %v7373 = vpop.f32.mrb[0].mxu0
        %v7374 = vadd.f32 0.0, %v7373
        %v7375 = vpop.f32.mrb[0].mxu0
        %v7376 = vadd.f32 0.0, %v7375
        %7377 = vmatprep.mubr.bf16.mxu0 %v7273
        %7378 = vmatmul.mubr.bf16.gmra.mrb[0].mxu0 %v7233
        %v7379 = vpop.f32.mrb[0].mxu0
        %v7380 = vadd.f32 0.0, %v7379
        %v7381 = vpop.f32.mrb[0].mxu0
        %v7382 = vadd.f32 0.0, %v7381
        %v7383 = vpop.f32.mrb[0].mxu0
        %v7384 = vadd.f32 0.0, %v7383
        %v7385 = vpop.f32.mrb[0].mxu0
        %v7386 = vadd.f32 0.0, %v7385
        %7387 = vdwg.mxu0
        %v7388 = vadd.f32 %v7045, %v7310
        %v7389 = vadd.f32 %v7046, %v7312
        %v7390 = vadd.f32 %v7047, %v7314
        %v7391 = vadd.f32 %v7048, %v7316
        %v7392 = vadd.f32 %v7049, %v7320
        %v7393 = vadd.f32 %v7050, %v7322
        %v7394 = vadd.f32 %v7051, %v7324
        %v7395 = vadd.f32 %v7052, %v7326
        %v7396 = vadd.f32 %v7053, %v7330
        %v7397 = vadd.f32 %v7054, %v7332
        %v7398 = vadd.f32 %v7055, %v7334
        %v7399 = vadd.f32 %v7056, %v7336
        %v7400 = vadd.f32 %v7057, %v7340
        %v7401 = vadd.f32 %v7058, %v7342
        %v7402 = vadd.f32 %v7059, %v7344
        %v7403 = vadd.f32 %v7060, %v7346
        %v7404 = vadd.f32 %v7061, %v7350
        %v7405 = vadd.f32 %v7062, %v7352
        %v7406 = vadd.f32 %v7063, %v7354
        %v7407 = vadd.f32 %v7064, %v7356
        %v7408 = vadd.f32 %v7065, %v7360
        %v7409 = vadd.f32 %v7066, %v7362
        %v7410 = vadd.f32 %v7067, %v7364
        %v7411 = vadd.f32 %v7068, %v7366
        %v7412 = vadd.f32 %v7069, %v7370
        %v7413 = vadd.f32 %v7070, %v7372
        %v7414 = vadd.f32 %v7071, %v7374
        %v7415 = vadd.f32 %v7072, %v7376
        %v7416 = vadd.f32 %v7073, %v7380
        %v7417 = vadd.f32 %v7074, %v7382
        %v7418 = vadd.f32 %v7075, %v7384
        %v7419 = vadd.f32 %v7076, %v7386
        %v7420 = vld [vmem:[%s6187] sm:$0xee]
        %v7422 = vunpack.c.l.b16 %v7420
        %v7423 = vunpack.c.h.b16 %v7420
        %v7424 = vpack.c.b16 %v6714, %v7422
        %v7425 = vpack.c.b16 %v6715, %v7423
        %v7426 = vrot.slane %v7424, 1
        %v7427 = vrot.slane %v6748, 1
        %v7428 = vsel %vm621, %v7426, %v7427
        %v7429 = vrot.slane %v7425, 1
        %v7430 = vrot.slane %v6749, 1
        %v7431 = vsel %vm621, %v7429, %v7430
        %v7432 = vrot.slane %v6750, 1
        %v7433 = vsel %vm621, %v7427, %v7432
        %v7434 = vrot.slane %v6751, 1
        %v7435 = vsel %vm621, %v7430, %v7434
        %v7436 = vrot.slane %v6752, 1
        %v7437 = vsel %vm621, %v7432, %v7436
        %v7438 = vrot.slane %v6753, 1
        %v7439 = vsel %vm621, %v7434, %v7438
        %v7440 = vrot.slane %v6754, 1
        %v7441 = vsel %vm621, %v7436, %v7440
        %v7442 = vrot.slane %v6755, 1
        %v7443 = vsel %vm621, %v7438, %v7442
        %v7444 = vrot.slane %v6756, 1
        %v7445 = vsel %vm621, %v7440, %v7444
        %v7446 = vrot.slane %v6757, 1
        %v7447 = vsel %vm621, %v7442, %v7446
        %v7448 = vrot.slane %v6758, 1
        %v7449 = vsel %vm621, %v7444, %v7448
        %v7450 = vrot.slane %v6759, 1
        %v7451 = vsel %vm621, %v7446, %v7450
        %v7452 = vrot.slane %v6760, 1
        %v7453 = vsel %vm621, %v7448, %v7452
        %v7454 = vrot.slane %v6761, 1
        %v7455 = vsel %vm621, %v7450, %v7454
        %v7456 = vrot.slane %v6762, 1
        %v7457 = vsel %vm621, %v7452, %v7456
        %v7458 = vrot.slane %v6763, 1
        %v7459 = vsel %vm621, %v7454, %v7458
        %v7469 = vsel %vm792, %v7431, 0
        %v7472 = vsel %vm792, %v7435, 0
        %v7475 = vsel %vm792, %v7439, 0
        %v7478 = vsel %vm792, %v7443, 0
        %v7481 = vsel %vm792, %v7447, 0
        %v7484 = vsel %vm792, %v7451, 0
        %v7487 = vsel %vm792, %v7455, 0
        %v7490 = vsel %vm792, %v7459, 0
        %7492 = vmatprep.subr.bf16.mxu0 %v2503
        %7493 = vmatpush1.bf16.msra.mxu0 %v2502
        %7494 = vmatprep.subr.bf16.mxu0 %v2505
        %7495 = vmatpush1.bf16.msra.mxu0 %v2504
        %7496 = vmatprep.subr.bf16.mxu0 %v2507
        %7497 = vmatpush1.bf16.msra.mxu0 %v2506
        %7498 = vmatprep.subr.bf16.mxu0 %v2509
        %7499 = vmatpush1.bf16.msra.mxu0 %v2508
        %7500 = vmatprep.subr.bf16.mxu0 %v2511
        %7501 = vmatpush1.bf16.msra.mxu0 %v2510
        %7502 = vmatprep.subr.bf16.mxu0 %v2513
        %7503 = vmatpush1.bf16.msra.mxu0 %v2512
        %7504 = vmatprep.subr.bf16.mxu0 %v2515
        %7505 = vmatpush1.bf16.msra.mxu0 %v2514
        %7506 = vmatprep.subr.bf16.mxu0 %v2517
        %7507 = vmatpush1.bf16.msra.mxu0 %v2516
        %7508 = vmatprep.subr.bf16.mxu0 %v2519
        %7509 = vmatpush1.bf16.msra.mxu0 %v2518
        %7510 = vmatprep.subr.bf16.mxu0 %v2521
        %7511 = vmatpush1.bf16.msra.mxu0 %v2520
        %7512 = vmatprep.subr.bf16.mxu0 %v2523
        %7513 = vmatpush1.bf16.msra.mxu0 %v2522
        %7514 = vmatprep.subr.bf16.mxu0 %v2525
        %7515 = vmatpush1.bf16.msra.mxu0 %v2524
        %7516 = vmatprep.subr.bf16.mxu0 %v2580
        %7517 = vmatpush1.bf16.msra.mxu0 %v2577
        %7518 = vmatprep.subr.bf16.mxu0 0
        %7519 = vmatpush1.bf16.msra.mxu0 0
        %7520 = vmatprep.subr.bf16.mxu0 0
        %7521 = vmatpush1.bf16.msra.mxu0 0
        %7522 = vmatprep.subr.bf16.mxu0 0
        %7523 = vmatpush1.bf16.msra.mxu0 0
        %7524 = vmatprep.mubr.bf16.mxu0 %v7469
        %7525 = vmatmul.mubr.bf16.gmra.mrb[0].mxu0 %v7428
        %v7526 = vpop.f32.mrb[0].mxu0
        %v7527 = vadd.f32 0.0, %v7526
        %v7528 = vpop.f32.mrb[0].mxu0
        %v7529 = vadd.f32 0.0, %v7528
        %v7530 = vpop.f32.mrb[0].mxu0
        %v7531 = vadd.f32 0.0, %v7530
        %v7532 = vpop.f32.mrb[0].mxu0
        %v7533 = vadd.f32 0.0, %v7532
        %7534 = vmatprep.mubr.bf16.mxu0 %v7472
        %7535 = vmatmul.mubr.bf16.gmra.mrb[0].mxu0 %v7433
        %v7536 = vpop.f32.mrb[0].mxu0
        %v7537 = vadd.f32 0.0, %v7536
        %v7538 = vpop.f32.mrb[0].mxu0
        %v7539 = vadd.f32 0.0, %v7538
        %v7540 = vpop.f32.mrb[0].mxu0
        %v7541 = vadd.f32 0.0, %v7540
        %v7542 = vpop.f32.mrb[0].mxu0
        %v7543 = vadd.f32 0.0, %v7542
        %7544 = vmatprep.mubr.bf16.mxu0 %v7475
        %7545 = vmatmul.mubr.bf16.gmra.mrb[0].mxu0 %v7437
        %v7546 = vpop.f32.mrb[0].mxu0
        %v7547 = vadd.f32 0.0, %v7546
        %v7548 = vpop.f32.mrb[0].mxu0
        %v7549 = vadd.f32 0.0, %v7548
        %v7550 = vpop.f32.mrb[0].mxu0
        %v7551 = vadd.f32 0.0, %v7550
        %v7552 = vpop.f32.mrb[0].mxu0
        %v7553 = vadd.f32 0.0, %v7552
        %7554 = vmatprep.mubr.bf16.mxu0 %v7478
        %7555 = vmatmul.mubr.bf16.gmra.mrb[0].mxu0 %v7441
        %v7556 = vpop.f32.mrb[0].mxu0
        %v7557 = vadd.f32 0.0, %v7556
        %v7558 = vpop.f32.mrb[0].mxu0
        %v7559 = vadd.f32 0.0, %v7558
        %v7560 = vpop.f32.mrb[0].mxu0
        %v7561 = vadd.f32 0.0, %v7560
        %v7562 = vpop.f32.mrb[0].mxu0
        %v7563 = vadd.f32 0.0, %v7562
        %7564 = vmatprep.mubr.bf16.mxu0 %v7481
        %7565 = vmatmul.mubr.bf16.gmra.mrb[0].mxu0 %v7445
        %v7566 = vpop.f32.mrb[0].mxu0
        %v7567 = vadd.f32 0.0, %v7566
        %v7568 = vpop.f32.mrb[0].mxu0
        %v7569 = vadd.f32 0.0, %v7568
        %v7570 = vpop.f32.mrb[0].mxu0
        %v7571 = vadd.f32 0.0, %v7570
        %v7572 = vpop.f32.mrb[0].mxu0
        %v7573 = vadd.f32 0.0, %v7572
        %7574 = vmatprep.mubr.bf16.mxu0 %v7484
        %7575 = vmatmul.mubr.bf16.gmra.mrb[0].mxu0 %v7449
        %v7576 = vpop.f32.mrb[0].mxu0
        %v7577 = vadd.f32 0.0, %v7576
        %v7578 = vpop.f32.mrb[0].mxu0
        %v7579 = vadd.f32 0.0, %v7578
        %v7580 = vpop.f32.mrb[0].mxu0
        %v7581 = vadd.f32 0.0, %v7580
        %v7582 = vpop.f32.mrb[0].mxu0
        %v7583 = vadd.f32 0.0, %v7582
        %7584 = vmatprep.mubr.bf16.mxu0 %v7487
        %7585 = vmatmul.mubr.bf16.gmra.mrb[0].mxu0 %v7453
        %v7586 = vpop.f32.mrb[0].mxu0
        %v7587 = vadd.f32 0.0, %v7586
        %v7588 = vpop.f32.mrb[0].mxu0
        %v7589 = vadd.f32 0.0, %v7588
        %v7590 = vpop.f32.mrb[0].mxu0
        %v7591 = vadd.f32 0.0, %v7590
        %v7592 = vpop.f32.mrb[0].mxu0
        %v7593 = vadd.f32 0.0, %v7592
        %7594 = vmatprep.mubr.bf16.mxu0 %v7490
        %7595 = vmatmul.mubr.bf16.gmra.mrb[0].mxu0 %v7457
        %v7596 = vpop.f32.mrb[0].mxu0
        %v7597 = vadd.f32 0.0, %v7596
        %v7598 = vpop.f32.mrb[0].mxu0
        %v7599 = vadd.f32 0.0, %v7598
        %v7600 = vpop.f32.mrb[0].mxu0
        %v7601 = vadd.f32 0.0, %v7600
        %v7602 = vpop.f32.mrb[0].mxu0
        %v7603 = vadd.f32 0.0, %v7602
        %7604 = vdwg.mxu0
        %v7605 = vadd.f32 %v7388, %v7527
        %v7606 = vadd.f32 %v7389, %v7529
        %v7607 = vadd.f32 %v7390, %v7531
        %v7608 = vadd.f32 %v7391, %v7533
        %v7609 = vadd.f32 %v7392, %v7537
        %v7610 = vadd.f32 %v7393, %v7539
        %v7611 = vadd.f32 %v7394, %v7541
        %v7612 = vadd.f32 %v7395, %v7543
        %v7613 = vadd.f32 %v7396, %v7547
        %v7614 = vadd.f32 %v7397, %v7549
        %v7615 = vadd.f32 %v7398, %v7551
        %v7616 = vadd.f32 %v7399, %v7553
        %v7617 = vadd.f32 %v7400, %v7557
        %v7618 = vadd.f32 %v7401, %v7559
        %v7619 = vadd.f32 %v7402, %v7561
        %v7620 = vadd.f32 %v7403, %v7563
        %v7621 = vadd.f32 %v7404, %v7567
        %v7622 = vadd.f32 %v7405, %v7569
        %v7623 = vadd.f32 %v7406, %v7571
        %v7624 = vadd.f32 %v7407, %v7573
        %v7625 = vadd.f32 %v7408, %v7577
        %v7626 = vadd.f32 %v7409, %v7579
        %v7627 = vadd.f32 %v7410, %v7581
        %v7628 = vadd.f32 %v7411, %v7583
        %v7629 = vadd.f32 %v7412, %v7587
        %v7630 = vadd.f32 %v7413, %v7589
        %v7631 = vadd.f32 %v7414, %v7591
        %v7632 = vadd.f32 %v7415, %v7593
        %v7633 = vadd.f32 %v7416, %v7597
        %v7634 = vadd.f32 %v7417, %v7599
        %v7635 = vadd.f32 %v7418, %v7601
        %v7636 = vadd.f32 %v7419, %v7603
        %7669 = vrot.lane.b32.xlu0 %v7605, 32
        %v7670 = vpop.permute.xlu0 %7669
        %7671 = vrot.lane.b32.xlu0 %v7606, 32
        %v7672 = vpop.permute.xlu0 %7671
        %7673 = vrot.lane.b32.xlu0 %v7607, 32
        %v7674 = vpop.permute.xlu0 %7673
        %7675 = vrot.lane.b32.xlu0 %v7608, 32
        %v7676 = vpop.permute.xlu0 %7675
        %7677 = vrot.lane.b32.xlu0 %v7609, 32
        %v7678 = vpop.permute.xlu0 %7677
        %7679 = vrot.lane.b32.xlu0 %v7610, 32
        %v7680 = vpop.permute.xlu0 %7679
        %7681 = vrot.lane.b32.xlu0 %v7611, 32
        %v7682 = vpop.permute.xlu0 %7681
        %7683 = vrot.lane.b32.xlu0 %v7612, 32
        %v7684 = vpop.permute.xlu0 %7683
        %7685 = vrot.lane.b32.xlu0 %v7613, 32
        %v7686 = vpop.permute.xlu0 %7685
        %7687 = vrot.lane.b32.xlu0 %v7614, 32
        %v7688 = vpop.permute.xlu0 %7687
        %7689 = vrot.lane.b32.xlu0 %v7615, 32
        %v7690 = vpop.permute.xlu0 %7689
        %7691 = vrot.lane.b32.xlu0 %v7616, 32
        %v7692 = vpop.permute.xlu0 %7691
        %7693 = vrot.lane.b32.xlu0 %v7617, 32
        %v7694 = vpop.permute.xlu0 %7693
        %7695 = vrot.lane.b32.xlu0 %v7618, 32
        %v7696 = vpop.permute.xlu0 %7695
        %7697 = vrot.lane.b32.xlu0 %v7619, 32
        %v7698 = vpop.permute.xlu0 %7697
        %7699 = vrot.lane.b32.xlu0 %v7620, 32
        %v7700 = vpop.permute.xlu0 %7699
        %7701 = vrot.lane.b32.xlu0 %v7621, 32
        %v7702 = vpop.permute.xlu0 %7701
        %7703 = vrot.lane.b32.xlu0 %v7622, 32
        %v7704 = vpop.permute.xlu0 %7703
        %7705 = vrot.lane.b32.xlu0 %v7623, 32
        %v7706 = vpop.permute.xlu0 %7705
        %7707 = vrot.lane.b32.xlu0 %v7624, 32
        %v7708 = vpop.permute.xlu0 %7707
        %7709 = vrot.lane.b32.xlu0 %v7625, 32
        %v7710 = vpop.permute.xlu0 %7709
        %7711 = vrot.lane.b32.xlu0 %v7626, 32
        %v7712 = vpop.permute.xlu0 %7711
        %7713 = vrot.lane.b32.xlu0 %v7627, 32
        %v7714 = vpop.permute.xlu0 %7713
        %7715 = vrot.lane.b32.xlu0 %v7628, 32
        %v7716 = vpop.permute.xlu0 %7715
        %7717 = vrot.lane.b32.xlu0 %v7629, 32
        %v7718 = vpop.permute.xlu0 %7717
        %7719 = vrot.lane.b32.xlu0 %v7630, 32
        %v7720 = vpop.permute.xlu0 %7719
        %7721 = vrot.lane.b32.xlu0 %v7631, 32
        %v7722 = vpop.permute.xlu0 %7721
        %7723 = vrot.lane.b32.xlu0 %v7632, 32
        %v7724 = vpop.permute.xlu0 %7723
        %7725 = vrot.lane.b32.xlu0 %v7633, 32
        %v7726 = vpop.permute.xlu0 %7725
        %7727 = vrot.lane.b32.xlu0 %v7634, 32
        %v7728 = vpop.permute.xlu0 %7727
        %7729 = vrot.lane.b32.xlu0 %v7635, 32
        %v7730 = vpop.permute.xlu0 %7729
        %7731 = vrot.lane.b32.xlu0 %v7636, 32
        %v7732 = vpop.permute.xlu0 %7731
        %v7733 = vsel %vm2823, %v7670, %v7672
        %v7734 = vsel %vm2823, %v7674, %v7676
        %v7735 = vsel %vm2823, %v7678, %v7680
        %v7736 = vsel %vm2823, %v7682, %v7684
        %v7737 = vsel %vm2823, %v7686, %v7688
        %v7738 = vsel %vm2823, %v7690, %v7692
        %v7739 = vsel %vm2823, %v7694, %v7696
        %v7740 = vsel %vm2823, %v7698, %v7700
        %v7741 = vsel %vm2823, %v7702, %v7704
        %v7742 = vsel %vm2823, %v7706, %v7708
        %v7743 = vsel %vm2823, %v7710, %v7712
        %v7744 = vsel %vm2823, %v7714, %v7716
        %v7745 = vsel %vm2823, %v7718, %v7720
        %v7746 = vsel %vm2823, %v7722, %v7724
        %v7747 = vsel %vm2823, %v7726, %v7728
        %v7748 = vsel %vm2823, %v7730, %v7732
        %v7765 = vmax.f32 %v7605, %v7733
        %v7766 = vmax.f32 %v7607, %v7734
        %v7767 = vmax.f32 %v7609, %v7735
        %v7768 = vmax.f32 %v7611, %v7736
        %v7769 = vmax.f32 %v7613, %v7737
        %v7770 = vmax.f32 %v7615, %v7738
        %v7771 = vmax.f32 %v7617, %v7739
        %v7772 = vmax.f32 %v7619, %v7740
        %v7773 = vmax.f32 %v7621, %v7741
        %v7774 = vmax.f32 %v7623, %v7742
        %v7775 = vmax.f32 %v7625, %v7743
        %v7776 = vmax.f32 %v7627, %v7744
        %v7777 = vmax.f32 %v7629, %v7745
        %v7778 = vmax.f32 %v7631, %v7746
        %v7779 = vmax.f32 %v7633, %v7747
        %v7780 = vmax.f32 %v7635, %v7748
        %v7781 = vadd.f32 %v7765, %v2877
        %v7782 = vadd.f32 %v7766, %v2877
        %v7783 = vadd.f32 %v7767, %v2877
        %v7784 = vadd.f32 %v7768, %v2877
        %v7785 = vadd.f32 %v7769, %v2877
        %v7786 = vadd.f32 %v7770, %v2877
        %v7787 = vadd.f32 %v7771, %v2877
        %v7788 = vadd.f32 %v7772, %v2877
        %v7789 = vadd.f32 %v7773, %v2877
        %v7790 = vadd.f32 %v7774, %v2877
        %v7791 = vadd.f32 %v7775, %v2877
        %v7792 = vadd.f32 %v7776, %v2877
        %v7793 = vadd.f32 %v7777, %v2877
        %v7794 = vadd.f32 %v7778, %v2877
        %v7795 = vadd.f32 %v7779, %v2877
        %v7796 = vadd.f32 %v7780, %v2877
        %v7797 = vmax.f32 %v7781, 0.0
        %v7798 = vmax.f32 %v7782, 0.0
        %v7799 = vmax.f32 %v7783, 0.0
        %v7800 = vmax.f32 %v7784, 0.0
        %v7801 = vmax.f32 %v7785, 0.0
        %v7802 = vmax.f32 %v7786, 0.0
        %v7803 = vmax.f32 %v7787, 0.0
        %v7804 = vmax.f32 %v7788, 0.0
        %v7805 = vmax.f32 %v7789, 0.0
        %v7806 = vmax.f32 %v7790, 0.0
        %v7807 = vmax.f32 %v7791, 0.0
        %v7808 = vmax.f32 %v7792, 0.0
        %v7809 = vmax.f32 %v7793, 0.0
        %v7810 = vmax.f32 %v7794, 0.0
        %v7811 = vmax.f32 %v7795, 0.0
        %v7812 = vmax.f32 %v7796, 0.0
        %v7813 = vpack.c.bf16 %v7798, %v7797
        %v7814 = vpack.c.bf16 %v7800, %v7799
        %v7815 = vpack.c.bf16 %v7802, %v7801
        %v7816 = vpack.c.bf16 %v7804, %v7803
        %v7817 = vpack.c.bf16 %v7806, %v7805
        %v7818 = vpack.c.bf16 %v7808, %v7807
        %v7819 = vpack.c.bf16 %v7810, %v7809
        %v7820 = vpack.c.bf16 %v7812, %v7811
        %7829 = vrot.lane.b32.xlu0 %v4545, 96
        %v7830 = vpop.permute.xlu0 %7829
        %7831 = vrot.lane.b32.xlu0 %v4546, 96
        %v7832 = vpop.permute.xlu0 %7831
        %7833 = vrot.lane.b32.xlu0 %v4547, 96
        %v7834 = vpop.permute.xlu0 %7833
        %7835 = vrot.lane.b32.xlu0 %v4548, 96
        %v7836 = vpop.permute.xlu0 %7835
        %7837 = vrot.lane.b32.xlu0 %v4549, 96
        %v7838 = vpop.permute.xlu0 %7837
        %7839 = vrot.lane.b32.xlu0 %v4550, 96
        %v7840 = vpop.permute.xlu0 %7839
        %7841 = vrot.lane.b32.xlu0 %v4551, 96
        %v7842 = vpop.permute.xlu0 %7841
        %7843 = vrot.lane.b32.xlu0 %v4552, 96
        %v7844 = vpop.permute.xlu0 %7843
        %7853 = vrot.lane.b32.xlu0 %v6179, 64
        %v7854 = vpop.permute.xlu0 %7853
        %7855 = vrot.lane.b32.xlu0 %v6180, 64
        %v7856 = vpop.permute.xlu0 %7855
        %7857 = vrot.lane.b32.xlu0 %v6181, 64
        %v7858 = vpop.permute.xlu0 %7857
        %7859 = vrot.lane.b32.xlu0 %v6182, 64
        %v7860 = vpop.permute.xlu0 %7859
        %7861 = vrot.lane.b32.xlu0 %v6183, 64
        %v7862 = vpop.permute.xlu0 %7861
        %7863 = vrot.lane.b32.xlu0 %v6184, 64
        %v7864 = vpop.permute.xlu0 %7863
        %7865 = vrot.lane.b32.xlu0 %v6185, 64
        %v7866 = vpop.permute.xlu0 %7865
        %7867 = vrot.lane.b32.xlu0 %v6186, 64
        %v7868 = vpop.permute.xlu0 %7867
        %7877 = vrot.lane.b32.xlu0 %v7813, 32
        %v7878 = vpop.permute.xlu0 %7877
        %7879 = vrot.lane.b32.xlu0 %v7814, 32
        %v7880 = vpop.permute.xlu0 %7879
        %7881 = vrot.lane.b32.xlu0 %v7815, 32
        %v7882 = vpop.permute.xlu0 %7881
        %7883 = vrot.lane.b32.xlu0 %v7816, 32
        %v7884 = vpop.permute.xlu0 %7883
        %7885 = vrot.lane.b32.xlu0 %v7817, 32
        %v7886 = vpop.permute.xlu0 %7885
        %7887 = vrot.lane.b32.xlu0 %v7818, 32
        %v7888 = vpop.permute.xlu0 %7887
        %7889 = vrot.lane.b32.xlu0 %v7819, 32
        %v7890 = vpop.permute.xlu0 %7889
        %7891 = vrot.lane.b32.xlu0 %v7820, 32
        %v7892 = vpop.permute.xlu0 %7891
        %vm7893 = vcmask 785408
        %v7896 = vsel %vm7893, %v2911, %v7830
        %v7900 = vsel %vm7893, %v2912, %v7832
        %v7904 = vsel %vm7893, %v2913, %v7834
        %v7908 = vsel %vm7893, %v2914, %v7836
        %v7912 = vsel %vm7893, %v2915, %v7838
        %v7916 = vsel %vm7893, %v2916, %v7840
        %v7920 = vsel %vm7893, %v2917, %v7842
        %v7924 = vsel %vm7893, %v2918, %v7844
        %vm7926 = vcmask 523264
        %v7928 = vsel %vm7926, %v7830, %v7854
        %v7931 = vsel %vm7926, %v7832, %v7856
        %v7934 = vsel %vm7926, %v7834, %v7858
        %v7937 = vsel %vm7926, %v7836, %v7860
        %v7940 = vsel %vm7926, %v7838, %v7862
        %v7943 = vsel %vm7926, %v7840, %v7864
        %v7946 = vsel %vm7926, %v7842, %v7866
        %v7949 = vsel %vm7926, %v7844, %v7868
        %v7952 = vsel %vm2823, %v7854, %v7878
        %v7955 = vsel %vm2823, %v7856, %v7880
        %v7958 = vsel %vm2823, %v7858, %v7882
        %v7961 = vsel %vm2823, %v7860, %v7884
        %v7964 = vsel %vm2823, %v7862, %v7886
        %v7967 = vsel %vm2823, %v7864, %v7888
        %v7970 = vsel %vm2823, %v7866, %v7890
        %v7973 = vsel %vm2823, %v7868, %v7892
        %v7975 = vld [vmem:[%s3] sm:$0xf]
        %v7976 = vld [vmem:[%s3 + $0x4] sm:$0xf]
        %v7977 = vld [vmem:[%s3 + $0x8] sm:$0xf]
        %v7978 = vld [vmem:[%s3 + $0xc] sm:$0xf]
        %v7979 = vld [vmem:[%s3 + $0x10] sm:$0xf]
        %v7980 = vld [vmem:[%s3 + $0x14] sm:$0xf]
        %v7981 = vld [vmem:[%s3 + $0x18] sm:$0xf]
        %v7982 = vld [vmem:[%s3 + $0x1c] sm:$0xf]
        %v7983 = vld [vmem:[%s3 + $0x20] sm:$0x1]
        %v7993 = vunpack.c.l.b16 %v7975
        %v7994 = vunpack.c.l.b16 %v7976
        %v7995 = vunpack.c.l.b16 %v7977
        %v7996 = vunpack.c.l.b16 %v7978
        %v7997 = vunpack.c.l.b16 %v7979
        %v7998 = vunpack.c.l.b16 %v7980
        %v7999 = vunpack.c.l.b16 %v7981
        %v8000 = vunpack.c.l.b16 %v7982
        %v8001 = vunpack.c.l.b16 %v7983
        %v8002 = vpack.c.b16 %v7994, %v7993
        %v8003 = vpack.c.b16 %v7996, %v7995
        %v8004 = vpack.c.b16 %v7998, %v7997
        %v8005 = vpack.c.b16 %v8000, %v7999
        %v8006 = vpack.c.b16 %v8001, %v8001
        %8012 = vmatprep.subr.bf16.mxu0 %v7928
        %8013 = vmatpush1.bf16.msra.mxu0 %v7896
        %8014 = vmatprep.subr.bf16.mxu0 %v7931
        %8015 = vmatpush1.bf16.msra.mxu0 %v7900
        %8016 = vmatprep.subr.bf16.mxu0 %v7934
        %8017 = vmatpush1.bf16.msra.mxu0 %v7904
        %8018 = vmatprep.subr.bf16.mxu0 %v7937
        %8019 = vmatpush1.bf16.msra.mxu0 %v7908
        %8020 = vmatprep.subr.bf16.mxu0 %v7940
        %8021 = vmatpush1.bf16.msra.mxu0 %v7912
        %8022 = vmatprep.subr.bf16.mxu0 %v7943
        %8023 = vmatpush1.bf16.msra.mxu0 %v7916
        %8024 = vmatprep.subr.bf16.mxu0 %v7946
        %8025 = vmatpush1.bf16.msra.mxu0 %v7920
        %8026 = vmatprep.subr.bf16.mxu0 %v7949
        %8027 = vmatpush1.bf16.msra.mxu0 %v7924
        %8028 = vmatprep.subr.bf16.mxu0 0
        %8029 = vmatpush1.bf16.msra.mxu0 0
        %8030 = vmatprep.subr.bf16.mxu0 0
        %8031 = vmatpush1.bf16.msra.mxu0 0
        %8032 = vmatprep.subr.bf16.mxu0 0
        %8033 = vmatpush1.bf16.msra.mxu0 0
        %8034 = vmatprep.subr.bf16.mxu0 0
        %8035 = vmatpush1.bf16.msra.mxu0 0
        %8036 = vmatprep.subr.bf16.mxu0 0
        %8037 = vmatpush1.bf16.msra.mxu0 0
        %8038 = vmatprep.subr.bf16.mxu0 0
        %8039 = vmatpush1.bf16.msra.mxu0 0
        %8040 = vmatprep.subr.bf16.mxu0 0
        %8041 = vmatpush1.bf16.msra.mxu0 0
        %8042 = vmatprep.subr.bf16.mxu0 0
        %8043 = vmatpush1.bf16.msra.mxu0 0
        %8044 = vmatprep.mubr.bf16.mxu0 0
        %8045 = vmatmul.mubr.bf16.gmra.mrb[0].mxu0 %v8002
        %v8046 = vpop.f32.mrb[0].mxu0
        %v8047 = vadd.f32 0.0, %v8046
        %v8048 = vpop.f32.mrb[0].mxu0
        %v8049 = vadd.f32 0.0, %v8048
        %v8050 = vpop.f32.mrb[0].mxu0
        %v8051 = vadd.f32 0.0, %v8050
        %v8052 = vpop.f32.mrb[0].mxu0
        %v8053 = vadd.f32 0.0, %v8052
        %8054 = vmatprep.mubr.bf16.mxu0 0
        %8055 = vmatmul.mubr.bf16.gmra.mrb[0].mxu0 %v8003
        %v8056 = vpop.f32.mrb[0].mxu0
        %v8057 = vadd.f32 0.0, %v8056
        %v8058 = vpop.f32.mrb[0].mxu0
        %v8059 = vadd.f32 0.0, %v8058
        %v8060 = vpop.f32.mrb[0].mxu0
        %v8061 = vadd.f32 0.0, %v8060
        %v8062 = vpop.f32.mrb[0].mxu0
        %v8063 = vadd.f32 0.0, %v8062
        %8064 = vmatprep.mubr.bf16.mxu0 0
        %8065 = vmatmul.mubr.bf16.gmra.mrb[0].mxu0 %v8004
        %v8066 = vpop.f32.mrb[0].mxu0
        %v8067 = vadd.f32 0.0, %v8066
        %v8068 = vpop.f32.mrb[0].mxu0
        %v8069 = vadd.f32 0.0, %v8068
        %v8070 = vpop.f32.mrb[0].mxu0
        %v8071 = vadd.f32 0.0, %v8070
        %v8072 = vpop.f32.mrb[0].mxu0
        %v8073 = vadd.f32 0.0, %v8072
        %8074 = vmatprep.mubr.bf16.mxu0 0
        %8075 = vmatmul.mubr.bf16.gmra.mrb[0].mxu0 %v8005
        %v8076 = vpop.f32.mrb[0].mxu0
        %v8077 = vadd.f32 0.0, %v8076
        %v8078 = vpop.f32.mrb[0].mxu0
        %v8079 = vadd.f32 0.0, %v8078
        %v8080 = vpop.f32.mrb[0].mxu0
        %v8081 = vadd.f32 0.0, %v8080
        %v8082 = vpop.f32.mrb[0].mxu0
        %v8083 = vadd.f32 0.0, %v8082
        %8084 = vmatprep.mubr.bf16.mxu0 0
        %8085 = vmatmul.mubr.bf16.gmra.mrb[0].mxu0 %v8006
        %v8086 = vpop.f32.mrb[0].mxu0
        %v8087 = vadd.f32 0.0, %v8086
        %v8088 = vpop.f32.mrb[0].mxu0
        %v8089 = vadd.f32 0.0, %v8088
        %v8090 = vpop.f32.mrb[0].mxu0
        %v8091 = vpop.f32.mrb[0].mxu0
        %8092 = vdwg.mxu0
        %8093 = vmatprep.subr.bf16.mxu0 0
        %8094 = vmatpush1.bf16.msra.mxu0 %v7952
        %8095 = vmatprep.subr.bf16.mxu0 0
        %8096 = vmatpush1.bf16.msra.mxu0 %v7955
        %8097 = vmatprep.subr.bf16.mxu0 0
        %8098 = vmatpush1.bf16.msra.mxu0 %v7958
        %8099 = vmatprep.subr.bf16.mxu0 0
        %8100 = vmatpush1.bf16.msra.mxu0 %v7961
        %8101 = vmatprep.subr.bf16.mxu0 0
        %8102 = vmatpush1.bf16.msra.mxu0 %v7964
        %8103 = vmatprep.subr.bf16.mxu0 0
        %8104 = vmatpush1.bf16.msra.mxu0 %v7967
        %8105 = vmatprep.subr.bf16.mxu0 0
        %8106 = vmatpush1.bf16.msra.mxu0 %v7970
        %8107 = vmatprep.subr.bf16.mxu0 0
        %8108 = vmatpush1.bf16.msra.mxu0 %v7973
        %8109 = vmatprep.subr.bf16.mxu0 0
        %8110 = vmatpush1.bf16.msra.mxu0 0
        %8111 = vmatprep.subr.bf16.mxu0 0
        %8112 = vmatpush1.bf16.msra.mxu0 0
        %8113 = vmatprep.subr.bf16.mxu0 0
        %8114 = vmatpush1.bf16.msra.mxu0 0
        %8115 = vmatprep.subr.bf16.mxu0 0
        %8116 = vmatpush1.bf16.msra.mxu0 0
        %8117 = vmatprep.subr.bf16.mxu0 0
        %8118 = vmatpush1.bf16.msra.mxu0 0
        %8119 = vmatprep.subr.bf16.mxu0 0
        %8120 = vmatpush1.bf16.msra.mxu0 0
        %8121 = vmatprep.subr.bf16.mxu0 0
        %8122 = vmatpush1.bf16.msra.mxu0 0
        %8123 = vmatprep.subr.bf16.mxu0 0
        %8124 = vmatpush1.bf16.msra.mxu0 0
        %8125 = vmatprep.mubr.bf16.mxu0 0
        %8126 = vmatmul.mubr.bf16.gmra.mrb[0].mxu0 %v8002
        %v8127 = vpop.f32.mrb[0].mxu0
        %v8128 = vadd.f32 0.0, %v8127
        %v8129 = vpop.f32.mrb[0].mxu0
        %v8130 = vpop.f32.mrb[0].mxu0
        %v8131 = vadd.f32 0.0, %v8130
        %v8132 = vpop.f32.mrb[0].mxu0
        %8133 = vmatprep.mubr.bf16.mxu0 0
        %8134 = vmatmul.mubr.bf16.gmra.mrb[0].mxu0 %v8003
        %v8135 = vpop.f32.mrb[0].mxu0
        %v8136 = vadd.f32 0.0, %v8135
        %v8137 = vpop.f32.mrb[0].mxu0
        %v8138 = vpop.f32.mrb[0].mxu0
        %v8139 = vadd.f32 0.0, %v8138
        %v8140 = vpop.f32.mrb[0].mxu0
        %8141 = vmatprep.mubr.bf16.mxu0 0
        %8142 = vmatmul.mubr.bf16.gmra.mrb[0].mxu0 %v8004
        %v8143 = vpop.f32.mrb[0].mxu0
        %v8144 = vadd.f32 0.0, %v8143
        %v8145 = vpop.f32.mrb[0].mxu0
        %v8146 = vpop.f32.mrb[0].mxu0
        %v8147 = vadd.f32 0.0, %v8146
        %v8148 = vpop.f32.mrb[0].mxu0
        %8149 = vmatprep.mubr.bf16.mxu0 0
        %8150 = vmatmul.mubr.bf16.gmra.mrb[0].mxu0 %v8005
        %v8151 = vpop.f32.mrb[0].mxu0
        %v8152 = vadd.f32 0.0, %v8151
        %v8153 = vpop.f32.mrb[0].mxu0
        %v8154 = vpop.f32.mrb[0].mxu0
        %v8155 = vadd.f32 0.0, %v8154
        %v8156 = vpop.f32.mrb[0].mxu0
        %8157 = vmatprep.mubr.bf16.mxu0 0
        %8158 = vmatmul.mubr.bf16.gmra.mrb[0].mxu0 %v8006
        %v8159 = vpop.f32.mrb[0].mxu0
        %v8160 = vadd.f32 0.0, %v8159
        %v8161 = vpop.f32.mrb[0].mxu0
        %v8162 = vpop.f32.mrb[0].mxu0
        %v8163 = vpop.f32.mrb[0].mxu0
        %8164 = vdwg.mxu0
        %s8165 = scalar_lea.vmem %s3, 36
        %v8166 = vld [vmem:[%s8165] sm:$0xf]
        %v8167 = vld [vmem:[%s8165 + $0x4] sm:$0xf]
        %v8168 = vld [vmem:[%s8165 + $0x8] sm:$0xf]
        %v8169 = vld [vmem:[%s8165 + $0xc] sm:$0xf]
        %v8170 = vld [vmem:[%s8165 + $0x10] sm:$0xf]
        %v8171 = vld [vmem:[%s8165 + $0x14] sm:$0xf]
        %v8172 = vld [vmem:[%s8165 + $0x18] sm:$0xf]
        %v8173 = vld [vmem:[%s8165 + $0x1c] sm:$0xf]
        %v8174 = vld [vmem:[%s8165 + $0x20] sm:$0x1]
        %v8184 = vunpack.c.l.b16 %v8166
        %v8185 = vunpack.c.l.b16 %v8167
        %v8186 = vunpack.c.l.b16 %v8168
        %v8187 = vunpack.c.l.b16 %v8169
        %v8188 = vunpack.c.l.b16 %v8170
        %v8189 = vunpack.c.l.b16 %v8171
        %v8190 = vunpack.c.l.b16 %v8172
        %v8191 = vunpack.c.l.b16 %v8173
        %v8192 = vunpack.c.l.b16 %v8174
        %v8193 = vpack.c.b16 %v8185, %v8184
        %v8194 = vpack.c.b16 %v8187, %v8186
        %v8195 = vpack.c.b16 %v8189, %v8188
        %v8196 = vpack.c.b16 %v8191, %v8190
        %v8197 = vpack.c.b16 %v8192, %v8192
        %8203 = vmatprep.subr.bf16.mxu0 %v7928
        %8204 = vmatpush1.bf16.msra.mxu0 %v7896
        %8205 = vmatprep.subr.bf16.mxu0 %v7931
        %8206 = vmatpush1.bf16.msra.mxu0 %v7900
        %8207 = vmatprep.subr.bf16.mxu0 %v7934
        %8208 = vmatpush1.bf16.msra.mxu0 %v7904
        %8209 = vmatprep.subr.bf16.mxu0 %v7937
        %8210 = vmatpush1.bf16.msra.mxu0 %v7908
        %8211 = vmatprep.subr.bf16.mxu0 %v7940
        %8212 = vmatpush1.bf16.msra.mxu0 %v7912
        %8213 = vmatprep.subr.bf16.mxu0 %v7943
        %8214 = vmatpush1.bf16.msra.mxu0 %v7916
        %8215 = vmatprep.subr.bf16.mxu0 %v7946
        %8216 = vmatpush1.bf16.msra.mxu0 %v7920
        %8217 = vmatprep.subr.bf16.mxu0 %v7949
        %8218 = vmatpush1.bf16.msra.mxu0 %v7924
        %8219 = vmatprep.subr.bf16.mxu0 0
        %8220 = vmatpush1.bf16.msra.mxu0 0
        %8221 = vmatprep.subr.bf16.mxu0 0
        %8222 = vmatpush1.bf16.msra.mxu0 0
        %8223 = vmatprep.subr.bf16.mxu0 0
        %8224 = vmatpush1.bf16.msra.mxu0 0
        %8225 = vmatprep.subr.bf16.mxu0 0
        %8226 = vmatpush1.bf16.msra.mxu0 0
        %8227 = vmatprep.subr.bf16.mxu0 0
        %8228 = vmatpush1.bf16.msra.mxu0 0
        %8229 = vmatprep.subr.bf16.mxu0 0
        %8230 = vmatpush1.bf16.msra.mxu0 0
        %8231 = vmatprep.subr.bf16.mxu0 0
        %8232 = vmatpush1.bf16.msra.mxu0 0
        %8233 = vmatprep.subr.bf16.mxu0 0
        %8234 = vmatpush1.bf16.msra.mxu0 0
        %8235 = vmatprep.mubr.bf16.mxu0 0
        %8236 = vmatmul.mubr.bf16.gmra.mrb[0].mxu0 %v8193
        %v8237 = vpop.f32.mrb[0].mxu0
        %v8238 = vadd.f32 0.0, %v8237
        %v8239 = vpop.f32.mrb[0].mxu0
        %v8240 = vadd.f32 0.0, %v8239
        %v8241 = vpop.f32.mrb[0].mxu0
        %v8242 = vadd.f32 0.0, %v8241
        %v8243 = vpop.f32.mrb[0].mxu0
        %v8244 = vadd.f32 0.0, %v8243
        %8245 = vmatprep.mubr.bf16.mxu0 0
        %8246 = vmatmul.mubr.bf16.gmra.mrb[0].mxu0 %v8194
        %v8247 = vpop.f32.mrb[0].mxu0
        %v8248 = vadd.f32 0.0, %v8247
        %v8249 = vpop.f32.mrb[0].mxu0
        %v8250 = vadd.f32 0.0, %v8249
        %v8251 = vpop.f32.mrb[0].mxu0
        %v8252 = vadd.f32 0.0, %v8251
        %v8253 = vpop.f32.mrb[0].mxu0
        %v8254 = vadd.f32 0.0, %v8253
        %8255 = vmatprep.mubr.bf16.mxu0 0
        %8256 = vmatmul.mubr.bf16.gmra.mrb[0].mxu0 %v8195
        %v8257 = vpop.f32.mrb[0].mxu0
        %v8258 = vadd.f32 0.0, %v8257
        %v8259 = vpop.f32.mrb[0].mxu0
        %v8260 = vadd.f32 0.0, %v8259
        %v8261 = vpop.f32.mrb[0].mxu0
        %v8262 = vadd.f32 0.0, %v8261
        %v8263 = vpop.f32.mrb[0].mxu0
        %v8264 = vadd.f32 0.0, %v8263
        %8265 = vmatprep.mubr.bf16.mxu0 0
        %8266 = vmatmul.mubr.bf16.gmra.mrb[0].mxu0 %v8196
        %v8267 = vpop.f32.mrb[0].mxu0
        %v8268 = vadd.f32 0.0, %v8267
        %v8269 = vpop.f32.mrb[0].mxu0
        %v8270 = vadd.f32 0.0, %v8269
        %v8271 = vpop.f32.mrb[0].mxu0
        %v8272 = vadd.f32 0.0, %v8271
        %v8273 = vpop.f32.mrb[0].mxu0
        %v8274 = vadd.f32 0.0, %v8273
        %8275 = vmatprep.mubr.bf16.mxu0 0
        %8276 = vmatmul.mubr.bf16.gmra.mrb[0].mxu0 %v8197
        %v8277 = vpop.f32.mrb[0].mxu0
        %v8278 = vadd.f32 0.0, %v8277
        %v8279 = vpop.f32.mrb[0].mxu0
        %v8280 = vadd.f32 0.0, %v8279
        %v8281 = vpop.f32.mrb[0].mxu0
        %v8282 = vpop.f32.mrb[0].mxu0
        %8283 = vdwg.mxu0
        %8284 = vmatprep.subr.bf16.mxu0 0
        %8285 = vmatpush1.bf16.msra.mxu0 %v7952
        %8286 = vmatprep.subr.bf16.mxu0 0
        %8287 = vmatpush1.bf16.msra.mxu0 %v7955
        %8288 = vmatprep.subr.bf16.mxu0 0
        %8289 = vmatpush1.bf16.msra.mxu0 %v7958
        %8290 = vmatprep.subr.bf16.mxu0 0
        %8291 = vmatpush1.bf16.msra.mxu0 %v7961
        %8292 = vmatprep.subr.bf16.mxu0 0
        %8293 = vmatpush1.bf16.msra.mxu0 %v7964
        %8294 = vmatprep.subr.bf16.mxu0 0
        %8295 = vmatpush1.bf16.msra.mxu0 %v7967
        %8296 = vmatprep.subr.bf16.mxu0 0
        %8297 = vmatpush1.bf16.msra.mxu0 %v7970
        %8298 = vmatprep.subr.bf16.mxu0 0
        %8299 = vmatpush1.bf16.msra.mxu0 %v7973
        %8300 = vmatprep.subr.bf16.mxu0 0
        %8301 = vmatpush1.bf16.msra.mxu0 0
        %8302 = vmatprep.subr.bf16.mxu0 0
        %8303 = vmatpush1.bf16.msra.mxu0 0
        %8304 = vmatprep.subr.bf16.mxu0 0
        %8305 = vmatpush1.bf16.msra.mxu0 0
        %8306 = vmatprep.subr.bf16.mxu0 0
        %8307 = vmatpush1.bf16.msra.mxu0 0
        %8308 = vmatprep.subr.bf16.mxu0 0
        %8309 = vmatpush1.bf16.msra.mxu0 0
        %8310 = vmatprep.subr.bf16.mxu0 0
        %8311 = vmatpush1.bf16.msra.mxu0 0
        %8312 = vmatprep.subr.bf16.mxu0 0
        %8313 = vmatpush1.bf16.msra.mxu0 0
        %8314 = vmatprep.subr.bf16.mxu0 0
        %8315 = vmatpush1.bf16.msra.mxu0 0
        %8316 = vmatprep.mubr.bf16.mxu0 0
        %8317 = vmatmul.mubr.bf16.gmra.mrb[0].mxu0 %v8193
        %v8318 = vpop.f32.mrb[0].mxu0
        %v8319 = vadd.f32 0.0, %v8318
        %v8320 = vpop.f32.mrb[0].mxu0
        %v8321 = vpop.f32.mrb[0].mxu0
        %v8322 = vadd.f32 0.0, %v8321
        %v8323 = vpop.f32.mrb[0].mxu0
        %8324 = vmatprep.mubr.bf16.mxu0 0
        %8325 = vmatmul.mubr.bf16.gmra.mrb[0].mxu0 %v8194
        %v8326 = vpop.f32.mrb[0].mxu0
        %v8327 = vadd.f32 0.0, %v8326
        %v8328 = vpop.f32.mrb[0].mxu0
        %v8329 = vpop.f32.mrb[0].mxu0
        %v8330 = vadd.f32 0.0, %v8329
        %v8331 = vpop.f32.mrb[0].mxu0
        %8332 = vmatprep.mubr.bf16.mxu0 0
        %8333 = vmatmul.mubr.bf16.gmra.mrb[0].mxu0 %v8195
        %v8334 = vpop.f32.mrb[0].mxu0
        %v8335 = vadd.f32 0.0, %v8334
        %v8336 = vpop.f32.mrb[0].mxu0
        %v8337 = vpop.f32.mrb[0].mxu0
        %v8338 = vadd.f32 0.0, %v8337
        %v8339 = vpop.f32.mrb[0].mxu0
        %8340 = vmatprep.mubr.bf16.mxu0 0
        %8341 = vmatmul.mubr.bf16.gmra.mrb[0].mxu0 %v8196
        %v8342 = vpop.f32.mrb[0].mxu0
        %v8343 = vadd.f32 0.0, %v8342
        %v8344 = vpop.f32.mrb[0].mxu0
        %v8345 = vpop.f32.mrb[0].mxu0
        %v8346 = vadd.f32 0.0, %v8345
        %v8347 = vpop.f32.mrb[0].mxu0
        %8348 = vmatprep.mubr.bf16.mxu0 0
        %8349 = vmatmul.mubr.bf16.gmra.mrb[0].mxu0 %v8197
        %v8350 = vpop.f32.mrb[0].mxu0
        %v8351 = vadd.f32 0.0, %v8350
        %v8352 = vpop.f32.mrb[0].mxu0
        %v8353 = vpop.f32.mrb[0].mxu0
        %v8354 = vpop.f32.mrb[0].mxu0
        %8355 = vdwg.mxu0
        %v8356 = vmax.f32 %v8047, %v8238
        %v8357 = vmax.f32 %v8049, %v8240
        %v8358 = vmax.f32 %v8128, %v8319
        %v8359 = vmax.f32 %v8051, %v8242
        %v8360 = vmax.f32 %v8053, %v8244
        %v8361 = vmax.f32 %v8131, %v8322
        %v8362 = vmax.f32 %v8057, %v8248
        %v8363 = vmax.f32 %v8059, %v8250
        %v8364 = vmax.f32 %v8136, %v8327
        %v8365 = vmax.f32 %v8061, %v8252
        %v8366 = vmax.f32 %v8063, %v8254
        %v8367 = vmax.f32 %v8139, %v8330
        %v8368 = vmax.f32 %v8067, %v8258
        %v8369 = vmax.f32 %v8069, %v8260
        %v8370 = vmax.f32 %v8144, %v8335
        %v8371 = vmax.f32 %v8071, %v8262
        %v8372 = vmax.f32 %v8073, %v8264
        %v8373 = vmax.f32 %v8147, %v8338
        %v8374 = vmax.f32 %v8077, %v8268
        %v8375 = vmax.f32 %v8079, %v8270
        %v8376 = vmax.f32 %v8152, %v8343
        %v8377 = vmax.f32 %v8081, %v8272
        %v8378 = vmax.f32 %v8083, %v8274
        %v8379 = vmax.f32 %v8155, %v8346
        %v8380 = vmax.f32 %v8087, %v8278
        %v8381 = vmax.f32 %v8089, %v8280
        %v8382 = vmax.f32 %v8160, %v8351
        %v8383 = vpack.c.bf16 %v8359, %v8356
        %v8384 = vpack.c.bf16 %v8360, %v8357
        %v8385 = vpack.c.bf16 %v8361, %v8358
        %v8386 = vpack.c.bf16 %v8365, %v8362
        %v8387 = vpack.c.bf16 %v8366, %v8363
        %v8388 = vpack.c.bf16 %v8367, %v8364
        %v8389 = vpack.c.bf16 %v8371, %v8368
        %v8390 = vpack.c.bf16 %v8372, %v8369
        %v8391 = vpack.c.bf16 %v8373, %v8370
        %v8392 = vpack.c.bf16 %v8377, %v8374
        %v8393 = vpack.c.bf16 %v8378, %v8375
        %v8394 = vpack.c.bf16 %v8379, %v8376
        %v8395 = vpack.c.bf16 %v8380, %v8380
        %v8396 = vpack.c.bf16 %v8381, %v8381
        %v8397 = vpack.c.bf16 %v8382, %v8382
        %v8398 = vld [vmem:[%s4] sm:$0xff]
        %v8399 = vld [vmem:[%s4 + $0x8] sm:$0xf]
        %v8400 = vld [vmem:[%s4 + $0xc] sm:$0xff]
        %v8401 = vld [vmem:[%s4 + $0x14] sm:$0xf]
        %v8402 = vld [vmem:[%s4 + $0x18] sm:$0xff]
        %v8403 = vld [vmem:[%s4 + $0x20] sm:$0xf]
        %v8404 = vld [vmem:[%s4 + $0x24] sm:$0xff]
        %v8405 = vld [vmem:[%s4 + $0x2c] sm:$0xf]
        %v8406 = vld [vmem:[%s4 + $0x30] sm:$0xff]
        %v8407 = vld [vmem:[%s4 + $0x38] sm:$0xf]
        %v8408 = vld [vmem:[%s4 + $0x3c] sm:$0xff]
        %v8409 = vld [vmem:[%s4 + $0x44] sm:$0xf]
        %v8410 = vld [vmem:[%s4 + $0x48] sm:$0xff]
        %v8411 = vld [vmem:[%s4 + $0x50] sm:$0xf]
        %v8412 = vld [vmem:[%s4 + $0x54] sm:$0xff]
        %v8413 = vld [vmem:[%s4 + $0x5c] sm:$0xf]
        %v8414 = vld [vmem:[%s4 + $0x60] sm:$0xff]
        %v8415 = vld [vmem:[%s4 + $0x68] sm:$0xf]
        %v8416 = vld [vmem:[%s4 + $0x6c] sm:$0xff]
        %v8417 = vld [vmem:[%s4 + $0x74] sm:$0xf]
        %v8418 = vld [vmem:[%s4 + $0x78] sm:$0xff]
        %v8419 = vld [vmem:[%s4 + $0x80] sm:$0xf]
        %v8420 = vld [vmem:[%s4 + $0x84] sm:$0xff]
        %v8421 = vld [vmem:[%s4 + $0x8c] sm:$0xf]
        %v8422 = vld [vmem:[%s4 + $0x90] sm:$0xff]
        %v8423 = vld [vmem:[%s4 + $0x98] sm:$0xf]
        %v8424 = vld [vmem:[%s4 + $0x9c] sm:$0xff]
        %v8425 = vld [vmem:[%s4 + $0xa4] sm:$0xf]
        %v8426 = vld [vmem:[%s4 + $0xa8] sm:$0xff]
        %v8427 = vld [vmem:[%s4 + $0xb0] sm:$0xf]
        %v8428 = vld [vmem:[%s4 + $0xb4] sm:$0xff]
        %v8429 = vld [vmem:[%s4 + $0xbc] sm:$0xf]
        %v8430 = vld [vmem:[%s4 + $0xc0] sm:$0xff]
        %v8431 = vld [vmem:[%s4 + $0xc8] sm:$0xf]
        %v8432 = vld [vmem:[%s4 + $0xcc] sm:$0xff]
        %v8433 = vld [vmem:[%s4 + $0xd4] sm:$0xf]
        %v8434 = vld [vmem:[%s4 + $0xd8] sm:$0xff]
        %v8435 = vld [vmem:[%s4 + $0xe0] sm:$0xf]
        %v8436 = vld [vmem:[%s4 + $0xe4] sm:$0xff]
        %v8437 = vld [vmem:[%s4 + $0xec] sm:$0xf]
        %v8438 = vld [vmem:[%s4 + $0xf0] sm:$0xff]
        %v8439 = vld [vmem:[%s4 + $0xf8] sm:$0xf]
        %v8440 = vld [vmem:[%s4 + $0xfc] sm:$0xff]
        %v8441 = vld [vmem:[%s4 + $0x104] sm:$0xf]
        %v8442 = vld [vmem:[%s4 + $0x108] sm:$0xff]
        %v8443 = vld [vmem:[%s4 + $0x110] sm:$0xf]
        %v8444 = vld [vmem:[%s4 + $0x114] sm:$0xff]
        %v8445 = vld [vmem:[%s4 + $0x11c] sm:$0xf]
        %v8446 = vld [vmem:[%s4 + $0x120] sm:$0xff]
        %v8447 = vld [vmem:[%s4 + $0x128] sm:$0xf]
        %v8448 = vld [vmem:[%s4 + $0x12c] sm:$0xff]
        %v8449 = vld [vmem:[%s4 + $0x134] sm:$0xf]
        %v8450 = vld [vmem:[%s4 + $0x138] sm:$0xff]
        %v8451 = vld [vmem:[%s4 + $0x140] sm:$0xf]
        %v8452 = vld [vmem:[%s4 + $0x144] sm:$0xff]
        %v8453 = vld [vmem:[%s4 + $0x14c] sm:$0xf]
        %v8454 = vld [vmem:[%s4 + $0x150] sm:$0xff]
        %v8455 = vld [vmem:[%s4 + $0x158] sm:$0xf]
        %v8456 = vld [vmem:[%s4 + $0x15c] sm:$0xff]
        %v8457 = vld [vmem:[%s4 + $0x164] sm:$0xf]
        %v8458 = vld [vmem:[%s4 + $0x168] sm:$0xff]
        %v8459 = vld [vmem:[%s4 + $0x170] sm:$0xf]
        %v8460 = vld [vmem:[%s4 + $0x174] sm:$0xff]
        %v8461 = vld [vmem:[%s4 + $0x17c] sm:$0xf]
        %v8462 = vld [vmem:[%s4 + $0x180] sm:$0xff]
        %v8463 = vld [vmem:[%s4 + $0x188] sm:$0xf]
        %v8464 = vld [vmem:[%s4 + $0x18c] sm:$0xff]
        %v8465 = vld [vmem:[%s4 + $0x194] sm:$0xf]
        %v8466 = vld [vmem:[%s4 + $0x198] sm:$0xff]
        %v8467 = vld [vmem:[%s4 + $0x1a0] sm:$0xf]
        %v8468 = vld [vmem:[%s4 + $0x1a4] sm:$0xff]
        %v8469 = vld [vmem:[%s4 + $0x1ac] sm:$0xf]
        %v8470 = vld [vmem:[%s4 + $0x1b0] sm:$0xff]
        %v8471 = vld [vmem:[%s4 + $0x1b8] sm:$0xf]
        %v8472 = vld [vmem:[%s4 + $0x1bc] sm:$0xff]
        %v8473 = vld [vmem:[%s4 + $0x1c4] sm:$0xf]
        %v8474 = vld [vmem:[%s4 + $0x1c8] sm:$0xff]
        %v8475 = vld [vmem:[%s4 + $0x1d0] sm:$0xf]
        %v8476 = vld [vmem:[%s4 + $0x1d4] sm:$0xff]
        %v8477 = vld [vmem:[%s4 + $0x1dc] sm:$0xf]
        %v8478 = vld [vmem:[%s4 + $0x1e0] sm:$0xff]
        %v8479 = vld [vmem:[%s4 + $0x1e8] sm:$0xf]
        %v8480 = vld [vmem:[%s4 + $0x1ec] sm:$0xff]
        %v8481 = vld [vmem:[%s4 + $0x1f4] sm:$0xf]
        %v8482 = vld [vmem:[%s4 + $0x1f8] sm:$0xff]
        %v8483 = vld [vmem:[%s4 + $0x200] sm:$0xf]
        %v8484 = vld [vmem:[%s4 + $0x204] sm:$0xff]
        %v8485 = vld [vmem:[%s4 + $0x20c] sm:$0xf]
        %v8486 = vld [vmem:[%s4 + $0x210] sm:$0xff]
        %v8487 = vld [vmem:[%s4 + $0x218] sm:$0xf]
        %v8488 = vld [vmem:[%s4 + $0x21c] sm:$0xff]
        %v8489 = vld [vmem:[%s4 + $0x224] sm:$0xf]
        %v8490 = vld [vmem:[%s4 + $0x228] sm:$0xff]
        %v8491 = vld [vmem:[%s4 + $0x230] sm:$0xf]
        %v8492 = vld [vmem:[%s4 + $0x234] sm:$0xff]
        %v8493 = vld [vmem:[%s4 + $0x23c] sm:$0xf]
        %s8494 = scalar_lea.vmem %s4, 576
        %v8495 = vld [vmem:[%s8494] sm:$0xff]
        %v8496 = vld [vmem:[%s8494 + $0x8] sm:$0xf]
        %v8497 = vld [vmem:[%s8494 + $0xc] sm:$0xff]
        %v8498 = vld [vmem:[%s8494 + $0x14] sm:$0xf]
        %v8499 = vld [vmem:[%s8494 + $0x18] sm:$0xff]
        %v8500 = vld [vmem:[%s8494 + $0x20] sm:$0xf]
        %v8501 = vld [vmem:[%s8494 + $0x24] sm:$0xff]
        %v8502 = vld [vmem:[%s8494 + $0x2c] sm:$0xf]
        %v8503 = vld [vmem:[%s8494 + $0x30] sm:$0xff]
        %v8504 = vld [vmem:[%s8494 + $0x38] sm:$0xf]
        %v8505 = vld [vmem:[%s8494 + $0x3c] sm:$0xff]
        %v8506 = vld [vmem:[%s8494 + $0x44] sm:$0xf]
        %v8507 = vld [vmem:[%s8494 + $0x48] sm:$0xff]
        %v8508 = vld [vmem:[%s8494 + $0x50] sm:$0xf]
        %v8509 = vld [vmem:[%s8494 + $0x54] sm:$0xff]
        %v8510 = vld [vmem:[%s8494 + $0x5c] sm:$0xf]
        %v8511 = vld [vmem:[%s8494 + $0x60] sm:$0xff]
        %v8512 = vld [vmem:[%s8494 + $0x68] sm:$0xf]
        %v8513 = vld [vmem:[%s8494 + $0x6c] sm:$0xff]
        %v8514 = vld [vmem:[%s8494 + $0x74] sm:$0xf]
        %v8515 = vld [vmem:[%s8494 + $0x78] sm:$0xff]
        %v8516 = vld [vmem:[%s8494 + $0x80] sm:$0xf]
        %v8517 = vld [vmem:[%s8494 + $0x84] sm:$0xff]
        %v8518 = vld [vmem:[%s8494 + $0x8c] sm:$0xf]
        %v8519 = vld [vmem:[%s8494 + $0x90] sm:$0xff]
        %v8520 = vld [vmem:[%s8494 + $0x98] sm:$0xf]
        %v8521 = vld [vmem:[%s8494 + $0x9c] sm:$0xff]
        %v8522 = vld [vmem:[%s8494 + $0xa4] sm:$0xf]
        %v8523 = vld [vmem:[%s8494 + $0xa8] sm:$0xff]
        %v8524 = vld [vmem:[%s8494 + $0xb0] sm:$0xf]
        %v8525 = vld [vmem:[%s8494 + $0xb4] sm:$0xff]
        %v8526 = vld [vmem:[%s8494 + $0xbc] sm:$0xf]
        %v8527 = vld [vmem:[%s8494 + $0xc0] sm:$0xff]
        %v8528 = vld [vmem:[%s8494 + $0xc8] sm:$0xf]
        %v8529 = vld [vmem:[%s8494 + $0xcc] sm:$0xff]
        %v8530 = vld [vmem:[%s8494 + $0xd4] sm:$0xf]
        %v8531 = vld [vmem:[%s8494 + $0xd8] sm:$0xff]
        %v8532 = vld [vmem:[%s8494 + $0xe0] sm:$0xf]
        %v8533 = vld [vmem:[%s8494 + $0xe4] sm:$0xff]
        %v8534 = vld [vmem:[%s8494 + $0xec] sm:$0xf]
        %v8535 = vld [vmem:[%s8494 + $0xf0] sm:$0xff]
        %v8536 = vld [vmem:[%s8494 + $0xf8] sm:$0xf]
        %v8537 = vld [vmem:[%s8494 + $0xfc] sm:$0xff]
        %v8538 = vld [vmem:[%s8494 + $0x104] sm:$0xf]
        %v8539 = vld [vmem:[%s8494 + $0x108] sm:$0xff]
        %v8540 = vld [vmem:[%s8494 + $0x110] sm:$0xf]
        %v8541 = vld [vmem:[%s8494 + $0x114] sm:$0xff]
        %v8542 = vld [vmem:[%s8494 + $0x11c] sm:$0xf]
        %v8543 = vld [vmem:[%s8494 + $0x120] sm:$0xff]
        %v8544 = vld [vmem:[%s8494 + $0x128] sm:$0xf]
        %v8545 = vld [vmem:[%s8494 + $0x12c] sm:$0xff]
        %v8546 = vld [vmem:[%s8494 + $0x134] sm:$0xf]
        %v8547 = vld [vmem:[%s8494 + $0x138] sm:$0xff]
        %v8548 = vld [vmem:[%s8494 + $0x140] sm:$0xf]
        %v8549 = vld [vmem:[%s8494 + $0x144] sm:$0xff]
        %v8550 = vld [vmem:[%s8494 + $0x14c] sm:$0xf]
        %v8551 = vld [vmem:[%s8494 + $0x150] sm:$0xff]
        %v8552 = vld [vmem:[%s8494 + $0x158] sm:$0xf]
        %v8553 = vld [vmem:[%s8494 + $0x15c] sm:$0xff]
        %v8554 = vld [vmem:[%s8494 + $0x164] sm:$0xf]
        %v8555 = vld [vmem:[%s8494 + $0x168] sm:$0xff]
        %v8556 = vld [vmem:[%s8494 + $0x170] sm:$0xf]
        %v8557 = vld [vmem:[%s8494 + $0x174] sm:$0xff]
        %v8558 = vld [vmem:[%s8494 + $0x17c] sm:$0xf]
        %v8559 = vld [vmem:[%s8494 + $0x180] sm:$0xff]
        %v8560 = vld [vmem:[%s8494 + $0x188] sm:$0xf]
        %v8561 = vld [vmem:[%s8494 + $0x18c] sm:$0xff]
        %v8562 = vld [vmem:[%s8494 + $0x194] sm:$0xf]
        %v8563 = vld [vmem:[%s8494 + $0x198] sm:$0xff]
        %v8564 = vld [vmem:[%s8494 + $0x1a0] sm:$0xf]
        %v8565 = vld [vmem:[%s8494 + $0x1a4] sm:$0xff]
        %v8566 = vld [vmem:[%s8494 + $0x1ac] sm:$0xf]
        %v8567 = vld [vmem:[%s8494 + $0x1b0] sm:$0xff]
        %v8568 = vld [vmem:[%s8494 + $0x1b8] sm:$0xf]
        %v8569 = vld [vmem:[%s8494 + $0x1bc] sm:$0xff]
        %v8570 = vld [vmem:[%s8494 + $0x1c4] sm:$0xf]
        %v8571 = vld [vmem:[%s8494 + $0x1c8] sm:$0xff]
        %v8572 = vld [vmem:[%s8494 + $0x1d0] sm:$0xf]
        %v8573 = vld [vmem:[%s8494 + $0x1d4] sm:$0xff]
        %v8574 = vld [vmem:[%s8494 + $0x1dc] sm:$0xf]
        %v8575 = vld [vmem:[%s8494 + $0x1e0] sm:$0xff]
        %v8576 = vld [vmem:[%s8494 + $0x1e8] sm:$0xf]
        %v8577 = vld [vmem:[%s8494 + $0x1ec] sm:$0xff]
        %v8578 = vld [vmem:[%s8494 + $0x1f4] sm:$0xf]
        %v8579 = vld [vmem:[%s8494 + $0x1f8] sm:$0xff]
        %v8580 = vld [vmem:[%s8494 + $0x200] sm:$0xf]
        %v8581 = vld [vmem:[%s8494 + $0x204] sm:$0xff]
        %v8582 = vld [vmem:[%s8494 + $0x20c] sm:$0xf]
        %v8583 = vld [vmem:[%s8494 + $0x210] sm:$0xff]
        %v8584 = vld [vmem:[%s8494 + $0x218] sm:$0xf]
        %v8585 = vld [vmem:[%s8494 + $0x21c] sm:$0xff]
        %v8586 = vld [vmem:[%s8494 + $0x224] sm:$0xf]
        %v8587 = vld [vmem:[%s8494 + $0x228] sm:$0xff]
        %v8588 = vld [vmem:[%s8494 + $0x230] sm:$0xf]
        %v8589 = vld [vmem:[%s8494 + $0x234] sm:$0xff]
        %v8590 = vld [vmem:[%s8494 + $0x23c] sm:$0xf]
        %v8592 = vshrl.u32 %v8389, 16
        %v8594 = vshll.u32 %v8389, 16
        %v8596 = vrot.slane %v8594, 1
        %v8597 = vor.u32 %v8592, %v8596
        %v8599 = vshll.u32 %v8392, 16
        %v8601 = vrot.slane %v8599, 1
        %v8602 = vsel %vm1396, %v8597, %v8601
        %v8604 = vshrl.u32 %v8390, 16
        %v8606 = vshll.u32 %v8390, 16
        %v8608 = vrot.slane %v8606, 1
        %v8609 = vor.u32 %v8604, %v8608
        %v8611 = vshll.u32 %v8393, 16
        %v8613 = vrot.slane %v8611, 1
        %v8614 = vsel %vm1396, %v8609, %v8613
        %v8616 = vshrl.u32 %v8391, 16
        %v8618 = vshll.u32 %v8391, 16
        %v8620 = vrot.slane %v8618, 1
        %v8621 = vor.u32 %v8616, %v8620
        %v8623 = vshll.u32 %v8394, 16
        %v8625 = vrot.slane %v8623, 1
        %v8626 = vsel %vm1396, %v8621, %v8625
        %v8627 = vshrl.u32 %v8392, 16
        %v8629 = vor.u32 %v8627, %v8601
        %v8631 = vshll.u32 %v8395, 16
        %v8633 = vrot.slane %v8631, 1
        %v8634 = vsel %vm1396, %v8629, %v8633
        %v8635 = vshrl.u32 %v8393, 16
        %v8637 = vor.u32 %v8635, %v8613
        %v8639 = vshll.u32 %v8396, 16
        %v8641 = vrot.slane %v8639, 1
        %v8642 = vsel %vm1396, %v8637, %v8641
        %v8643 = vshrl.u32 %v8394, 16
        %v8645 = vor.u32 %v8643, %v8625
        %v8647 = vshll.u32 %v8397, 16
        %v8649 = vrot.slane %v8647, 1
        %v8650 = vsel %vm1396, %v8645, %v8649
        %v8753 = vunpack.c.l.b16 %v8495
        %v8754 = vunpack.c.h.b16 %v8495
        %v8755 = vunpack.c.l.b16 %v8496
        %v8756 = vunpack.c.l.b16 %v8497
        %v8757 = vunpack.c.h.b16 %v8497
        %v8758 = vunpack.c.l.b16 %v8498
        %v8759 = vunpack.c.l.b16 %v8499
        %v8760 = vunpack.c.h.b16 %v8499
        %v8761 = vunpack.c.l.b16 %v8500
        %v8762 = vunpack.c.l.b16 %v8501
        %v8763 = vunpack.c.h.b16 %v8501
        %v8764 = vunpack.c.l.b16 %v8502
        %v8765 = vunpack.c.l.b16 %v8503
        %v8766 = vunpack.c.h.b16 %v8503
        %v8767 = vunpack.c.l.b16 %v8504
        %v8768 = vunpack.c.l.b16 %v8505
        %v8769 = vunpack.c.h.b16 %v8505
        %v8770 = vunpack.c.l.b16 %v8506
        %v8771 = vunpack.c.l.b16 %v8507
        %v8772 = vunpack.c.h.b16 %v8507
        %v8773 = vunpack.c.l.b16 %v8508
        %v8774 = vunpack.c.l.b16 %v8509
        %v8775 = vunpack.c.h.b16 %v8509
        %v8776 = vunpack.c.l.b16 %v8510
        %v8777 = vunpack.c.l.b16 %v8511
        %v8778 = vunpack.c.h.b16 %v8511
        %v8779 = vunpack.c.l.b16 %v8512
        %v8780 = vunpack.c.l.b16 %v8513
        %v8781 = vunpack.c.h.b16 %v8513
        %v8782 = vunpack.c.l.b16 %v8514
        %v8783 = vunpack.c.l.b16 %v8515
        %v8784 = vunpack.c.h.b16 %v8515
        %v8785 = vunpack.c.l.b16 %v8516
        %v8786 = vunpack.c.l.b16 %v8517
        %v8787 = vunpack.c.h.b16 %v8517
        %v8788 = vunpack.c.l.b16 %v8518
        %v8789 = vunpack.c.l.b16 %v8519
        %v8790 = vunpack.c.h.b16 %v8519
        %v8791 = vunpack.c.l.b16 %v8520
        %v8792 = vunpack.c.l.b16 %v8521
        %v8793 = vunpack.c.h.b16 %v8521
        %v8794 = vunpack.c.l.b16 %v8522
        %v8795 = vunpack.c.l.b16 %v8523
        %v8796 = vunpack.c.h.b16 %v8523
        %v8797 = vunpack.c.l.b16 %v8524
        %v8798 = vunpack.c.l.b16 %v8525
        %v8799 = vunpack.c.h.b16 %v8525
        %v8800 = vunpack.c.l.b16 %v8526
        %v8801 = vunpack.c.l.b16 %v8527
        %v8802 = vunpack.c.h.b16 %v8527
        %v8803 = vunpack.c.l.b16 %v8528
        %v8804 = vunpack.c.l.b16 %v8529
        %v8805 = vunpack.c.h.b16 %v8529
        %v8806 = vunpack.c.l.b16 %v8530
        %v8807 = vunpack.c.l.b16 %v8531
        %v8808 = vunpack.c.h.b16 %v8531
        %v8809 = vunpack.c.l.b16 %v8532
        %v8810 = vunpack.c.l.b16 %v8533
        %v8811 = vunpack.c.h.b16 %v8533
        %v8812 = vunpack.c.l.b16 %v8534
        %v8813 = vunpack.c.l.b16 %v8535
        %v8814 = vunpack.c.h.b16 %v8535
        %v8815 = vunpack.c.l.b16 %v8536
        %v8816 = vunpack.c.l.b16 %v8537
        %v8817 = vunpack.c.h.b16 %v8537
        %v8818 = vunpack.c.l.b16 %v8538
        %v8819 = vunpack.c.l.b16 %v8539
        %v8820 = vunpack.c.h.b16 %v8539
        %v8821 = vunpack.c.l.b16 %v8540
        %v8822 = vunpack.c.l.b16 %v8541
        %v8823 = vunpack.c.h.b16 %v8541
        %v8824 = vunpack.c.l.b16 %v8542
        %v8825 = vunpack.c.l.b16 %v8543
        %v8826 = vunpack.c.h.b16 %v8543
        %v8827 = vunpack.c.l.b16 %v8544
        %v8828 = vunpack.c.l.b16 %v8545
        %v8829 = vunpack.c.h.b16 %v8545
        %v8830 = vunpack.c.l.b16 %v8546
        %v8831 = vunpack.c.l.b16 %v8547
        %v8832 = vunpack.c.h.b16 %v8547
        %v8833 = vunpack.c.l.b16 %v8548
        %v8834 = vunpack.c.l.b16 %v8549
        %v8835 = vunpack.c.h.b16 %v8549
        %v8836 = vunpack.c.l.b16 %v8550
        %v8837 = vunpack.c.l.b16 %v8551
        %v8838 = vunpack.c.h.b16 %v8551
        %v8839 = vunpack.c.l.b16 %v8552
        %v8840 = vunpack.c.l.b16 %v8553
        %v8841 = vunpack.c.h.b16 %v8553
        %v8842 = vunpack.c.l.b16 %v8554
        %v8843 = vunpack.c.l.b16 %v8555
        %v8844 = vunpack.c.h.b16 %v8555
        %v8845 = vunpack.c.l.b16 %v8556
        %v8846 = vunpack.c.l.b16 %v8557
        %v8847 = vunpack.c.h.b16 %v8557
        %v8848 = vunpack.c.l.b16 %v8558
        %v8849 = vunpack.c.l.b16 %v8559
        %v8850 = vunpack.c.h.b16 %v8559
        %v8851 = vunpack.c.l.b16 %v8560
        %v8852 = vunpack.c.l.b16 %v8561
        %v8853 = vunpack.c.h.b16 %v8561
        %v8854 = vunpack.c.l.b16 %v8562
        %v8855 = vunpack.c.l.b16 %v8563
        %v8856 = vunpack.c.h.b16 %v8563
        %v8857 = vunpack.c.l.b16 %v8564
        %v8858 = vunpack.c.l.b16 %v8565
        %v8859 = vunpack.c.h.b16 %v8565
        %v8860 = vunpack.c.l.b16 %v8566
        %v8861 = vunpack.c.l.b16 %v8567
        %v8862 = vunpack.c.h.b16 %v8567
        %v8863 = vunpack.c.l.b16 %v8568
        %v8864 = vunpack.c.l.b16 %v8569
        %v8865 = vunpack.c.h.b16 %v8569
        %v8866 = vunpack.c.l.b16 %v8570
        %v8867 = vunpack.c.l.b16 %v8571
        %v8868 = vunpack.c.h.b16 %v8571
        %v8869 = vunpack.c.l.b16 %v8572
        %v8870 = vunpack.c.l.b16 %v8573
        %v8871 = vunpack.c.h.b16 %v8573
        %v8872 = vunpack.c.l.b16 %v8574
        %v8873 = vunpack.c.l.b16 %v8575
        %v8874 = vunpack.c.h.b16 %v8575
        %v8875 = vunpack.c.l.b16 %v8576
        %v8876 = vunpack.c.l.b16 %v8577
        %v8877 = vunpack.c.h.b16 %v8577
        %v8878 = vunpack.c.l.b16 %v8578
        %v8879 = vunpack.c.l.b16 %v8579
        %v8880 = vunpack.c.h.b16 %v8579
        %v8881 = vunpack.c.l.b16 %v8580
        %v8882 = vunpack.c.l.b16 %v8581
        %v8883 = vunpack.c.h.b16 %v8581
        %v8884 = vunpack.c.l.b16 %v8582
        %v8885 = vunpack.c.l.b16 %v8583
        %v8886 = vunpack.c.h.b16 %v8583
        %v8887 = vunpack.c.l.b16 %v8584
        %v8888 = vunpack.c.l.b16 %v8585
        %v8889 = vunpack.c.h.b16 %v8585
        %v8890 = vunpack.c.l.b16 %v8586
        %v8891 = vunpack.c.l.b16 %v8587
        %v8892 = vunpack.c.h.b16 %v8587
        %v8893 = vunpack.c.l.b16 %v8588
        %v8894 = vunpack.c.l.b16 %v8589
        %v8895 = vunpack.c.h.b16 %v8589
        %v8896 = vunpack.c.l.b16 %v8590
        %v8897 = vpack.c.b16 %v8756, %v8753
        %v8898 = vpack.c.b16 %v8757, %v8754
        %v8899 = vpack.c.b16 %v8758, %v8755
        %v8900 = vpack.c.b16 %v8762, %v8759
        %v8901 = vpack.c.b16 %v8763, %v8760
        %v8902 = vpack.c.b16 %v8764, %v8761
        %v8903 = vpack.c.b16 %v8768, %v8765
        %v8904 = vpack.c.b16 %v8769, %v8766
        %v8905 = vpack.c.b16 %v8770, %v8767
        %v8906 = vpack.c.b16 %v8774, %v8771
        %v8907 = vpack.c.b16 %v8775, %v8772
        %v8908 = vpack.c.b16 %v8776, %v8773
        %v8909 = vpack.c.b16 %v8780, %v8777
        %v8910 = vpack.c.b16 %v8781, %v8778
        %v8911 = vpack.c.b16 %v8782, %v8779
        %v8912 = vpack.c.b16 %v8786, %v8783
        %v8913 = vpack.c.b16 %v8787, %v8784
        %v8914 = vpack.c.b16 %v8788, %v8785
        %v8915 = vpack.c.b16 %v8792, %v8789
        %v8916 = vpack.c.b16 %v8793, %v8790
        %v8917 = vpack.c.b16 %v8794, %v8791
        %v8918 = vpack.c.b16 %v8798, %v8795
        %v8919 = vpack.c.b16 %v8799, %v8796
        %v8920 = vpack.c.b16 %v8800, %v8797
        %v8921 = vpack.c.b16 %v8804, %v8801
        %v8922 = vpack.c.b16 %v8805, %v8802
        %v8923 = vpack.c.b16 %v8806, %v8803
        %v8924 = vpack.c.b16 %v8810, %v8807
        %v8925 = vpack.c.b16 %v8811, %v8808
        %v8926 = vpack.c.b16 %v8812, %v8809
        %v8927 = vpack.c.b16 %v8816, %v8813
        %v8928 = vpack.c.b16 %v8817, %v8814
        %v8929 = vpack.c.b16 %v8818, %v8815
        %v8930 = vpack.c.b16 %v8822, %v8819
        %v8931 = vpack.c.b16 %v8823, %v8820
        %v8932 = vpack.c.b16 %v8824, %v8821
        %v8933 = vpack.c.b16 %v8828, %v8825
        %v8934 = vpack.c.b16 %v8829, %v8826
        %v8935 = vpack.c.b16 %v8830, %v8827
        %v8936 = vpack.c.b16 %v8834, %v8831
        %v8937 = vpack.c.b16 %v8835, %v8832
        %v8938 = vpack.c.b16 %v8836, %v8833
        %v8939 = vpack.c.b16 %v8840, %v8837
        %v8940 = vpack.c.b16 %v8841, %v8838
        %v8941 = vpack.c.b16 %v8842, %v8839
        %v8942 = vpack.c.b16 %v8846, %v8843
        %v8943 = vpack.c.b16 %v8847, %v8844
        %v8944 = vpack.c.b16 %v8848, %v8845
        %v8945 = vpack.c.b16 %v8852, %v8849
        %v8946 = vpack.c.b16 %v8853, %v8850
        %v8947 = vpack.c.b16 %v8854, %v8851
        %v8948 = vpack.c.b16 %v8858, %v8855
        %v8949 = vpack.c.b16 %v8859, %v8856
        %v8950 = vpack.c.b16 %v8860, %v8857
        %v8951 = vpack.c.b16 %v8864, %v8861
        %v8952 = vpack.c.b16 %v8865, %v8862
        %v8953 = vpack.c.b16 %v8866, %v8863
        %v8954 = vpack.c.b16 %v8870, %v8867
        %v8955 = vpack.c.b16 %v8871, %v8868
        %v8956 = vpack.c.b16 %v8872, %v8869
        %v8957 = vpack.c.b16 %v8876, %v8873
        %v8958 = vpack.c.b16 %v8877, %v8874
        %v8959 = vpack.c.b16 %v8878, %v8875
        %v8960 = vpack.c.b16 %v8882, %v8879
        %v8961 = vpack.c.b16 %v8883, %v8880
        %v8962 = vpack.c.b16 %v8884, %v8881
        %v8963 = vpack.c.b16 %v8888, %v8885
        %v8964 = vpack.c.b16 %v8889, %v8886
        %v8965 = vpack.c.b16 %v8890, %v8887
        %v8966 = vpack.c.b16 %v8894, %v8891
        %v8967 = vpack.c.b16 %v8895, %v8892
        %v8968 = vpack.c.b16 %v8896, %v8893
        %9041 = vmatprep.subr.bf16.mxu0 %v8898
        %9042 = vmatpush1.bf16.msra.mxu0 %v8897
        %9043 = vmatprep.subr.bf16.mxu0 %v8901
        %9044 = vmatpush1.bf16.msra.mxu0 %v8900
        %9045 = vmatprep.subr.bf16.mxu0 %v8904
        %9046 = vmatpush1.bf16.msra.mxu0 %v8903
        %9047 = vmatprep.subr.bf16.mxu0 %v8907
        %9048 = vmatpush1.bf16.msra.mxu0 %v8906
        %9049 = vmatprep.subr.bf16.mxu0 %v8910
        %9050 = vmatpush1.bf16.msra.mxu0 %v8909
        %9051 = vmatprep.subr.bf16.mxu0 %v8913
        %9052 = vmatpush1.bf16.msra.mxu0 %v8912
        %9053 = vmatprep.subr.bf16.mxu0 %v8916
        %9054 = vmatpush1.bf16.msra.mxu0 %v8915
        %9055 = vmatprep.subr.bf16.mxu0 %v8919
        %9056 = vmatpush1.bf16.msra.mxu0 %v8918
        %9057 = vmatprep.subr.bf16.mxu0 %v8922
        %9058 = vmatpush1.bf16.msra.mxu0 %v8921
        %9059 = vmatprep.subr.bf16.mxu0 %v8925
        %9060 = vmatpush1.bf16.msra.mxu0 %v8924
        %9061 = vmatprep.subr.bf16.mxu0 %v8928
        %9062 = vmatpush1.bf16.msra.mxu0 %v8927
        %9063 = vmatprep.subr.bf16.mxu0 %v8931
        %9064 = vmatpush1.bf16.msra.mxu0 %v8930
        %9065 = vmatprep.subr.bf16.mxu0 %v8934
        %9066 = vmatpush1.bf16.msra.mxu0 %v8933
        %9067 = vmatprep.subr.bf16.mxu0 %v8937
        %9068 = vmatpush1.bf16.msra.mxu0 %v8936
        %9069 = vmatprep.subr.bf16.mxu0 %v8940
        %9070 = vmatpush1.bf16.msra.mxu0 %v8939
        %9071 = vmatprep.subr.bf16.mxu0 %v8943
        %9072 = vmatpush1.bf16.msra.mxu0 %v8942
        %9073 = vmatprep.mubr.bf16.mxu0 %v8614
        %9074 = vmatmul.mubr.bf16.gmra.mrb[0].mxu0 %v8602
        %v9075 = vpop.f32.mrb[0].mxu0
        %v9076 = vadd.f32 0.0, %v9075
        %v9077 = vpop.f32.mrb[0].mxu0
        %v9078 = vadd.f32 0.0, %v9077
        %v9079 = vpop.f32.mrb[0].mxu0
        %v9080 = vadd.f32 0.0, %v9079
        %v9081 = vpop.f32.mrb[0].mxu0
        %v9082 = vadd.f32 0.0, %v9081
        %9083 = vmatprep.mubr.bf16.mxu0 %v8642
        %9084 = vmatmul.mubr.bf16.gmra.mrb[0].mxu0 %v8634
        %v9085 = vpop.f32.mrb[0].mxu0
        %v9086 = vadd.f32 0.0, %v9085
        %v9087 = vpop.f32.mrb[0].mxu0
        %v9088 = vadd.f32 0.0, %v9087
        %v9089 = vpop.f32.mrb[0].mxu0
        %v9090 = vadd.f32 0.0, %v9089
        %v9091 = vpop.f32.mrb[0].mxu0
        %v9092 = vadd.f32 0.0, %v9091
        %9093 = vdwg.mxu0
        %9094 = vmatprep.subr.bf16.mxu0 %v8946
        %9095 = vmatpush1.bf16.msra.mxu0 %v8945
        %9096 = vmatprep.subr.bf16.mxu0 %v8949
        %9097 = vmatpush1.bf16.msra.mxu0 %v8948
        %9098 = vmatprep.subr.bf16.mxu0 %v8952
        %9099 = vmatpush1.bf16.msra.mxu0 %v8951
        %9100 = vmatprep.subr.bf16.mxu0 %v8955
        %9101 = vmatpush1.bf16.msra.mxu0 %v8954
        %9102 = vmatprep.subr.bf16.mxu0 %v8958
        %9103 = vmatpush1.bf16.msra.mxu0 %v8957
        %9104 = vmatprep.subr.bf16.mxu0 %v8961
        %9105 = vmatpush1.bf16.msra.mxu0 %v8960
        %9106 = vmatprep.subr.bf16.mxu0 %v8964
        %9107 = vmatpush1.bf16.msra.mxu0 %v8963
        %9108 = vmatprep.subr.bf16.mxu0 %v8967
        %9109 = vmatpush1.bf16.msra.mxu0 %v8966
        %9110 = vmatprep.subr.bf16.mxu0 0
        %9111 = vmatpush1.bf16.msra.mxu0 0
        %9112 = vmatprep.subr.bf16.mxu0 0
        %9113 = vmatpush1.bf16.msra.mxu0 0
        %9114 = vmatprep.subr.bf16.mxu0 0
        %9115 = vmatpush1.bf16.msra.mxu0 0
        %9116 = vmatprep.subr.bf16.mxu0 0
        %9117 = vmatpush1.bf16.msra.mxu0 0
        %9118 = vmatprep.subr.bf16.mxu0 0
        %9119 = vmatpush1.bf16.msra.mxu0 0
        %9120 = vmatprep.subr.bf16.mxu0 0
        %9121 = vmatpush1.bf16.msra.mxu0 0
        %9122 = vmatprep.subr.bf16.mxu0 0
        %9123 = vmatpush1.bf16.msra.mxu0 0
        %9124 = vmatprep.subr.bf16.mxu0 0
        %9125 = vmatpush1.bf16.msra.mxu0 0
        %9126 = vmatprep.mubr.bf16.mxu0 0
        %9127 = vmatmul.mubr.bf16.gmra.mrb[0].mxu0 %v8626
        %v9128 = vpop.f32.mrb[0].mxu0
        %v9129 = vadd.f32 %v9076, %v9128
        %v9130 = vpop.f32.mrb[0].mxu0
        %v9131 = vadd.f32 %v9078, %v9130
        %v9132 = vpop.f32.mrb[0].mxu0
        %v9133 = vadd.f32 %v9080, %v9132
        %v9134 = vpop.f32.mrb[0].mxu0
        %v9135 = vadd.f32 %v9082, %v9134
        %9136 = vmatprep.mubr.bf16.mxu0 0
        %9137 = vmatmul.mubr.bf16.gmra.mrb[0].mxu0 %v8650
        %v9138 = vpop.f32.mrb[0].mxu0
        %v9139 = vadd.f32 %v9086, %v9138
        %v9140 = vpop.f32.mrb[0].mxu0
        %v9141 = vadd.f32 %v9088, %v9140
        %v9142 = vpop.f32.mrb[0].mxu0
        %v9143 = vadd.f32 %v9090, %v9142
        %v9144 = vpop.f32.mrb[0].mxu0
        %v9145 = vadd.f32 %v9092, %v9144
        %9146 = vdwg.mxu0
        %9147 = vmatprep.subr.bf16.mxu0 0
        %9148 = vmatpush1.bf16.msra.mxu0 %v8899
        %9149 = vmatprep.subr.bf16.mxu0 0
        %9150 = vmatpush1.bf16.msra.mxu0 %v8902
        %9151 = vmatprep.subr.bf16.mxu0 0
        %9152 = vmatpush1.bf16.msra.mxu0 %v8905
        %9153 = vmatprep.subr.bf16.mxu0 0
        %9154 = vmatpush1.bf16.msra.mxu0 %v8908
        %9155 = vmatprep.subr.bf16.mxu0 0
        %9156 = vmatpush1.bf16.msra.mxu0 %v8911
        %9157 = vmatprep.subr.bf16.mxu0 0
        %9158 = vmatpush1.bf16.msra.mxu0 %v8914
        %9159 = vmatprep.subr.bf16.mxu0 0
        %9160 = vmatpush1.bf16.msra.mxu0 %v8917
        %9161 = vmatprep.subr.bf16.mxu0 0
        %9162 = vmatpush1.bf16.msra.mxu0 %v8920
        %9163 = vmatprep.subr.bf16.mxu0 0
        %9164 = vmatpush1.bf16.msra.mxu0 %v8923
        %9165 = vmatprep.subr.bf16.mxu0 0
        %9166 = vmatpush1.bf16.msra.mxu0 %v8926
        %9167 = vmatprep.subr.bf16.mxu0 0
        %9168 = vmatpush1.bf16.msra.mxu0 %v8929
        %9169 = vmatprep.subr.bf16.mxu0 0
        %9170 = vmatpush1.bf16.msra.mxu0 %v8932
        %9171 = vmatprep.subr.bf16.mxu0 0
        %9172 = vmatpush1.bf16.msra.mxu0 %v8935
        %9173 = vmatprep.subr.bf16.mxu0 0
        %9174 = vmatpush1.bf16.msra.mxu0 %v8938
        %9175 = vmatprep.subr.bf16.mxu0 0
        %9176 = vmatpush1.bf16.msra.mxu0 %v8941
        %9177 = vmatprep.subr.bf16.mxu0 0
        %9178 = vmatpush1.bf16.msra.mxu0 %v8944
        %9179 = vmatprep.mubr.bf16.mxu0 %v8614
        %9180 = vmatmul.mubr.bf16.gmra.mrb[0].mxu0 %v8602
        %v9181 = vpop.f32.mrb[0].mxu0
        %v9182 = vadd.f32 0.0, %v9181
        %v9183 = vpop.f32.mrb[0].mxu0
        %v9184 = vpop.f32.mrb[0].mxu0
        %v9185 = vadd.f32 0.0, %v9184
        %v9186 = vpop.f32.mrb[0].mxu0
        %9187 = vmatprep.mubr.bf16.mxu0 %v8642
        %9188 = vmatmul.mubr.bf16.gmra.mrb[0].mxu0 %v8634
        %v9189 = vpop.f32.mrb[0].mxu0
        %v9190 = vadd.f32 0.0, %v9189
        %v9191 = vpop.f32.mrb[0].mxu0
        %v9192 = vpop.f32.mrb[0].mxu0
        %v9193 = vadd.f32 0.0, %v9192
        %v9194 = vpop.f32.mrb[0].mxu0
        %9195 = vdwg.mxu0
        %9196 = vmatprep.subr.bf16.mxu0 0
        %9197 = vmatpush1.bf16.msra.mxu0 %v8947
        %9198 = vmatprep.subr.bf16.mxu0 0
        %9199 = vmatpush1.bf16.msra.mxu0 %v8950
        %9200 = vmatprep.subr.bf16.mxu0 0
        %9201 = vmatpush1.bf16.msra.mxu0 %v8953
        %9202 = vmatprep.subr.bf16.mxu0 0
        %9203 = vmatpush1.bf16.msra.mxu0 %v8956
        %9204 = vmatprep.subr.bf16.mxu0 0
        %9205 = vmatpush1.bf16.msra.mxu0 %v8959
        %9206 = vmatprep.subr.bf16.mxu0 0
        %9207 = vmatpush1.bf16.msra.mxu0 %v8962
        %9208 = vmatprep.subr.bf16.mxu0 0
        %9209 = vmatpush1.bf16.msra.mxu0 %v8965
        %9210 = vmatprep.subr.bf16.mxu0 0
        %9211 = vmatpush1.bf16.msra.mxu0 %v8968
        %9212 = vmatprep.subr.bf16.mxu0 0
        %9213 = vmatpush1.bf16.msra.mxu0 0
        %9214 = vmatprep.subr.bf16.mxu0 0
        %9215 = vmatpush1.bf16.msra.mxu0 0
        %9216 = vmatprep.subr.bf16.mxu0 0
        %9217 = vmatpush1.bf16.msra.mxu0 0
        %9218 = vmatprep.subr.bf16.mxu0 0
        %9219 = vmatpush1.bf16.msra.mxu0 0
        %9220 = vmatprep.subr.bf16.mxu0 0
        %9221 = vmatpush1.bf16.msra.mxu0 0
        %9222 = vmatprep.subr.bf16.mxu0 0
        %9223 = vmatpush1.bf16.msra.mxu0 0
        %9224 = vmatprep.subr.bf16.mxu0 0
        %9225 = vmatpush1.bf16.msra.mxu0 0
        %9226 = vmatprep.subr.bf16.mxu0 0
        %9227 = vmatpush1.bf16.msra.mxu0 0
        %9228 = vmatprep.mubr.bf16.mxu0 0
        %9229 = vmatmul.mubr.bf16.gmra.mrb[0].mxu0 %v8626
        %v9230 = vpop.f32.mrb[0].mxu0
        %v9231 = vadd.f32 %v9182, %v9230
        %v9232 = vpop.f32.mrb[0].mxu0
        %v9233 = vpop.f32.mrb[0].mxu0
        %v9234 = vadd.f32 %v9185, %v9233
        %v9235 = vpop.f32.mrb[0].mxu0
        %9236 = vmatprep.mubr.bf16.mxu0 0
        %9237 = vmatmul.mubr.bf16.gmra.mrb[0].mxu0 %v8650
        %v9238 = vpop.f32.mrb[0].mxu0
        %v9239 = vadd.f32 %v9190, %v9238
        %v9240 = vpop.f32.mrb[0].mxu0
        %v9241 = vpop.f32.mrb[0].mxu0
        %v9242 = vadd.f32 %v9193, %v9241
        %v9243 = vpop.f32.mrb[0].mxu0
        %9244 = vdwg.mxu0
        %v9341 = vunpack.c.l.b16 %v8398
        %v9342 = vunpack.c.h.b16 %v8398
        %v9343 = vunpack.c.l.b16 %v8399
        %v9344 = vunpack.c.l.b16 %v8400
        %v9345 = vunpack.c.h.b16 %v8400
        %v9346 = vunpack.c.l.b16 %v8401
        %v9347 = vunpack.c.l.b16 %v8402
        %v9348 = vunpack.c.h.b16 %v8402
        %v9349 = vunpack.c.l.b16 %v8403
        %v9350 = vunpack.c.l.b16 %v8404
        %v9351 = vunpack.c.h.b16 %v8404
        %v9352 = vunpack.c.l.b16 %v8405
        %v9353 = vunpack.c.l.b16 %v8406
        %v9354 = vunpack.c.h.b16 %v8406
        %v9355 = vunpack.c.l.b16 %v8407
        %v9356 = vunpack.c.l.b16 %v8408
        %v9357 = vunpack.c.h.b16 %v8408
        %v9358 = vunpack.c.l.b16 %v8409
        %v9359 = vunpack.c.l.b16 %v8410
        %v9360 = vunpack.c.h.b16 %v8410
        %v9361 = vunpack.c.l.b16 %v8411
        %v9362 = vunpack.c.l.b16 %v8412
        %v9363 = vunpack.c.h.b16 %v8412
        %v9364 = vunpack.c.l.b16 %v8413
        %v9365 = vunpack.c.l.b16 %v8414
        %v9366 = vunpack.c.h.b16 %v8414
        %v9367 = vunpack.c.l.b16 %v8415
        %v9368 = vunpack.c.l.b16 %v8416
        %v9369 = vunpack.c.h.b16 %v8416
        %v9370 = vunpack.c.l.b16 %v8417
        %v9371 = vunpack.c.l.b16 %v8418
        %v9372 = vunpack.c.h.b16 %v8418
        %v9373 = vunpack.c.l.b16 %v8419
        %v9374 = vunpack.c.l.b16 %v8420
        %v9375 = vunpack.c.h.b16 %v8420
        %v9376 = vunpack.c.l.b16 %v8421
        %v9377 = vunpack.c.l.b16 %v8422
        %v9378 = vunpack.c.h.b16 %v8422
        %v9379 = vunpack.c.l.b16 %v8423
        %v9380 = vunpack.c.l.b16 %v8424
        %v9381 = vunpack.c.h.b16 %v8424
        %v9382 = vunpack.c.l.b16 %v8425
        %v9383 = vunpack.c.l.b16 %v8426
        %v9384 = vunpack.c.h.b16 %v8426
        %v9385 = vunpack.c.l.b16 %v8427
        %v9386 = vunpack.c.l.b16 %v8428
        %v9387 = vunpack.c.h.b16 %v8428
        %v9388 = vunpack.c.l.b16 %v8429
        %v9389 = vunpack.c.l.b16 %v8430
        %v9390 = vunpack.c.h.b16 %v8430
        %v9391 = vunpack.c.l.b16 %v8431
        %v9392 = vunpack.c.l.b16 %v8432
        %v9393 = vunpack.c.h.b16 %v8432
        %v9394 = vunpack.c.l.b16 %v8433
        %v9395 = vunpack.c.l.b16 %v8434
        %v9396 = vunpack.c.h.b16 %v8434
        %v9397 = vunpack.c.l.b16 %v8435
        %v9398 = vunpack.c.l.b16 %v8436
        %v9399 = vunpack.c.h.b16 %v8436
        %v9400 = vunpack.c.l.b16 %v8437
        %v9401 = vunpack.c.l.b16 %v8438
        %v9402 = vunpack.c.h.b16 %v8438
        %v9403 = vunpack.c.l.b16 %v8439
        %v9404 = vunpack.c.l.b16 %v8440
        %v9405 = vunpack.c.h.b16 %v8440
        %v9406 = vunpack.c.l.b16 %v8441
        %v9407 = vunpack.c.l.b16 %v8442
        %v9408 = vunpack.c.h.b16 %v8442
        %v9409 = vunpack.c.l.b16 %v8443
        %v9410 = vunpack.c.l.b16 %v8444
        %v9411 = vunpack.c.h.b16 %v8444
        %v9412 = vunpack.c.l.b16 %v8445
        %v9413 = vunpack.c.l.b16 %v8446
        %v9414 = vunpack.c.h.b16 %v8446
        %v9415 = vunpack.c.l.b16 %v8447
        %v9416 = vunpack.c.l.b16 %v8448
        %v9417 = vunpack.c.h.b16 %v8448
        %v9418 = vunpack.c.l.b16 %v8449
        %v9419 = vunpack.c.l.b16 %v8450
        %v9420 = vunpack.c.h.b16 %v8450
        %v9421 = vunpack.c.l.b16 %v8451
        %v9422 = vunpack.c.l.b16 %v8452
        %v9423 = vunpack.c.h.b16 %v8452
        %v9424 = vunpack.c.l.b16 %v8453
        %v9425 = vunpack.c.l.b16 %v8454
        %v9426 = vunpack.c.h.b16 %v8454
        %v9427 = vunpack.c.l.b16 %v8455
        %v9428 = vunpack.c.l.b16 %v8456
        %v9429 = vunpack.c.h.b16 %v8456
        %v9430 = vunpack.c.l.b16 %v8457
        %v9431 = vunpack.c.l.b16 %v8458
        %v9432 = vunpack.c.h.b16 %v8458
        %v9433 = vunpack.c.l.b16 %v8459
        %v9434 = vunpack.c.l.b16 %v8460
        %v9435 = vunpack.c.h.b16 %v8460
        %v9436 = vunpack.c.l.b16 %v8461
        %v9437 = vunpack.c.l.b16 %v8462
        %v9438 = vunpack.c.h.b16 %v8462
        %v9439 = vunpack.c.l.b16 %v8463
        %v9440 = vunpack.c.l.b16 %v8464
        %v9441 = vunpack.c.h.b16 %v8464
        %v9442 = vunpack.c.l.b16 %v8465
        %v9443 = vunpack.c.l.b16 %v8466
        %v9444 = vunpack.c.h.b16 %v8466
        %v9445 = vunpack.c.l.b16 %v8467
        %v9446 = vunpack.c.l.b16 %v8468
        %v9447 = vunpack.c.h.b16 %v8468
        %v9448 = vunpack.c.l.b16 %v8469
        %v9449 = vunpack.c.l.b16 %v8470
        %v9450 = vunpack.c.h.b16 %v8470
        %v9451 = vunpack.c.l.b16 %v8471
        %v9452 = vunpack.c.l.b16 %v8472
        %v9453 = vunpack.c.h.b16 %v8472
        %v9454 = vunpack.c.l.b16 %v8473
        %v9455 = vunpack.c.l.b16 %v8474
        %v9456 = vunpack.c.h.b16 %v8474
        %v9457 = vunpack.c.l.b16 %v8475
        %v9458 = vunpack.c.l.b16 %v8476
        %v9459 = vunpack.c.h.b16 %v8476
        %v9460 = vunpack.c.l.b16 %v8477
        %v9461 = vunpack.c.l.b16 %v8478
        %v9462 = vunpack.c.h.b16 %v8478
        %v9463 = vunpack.c.l.b16 %v8479
        %v9464 = vunpack.c.l.b16 %v8480
        %v9465 = vunpack.c.h.b16 %v8480
        %v9466 = vunpack.c.l.b16 %v8481
        %v9467 = vunpack.c.l.b16 %v8482
        %v9468 = vunpack.c.h.b16 %v8482
        %v9469 = vunpack.c.l.b16 %v8483
        %v9470 = vunpack.c.l.b16 %v8484
        %v9471 = vunpack.c.h.b16 %v8484
        %v9472 = vunpack.c.l.b16 %v8485
        %v9473 = vunpack.c.l.b16 %v8486
        %v9474 = vunpack.c.h.b16 %v8486
        %v9475 = vunpack.c.l.b16 %v8487
        %v9476 = vunpack.c.l.b16 %v8488
        %v9477 = vunpack.c.h.b16 %v8488
        %v9478 = vunpack.c.l.b16 %v8489
        %v9479 = vunpack.c.l.b16 %v8490
        %v9480 = vunpack.c.h.b16 %v8490
        %v9481 = vunpack.c.l.b16 %v8491
        %v9482 = vunpack.c.l.b16 %v8492
        %v9483 = vunpack.c.h.b16 %v8492
        %v9484 = vunpack.c.l.b16 %v8493
        %v9485 = vpack.c.b16 %v9344, %v9341
        %v9486 = vpack.c.b16 %v9345, %v9342
        %v9487 = vpack.c.b16 %v9346, %v9343
        %v9488 = vpack.c.b16 %v9350, %v9347
        %v9489 = vpack.c.b16 %v9351, %v9348
        %v9490 = vpack.c.b16 %v9352, %v9349
        %v9491 = vpack.c.b16 %v9356, %v9353
        %v9492 = vpack.c.b16 %v9357, %v9354
        %v9493 = vpack.c.b16 %v9358, %v9355
        %v9494 = vpack.c.b16 %v9362, %v9359
        %v9495 = vpack.c.b16 %v9363, %v9360
        %v9496 = vpack.c.b16 %v9364, %v9361
        %v9497 = vpack.c.b16 %v9368, %v9365
        %v9498 = vpack.c.b16 %v9369, %v9366
        %v9499 = vpack.c.b16 %v9370, %v9367
        %v9500 = vpack.c.b16 %v9374, %v9371
        %v9501 = vpack.c.b16 %v9375, %v9372
        %v9502 = vpack.c.b16 %v9376, %v9373
        %v9503 = vpack.c.b16 %v9380, %v9377
        %v9504 = vpack.c.b16 %v9381, %v9378
        %v9505 = vpack.c.b16 %v9382, %v9379
        %v9506 = vpack.c.b16 %v9386, %v9383
        %v9507 = vpack.c.b16 %v9387, %v9384
        %v9508 = vpack.c.b16 %v9388, %v9385
        %v9509 = vpack.c.b16 %v9392, %v9389
        %v9510 = vpack.c.b16 %v9393, %v9390
        %v9511 = vpack.c.b16 %v9394, %v9391
        %v9512 = vpack.c.b16 %v9398, %v9395
        %v9513 = vpack.c.b16 %v9399, %v9396
        %v9514 = vpack.c.b16 %v9400, %v9397
        %v9515 = vpack.c.b16 %v9404, %v9401
        %v9516 = vpack.c.b16 %v9405, %v9402
        %v9517 = vpack.c.b16 %v9406, %v9403
        %v9518 = vpack.c.b16 %v9410, %v9407
        %v9519 = vpack.c.b16 %v9411, %v9408
        %v9520 = vpack.c.b16 %v9412, %v9409
        %v9521 = vpack.c.b16 %v9416, %v9413
        %v9522 = vpack.c.b16 %v9417, %v9414
        %v9523 = vpack.c.b16 %v9418, %v9415
        %v9524 = vpack.c.b16 %v9422, %v9419
        %v9525 = vpack.c.b16 %v9423, %v9420
        %v9526 = vpack.c.b16 %v9424, %v9421
        %v9527 = vpack.c.b16 %v9428, %v9425
        %v9528 = vpack.c.b16 %v9429, %v9426
        %v9529 = vpack.c.b16 %v9430, %v9427
        %v9530 = vpack.c.b16 %v9434, %v9431
        %v9531 = vpack.c.b16 %v9435, %v9432
        %v9532 = vpack.c.b16 %v9436, %v9433
        %v9533 = vpack.c.b16 %v9440, %v9437
        %v9534 = vpack.c.b16 %v9441, %v9438
        %v9535 = vpack.c.b16 %v9442, %v9439
        %v9536 = vpack.c.b16 %v9446, %v9443
        %v9537 = vpack.c.b16 %v9447, %v9444
        %v9538 = vpack.c.b16 %v9448, %v9445
        %v9539 = vpack.c.b16 %v9452, %v9449
        %v9540 = vpack.c.b16 %v9453, %v9450
        %v9541 = vpack.c.b16 %v9454, %v9451
        %v9542 = vpack.c.b16 %v9458, %v9455
        %v9543 = vpack.c.b16 %v9459, %v9456
        %v9544 = vpack.c.b16 %v9460, %v9457
        %v9545 = vpack.c.b16 %v9464, %v9461
        %v9546 = vpack.c.b16 %v9465, %v9462
        %v9547 = vpack.c.b16 %v9466, %v9463
        %v9548 = vpack.c.b16 %v9470, %v9467
        %v9549 = vpack.c.b16 %v9471, %v9468
        %v9550 = vpack.c.b16 %v9472, %v9469
        %v9551 = vpack.c.b16 %v9476, %v9473
        %v9552 = vpack.c.b16 %v9477, %v9474
        %v9553 = vpack.c.b16 %v9478, %v9475
        %v9554 = vpack.c.b16 %v9482, %v9479
        %v9555 = vpack.c.b16 %v9483, %v9480
        %v9556 = vpack.c.b16 %v9484, %v9481
        %9629 = vmatprep.subr.bf16.mxu0 %v9486
        %9630 = vmatpush1.bf16.msra.mxu0 %v9485
        %9631 = vmatprep.subr.bf16.mxu0 %v9489
        %9632 = vmatpush1.bf16.msra.mxu0 %v9488
        %9633 = vmatprep.subr.bf16.mxu0 %v9492
        %9634 = vmatpush1.bf16.msra.mxu0 %v9491
        %9635 = vmatprep.subr.bf16.mxu0 %v9495
        %9636 = vmatpush1.bf16.msra.mxu0 %v9494
        %9637 = vmatprep.subr.bf16.mxu0 %v9498
        %9638 = vmatpush1.bf16.msra.mxu0 %v9497
        %9639 = vmatprep.subr.bf16.mxu0 %v9501
        %9640 = vmatpush1.bf16.msra.mxu0 %v9500
        %9641 = vmatprep.subr.bf16.mxu0 %v9504
        %9642 = vmatpush1.bf16.msra.mxu0 %v9503
        %9643 = vmatprep.subr.bf16.mxu0 %v9507
        %9644 = vmatpush1.bf16.msra.mxu0 %v9506
        %9645 = vmatprep.subr.bf16.mxu0 %v9510
        %9646 = vmatpush1.bf16.msra.mxu0 %v9509
        %9647 = vmatprep.subr.bf16.mxu0 %v9513
        %9648 = vmatpush1.bf16.msra.mxu0 %v9512
        %9649 = vmatprep.subr.bf16.mxu0 %v9516
        %9650 = vmatpush1.bf16.msra.mxu0 %v9515
        %9651 = vmatprep.subr.bf16.mxu0 %v9519
        %9652 = vmatpush1.bf16.msra.mxu0 %v9518
        %9653 = vmatprep.subr.bf16.mxu0 %v9522
        %9654 = vmatpush1.bf16.msra.mxu0 %v9521
        %9655 = vmatprep.subr.bf16.mxu0 %v9525
        %9656 = vmatpush1.bf16.msra.mxu0 %v9524
        %9657 = vmatprep.subr.bf16.mxu0 %v9528
        %9658 = vmatpush1.bf16.msra.mxu0 %v9527
        %9659 = vmatprep.subr.bf16.mxu0 %v9531
        %9660 = vmatpush1.bf16.msra.mxu0 %v9530
        %9661 = vmatprep.mubr.bf16.mxu0 %v8384
        %9662 = vmatmul.mubr.bf16.gmra.mrb[0].mxu0 %v8383
        %v9663 = vpop.f32.mrb[0].mxu0
        %v9664 = vadd.f32 %v9129, %v9663
        %v9665 = vpop.f32.mrb[0].mxu0
        %v9666 = vadd.f32 %v9131, %v9665
        %v9667 = vpop.f32.mrb[0].mxu0
        %v9668 = vadd.f32 %v9133, %v9667
        %v9669 = vpop.f32.mrb[0].mxu0
        %v9670 = vadd.f32 %v9135, %v9669
        %9671 = vmatprep.mubr.bf16.mxu0 %v8387
        %9672 = vmatmul.mubr.bf16.gmra.mrb[0].mxu0 %v8386
        %v9673 = vpop.f32.mrb[0].mxu0
        %v9674 = vadd.f32 %v9139, %v9673
        %v9675 = vpop.f32.mrb[0].mxu0
        %v9676 = vadd.f32 %v9141, %v9675
        %v9677 = vpop.f32.mrb[0].mxu0
        %v9678 = vadd.f32 %v9143, %v9677
        %v9679 = vpop.f32.mrb[0].mxu0
        %v9680 = vadd.f32 %v9145, %v9679
        %9681 = vdwg.mxu0
        %9682 = vmatprep.subr.bf16.mxu0 %v9534
        %9683 = vmatpush1.bf16.msra.mxu0 %v9533
        %9684 = vmatprep.subr.bf16.mxu0 %v9537
        %9685 = vmatpush1.bf16.msra.mxu0 %v9536
        %9686 = vmatprep.subr.bf16.mxu0 %v9540
        %9687 = vmatpush1.bf16.msra.mxu0 %v9539
        %9688 = vmatprep.subr.bf16.mxu0 %v9543
        %9689 = vmatpush1.bf16.msra.mxu0 %v9542
        %9690 = vmatprep.subr.bf16.mxu0 %v9546
        %9691 = vmatpush1.bf16.msra.mxu0 %v9545
        %9692 = vmatprep.subr.bf16.mxu0 %v9549
        %9693 = vmatpush1.bf16.msra.mxu0 %v9548
        %9694 = vmatprep.subr.bf16.mxu0 %v9552
        %9695 = vmatpush1.bf16.msra.mxu0 %v9551
        %9696 = vmatprep.subr.bf16.mxu0 %v9555
        %9697 = vmatpush1.bf16.msra.mxu0 %v9554
        %9698 = vmatprep.subr.bf16.mxu0 0
        %9699 = vmatpush1.bf16.msra.mxu0 0
        %9700 = vmatprep.subr.bf16.mxu0 0
        %9701 = vmatpush1.bf16.msra.mxu0 0
        %9702 = vmatprep.subr.bf16.mxu0 0
        %9703 = vmatpush1.bf16.msra.mxu0 0
        %9704 = vmatprep.subr.bf16.mxu0 0
        %9705 = vmatpush1.bf16.msra.mxu0 0
        %9706 = vmatprep.subr.bf16.mxu0 0
        %9707 = vmatpush1.bf16.msra.mxu0 0
        %9708 = vmatprep.subr.bf16.mxu0 0
        %9709 = vmatpush1.bf16.msra.mxu0 0
        %9710 = vmatprep.subr.bf16.mxu0 0
        %9711 = vmatpush1.bf16.msra.mxu0 0
        %9712 = vmatprep.subr.bf16.mxu0 0
        %9713 = vmatpush1.bf16.msra.mxu0 0
        %9714 = vmatprep.mubr.bf16.mxu0 0
        %9715 = vmatmul.mubr.bf16.gmra.mrb[0].mxu0 %v8385
        %v9716 = vpop.f32.mrb[0].mxu0
        %v9717 = vadd.f32 %v9664, %v9716
        %v9718 = vpop.f32.mrb[0].mxu0
        %v9719 = vadd.f32 %v9666, %v9718
        %v9720 = vpop.f32.mrb[0].mxu0
        %v9721 = vadd.f32 %v9668, %v9720
        %v9722 = vpop.f32.mrb[0].mxu0
        %v9723 = vadd.f32 %v9670, %v9722
        %9724 = vmatprep.mubr.bf16.mxu0 0
        %9725 = vmatmul.mubr.bf16.gmra.mrb[0].mxu0 %v8388
        %v9726 = vpop.f32.mrb[0].mxu0
        %v9727 = vadd.f32 %v9674, %v9726
        %v9728 = vpop.f32.mrb[0].mxu0
        %v9729 = vadd.f32 %v9676, %v9728
        %v9730 = vpop.f32.mrb[0].mxu0
        %v9731 = vadd.f32 %v9678, %v9730
        %v9732 = vpop.f32.mrb[0].mxu0
        %v9733 = vadd.f32 %v9680, %v9732
        %9734 = vdwg.mxu0
        %9735 = vmatprep.subr.bf16.mxu0 0
        %9736 = vmatpush1.bf16.msra.mxu0 %v9487
        %9737 = vmatprep.subr.bf16.mxu0 0
        %9738 = vmatpush1.bf16.msra.mxu0 %v9490
        %9739 = vmatprep.subr.bf16.mxu0 0
        %9740 = vmatpush1.bf16.msra.mxu0 %v9493
        %9741 = vmatprep.subr.bf16.mxu0 0
        %9742 = vmatpush1.bf16.msra.mxu0 %v9496
        %9743 = vmatprep.subr.bf16.mxu0 0
        %9744 = vmatpush1.bf16.msra.mxu0 %v9499
        %9745 = vmatprep.subr.bf16.mxu0 0
        %9746 = vmatpush1.bf16.msra.mxu0 %v9502
        %9747 = vmatprep.subr.bf16.mxu0 0
        %9748 = vmatpush1.bf16.msra.mxu0 %v9505
        %9749 = vmatprep.subr.bf16.mxu0 0
        %9750 = vmatpush1.bf16.msra.mxu0 %v9508
        %9751 = vmatprep.subr.bf16.mxu0 0
        %9752 = vmatpush1.bf16.msra.mxu0 %v9511
        %9753 = vmatprep.subr.bf16.mxu0 0
        %9754 = vmatpush1.bf16.msra.mxu0 %v9514
        %9755 = vmatprep.subr.bf16.mxu0 0
        %9756 = vmatpush1.bf16.msra.mxu0 %v9517
        %9757 = vmatprep.subr.bf16.mxu0 0
        %9758 = vmatpush1.bf16.msra.mxu0 %v9520
        %9759 = vmatprep.subr.bf16.mxu0 0
        %9760 = vmatpush1.bf16.msra.mxu0 %v9523
        %9761 = vmatprep.subr.bf16.mxu0 0
        %9762 = vmatpush1.bf16.msra.mxu0 %v9526
        %9763 = vmatprep.subr.bf16.mxu0 0
        %9764 = vmatpush1.bf16.msra.mxu0 %v9529
        %9765 = vmatprep.subr.bf16.mxu0 0
        %9766 = vmatpush1.bf16.msra.mxu0 %v9532
        %9767 = vmatprep.mubr.bf16.mxu0 %v8384
        %9768 = vmatmul.mubr.bf16.gmra.mrb[0].mxu0 %v8383
        %v9769 = vpop.f32.mrb[0].mxu0
        %v9770 = vadd.f32 %v9231, %v9769
        %v9771 = vpop.f32.mrb[0].mxu0
        %v9772 = vpop.f32.mrb[0].mxu0
        %v9773 = vadd.f32 %v9234, %v9772
        %v9774 = vpop.f32.mrb[0].mxu0
        %9775 = vmatprep.mubr.bf16.mxu0 %v8387
        %9776 = vmatmul.mubr.bf16.gmra.mrb[0].mxu0 %v8386
        %v9777 = vpop.f32.mrb[0].mxu0
        %v9778 = vadd.f32 %v9239, %v9777
        %v9779 = vpop.f32.mrb[0].mxu0
        %v9780 = vpop.f32.mrb[0].mxu0
        %v9781 = vadd.f32 %v9242, %v9780
        %v9782 = vpop.f32.mrb[0].mxu0
        %9783 = vdwg.mxu0
        %9784 = vmatprep.subr.bf16.mxu0 0
        %9785 = vmatpush1.bf16.msra.mxu0 %v9535
        %9786 = vmatprep.subr.bf16.mxu0 0
        %9787 = vmatpush1.bf16.msra.mxu0 %v9538
        %9788 = vmatprep.subr.bf16.mxu0 0
        %9789 = vmatpush1.bf16.msra.mxu0 %v9541
        %9790 = vmatprep.subr.bf16.mxu0 0
        %9791 = vmatpush1.bf16.msra.mxu0 %v9544
        %9792 = vmatprep.subr.bf16.mxu0 0
        %9793 = vmatpush1.bf16.msra.mxu0 %v9547
        %9794 = vmatprep.subr.bf16.mxu0 0
        %9795 = vmatpush1.bf16.msra.mxu0 %v9550
        %9796 = vmatprep.subr.bf16.mxu0 0
        %9797 = vmatpush1.bf16.msra.mxu0 %v9553
        %9798 = vmatprep.subr.bf16.mxu0 0
        %9799 = vmatpush1.bf16.msra.mxu0 %v9556
        %9800 = vmatprep.subr.bf16.mxu0 0
        %9801 = vmatpush1.bf16.msra.mxu0 0
        %9802 = vmatprep.subr.bf16.mxu0 0
        %9803 = vmatpush1.bf16.msra.mxu0 0
        %9804 = vmatprep.subr.bf16.mxu0 0
        %9805 = vmatpush1.bf16.msra.mxu0 0
        %9806 = vmatprep.subr.bf16.mxu0 0
        %9807 = vmatpush1.bf16.msra.mxu0 0
        %9808 = vmatprep.subr.bf16.mxu0 0
        %9809 = vmatpush1.bf16.msra.mxu0 0
        %9810 = vmatprep.subr.bf16.mxu0 0
        %9811 = vmatpush1.bf16.msra.mxu0 0
        %9812 = vmatprep.subr.bf16.mxu0 0
        %9813 = vmatpush1.bf16.msra.mxu0 0
        %9814 = vmatprep.subr.bf16.mxu0 0
        %9815 = vmatpush1.bf16.msra.mxu0 0
        %9816 = vmatprep.mubr.bf16.mxu0 0
        %9817 = vmatmul.mubr.bf16.gmra.mrb[0].mxu0 %v8385
        %v9818 = vpop.f32.mrb[0].mxu0
        %v9819 = vadd.f32 %v9770, %v9818
        %v9820 = vpop.f32.mrb[0].mxu0
        %v9821 = vpop.f32.mrb[0].mxu0
        %v9822 = vadd.f32 %v9773, %v9821
        %v9823 = vpop.f32.mrb[0].mxu0
        %9824 = vmatprep.mubr.bf16.mxu0 0
        %9825 = vmatmul.mubr.bf16.gmra.mrb[0].mxu0 %v8388
        %v9826 = vpop.f32.mrb[0].mxu0
        %v9827 = vadd.f32 %v9778, %v9826
        %v9828 = vpop.f32.mrb[0].mxu0
        %v9829 = vpop.f32.mrb[0].mxu0
        %v9830 = vadd.f32 %v9781, %v9829
        %v9831 = vpop.f32.mrb[0].mxu0
        %9832 = vdwg.mxu0
        %s9833 = scalar_lea.vmem %s4, 1152
        %v9834 = vld [vmem:[%s9833] sm:$0xff]
        %v9835 = vld [vmem:[%s9833 + $0x8] sm:$0xf]
        %v9836 = vld [vmem:[%s9833 + $0xc] sm:$0xff]
        %v9837 = vld [vmem:[%s9833 + $0x14] sm:$0xf]
        %v9838 = vld [vmem:[%s9833 + $0x18] sm:$0xff]
        %v9839 = vld [vmem:[%s9833 + $0x20] sm:$0xf]
        %v9840 = vld [vmem:[%s9833 + $0x24] sm:$0xff]
        %v9841 = vld [vmem:[%s9833 + $0x2c] sm:$0xf]
        %v9842 = vld [vmem:[%s9833 + $0x30] sm:$0xff]
        %v9843 = vld [vmem:[%s9833 + $0x38] sm:$0xf]
        %v9844 = vld [vmem:[%s9833 + $0x3c] sm:$0xff]
        %v9845 = vld [vmem:[%s9833 + $0x44] sm:$0xf]
        %v9846 = vld [vmem:[%s9833 + $0x48] sm:$0xff]
        %v9847 = vld [vmem:[%s9833 + $0x50] sm:$0xf]
        %v9848 = vld [vmem:[%s9833 + $0x54] sm:$0xff]
        %v9849 = vld [vmem:[%s9833 + $0x5c] sm:$0xf]
        %v9850 = vld [vmem:[%s9833 + $0x60] sm:$0xff]
        %v9851 = vld [vmem:[%s9833 + $0x68] sm:$0xf]
        %v9852 = vld [vmem:[%s9833 + $0x6c] sm:$0xff]
        %v9853 = vld [vmem:[%s9833 + $0x74] sm:$0xf]
        %v9854 = vld [vmem:[%s9833 + $0x78] sm:$0xff]
        %v9855 = vld [vmem:[%s9833 + $0x80] sm:$0xf]
        %v9856 = vld [vmem:[%s9833 + $0x84] sm:$0xff]
        %v9857 = vld [vmem:[%s9833 + $0x8c] sm:$0xf]
        %v9858 = vld [vmem:[%s9833 + $0x90] sm:$0xff]
        %v9859 = vld [vmem:[%s9833 + $0x98] sm:$0xf]
        %v9860 = vld [vmem:[%s9833 + $0x9c] sm:$0xff]
        %v9861 = vld [vmem:[%s9833 + $0xa4] sm:$0xf]
        %v9862 = vld [vmem:[%s9833 + $0xa8] sm:$0xff]
        %v9863 = vld [vmem:[%s9833 + $0xb0] sm:$0xf]
        %v9864 = vld [vmem:[%s9833 + $0xb4] sm:$0xff]
        %v9865 = vld [vmem:[%s9833 + $0xbc] sm:$0xf]
        %v9866 = vld [vmem:[%s9833 + $0xc0] sm:$0xff]
        %v9867 = vld [vmem:[%s9833 + $0xc8] sm:$0xf]
        %v9868 = vld [vmem:[%s9833 + $0xcc] sm:$0xff]
        %v9869 = vld [vmem:[%s9833 + $0xd4] sm:$0xf]
        %v9870 = vld [vmem:[%s9833 + $0xd8] sm:$0xff]
        %v9871 = vld [vmem:[%s9833 + $0xe0] sm:$0xf]
        %v9872 = vld [vmem:[%s9833 + $0xe4] sm:$0xff]
        %v9873 = vld [vmem:[%s9833 + $0xec] sm:$0xf]
        %v9874 = vld [vmem:[%s9833 + $0xf0] sm:$0xff]
        %v9875 = vld [vmem:[%s9833 + $0xf8] sm:$0xf]
        %v9876 = vld [vmem:[%s9833 + $0xfc] sm:$0xff]
        %v9877 = vld [vmem:[%s9833 + $0x104] sm:$0xf]
        %v9878 = vld [vmem:[%s9833 + $0x108] sm:$0xff]
        %v9879 = vld [vmem:[%s9833 + $0x110] sm:$0xf]
        %v9880 = vld [vmem:[%s9833 + $0x114] sm:$0xff]
        %v9881 = vld [vmem:[%s9833 + $0x11c] sm:$0xf]
        %v9882 = vld [vmem:[%s9833 + $0x120] sm:$0xff]
        %v9883 = vld [vmem:[%s9833 + $0x128] sm:$0xf]
        %v9884 = vld [vmem:[%s9833 + $0x12c] sm:$0xff]
        %v9885 = vld [vmem:[%s9833 + $0x134] sm:$0xf]
        %v9886 = vld [vmem:[%s9833 + $0x138] sm:$0xff]
        %v9887 = vld [vmem:[%s9833 + $0x140] sm:$0xf]
        %v9888 = vld [vmem:[%s9833 + $0x144] sm:$0xff]
        %v9889 = vld [vmem:[%s9833 + $0x14c] sm:$0xf]
        %v9890 = vld [vmem:[%s9833 + $0x150] sm:$0xff]
        %v9891 = vld [vmem:[%s9833 + $0x158] sm:$0xf]
        %v9892 = vld [vmem:[%s9833 + $0x15c] sm:$0xff]
        %v9893 = vld [vmem:[%s9833 + $0x164] sm:$0xf]
        %v9894 = vld [vmem:[%s9833 + $0x168] sm:$0xff]
        %v9895 = vld [vmem:[%s9833 + $0x170] sm:$0xf]
        %v9896 = vld [vmem:[%s9833 + $0x174] sm:$0xff]
        %v9897 = vld [vmem:[%s9833 + $0x17c] sm:$0xf]
        %v9898 = vld [vmem:[%s9833 + $0x180] sm:$0xff]
        %v9899 = vld [vmem:[%s9833 + $0x188] sm:$0xf]
        %v9900 = vld [vmem:[%s9833 + $0x18c] sm:$0xff]
        %v9901 = vld [vmem:[%s9833 + $0x194] sm:$0xf]
        %v9902 = vld [vmem:[%s9833 + $0x198] sm:$0xff]
        %v9903 = vld [vmem:[%s9833 + $0x1a0] sm:$0xf]
        %v9904 = vld [vmem:[%s9833 + $0x1a4] sm:$0xff]
        %v9905 = vld [vmem:[%s9833 + $0x1ac] sm:$0xf]
        %v9906 = vld [vmem:[%s9833 + $0x1b0] sm:$0xff]
        %v9907 = vld [vmem:[%s9833 + $0x1b8] sm:$0xf]
        %v9908 = vld [vmem:[%s9833 + $0x1bc] sm:$0xff]
        %v9909 = vld [vmem:[%s9833 + $0x1c4] sm:$0xf]
        %v9910 = vld [vmem:[%s9833 + $0x1c8] sm:$0xff]
        %v9911 = vld [vmem:[%s9833 + $0x1d0] sm:$0xf]
        %v9912 = vld [vmem:[%s9833 + $0x1d4] sm:$0xff]
        %v9913 = vld [vmem:[%s9833 + $0x1dc] sm:$0xf]
        %v9914 = vld [vmem:[%s9833 + $0x1e0] sm:$0xff]
        %v9915 = vld [vmem:[%s9833 + $0x1e8] sm:$0xf]
        %v9916 = vld [vmem:[%s9833 + $0x1ec] sm:$0xff]
        %v9917 = vld [vmem:[%s9833 + $0x1f4] sm:$0xf]
        %v9918 = vld [vmem:[%s9833 + $0x1f8] sm:$0xff]
        %v9919 = vld [vmem:[%s9833 + $0x200] sm:$0xf]
        %v9920 = vld [vmem:[%s9833 + $0x204] sm:$0xff]
        %v9921 = vld [vmem:[%s9833 + $0x20c] sm:$0xf]
        %v9922 = vld [vmem:[%s9833 + $0x210] sm:$0xff]
        %v9923 = vld [vmem:[%s9833 + $0x218] sm:$0xf]
        %v9924 = vld [vmem:[%s9833 + $0x21c] sm:$0xff]
        %v9925 = vld [vmem:[%s9833 + $0x224] sm:$0xf]
        %v9926 = vld [vmem:[%s9833 + $0x228] sm:$0xff]
        %v9927 = vld [vmem:[%s9833 + $0x230] sm:$0xf]
        %v9928 = vld [vmem:[%s9833 + $0x234] sm:$0xff]
        %v9929 = vld [vmem:[%s9833 + $0x23c] sm:$0xf]
        %v9931 = vshrl.u32 %v8383, 16
        %v9933 = vshll.u32 %v8383, 16
        %v9935 = vrot.slane %v9933, 1
        %v9936 = vor.u32 %v9931, %v9935
        %v9938 = vshll.u32 %v8386, 16
        %v9940 = vrot.slane %v9938, 1
        %v9941 = vsel %vm1396, %v9936, %v9940
        %v9943 = vshrl.u32 %v8384, 16
        %v9945 = vshll.u32 %v8384, 16
        %v9947 = vrot.slane %v9945, 1
        %v9948 = vor.u32 %v9943, %v9947
        %v9950 = vshll.u32 %v8387, 16
        %v9952 = vrot.slane %v9950, 1
        %v9953 = vsel %vm1396, %v9948, %v9952
        %v9955 = vshrl.u32 %v8385, 16
        %v9957 = vshll.u32 %v8385, 16
        %v9959 = vrot.slane %v9957, 1
        %v9960 = vor.u32 %v9955, %v9959
        %v9962 = vshll.u32 %v8388, 16
        %v9964 = vrot.slane %v9962, 1
        %v9965 = vsel %vm1396, %v9960, %v9964
        %v9966 = vshrl.u32 %v8386, 16
        %v9968 = vor.u32 %v9966, %v9940
        %v9969 = vsel %vm1396, %v9968, %v8596
        %v9970 = vshrl.u32 %v8387, 16
        %v9972 = vor.u32 %v9970, %v9952
        %v9973 = vsel %vm1396, %v9972, %v8608
        %v9974 = vshrl.u32 %v8388, 16
        %v9976 = vor.u32 %v9974, %v9964
        %v9977 = vsel %vm1396, %v9976, %v8620
        %v10080 = vunpack.c.l.b16 %v9834
        %v10081 = vunpack.c.h.b16 %v9834
        %v10082 = vunpack.c.l.b16 %v9835
        %v10083 = vunpack.c.l.b16 %v9836
        %v10084 = vunpack.c.h.b16 %v9836
        %v10085 = vunpack.c.l.b16 %v9837
        %v10086 = vunpack.c.l.b16 %v9838
        %v10087 = vunpack.c.h.b16 %v9838
        %v10088 = vunpack.c.l.b16 %v9839
        %v10089 = vunpack.c.l.b16 %v9840
        %v10090 = vunpack.c.h.b16 %v9840
        %v10091 = vunpack.c.l.b16 %v9841
        %v10092 = vunpack.c.l.b16 %v9842
        %v10093 = vunpack.c.h.b16 %v9842
        %v10094 = vunpack.c.l.b16 %v9843
        %v10095 = vunpack.c.l.b16 %v9844
        %v10096 = vunpack.c.h.b16 %v9844
        %v10097 = vunpack.c.l.b16 %v9845
        %v10098 = vunpack.c.l.b16 %v9846
        %v10099 = vunpack.c.h.b16 %v9846
        %v10100 = vunpack.c.l.b16 %v9847
        %v10101 = vunpack.c.l.b16 %v9848
        %v10102 = vunpack.c.h.b16 %v9848
        %v10103 = vunpack.c.l.b16 %v9849
        %v10104 = vunpack.c.l.b16 %v9850
        %v10105 = vunpack.c.h.b16 %v9850
        %v10106 = vunpack.c.l.b16 %v9851
        %v10107 = vunpack.c.l.b16 %v9852
        %v10108 = vunpack.c.h.b16 %v9852
        %v10109 = vunpack.c.l.b16 %v9853
        %v10110 = vunpack.c.l.b16 %v9854
        %v10111 = vunpack.c.h.b16 %v9854
        %v10112 = vunpack.c.l.b16 %v9855
        %v10113 = vunpack.c.l.b16 %v9856
        %v10114 = vunpack.c.h.b16 %v9856
        %v10115 = vunpack.c.l.b16 %v9857
        %v10116 = vunpack.c.l.b16 %v9858
        %v10117 = vunpack.c.h.b16 %v9858
        %v10118 = vunpack.c.l.b16 %v9859
        %v10119 = vunpack.c.l.b16 %v9860
        %v10120 = vunpack.c.h.b16 %v9860
        %v10121 = vunpack.c.l.b16 %v9861
        %v10122 = vunpack.c.l.b16 %v9862
        %v10123 = vunpack.c.h.b16 %v9862
        %v10124 = vunpack.c.l.b16 %v9863
        %v10125 = vunpack.c.l.b16 %v9864
        %v10126 = vunpack.c.h.b16 %v9864
        %v10127 = vunpack.c.l.b16 %v9865
        %v10128 = vunpack.c.l.b16 %v9866
        %v10129 = vunpack.c.h.b16 %v9866
        %v10130 = vunpack.c.l.b16 %v9867
        %v10131 = vunpack.c.l.b16 %v9868
        %v10132 = vunpack.c.h.b16 %v9868
        %v10133 = vunpack.c.l.b16 %v9869
        %v10134 = vunpack.c.l.b16 %v9870
        %v10135 = vunpack.c.h.b16 %v9870
        %v10136 = vunpack.c.l.b16 %v9871
        %v10137 = vunpack.c.l.b16 %v9872
        %v10138 = vunpack.c.h.b16 %v9872
        %v10139 = vunpack.c.l.b16 %v9873
        %v10140 = vunpack.c.l.b16 %v9874
        %v10141 = vunpack.c.h.b16 %v9874
        %v10142 = vunpack.c.l.b16 %v9875
        %v10143 = vunpack.c.l.b16 %v9876
        %v10144 = vunpack.c.h.b16 %v9876
        %v10145 = vunpack.c.l.b16 %v9877
        %v10146 = vunpack.c.l.b16 %v9878
        %v10147 = vunpack.c.h.b16 %v9878
        %v10148 = vunpack.c.l.b16 %v9879
        %v10149 = vunpack.c.l.b16 %v9880
        %v10150 = vunpack.c.h.b16 %v9880
        %v10151 = vunpack.c.l.b16 %v9881
        %v10152 = vunpack.c.l.b16 %v9882
        %v10153 = vunpack.c.h.b16 %v9882
        %v10154 = vunpack.c.l.b16 %v9883
        %v10155 = vunpack.c.l.b16 %v9884
        %v10156 = vunpack.c.h.b16 %v9884
        %v10157 = vunpack.c.l.b16 %v9885
        %v10158 = vunpack.c.l.b16 %v9886
        %v10159 = vunpack.c.h.b16 %v9886
        %v10160 = vunpack.c.l.b16 %v9887
        %v10161 = vunpack.c.l.b16 %v9888
        %v10162 = vunpack.c.h.b16 %v9888
        %v10163 = vunpack.c.l.b16 %v9889
        %v10164 = vunpack.c.l.b16 %v9890
        %v10165 = vunpack.c.h.b16 %v9890
        %v10166 = vunpack.c.l.b16 %v9891
        %v10167 = vunpack.c.l.b16 %v9892
        %v10168 = vunpack.c.h.b16 %v9892
        %v10169 = vunpack.c.l.b16 %v9893
        %v10170 = vunpack.c.l.b16 %v9894
        %v10171 = vunpack.c.h.b16 %v9894
        %v10172 = vunpack.c.l.b16 %v9895
        %v10173 = vunpack.c.l.b16 %v9896
        %v10174 = vunpack.c.h.b16 %v9896
        %v10175 = vunpack.c.l.b16 %v9897
        %v10176 = vunpack.c.l.b16 %v9898
        %v10177 = vunpack.c.h.b16 %v9898
        %v10178 = vunpack.c.l.b16 %v9899
        %v10179 = vunpack.c.l.b16 %v9900
        %v10180 = vunpack.c.h.b16 %v9900
        %v10181 = vunpack.c.l.b16 %v9901
        %v10182 = vunpack.c.l.b16 %v9902
        %v10183 = vunpack.c.h.b16 %v9902
        %v10184 = vunpack.c.l.b16 %v9903
        %v10185 = vunpack.c.l.b16 %v9904
        %v10186 = vunpack.c.h.b16 %v9904
        %v10187 = vunpack.c.l.b16 %v9905
        %v10188 = vunpack.c.l.b16 %v9906
        %v10189 = vunpack.c.h.b16 %v9906
        %v10190 = vunpack.c.l.b16 %v9907
        %v10191 = vunpack.c.l.b16 %v9908
        %v10192 = vunpack.c.h.b16 %v9908
        %v10193 = vunpack.c.l.b16 %v9909
        %v10194 = vunpack.c.l.b16 %v9910
        %v10195 = vunpack.c.h.b16 %v9910
        %v10196 = vunpack.c.l.b16 %v9911
        %v10197 = vunpack.c.l.b16 %v9912
        %v10198 = vunpack.c.h.b16 %v9912
        %v10199 = vunpack.c.l.b16 %v9913
        %v10200 = vunpack.c.l.b16 %v9914
        %v10201 = vunpack.c.h.b16 %v9914
        %v10202 = vunpack.c.l.b16 %v9915
        %v10203 = vunpack.c.l.b16 %v9916
        %v10204 = vunpack.c.h.b16 %v9916
        %v10205 = vunpack.c.l.b16 %v9917
        %v10206 = vunpack.c.l.b16 %v9918
        %v10207 = vunpack.c.h.b16 %v9918
        %v10208 = vunpack.c.l.b16 %v9919
        %v10209 = vunpack.c.l.b16 %v9920
        %v10210 = vunpack.c.h.b16 %v9920
        %v10211 = vunpack.c.l.b16 %v9921
        %v10212 = vunpack.c.l.b16 %v9922
        %v10213 = vunpack.c.h.b16 %v9922
        %v10214 = vunpack.c.l.b16 %v9923
        %v10215 = vunpack.c.l.b16 %v9924
        %v10216 = vunpack.c.h.b16 %v9924
        %v10217 = vunpack.c.l.b16 %v9925
        %v10218 = vunpack.c.l.b16 %v9926
        %v10219 = vunpack.c.h.b16 %v9926
        %v10220 = vunpack.c.l.b16 %v9927
        %v10221 = vunpack.c.l.b16 %v9928
        %v10222 = vunpack.c.h.b16 %v9928
        %v10223 = vunpack.c.l.b16 %v9929
        %v10224 = vpack.c.b16 %v10083, %v10080
        %v10225 = vpack.c.b16 %v10084, %v10081
        %v10226 = vpack.c.b16 %v10085, %v10082
        %v10227 = vpack.c.b16 %v10089, %v10086
        %v10228 = vpack.c.b16 %v10090, %v10087
        %v10229 = vpack.c.b16 %v10091, %v10088
        %v10230 = vpack.c.b16 %v10095, %v10092
        %v10231 = vpack.c.b16 %v10096, %v10093
        %v10232 = vpack.c.b16 %v10097, %v10094
        %v10233 = vpack.c.b16 %v10101, %v10098
        %v10234 = vpack.c.b16 %v10102, %v10099
        %v10235 = vpack.c.b16 %v10103, %v10100
        %v10236 = vpack.c.b16 %v10107, %v10104
        %v10237 = vpack.c.b16 %v10108, %v10105
        %v10238 = vpack.c.b16 %v10109, %v10106
        %v10239 = vpack.c.b16 %v10113, %v10110
        %v10240 = vpack.c.b16 %v10114, %v10111
        %v10241 = vpack.c.b16 %v10115, %v10112
        %v10242 = vpack.c.b16 %v10119, %v10116
        %v10243 = vpack.c.b16 %v10120, %v10117
        %v10244 = vpack.c.b16 %v10121, %v10118
        %v10245 = vpack.c.b16 %v10125, %v10122
        %v10246 = vpack.c.b16 %v10126, %v10123
        %v10247 = vpack.c.b16 %v10127, %v10124
        %v10248 = vpack.c.b16 %v10131, %v10128
        %v10249 = vpack.c.b16 %v10132, %v10129
        %v10250 = vpack.c.b16 %v10133, %v10130
        %v10251 = vpack.c.b16 %v10137, %v10134
        %v10252 = vpack.c.b16 %v10138, %v10135
        %v10253 = vpack.c.b16 %v10139, %v10136
        %v10254 = vpack.c.b16 %v10143, %v10140
        %v10255 = vpack.c.b16 %v10144, %v10141
        %v10256 = vpack.c.b16 %v10145, %v10142
        %v10257 = vpack.c.b16 %v10149, %v10146
        %v10258 = vpack.c.b16 %v10150, %v10147
        %v10259 = vpack.c.b16 %v10151, %v10148
        %v10260 = vpack.c.b16 %v10155, %v10152
        %v10261 = vpack.c.b16 %v10156, %v10153
        %v10262 = vpack.c.b16 %v10157, %v10154
        %v10263 = vpack.c.b16 %v10161, %v10158
        %v10264 = vpack.c.b16 %v10162, %v10159
        %v10265 = vpack.c.b16 %v10163, %v10160
        %v10266 = vpack.c.b16 %v10167, %v10164
        %v10267 = vpack.c.b16 %v10168, %v10165
        %v10268 = vpack.c.b16 %v10169, %v10166
        %v10269 = vpack.c.b16 %v10173, %v10170
        %v10270 = vpack.c.b16 %v10174, %v10171
        %v10271 = vpack.c.b16 %v10175, %v10172
        %v10272 = vpack.c.b16 %v10179, %v10176
        %v10273 = vpack.c.b16 %v10180, %v10177
        %v10274 = vpack.c.b16 %v10181, %v10178
        %v10275 = vpack.c.b16 %v10185, %v10182
        %v10276 = vpack.c.b16 %v10186, %v10183
        %v10277 = vpack.c.b16 %v10187, %v10184
        %v10278 = vpack.c.b16 %v10191, %v10188
        %v10279 = vpack.c.b16 %v10192, %v10189
        %v10280 = vpack.c.b16 %v10193, %v10190
        %v10281 = vpack.c.b16 %v10197, %v10194
        %v10282 = vpack.c.b16 %v10198, %v10195
        %v10283 = vpack.c.b16 %v10199, %v10196
        %v10284 = vpack.c.b16 %v10203, %v10200
        %v10285 = vpack.c.b16 %v10204, %v10201
        %v10286 = vpack.c.b16 %v10205, %v10202
        %v10287 = vpack.c.b16 %v10209, %v10206
        %v10288 = vpack.c.b16 %v10210, %v10207
        %v10289 = vpack.c.b16 %v10211, %v10208
        %v10290 = vpack.c.b16 %v10215, %v10212
        %v10291 = vpack.c.b16 %v10216, %v10213
        %v10292 = vpack.c.b16 %v10217, %v10214
        %v10293 = vpack.c.b16 %v10221, %v10218
        %v10294 = vpack.c.b16 %v10222, %v10219
        %v10295 = vpack.c.b16 %v10223, %v10220
        %10368 = vmatprep.subr.bf16.mxu0 %v10225
        %10369 = vmatpush1.bf16.msra.mxu0 %v10224
        %10370 = vmatprep.subr.bf16.mxu0 %v10228
        %10371 = vmatpush1.bf16.msra.mxu0 %v10227
        %10372 = vmatprep.subr.bf16.mxu0 %v10231
        %10373 = vmatpush1.bf16.msra.mxu0 %v10230
        %10374 = vmatprep.subr.bf16.mxu0 %v10234
        %10375 = vmatpush1.bf16.msra.mxu0 %v10233
        %10376 = vmatprep.subr.bf16.mxu0 %v10237
        %10377 = vmatpush1.bf16.msra.mxu0 %v10236
        %10378 = vmatprep.subr.bf16.mxu0 %v10240
        %10379 = vmatpush1.bf16.msra.mxu0 %v10239
        %10380 = vmatprep.subr.bf16.mxu0 %v10243
        %10381 = vmatpush1.bf16.msra.mxu0 %v10242
        %10382 = vmatprep.subr.bf16.mxu0 %v10246
        %10383 = vmatpush1.bf16.msra.mxu0 %v10245
        %10384 = vmatprep.subr.bf16.mxu0 %v10249
        %10385 = vmatpush1.bf16.msra.mxu0 %v10248
        %10386 = vmatprep.subr.bf16.mxu0 %v10252
        %10387 = vmatpush1.bf16.msra.mxu0 %v10251
        %10388 = vmatprep.subr.bf16.mxu0 %v10255
        %10389 = vmatpush1.bf16.msra.mxu0 %v10254
        %10390 = vmatprep.subr.bf16.mxu0 %v10258
        %10391 = vmatpush1.bf16.msra.mxu0 %v10257
        %10392 = vmatprep.subr.bf16.mxu0 %v10261
        %10393 = vmatpush1.bf16.msra.mxu0 %v10260
        %10394 = vmatprep.subr.bf16.mxu0 %v10264
        %10395 = vmatpush1.bf16.msra.mxu0 %v10263
        %10396 = vmatprep.subr.bf16.mxu0 %v10267
        %10397 = vmatpush1.bf16.msra.mxu0 %v10266
        %10398 = vmatprep.subr.bf16.mxu0 %v10270
        %10399 = vmatpush1.bf16.msra.mxu0 %v10269
        %10400 = vmatprep.mubr.bf16.mxu0 %v9953
        %10401 = vmatmul.mubr.bf16.gmra.mrb[0].mxu0 %v9941
        %v10402 = vpop.f32.mrb[0].mxu0
        %v10403 = vadd.f32 0.0, %v10402
        %v10404 = vpop.f32.mrb[0].mxu0
        %v10405 = vadd.f32 0.0, %v10404
        %v10406 = vpop.f32.mrb[0].mxu0
        %v10407 = vadd.f32 0.0, %v10406
        %v10408 = vpop.f32.mrb[0].mxu0
        %v10409 = vadd.f32 0.0, %v10408
        %10410 = vmatprep.mubr.bf16.mxu0 %v9973
        %10411 = vmatmul.mubr.bf16.gmra.mrb[0].mxu0 %v9969
        %v10412 = vpop.f32.mrb[0].mxu0
        %v10413 = vadd.f32 0.0, %v10412
        %v10414 = vpop.f32.mrb[0].mxu0
        %v10415 = vadd.f32 0.0, %v10414
        %v10416 = vpop.f32.mrb[0].mxu0
        %v10417 = vadd.f32 0.0, %v10416
        %v10418 = vpop.f32.mrb[0].mxu0
        %v10419 = vadd.f32 0.0, %v10418
        %10420 = vdwg.mxu0
        %10421 = vmatprep.subr.bf16.mxu0 %v10273
        %10422 = vmatpush1.bf16.msra.mxu0 %v10272
        %10423 = vmatprep.subr.bf16.mxu0 %v10276
        %10424 = vmatpush1.bf16.msra.mxu0 %v10275
        %10425 = vmatprep.subr.bf16.mxu0 %v10279
        %10426 = vmatpush1.bf16.msra.mxu0 %v10278
        %10427 = vmatprep.subr.bf16.mxu0 %v10282
        %10428 = vmatpush1.bf16.msra.mxu0 %v10281
        %10429 = vmatprep.subr.bf16.mxu0 %v10285
        %10430 = vmatpush1.bf16.msra.mxu0 %v10284
        %10431 = vmatprep.subr.bf16.mxu0 %v10288
        %10432 = vmatpush1.bf16.msra.mxu0 %v10287
        %10433 = vmatprep.subr.bf16.mxu0 %v10291
        %10434 = vmatpush1.bf16.msra.mxu0 %v10290
        %10435 = vmatprep.subr.bf16.mxu0 %v10294
        %10436 = vmatpush1.bf16.msra.mxu0 %v10293
        %10437 = vmatprep.subr.bf16.mxu0 0
        %10438 = vmatpush1.bf16.msra.mxu0 0
        %10439 = vmatprep.subr.bf16.mxu0 0
        %10440 = vmatpush1.bf16.msra.mxu0 0
        %10441 = vmatprep.subr.bf16.mxu0 0
        %10442 = vmatpush1.bf16.msra.mxu0 0
        %10443 = vmatprep.subr.bf16.mxu0 0
        %10444 = vmatpush1.bf16.msra.mxu0 0
        %10445 = vmatprep.subr.bf16.mxu0 0
        %10446 = vmatpush1.bf16.msra.mxu0 0
        %10447 = vmatprep.subr.bf16.mxu0 0
        %10448 = vmatpush1.bf16.msra.mxu0 0
        %10449 = vmatprep.subr.bf16.mxu0 0
        %10450 = vmatpush1.bf16.msra.mxu0 0
        %10451 = vmatprep.subr.bf16.mxu0 0
        %10452 = vmatpush1.bf16.msra.mxu0 0
        %10453 = vmatprep.mubr.bf16.mxu0 0
        %10454 = vmatmul.mubr.bf16.gmra.mrb[0].mxu0 %v9965
        %v10455 = vpop.f32.mrb[0].mxu0
        %v10456 = vadd.f32 %v10403, %v10455
        %v10457 = vpop.f32.mrb[0].mxu0
        %v10458 = vadd.f32 %v10405, %v10457
        %v10459 = vpop.f32.mrb[0].mxu0
        %v10460 = vadd.f32 %v10407, %v10459
        %v10461 = vpop.f32.mrb[0].mxu0
        %v10462 = vadd.f32 %v10409, %v10461
        %10463 = vmatprep.mubr.bf16.mxu0 0
        %10464 = vmatmul.mubr.bf16.gmra.mrb[0].mxu0 %v9977
        %v10465 = vpop.f32.mrb[0].mxu0
        %v10466 = vadd.f32 %v10413, %v10465
        %v10467 = vpop.f32.mrb[0].mxu0
        %v10468 = vadd.f32 %v10415, %v10467
        %v10469 = vpop.f32.mrb[0].mxu0
        %v10470 = vadd.f32 %v10417, %v10469
        %v10471 = vpop.f32.mrb[0].mxu0
        %v10472 = vadd.f32 %v10419, %v10471
        %10473 = vdwg.mxu0
        %10474 = vmatprep.subr.bf16.mxu0 0
        %10475 = vmatpush1.bf16.msra.mxu0 %v10226
        %10476 = vmatprep.subr.bf16.mxu0 0
        %10477 = vmatpush1.bf16.msra.mxu0 %v10229
        %10478 = vmatprep.subr.bf16.mxu0 0
        %10479 = vmatpush1.bf16.msra.mxu0 %v10232
        %10480 = vmatprep.subr.bf16.mxu0 0
        %10481 = vmatpush1.bf16.msra.mxu0 %v10235
        %10482 = vmatprep.subr.bf16.mxu0 0
        %10483 = vmatpush1.bf16.msra.mxu0 %v10238
        %10484 = vmatprep.subr.bf16.mxu0 0
        %10485 = vmatpush1.bf16.msra.mxu0 %v10241
        %10486 = vmatprep.subr.bf16.mxu0 0
        %10487 = vmatpush1.bf16.msra.mxu0 %v10244
        %10488 = vmatprep.subr.bf16.mxu0 0
        %10489 = vmatpush1.bf16.msra.mxu0 %v10247
        %10490 = vmatprep.subr.bf16.mxu0 0
        %10491 = vmatpush1.bf16.msra.mxu0 %v10250
        %10492 = vmatprep.subr.bf16.mxu0 0
        %10493 = vmatpush1.bf16.msra.mxu0 %v10253
        %10494 = vmatprep.subr.bf16.mxu0 0
        %10495 = vmatpush1.bf16.msra.mxu0 %v10256
        %10496 = vmatprep.subr.bf16.mxu0 0
        %10497 = vmatpush1.bf16.msra.mxu0 %v10259
        %10498 = vmatprep.subr.bf16.mxu0 0
        %10499 = vmatpush1.bf16.msra.mxu0 %v10262
        %10500 = vmatprep.subr.bf16.mxu0 0
        %10501 = vmatpush1.bf16.msra.mxu0 %v10265
        %10502 = vmatprep.subr.bf16.mxu0 0
        %10503 = vmatpush1.bf16.msra.mxu0 %v10268
        %10504 = vmatprep.subr.bf16.mxu0 0
        %10505 = vmatpush1.bf16.msra.mxu0 %v10271
        %10506 = vmatprep.mubr.bf16.mxu0 %v9953
        %10507 = vmatmul.mubr.bf16.gmra.mrb[0].mxu0 %v9941
        %v10508 = vpop.f32.mrb[0].mxu0
        %v10509 = vadd.f32 0.0, %v10508
        %v10510 = vpop.f32.mrb[0].mxu0
        %v10511 = vpop.f32.mrb[0].mxu0
        %v10512 = vadd.f32 0.0, %v10511
        %v10513 = vpop.f32.mrb[0].mxu0
        %10514 = vmatprep.mubr.bf16.mxu0 %v9973
        %10515 = vmatmul.mubr.bf16.gmra.mrb[0].mxu0 %v9969
        %v10516 = vpop.f32.mrb[0].mxu0
        %v10517 = vadd.f32 0.0, %v10516
        %v10518 = vpop.f32.mrb[0].mxu0
        %v10519 = vpop.f32.mrb[0].mxu0
        %v10520 = vadd.f32 0.0, %v10519
        %v10521 = vpop.f32.mrb[0].mxu0
        %10522 = vdwg.mxu0
        %10523 = vmatprep.subr.bf16.mxu0 0
        %10524 = vmatpush1.bf16.msra.mxu0 %v10274
        %10525 = vmatprep.subr.bf16.mxu0 0
        %10526 = vmatpush1.bf16.msra.mxu0 %v10277
        %10527 = vmatprep.subr.bf16.mxu0 0
        %10528 = vmatpush1.bf16.msra.mxu0 %v10280
        %10529 = vmatprep.subr.bf16.mxu0 0
        %10530 = vmatpush1.bf16.msra.mxu0 %v10283
        %10531 = vmatprep.subr.bf16.mxu0 0
        %10532 = vmatpush1.bf16.msra.mxu0 %v10286
        %10533 = vmatprep.subr.bf16.mxu0 0
        %10534 = vmatpush1.bf16.msra.mxu0 %v10289
        %10535 = vmatprep.subr.bf16.mxu0 0
        %10536 = vmatpush1.bf16.msra.mxu0 %v10292
        %10537 = vmatprep.subr.bf16.mxu0 0
        %10538 = vmatpush1.bf16.msra.mxu0 %v10295
        %10539 = vmatprep.subr.bf16.mxu0 0
        %10540 = vmatpush1.bf16.msra.mxu0 0
        %10541 = vmatprep.subr.bf16.mxu0 0
        %10542 = vmatpush1.bf16.msra.mxu0 0
        %10543 = vmatprep.subr.bf16.mxu0 0
        %10544 = vmatpush1.bf16.msra.mxu0 0
        %10545 = vmatprep.subr.bf16.mxu0 0
        %10546 = vmatpush1.bf16.msra.mxu0 0
        %10547 = vmatprep.subr.bf16.mxu0 0
        %10548 = vmatpush1.bf16.msra.mxu0 0
        %10549 = vmatprep.subr.bf16.mxu0 0
        %10550 = vmatpush1.bf16.msra.mxu0 0
        %10551 = vmatprep.subr.bf16.mxu0 0
        %10552 = vmatpush1.bf16.msra.mxu0 0
        %10553 = vmatprep.subr.bf16.mxu0 0
        %10554 = vmatpush1.bf16.msra.mxu0 0
        %10555 = vmatprep.mubr.bf16.mxu0 0
        %10556 = vmatmul.mubr.bf16.gmra.mrb[0].mxu0 %v9965
        %v10557 = vpop.f32.mrb[0].mxu0
        %v10558 = vadd.f32 %v10509, %v10557
        %v10559 = vpop.f32.mrb[0].mxu0
        %v10560 = vpop.f32.mrb[0].mxu0
        %v10561 = vadd.f32 %v10512, %v10560
        %v10562 = vpop.f32.mrb[0].mxu0
        %10563 = vmatprep.mubr.bf16.mxu0 0
        %10564 = vmatmul.mubr.bf16.gmra.mrb[0].mxu0 %v9977
        %v10565 = vpop.f32.mrb[0].mxu0
        %v10566 = vadd.f32 %v10517, %v10565
        %v10567 = vpop.f32.mrb[0].mxu0
        %v10568 = vpop.f32.mrb[0].mxu0
        %v10569 = vadd.f32 %v10520, %v10568
        %v10570 = vpop.f32.mrb[0].mxu0
        %10571 = vdwg.mxu0
        %v10572 = vadd.f32 %v9717, %v10456
        %v10573 = vadd.f32 %v9719, %v10458
        %v10574 = vadd.f32 %v9819, %v10558
        %v10575 = vadd.f32 %v9721, %v10460
        %v10576 = vadd.f32 %v9723, %v10462
        %v10577 = vadd.f32 %v9822, %v10561
        %v10578 = vadd.f32 %v9727, %v10466
        %v10579 = vadd.f32 %v9729, %v10468
        %v10580 = vadd.f32 %v9827, %v10566
        %v10581 = vadd.f32 %v9731, %v10470
        %v10582 = vadd.f32 %v9733, %v10472
        %v10583 = vadd.f32 %v9830, %v10569
        %10592 = vrot.lane.b32.xlu0 %v10573, 64
        %v10593 = vpop.permute.xlu0 %10592
        %10594 = vrot.lane.b32.xlu0 %v10574, 64
        %v10595 = vpop.permute.xlu0 %10594
        %10596 = vrot.lane.b32.xlu0 %v10576, 64
        %v10597 = vpop.permute.xlu0 %10596
        %10598 = vrot.lane.b32.xlu0 %v10577, 64
        %v10599 = vpop.permute.xlu0 %10598
        %10600 = vrot.lane.b32.xlu0 %v10579, 64
        %v10601 = vpop.permute.xlu0 %10600
        %10602 = vrot.lane.b32.xlu0 %v10580, 64
        %v10603 = vpop.permute.xlu0 %10602
        %10604 = vrot.lane.b32.xlu0 %v10582, 64
        %v10605 = vpop.permute.xlu0 %10604
        %10606 = vrot.lane.b32.xlu0 %v10583, 64
        %v10607 = vpop.permute.xlu0 %10606
        %v10608 = vsel %vm7926, %v10593, %v10595
        %v10609 = vsel %vm7926, %v10597, %v10599
        %v10610 = vsel %vm7926, %v10601, %v10603
        %v10611 = vsel %vm7926, %v10605, %v10607
        %v10620 = vmax.f32 %v10572, %v10608
        %v10621 = vmax.f32 %v10573, %v10595
        %v10622 = vmax.f32 %v10575, %v10609
        %v10623 = vmax.f32 %v10576, %v10599
        %v10624 = vmax.f32 %v10578, %v10610
        %v10625 = vmax.f32 %v10579, %v10603
        %v10626 = vmax.f32 %v10581, %v10611
        %v10627 = vmax.f32 %v10582, %v10607
        %v10628 = vld [vmem:[%s5] sm:$0x3]
        %v10630 = vlaneseq
        %v10631 = vshrl.u32 %v10630, 7
        %v10632 = vsub.s32 0, %v10631
        %v10633 = vrot.slane %v10628, %v10632
        %v10634 = vlaneseq
        %v10635 = vshrl.u32 %v10634, 7
        %v10636 = vsub.s32 1, %v10635
        %v10637 = vrot.slane %v10628, %v10636
        %v10640 = vadd.f32 %v10620, %v10633
        %v10641 = vadd.f32 %v10621, %v10637
        %v10642 = vadd.f32 %v10622, %v10633
        %v10643 = vadd.f32 %v10623, %v10637
        %v10644 = vadd.f32 %v10624, %v10633
        %v10645 = vadd.f32 %v10625, %v10637
        %v10646 = vadd.f32 %v10626, %v10633
        %v10647 = vadd.f32 %v10627, %v10637
        %v10648 = vmax.f32 %v10640, 0.0
        %v10649 = vmax.f32 %v10641, 0.0
        %v10650 = vmax.f32 %v10642, 0.0
        %v10651 = vmax.f32 %v10643, 0.0
        %v10652 = vmax.f32 %v10644, 0.0
        %v10653 = vmax.f32 %v10645, 0.0
        %v10654 = vmax.f32 %v10646, 0.0
        %v10655 = vmax.f32 %v10647, 0.0
        %v10656 = vpack.c.bf16 %v10650, %v10648
        %v10657 = vpack.c.bf16 %v10651, %v10649
        %v10658 = vpack.c.bf16 %v10654, %v10652
        %v10659 = vpack.c.bf16 %v10655, %v10653
        %v10660 = vld [vmem:[%s6] sm:$0xf]
        %v10661 = vld [vmem:[%s6 + $0x4] sm:$0xf]
        %v10662 = vld [vmem:[%s6 + $0x8] sm:$0x3]
        %v10666 = vunpack.c.l.b16 %v10660
        %v10667 = vunpack.c.l.b16 %v10661
        %v10668 = vunpack.c.l.b16 %v10662
        %v10669 = vpack.c.b16 %v10667, %v10666
        %v10670 = vpack.c.b16 %v10668, %v10668
        %v10672 = vsel %vm2823, %v10669, 0
        %v10675 = vsel %vm2823, %v10670, 0
        %10677 = vmatprep.subr.bf16.mxu0 %v10657
        %10678 = vmatpush1.bf16.msra.mxu0 %v10656
        %10679 = vmatprep.subr.bf16.mxu0 %v10659
        %10680 = vmatpush1.bf16.msra.mxu0 %v10658
        %10681 = vmatprep.subr.bf16.mxu0 0
        %10682 = vmatpush1.bf16.msra.mxu0 0
        %10683 = vmatprep.subr.bf16.mxu0 0
        %10684 = vmatpush1.bf16.msra.mxu0 0
        %10685 = vmatprep.subr.bf16.mxu0 0
        %10686 = vmatpush1.bf16.msra.mxu0 0
        %10687 = vmatprep.subr.bf16.mxu0 0
        %10688 = vmatpush1.bf16.msra.mxu0 0
        %10689 = vmatprep.subr.bf16.mxu0 0
        %10690 = vmatpush1.bf16.msra.mxu0 0
        %10691 = vmatprep.subr.bf16.mxu0 0
        %10692 = vmatpush1.bf16.msra.mxu0 0
        %10693 = vmatprep.subr.bf16.mxu0 0
        %10694 = vmatpush1.bf16.msra.mxu0 0
        %10695 = vmatprep.subr.bf16.mxu0 0
        %10696 = vmatpush1.bf16.msra.mxu0 0
        %10697 = vmatprep.subr.bf16.mxu0 0
        %10698 = vmatpush1.bf16.msra.mxu0 0
        %10699 = vmatprep.subr.bf16.mxu0 0
        %10700 = vmatpush1.bf16.msra.mxu0 0
        %10701 = vmatprep.subr.bf16.mxu0 0
        %10702 = vmatpush1.bf16.msra.mxu0 0
        %10703 = vmatprep.subr.bf16.mxu0 0
        %10704 = vmatpush1.bf16.msra.mxu0 0
        %10705 = vmatprep.subr.bf16.mxu0 0
        %10706 = vmatpush1.bf16.msra.mxu0 0
        %10707 = vmatprep.subr.bf16.mxu0 0
        %10708 = vmatpush1.bf16.msra.mxu0 0
        %10709 = vmatprep.mubr.bf16.mxu0 0
        %10710 = vmatmul.mubr.bf16.gmra.mrb[0].mxu0 %v10672
        %v10711 = vpop.f32.mrb[0].mxu0
        %v10712 = vadd.f32 0.0, %v10711
        %v10713 = vpop.f32.mrb[0].mxu0
        %v10714 = vadd.f32 0.0, %v10713
        %v10715 = vpop.f32.mrb[0].mxu0
        %v10716 = vadd.f32 0.0, %v10715
        %v10717 = vpop.f32.mrb[0].mxu0
        %v10718 = vadd.f32 0.0, %v10717
        %10719 = vmatprep.mubr.bf16.mxu0 0
        %10720 = vmatmul.mubr.bf16.gmra.mrb[0].mxu0 %v10675
        %v10721 = vpop.f32.mrb[0].mxu0
        %v10722 = vadd.f32 0.0, %v10721
        %v10723 = vpop.f32.mrb[0].mxu0
        %v10724 = vadd.f32 0.0, %v10723
        %v10725 = vpop.f32.mrb[0].mxu0
        %v10726 = vpop.f32.mrb[0].mxu0
        %10727 = vdwg.mxu0
        %s10728 = scalar_lea.vmem %s6, 12
        %v10729 = vld [vmem:[%s10728] sm:$0xf]
        %v10730 = vld [vmem:[%s10728 + $0x4] sm:$0xf]
        %v10731 = vld [vmem:[%s10728 + $0x8] sm:$0x3]
        %v10735 = vunpack.c.l.b16 %v10729
        %v10736 = vunpack.c.l.b16 %v10730
        %v10737 = vunpack.c.l.b16 %v10731
        %v10738 = vpack.c.b16 %v10736, %v10735
        %v10739 = vpack.c.b16 %v10737, %v10737
        %v10741 = vsel %vm2823, %v10738, 0
        %v10744 = vsel %vm2823, %v10739, 0
        %10746 = vmatprep.subr.bf16.mxu0 %v10657
        %10747 = vmatpush1.bf16.msra.mxu0 %v10656
        %10748 = vmatprep.subr.bf16.mxu0 %v10659
        %10749 = vmatpush1.bf16.msra.mxu0 %v10658
        %10750 = vmatprep.subr.bf16.mxu0 0
        %10751 = vmatpush1.bf16.msra.mxu0 0
        %10752 = vmatprep.subr.bf16.mxu0 0
        %10753 = vmatpush1.bf16.msra.mxu0 0
        %10754 = vmatprep.subr.bf16.mxu0 0
        %10755 = vmatpush1.bf16.msra.mxu0 0
        %10756 = vmatprep.subr.bf16.mxu0 0
        %10757 = vmatpush1.bf16.msra.mxu0 0
        %10758 = vmatprep.subr.bf16.mxu0 0
        %10759 = vmatpush1.bf16.msra.mxu0 0
        %10760 = vmatprep.subr.bf16.mxu0 0
        %10761 = vmatpush1.bf16.msra.mxu0 0
        %10762 = vmatprep.subr.bf16.mxu0 0
        %10763 = vmatpush1.bf16.msra.mxu0 0
        %10764 = vmatprep.subr.bf16.mxu0 0
        %10765 = vmatpush1.bf16.msra.mxu0 0
        %10766 = vmatprep.subr.bf16.mxu0 0
        %10767 = vmatpush1.bf16.msra.mxu0 0
        %10768 = vmatprep.subr.bf16.mxu0 0
        %10769 = vmatpush1.bf16.msra.mxu0 0
        %10770 = vmatprep.subr.bf16.mxu0 0
        %10771 = vmatpush1.bf16.msra.mxu0 0
        %10772 = vmatprep.subr.bf16.mxu0 0
        %10773 = vmatpush1.bf16.msra.mxu0 0
        %10774 = vmatprep.subr.bf16.mxu0 0
        %10775 = vmatpush1.bf16.msra.mxu0 0
        %10776 = vmatprep.subr.bf16.mxu0 0
        %10777 = vmatpush1.bf16.msra.mxu0 0
        %10778 = vmatprep.mubr.bf16.mxu0 0
        %10779 = vmatmul.mubr.bf16.gmra.mrb[0].mxu0 %v10741
        %v10780 = vpop.f32.mrb[0].mxu0
        %v10781 = vadd.f32 0.0, %v10780
        %v10782 = vpop.f32.mrb[0].mxu0
        %v10783 = vadd.f32 0.0, %v10782
        %v10784 = vpop.f32.mrb[0].mxu0
        %v10785 = vadd.f32 0.0, %v10784
        %v10786 = vpop.f32.mrb[0].mxu0
        %v10787 = vadd.f32 0.0, %v10786
        %10788 = vmatprep.mubr.bf16.mxu0 0
        %10789 = vmatmul.mubr.bf16.gmra.mrb[0].mxu0 %v10744
        %v10790 = vpop.f32.mrb[0].mxu0
        %v10791 = vadd.f32 0.0, %v10790
        %v10792 = vpop.f32.mrb[0].mxu0
        %v10793 = vadd.f32 0.0, %v10792
        %v10794 = vpop.f32.mrb[0].mxu0
        %v10795 = vpop.f32.mrb[0].mxu0
        %10796 = vdwg.mxu0
        %v10797 = vmax.f32 %v10712, %v10781
        %v10798 = vmax.f32 %v10714, %v10783
        %v10799 = vmax.f32 %v10716, %v10785
        %v10800 = vmax.f32 %v10718, %v10787
        %v10801 = vmax.f32 %v10722, %v10791
        %v10802 = vmax.f32 %v10724, %v10793
        %v10803 = vpack.c.bf16 %v10799, %v10797
        %v10804 = vpack.c.bf16 %v10800, %v10798
        %v10805 = vpack.c.bf16 %v10801, %v10801
        %v10806 = vpack.c.bf16 %v10802, %v10802
        %v10807 = vld [vmem:[%s7] sm:$0xf]
        %v10808 = vld [vmem:[%s7 + $0x4] sm:$0xf]
        %v10809 = vld [vmem:[%s7 + $0x8] sm:$0xf]
        %v10810 = vld [vmem:[%s7 + $0xc] sm:$0xf]
        %v10811 = vld [vmem:[%s7 + $0x10] sm:$0xf]
        %v10812 = vld [vmem:[%s7 + $0x14] sm:$0xf]
        %v10813 = vld [vmem:[%s7 + $0x18] sm:$0xf]
        %v10814 = vld [vmem:[%s7 + $0x1c] sm:$0xf]
        %v10815 = vld [vmem:[%s7 + $0x20] sm:$0xf]
        %v10816 = vld [vmem:[%s7 + $0x24] sm:$0xf]
        %v10817 = vld [vmem:[%s7 + $0x28] sm:$0xf]
        %v10818 = vld [vmem:[%s7 + $0x2c] sm:$0xf]
        %v10819 = vld [vmem:[%s7 + $0x30] sm:$0xf]
        %v10820 = vld [vmem:[%s7 + $0x34] sm:$0xf]
        %v10821 = vld [vmem:[%s7 + $0x38] sm:$0xf]
        %v10822 = vld [vmem:[%s7 + $0x3c] sm:$0xf]
        %v10823 = vld [vmem:[%s7 + $0x40] sm:$0xf]
        %v10824 = vld [vmem:[%s7 + $0x44] sm:$0xf]
        %v10825 = vld [vmem:[%s7 + $0x48] sm:$0xf]
        %v10826 = vld [vmem:[%s7 + $0x4c] sm:$0xf]
        %v10827 = vld [vmem:[%s7 + $0x50] sm:$0xf]
        %v10828 = vld [vmem:[%s7 + $0x54] sm:$0xf]
        %v10829 = vld [vmem:[%s7 + $0x58] sm:$0xf]
        %v10830 = vld [vmem:[%s7 + $0x5c] sm:$0xf]
        %s10831 = scalar_lea.vmem %s7, 96
        %v10832 = vld [vmem:[%s10831] sm:$0xf]
        %v10833 = vld [vmem:[%s10831 + $0x4] sm:$0xf]
        %v10834 = vld [vmem:[%s10831 + $0x8] sm:$0xf]
        %v10835 = vld [vmem:[%s10831 + $0xc] sm:$0xf]
        %v10836 = vld [vmem:[%s10831 + $0x10] sm:$0xf]
        %v10837 = vld [vmem:[%s10831 + $0x14] sm:$0xf]
        %v10838 = vld [vmem:[%s10831 + $0x18] sm:$0xf]
        %v10839 = vld [vmem:[%s10831 + $0x1c] sm:$0xf]
        %v10840 = vld [vmem:[%s10831 + $0x20] sm:$0xf]
        %v10841 = vld [vmem:[%s10831 + $0x24] sm:$0xf]
        %v10842 = vld [vmem:[%s10831 + $0x28] sm:$0xf]
        %v10843 = vld [vmem:[%s10831 + $0x2c] sm:$0xf]
        %v10844 = vld [vmem:[%s10831 + $0x30] sm:$0xf]
        %v10845 = vld [vmem:[%s10831 + $0x34] sm:$0xf]
        %v10846 = vld [vmem:[%s10831 + $0x38] sm:$0xf]
        %v10847 = vld [vmem:[%s10831 + $0x3c] sm:$0xf]
        %v10848 = vld [vmem:[%s10831 + $0x40] sm:$0xf]
        %v10849 = vld [vmem:[%s10831 + $0x44] sm:$0xf]
        %v10850 = vld [vmem:[%s10831 + $0x48] sm:$0xf]
        %v10851 = vld [vmem:[%s10831 + $0x4c] sm:$0xf]
        %v10852 = vld [vmem:[%s10831 + $0x50] sm:$0xf]
        %v10853 = vld [vmem:[%s10831 + $0x54] sm:$0xf]
        %v10854 = vld [vmem:[%s10831 + $0x58] sm:$0xf]
        %v10855 = vld [vmem:[%s10831 + $0x5c] sm:$0xf]
        %vm10860 = vcmask 1042432
        %v10861 = vrot.slane %v10803, 5
        %v10862 = vrot.slane %v10805, 5
        %v10863 = vsel %vm10860, %v10861, %v10862
        %v10864 = vrot.slane %v10804, 5
        %v10865 = vrot.slane %v10806, 5
        %v10866 = vsel %vm10860, %v10864, %v10865
        %v10892 = vunpack.c.l.b16 %v10832
        %v10893 = vunpack.c.l.b16 %v10833
        %v10894 = vunpack.c.l.b16 %v10834
        %v10895 = vunpack.c.l.b16 %v10835
        %v10896 = vunpack.c.l.b16 %v10836
        %v10897 = vunpack.c.l.b16 %v10837
        %v10898 = vunpack.c.l.b16 %v10838
        %v10899 = vunpack.c.l.b16 %v10839
        %v10900 = vunpack.c.l.b16 %v10840
        %v10901 = vunpack.c.l.b16 %v10841
        %v10902 = vunpack.c.l.b16 %v10842
        %v10903 = vunpack.c.l.b16 %v10843
        %v10904 = vunpack.c.l.b16 %v10844
        %v10905 = vunpack.c.l.b16 %v10845
        %v10906 = vunpack.c.l.b16 %v10846
        %v10907 = vunpack.c.l.b16 %v10847
        %v10908 = vunpack.c.l.b16 %v10848
        %v10909 = vunpack.c.l.b16 %v10849
        %v10910 = vunpack.c.l.b16 %v10850
        %v10911 = vunpack.c.l.b16 %v10851
        %v10912 = vunpack.c.l.b16 %v10852
        %v10913 = vunpack.c.l.b16 %v10853
        %v10914 = vunpack.c.l.b16 %v10854
        %v10915 = vunpack.c.l.b16 %v10855
        %v10916 = vpack.c.b16 %v10893, %v10892
        %v10917 = vpack.c.b16 %v10895, %v10894
        %v10918 = vpack.c.b16 %v10897, %v10896
        %v10919 = vpack.c.b16 %v10899, %v10898
        %v10920 = vpack.c.b16 %v10901, %v10900
        %v10921 = vpack.c.b16 %v10903, %v10902
        %v10922 = vpack.c.b16 %v10905, %v10904
        %v10923 = vpack.c.b16 %v10907, %v10906
        %v10924 = vpack.c.b16 %v10909, %v10908
        %v10925 = vpack.c.b16 %v10911, %v10910
        %v10926 = vpack.c.b16 %v10913, %v10912
        %v10927 = vpack.c.b16 %v10915, %v10914
        %v10941 = vsel %vm7926, %v10866, 0
        %10943 = vmatprep.subr.bf16.mxu0 0
        %10944 = vmatpush1.bf16.msra.mxu0 %v10916
        %10945 = vmatprep.subr.bf16.mxu0 0
        %10946 = vmatpush1.bf16.msra.mxu0 %v10917
        %10947 = vmatprep.subr.bf16.mxu0 0
        %10948 = vmatpush1.bf16.msra.mxu0 %v10918
        %10949 = vmatprep.subr.bf16.mxu0 0
        %10950 = vmatpush1.bf16.msra.mxu0 %v10919
        %10951 = vmatprep.subr.bf16.mxu0 0
        %10952 = vmatpush1.bf16.msra.mxu0 %v10920
        %10953 = vmatprep.subr.bf16.mxu0 0
        %10954 = vmatpush1.bf16.msra.mxu0 %v10921
        %10955 = vmatprep.subr.bf16.mxu0 0
        %10956 = vmatpush1.bf16.msra.mxu0 %v10922
        %10957 = vmatprep.subr.bf16.mxu0 0
        %10958 = vmatpush1.bf16.msra.mxu0 %v10923
        %10959 = vmatprep.subr.bf16.mxu0 0
        %10960 = vmatpush1.bf16.msra.mxu0 %v10924
        %10961 = vmatprep.subr.bf16.mxu0 0
        %10962 = vmatpush1.bf16.msra.mxu0 %v10925
        %10963 = vmatprep.subr.bf16.mxu0 0
        %10964 = vmatpush1.bf16.msra.mxu0 %v10926
        %10965 = vmatprep.subr.bf16.mxu0 0
        %10966 = vmatpush1.bf16.msra.mxu0 %v10927
        %10967 = vmatprep.subr.bf16.mxu0 0
        %10968 = vmatpush1.bf16.msra.mxu0 0
        %10969 = vmatprep.subr.bf16.mxu0 0
        %10970 = vmatpush1.bf16.msra.mxu0 0
        %10971 = vmatprep.subr.bf16.mxu0 0
        %10972 = vmatpush1.bf16.msra.mxu0 0
        %10973 = vmatprep.subr.bf16.mxu0 0
        %10974 = vmatpush1.bf16.msra.mxu0 0
        %10975 = vmatprep.mubr.bf16.mxu0 %v10941
        %10976 = vmatmul.mubr.bf16.gmra.mrb[0].mxu0 %v10863
        %v10977 = vpop.f32.mrb[0].mxu0
        %v10978 = vadd.f32 0.0, %v10977
        %v10979 = vpop.f32.mrb[0].mxu0
        %v10980 = vpop.f32.mrb[0].mxu0
        %v10981 = vpop.f32.mrb[0].mxu0
        %10982 = vdwg.mxu0
        %v11007 = vunpack.c.l.b16 %v10807
        %v11008 = vunpack.c.l.b16 %v10808
        %v11009 = vunpack.c.l.b16 %v10809
        %v11010 = vunpack.c.l.b16 %v10810
        %v11011 = vunpack.c.l.b16 %v10811
        %v11012 = vunpack.c.l.b16 %v10812
        %v11013 = vunpack.c.l.b16 %v10813
        %v11014 = vunpack.c.l.b16 %v10814
        %v11015 = vunpack.c.l.b16 %v10815
        %v11016 = vunpack.c.l.b16 %v10816
        %v11017 = vunpack.c.l.b16 %v10817
        %v11018 = vunpack.c.l.b16 %v10818
        %v11019 = vunpack.c.l.b16 %v10819
        %v11020 = vunpack.c.l.b16 %v10820
        %v11021 = vunpack.c.l.b16 %v10821
        %v11022 = vunpack.c.l.b16 %v10822
        %v11023 = vunpack.c.l.b16 %v10823
        %v11024 = vunpack.c.l.b16 %v10824
        %v11025 = vunpack.c.l.b16 %v10825
        %v11026 = vunpack.c.l.b16 %v10826
        %v11027 = vunpack.c.l.b16 %v10827
        %v11028 = vunpack.c.l.b16 %v10828
        %v11029 = vunpack.c.l.b16 %v10829
        %v11030 = vunpack.c.l.b16 %v10830
        %v11031 = vpack.c.b16 %v11008, %v11007
        %v11032 = vpack.c.b16 %v11010, %v11009
        %v11033 = vpack.c.b16 %v11012, %v11011
        %v11034 = vpack.c.b16 %v11014, %v11013
        %v11035 = vpack.c.b16 %v11016, %v11015
        %v11036 = vpack.c.b16 %v11018, %v11017
        %v11037 = vpack.c.b16 %v11020, %v11019
        %v11038 = vpack.c.b16 %v11022, %v11021
        %v11039 = vpack.c.b16 %v11024, %v11023
        %v11040 = vpack.c.b16 %v11026, %v11025
        %v11041 = vpack.c.b16 %v11028, %v11027
        %v11042 = vpack.c.b16 %v11030, %v11029
        %v11056 = vsel %vm7926, %v10804, 0
        %11058 = vmatprep.subr.bf16.mxu0 0
        %11059 = vmatpush1.bf16.msra.mxu0 %v11031
        %11060 = vmatprep.subr.bf16.mxu0 0
        %11061 = vmatpush1.bf16.msra.mxu0 %v11032
        %11062 = vmatprep.subr.bf16.mxu0 0
        %11063 = vmatpush1.bf16.msra.mxu0 %v11033
        %11064 = vmatprep.subr.bf16.mxu0 0
        %11065 = vmatpush1.bf16.msra.mxu0 %v11034
        %11066 = vmatprep.subr.bf16.mxu0 0
        %11067 = vmatpush1.bf16.msra.mxu0 %v11035
        %11068 = vmatprep.subr.bf16.mxu0 0
        %11069 = vmatpush1.bf16.msra.mxu0 %v11036
        %11070 = vmatprep.subr.bf16.mxu0 0
        %11071 = vmatpush1.bf16.msra.mxu0 %v11037
        %11072 = vmatprep.subr.bf16.mxu0 0
        %11073 = vmatpush1.bf16.msra.mxu0 %v11038
        %11074 = vmatprep.subr.bf16.mxu0 0
        %11075 = vmatpush1.bf16.msra.mxu0 %v11039
        %11076 = vmatprep.subr.bf16.mxu0 0
        %11077 = vmatpush1.bf16.msra.mxu0 %v11040
        %11078 = vmatprep.subr.bf16.mxu0 0
        %11079 = vmatpush1.bf16.msra.mxu0 %v11041
        %11080 = vmatprep.subr.bf16.mxu0 0
        %11081 = vmatpush1.bf16.msra.mxu0 %v11042
        %11082 = vmatprep.subr.bf16.mxu0 0
        %11083 = vmatpush1.bf16.msra.mxu0 0
        %11084 = vmatprep.subr.bf16.mxu0 0
        %11085 = vmatpush1.bf16.msra.mxu0 0
        %11086 = vmatprep.subr.bf16.mxu0 0
        %11087 = vmatpush1.bf16.msra.mxu0 0
        %11088 = vmatprep.subr.bf16.mxu0 0
        %11089 = vmatpush1.bf16.msra.mxu0 0
        %11090 = vmatprep.mubr.bf16.mxu0 %v11056
        %11091 = vmatmul.mubr.bf16.gmra.mrb[0].mxu0 %v10803
        %v11092 = vpop.f32.mrb[0].mxu0
        %v11093 = vadd.f32 %v10978, %v11092
        %v11094 = vpop.f32.mrb[0].mxu0
        %v11095 = vpop.f32.mrb[0].mxu0
        %v11096 = vpop.f32.mrb[0].mxu0
        %11097 = vdwg.mxu0
        %s11098 = scalar_lea.vmem %s7, 192
        %v11099 = vld [vmem:[%s11098] sm:$0xf]
        %v11100 = vld [vmem:[%s11098 + $0x4] sm:$0xf]
        %v11101 = vld [vmem:[%s11098 + $0x8] sm:$0xf]
        %v11102 = vld [vmem:[%s11098 + $0xc] sm:$0xf]
        %v11103 = vld [vmem:[%s11098 + $0x10] sm:$0xf]
        %v11104 = vld [vmem:[%s11098 + $0x14] sm:$0xf]
        %v11105 = vld [vmem:[%s11098 + $0x18] sm:$0xf]
        %v11106 = vld [vmem:[%s11098 + $0x1c] sm:$0xf]
        %v11107 = vld [vmem:[%s11098 + $0x20] sm:$0xf]
        %v11108 = vld [vmem:[%s11098 + $0x24] sm:$0xf]
        %v11109 = vld [vmem:[%s11098 + $0x28] sm:$0xf]
        %v11110 = vld [vmem:[%s11098 + $0x2c] sm:$0xf]
        %v11111 = vld [vmem:[%s11098 + $0x30] sm:$0xf]
        %v11112 = vld [vmem:[%s11098 + $0x34] sm:$0xf]
        %v11113 = vld [vmem:[%s11098 + $0x38] sm:$0xf]
        %v11114 = vld [vmem:[%s11098 + $0x3c] sm:$0xf]
        %v11115 = vld [vmem:[%s11098 + $0x40] sm:$0xf]
        %v11116 = vld [vmem:[%s11098 + $0x44] sm:$0xf]
        %v11117 = vld [vmem:[%s11098 + $0x48] sm:$0xf]
        %v11118 = vld [vmem:[%s11098 + $0x4c] sm:$0xf]
        %v11119 = vld [vmem:[%s11098 + $0x50] sm:$0xf]
        %v11120 = vld [vmem:[%s11098 + $0x54] sm:$0xf]
        %v11121 = vld [vmem:[%s11098 + $0x58] sm:$0xf]
        %v11122 = vld [vmem:[%s11098 + $0x5c] sm:$0xf]
        %v11124 = vshrl.u32 %v10803, 16
        %v11126 = vshll.u32 %v10803, 16
        %v11128 = vrot.slane %v11126, 1
        %v11129 = vor.u32 %v11124, %v11128
        %v11130 = vshrl.u32 %v10804, 16
        %v11132 = vshll.u32 %v10804, 16
        %v11134 = vrot.slane %v11132, 1
        %v11135 = vor.u32 %v11130, %v11134
        %v11161 = vunpack.c.l.b16 %v11099
        %v11162 = vunpack.c.l.b16 %v11100
        %v11163 = vunpack.c.l.b16 %v11101
        %v11164 = vunpack.c.l.b16 %v11102
        %v11165 = vunpack.c.l.b16 %v11103
        %v11166 = vunpack.c.l.b16 %v11104
        %v11167 = vunpack.c.l.b16 %v11105
        %v11168 = vunpack.c.l.b16 %v11106
        %v11169 = vunpack.c.l.b16 %v11107
        %v11170 = vunpack.c.l.b16 %v11108
        %v11171 = vunpack.c.l.b16 %v11109
        %v11172 = vunpack.c.l.b16 %v11110
        %v11173 = vunpack.c.l.b16 %v11111
        %v11174 = vunpack.c.l.b16 %v11112
        %v11175 = vunpack.c.l.b16 %v11113
        %v11176 = vunpack.c.l.b16 %v11114
        %v11177 = vunpack.c.l.b16 %v11115
        %v11178 = vunpack.c.l.b16 %v11116
        %v11179 = vunpack.c.l.b16 %v11117
        %v11180 = vunpack.c.l.b16 %v11118
        %v11181 = vunpack.c.l.b16 %v11119
        %v11182 = vunpack.c.l.b16 %v11120
        %v11183 = vunpack.c.l.b16 %v11121
        %v11184 = vunpack.c.l.b16 %v11122
        %v11185 = vpack.c.b16 %v11162, %v11161
        %v11186 = vpack.c.b16 %v11164, %v11163
        %v11187 = vpack.c.b16 %v11166, %v11165
        %v11188 = vpack.c.b16 %v11168, %v11167
        %v11189 = vpack.c.b16 %v11170, %v11169
        %v11190 = vpack.c.b16 %v11172, %v11171
        %v11191 = vpack.c.b16 %v11174, %v11173
        %v11192 = vpack.c.b16 %v11176, %v11175
        %v11193 = vpack.c.b16 %v11178, %v11177
        %v11194 = vpack.c.b16 %v11180, %v11179
        %v11195 = vpack.c.b16 %v11182, %v11181
        %v11196 = vpack.c.b16 %v11184, %v11183
        %v11210 = vsel %vm7926, %v11135, 0
        %11212 = vmatprep.subr.bf16.mxu0 0
        %11213 = vmatpush1.bf16.msra.mxu0 %v11185
        %11214 = vmatprep.subr.bf16.mxu0 0
        %11215 = vmatpush1.bf16.msra.mxu0 %v11186
        %11216 = vmatprep.subr.bf16.mxu0 0
        %11217 = vmatpush1.bf16.msra.mxu0 %v11187
        %11218 = vmatprep.subr.bf16.mxu0 0
        %11219 = vmatpush1.bf16.msra.mxu0 %v11188
        %11220 = vmatprep.subr.bf16.mxu0 0
        %11221 = vmatpush1.bf16.msra.mxu0 %v11189
        %11222 = vmatprep.subr.bf16.mxu0 0
        %11223 = vmatpush1.bf16.msra.mxu0 %v11190
        %11224 = vmatprep.subr.bf16.mxu0 0
        %11225 = vmatpush1.bf16.msra.mxu0 %v11191
        %11226 = vmatprep.subr.bf16.mxu0 0
        %11227 = vmatpush1.bf16.msra.mxu0 %v11192
        %11228 = vmatprep.subr.bf16.mxu0 0
        %11229 = vmatpush1.bf16.msra.mxu0 %v11193
        %11230 = vmatprep.subr.bf16.mxu0 0
        %11231 = vmatpush1.bf16.msra.mxu0 %v11194
        %11232 = vmatprep.subr.bf16.mxu0 0
        %11233 = vmatpush1.bf16.msra.mxu0 %v11195
        %11234 = vmatprep.subr.bf16.mxu0 0
        %11235 = vmatpush1.bf16.msra.mxu0 %v11196
        %11236 = vmatprep.subr.bf16.mxu0 0
        %11237 = vmatpush1.bf16.msra.mxu0 0
        %11238 = vmatprep.subr.bf16.mxu0 0
        %11239 = vmatpush1.bf16.msra.mxu0 0
        %11240 = vmatprep.subr.bf16.mxu0 0
        %11241 = vmatpush1.bf16.msra.mxu0 0
        %11242 = vmatprep.subr.bf16.mxu0 0
        %11243 = vmatpush1.bf16.msra.mxu0 0
        %11244 = vmatprep.mubr.bf16.mxu0 %v11210
        %11245 = vmatmul.mubr.bf16.gmra.mrb[0].mxu0 %v11129
        %v11246 = vpop.f32.mrb[0].mxu0
        %v11247 = vadd.f32 0.0, %v11246
        %v11248 = vpop.f32.mrb[0].mxu0
        %v11249 = vpop.f32.mrb[0].mxu0
        %v11250 = vpop.f32.mrb[0].mxu0
        %11251 = vdwg.mxu0
        %v11252 = vadd.f32 %v11093, %v11247
        %s11253 = scalar_lea.vmem %s7, 288
        %v11254 = vld [vmem:[%s11253] sm:$0xf]
        %v11255 = vld [vmem:[%s11253 + $0x4] sm:$0xf]
        %v11256 = vld [vmem:[%s11253 + $0x8] sm:$0xf]
        %v11257 = vld [vmem:[%s11253 + $0xc] sm:$0xf]
        %v11258 = vld [vmem:[%s11253 + $0x10] sm:$0xf]
        %v11259 = vld [vmem:[%s11253 + $0x14] sm:$0xf]
        %v11260 = vld [vmem:[%s11253 + $0x18] sm:$0xf]
        %v11261 = vld [vmem:[%s11253 + $0x1c] sm:$0xf]
        %v11262 = vld [vmem:[%s11253 + $0x20] sm:$0xf]
        %v11263 = vld [vmem:[%s11253 + $0x24] sm:$0xf]
        %v11264 = vld [vmem:[%s11253 + $0x28] sm:$0xf]
        %v11265 = vld [vmem:[%s11253 + $0x2c] sm:$0xf]
        %v11266 = vld [vmem:[%s11253 + $0x30] sm:$0xf]
        %v11267 = vld [vmem:[%s11253 + $0x34] sm:$0xf]
        %v11268 = vld [vmem:[%s11253 + $0x38] sm:$0xf]
        %v11269 = vld [vmem:[%s11253 + $0x3c] sm:$0xf]
        %v11270 = vld [vmem:[%s11253 + $0x40] sm:$0xf]
        %v11271 = vld [vmem:[%s11253 + $0x44] sm:$0xf]
        %v11272 = vld [vmem:[%s11253 + $0x48] sm:$0xf]
        %v11273 = vld [vmem:[%s11253 + $0x4c] sm:$0xf]
        %v11274 = vld [vmem:[%s11253 + $0x50] sm:$0xf]
        %v11275 = vld [vmem:[%s11253 + $0x54] sm:$0xf]
        %v11276 = vld [vmem:[%s11253 + $0x58] sm:$0xf]
        %v11277 = vld [vmem:[%s11253 + $0x5c] sm:$0xf]
        %vm11278 = vsmask.f32 2304
        %v11279 = vrot.slane %v11124, 5
        %v11280 = vrot.slane %v11126, 6
        %v11281 = vor.u32 %v11279, %v11280
        %v11283 = vshrl.u32 %v10805, 16
        %v11285 = vrot.slane %v11283, 5
        %v11286 = vshll.u32 %v10805, 16
        %v11288 = vrot.slane %v11286, 6
        %v11289 = vor.u32 %v11285, %v11288
        %v11290 = vsel %vm11278, %v11281, %v11289
        %v11291 = vrot.slane %v11130, 5
        %v11292 = vrot.slane %v11132, 6
        %v11293 = vor.u32 %v11291, %v11292
        %v11295 = vshrl.u32 %v10806, 16
        %v11297 = vrot.slane %v11295, 5
        %v11298 = vshll.u32 %v10806, 16
        %v11300 = vrot.slane %v11298, 6
        %v11301 = vor.u32 %v11297, %v11300
        %v11302 = vsel %vm11278, %v11293, %v11301
        %v11328 = vunpack.c.l.b16 %v11254
        %v11329 = vunpack.c.l.b16 %v11255
        %v11330 = vunpack.c.l.b16 %v11256
        %v11331 = vunpack.c.l.b16 %v11257
        %v11332 = vunpack.c.l.b16 %v11258
        %v11333 = vunpack.c.l.b16 %v11259
        %v11334 = vunpack.c.l.b16 %v11260
        %v11335 = vunpack.c.l.b16 %v11261
        %v11336 = vunpack.c.l.b16 %v11262
        %v11337 = vunpack.c.l.b16 %v11263
        %v11338 = vunpack.c.l.b16 %v11264
        %v11339 = vunpack.c.l.b16 %v11265
        %v11340 = vunpack.c.l.b16 %v11266
        %v11341 = vunpack.c.l.b16 %v11267
        %v11342 = vunpack.c.l.b16 %v11268
        %v11343 = vunpack.c.l.b16 %v11269
        %v11344 = vunpack.c.l.b16 %v11270
        %v11345 = vunpack.c.l.b16 %v11271
        %v11346 = vunpack.c.l.b16 %v11272
        %v11347 = vunpack.c.l.b16 %v11273
        %v11348 = vunpack.c.l.b16 %v11274
        %v11349 = vunpack.c.l.b16 %v11275
        %v11350 = vunpack.c.l.b16 %v11276
        %v11351 = vunpack.c.l.b16 %v11277
        %v11352 = vpack.c.b16 %v11329, %v11328
        %v11353 = vpack.c.b16 %v11331, %v11330
        %v11354 = vpack.c.b16 %v11333, %v11332
        %v11355 = vpack.c.b16 %v11335, %v11334
        %v11356 = vpack.c.b16 %v11337, %v11336
        %v11357 = vpack.c.b16 %v11339, %v11338
        %v11358 = vpack.c.b16 %v11341, %v11340
        %v11359 = vpack.c.b16 %v11343, %v11342
        %v11360 = vpack.c.b16 %v11345, %v11344
        %v11361 = vpack.c.b16 %v11347, %v11346
        %v11362 = vpack.c.b16 %v11349, %v11348
        %v11363 = vpack.c.b16 %v11351, %v11350
        %v11377 = vsel %vm7926, %v11302, 0
        %11379 = vmatprep.subr.bf16.mxu0 0
        %11380 = vmatpush1.bf16.msra.mxu0 %v11352
        %11381 = vmatprep.subr.bf16.mxu0 0
        %11382 = vmatpush1.bf16.msra.mxu0 %v11353
        %11383 = vmatprep.subr.bf16.mxu0 0
        %11384 = vmatpush1.bf16.msra.mxu0 %v11354
        %11385 = vmatprep.subr.bf16.mxu0 0
        %11386 = vmatpush1.bf16.msra.mxu0 %v11355
        %11387 = vmatprep.subr.bf16.mxu0 0
        %11388 = vmatpush1.bf16.msra.mxu0 %v11356
        %11389 = vmatprep.subr.bf16.mxu0 0
        %11390 = vmatpush1.bf16.msra.mxu0 %v11357
        %11391 = vmatprep.subr.bf16.mxu0 0
        %11392 = vmatpush1.bf16.msra.mxu0 %v11358
        %11393 = vmatprep.subr.bf16.mxu0 0
        %11394 = vmatpush1.bf16.msra.mxu0 %v11359
        %11395 = vmatprep.subr.bf16.mxu0 0
        %11396 = vmatpush1.bf16.msra.mxu0 %v11360
        %11397 = vmatprep.subr.bf16.mxu0 0
        %11398 = vmatpush1.bf16.msra.mxu0 %v11361
        %11399 = vmatprep.subr.bf16.mxu0 0
        %11400 = vmatpush1.bf16.msra.mxu0 %v11362
        %11401 = vmatprep.subr.bf16.mxu0 0
        %11402 = vmatpush1.bf16.msra.mxu0 %v11363
        %11403 = vmatprep.subr.bf16.mxu0 0
        %11404 = vmatpush1.bf16.msra.mxu0 0
        %11405 = vmatprep.subr.bf16.mxu0 0
        %11406 = vmatpush1.bf16.msra.mxu0 0
        %11407 = vmatprep.subr.bf16.mxu0 0
        %11408 = vmatpush1.bf16.msra.mxu0 0
        %11409 = vmatprep.subr.bf16.mxu0 0
        %11410 = vmatpush1.bf16.msra.mxu0 0
        %11411 = vmatprep.mubr.bf16.mxu0 %v11377
        %11412 = vmatmul.mubr.bf16.gmra.mrb[0].mxu0 %v11290
        %v11413 = vpop.f32.mrb[0].mxu0
        %v11414 = vadd.f32 0.0, %v11413
        %v11415 = vpop.f32.mrb[0].mxu0
        %v11416 = vpop.f32.mrb[0].mxu0
        %v11417 = vpop.f32.mrb[0].mxu0
        %11418 = vdwg.mxu0
        %v11419 = vadd.f32 %v11252, %v11414
        %s11420 = scalar_lea.vmem %s7, 384
        %v11421 = vld [vmem:[%s11420] sm:$0xf]
        %v11422 = vld [vmem:[%s11420 + $0x4] sm:$0xf]
        %v11423 = vld [vmem:[%s11420 + $0x8] sm:$0xf]
        %v11424 = vld [vmem:[%s11420 + $0xc] sm:$0xf]
        %v11425 = vld [vmem:[%s11420 + $0x10] sm:$0xf]
        %v11426 = vld [vmem:[%s11420 + $0x14] sm:$0xf]
        %v11427 = vld [vmem:[%s11420 + $0x18] sm:$0xf]
        %v11428 = vld [vmem:[%s11420 + $0x1c] sm:$0xf]
        %v11429 = vld [vmem:[%s11420 + $0x20] sm:$0xf]
        %v11430 = vld [vmem:[%s11420 + $0x24] sm:$0xf]
        %v11431 = vld [vmem:[%s11420 + $0x28] sm:$0xf]
        %v11432 = vld [vmem:[%s11420 + $0x2c] sm:$0xf]
        %v11433 = vld [vmem:[%s11420 + $0x30] sm:$0xf]
        %v11434 = vld [vmem:[%s11420 + $0x34] sm:$0xf]
        %v11435 = vld [vmem:[%s11420 + $0x38] sm:$0xf]
        %v11436 = vld [vmem:[%s11420 + $0x3c] sm:$0xf]
        %v11437 = vld [vmem:[%s11420 + $0x40] sm:$0xf]
        %v11438 = vld [vmem:[%s11420 + $0x44] sm:$0xf]
        %v11439 = vld [vmem:[%s11420 + $0x48] sm:$0xf]
        %v11440 = vld [vmem:[%s11420 + $0x4c] sm:$0xf]
        %v11441 = vld [vmem:[%s11420 + $0x50] sm:$0xf]
        %v11442 = vld [vmem:[%s11420 + $0x54] sm:$0xf]
        %v11443 = vld [vmem:[%s11420 + $0x58] sm:$0xf]
        %v11444 = vld [vmem:[%s11420 + $0x5c] sm:$0xf]
        %v11445 = vrot.slane %v10803, 1
        %v11446 = vrot.slane %v10804, 1
        %v11472 = vunpack.c.l.b16 %v11421
        %v11473 = vunpack.c.l.b16 %v11422
        %v11474 = vunpack.c.l.b16 %v11423
        %v11475 = vunpack.c.l.b16 %v11424
        %v11476 = vunpack.c.l.b16 %v11425
        %v11477 = vunpack.c.l.b16 %v11426
        %v11478 = vunpack.c.l.b16 %v11427
        %v11479 = vunpack.c.l.b16 %v11428
        %v11480 = vunpack.c.l.b16 %v11429
        %v11481 = vunpack.c.l.b16 %v11430
        %v11482 = vunpack.c.l.b16 %v11431
        %v11483 = vunpack.c.l.b16 %v11432
        %v11484 = vunpack.c.l.b16 %v11433
        %v11485 = vunpack.c.l.b16 %v11434
        %v11486 = vunpack.c.l.b16 %v11435
        %v11487 = vunpack.c.l.b16 %v11436
        %v11488 = vunpack.c.l.b16 %v11437
        %v11489 = vunpack.c.l.b16 %v11438
        %v11490 = vunpack.c.l.b16 %v11439
        %v11491 = vunpack.c.l.b16 %v11440
        %v11492 = vunpack.c.l.b16 %v11441
        %v11493 = vunpack.c.l.b16 %v11442
        %v11494 = vunpack.c.l.b16 %v11443
        %v11495 = vunpack.c.l.b16 %v11444
        %v11496 = vpack.c.b16 %v11473, %v11472
        %v11497 = vpack.c.b16 %v11475, %v11474
        %v11498 = vpack.c.b16 %v11477, %v11476
        %v11499 = vpack.c.b16 %v11479, %v11478
        %v11500 = vpack.c.b16 %v11481, %v11480
        %v11501 = vpack.c.b16 %v11483, %v11482
        %v11502 = vpack.c.b16 %v11485, %v11484
        %v11503 = vpack.c.b16 %v11487, %v11486
        %v11504 = vpack.c.b16 %v11489, %v11488
        %v11505 = vpack.c.b16 %v11491, %v11490
        %v11506 = vpack.c.b16 %v11493, %v11492
        %v11507 = vpack.c.b16 %v11495, %v11494
        %v11521 = vsel %vm7926, %v11446, 0
        %11523 = vmatprep.subr.bf16.mxu0 0
        %11524 = vmatpush1.bf16.msra.mxu0 %v11496
        %11525 = vmatprep.subr.bf16.mxu0 0
        %11526 = vmatpush1.bf16.msra.mxu0 %v11497
        %11527 = vmatprep.subr.bf16.mxu0 0
        %11528 = vmatpush1.bf16.msra.mxu0 %v11498
        %11529 = vmatprep.subr.bf16.mxu0 0
        %11530 = vmatpush1.bf16.msra.mxu0 %v11499
        %11531 = vmatprep.subr.bf16.mxu0 0
        %11532 = vmatpush1.bf16.msra.mxu0 %v11500
        %11533 = vmatprep.subr.bf16.mxu0 0
        %11534 = vmatpush1.bf16.msra.mxu0 %v11501
        %11535 = vmatprep.subr.bf16.mxu0 0
        %11536 = vmatpush1.bf16.msra.mxu0 %v11502
        %11537 = vmatprep.subr.bf16.mxu0 0
        %11538 = vmatpush1.bf16.msra.mxu0 %v11503
        %11539 = vmatprep.subr.bf16.mxu0 0
        %11540 = vmatpush1.bf16.msra.mxu0 %v11504
        %11541 = vmatprep.subr.bf16.mxu0 0
        %11542 = vmatpush1.bf16.msra.mxu0 %v11505
        %11543 = vmatprep.subr.bf16.mxu0 0
        %11544 = vmatpush1.bf16.msra.mxu0 %v11506
        %11545 = vmatprep.subr.bf16.mxu0 0
        %11546 = vmatpush1.bf16.msra.mxu0 %v11507
        %11547 = vmatprep.subr.bf16.mxu0 0
        %11548 = vmatpush1.bf16.msra.mxu0 0
        %11549 = vmatprep.subr.bf16.mxu0 0
        %11550 = vmatpush1.bf16.msra.mxu0 0
        %11551 = vmatprep.subr.bf16.mxu0 0
        %11552 = vmatpush1.bf16.msra.mxu0 0
        %11553 = vmatprep.subr.bf16.mxu0 0
        %11554 = vmatpush1.bf16.msra.mxu0 0
        %11555 = vmatprep.mubr.bf16.mxu0 %v11521
        %11556 = vmatmul.mubr.bf16.gmra.mrb[0].mxu0 %v11445
        %v11557 = vpop.f32.mrb[0].mxu0
        %v11558 = vadd.f32 0.0, %v11557
        %v11559 = vpop.f32.mrb[0].mxu0
        %v11560 = vpop.f32.mrb[0].mxu0
        %v11561 = vpop.f32.mrb[0].mxu0
        %11562 = vdwg.mxu0
        %v11563 = vadd.f32 %v11419, %v11558
        %11565 = vrot.lane.b32.xlu0 %v11563, 104
        %v11566 = vpop.permute.xlu0 %11565
        %v11568 = vmax.f32 %v11563, %v11566
        %v11569 = vld [vmem:[%s8] sm:$0x1]
        %v11571 = vlaneseq
        %v11572 = vshrl.u32 %v11571, 7
        %v11573 = vsub.s32 0, %v11572
        %v11574 = vrot.slane %v11569, %v11573
        %v11576 = vadd.f32 %v11568, %v11574
        %v11577 = vmax.f32 %v11576, 0.0
        %v11578 = vpack.c.bf16 %v11577, %v11577
        %v11579 = vld [vmem:[%s9] sm:$0x7]
        %vm11580 = vcmask 64512
        %v11582 = vsel %vm11580, %v11579, 0
        %v11585 = vsel %vm817, %v11578, 0
        %11587 = vmatprep.subr.bf16.mxu0 0
        %11588 = vmatpush1.bf16.msra.mxu0 %v11585
        %11589 = vmatprep.subr.bf16.mxu0 0
        %11590 = vmatpush1.bf16.msra.mxu0 0
        %11591 = vmatprep.subr.bf16.mxu0 0
        %11592 = vmatpush1.bf16.msra.mxu0 0
        %11593 = vmatprep.subr.bf16.mxu0 0
        %11594 = vmatpush1.bf16.msra.mxu0 0
        %11595 = vmatprep.subr.bf16.mxu0 0
        %11596 = vmatpush1.bf16.msra.mxu0 0
        %11597 = vmatprep.subr.bf16.mxu0 0
        %11598 = vmatpush1.bf16.msra.mxu0 0
        %11599 = vmatprep.subr.bf16.mxu0 0
        %11600 = vmatpush1.bf16.msra.mxu0 0
        %11601 = vmatprep.subr.bf16.mxu0 0
        %11602 = vmatpush1.bf16.msra.mxu0 0
        %11603 = vmatprep.subr.bf16.mxu0 0
        %11604 = vmatpush1.bf16.msra.mxu0 0
        %11605 = vmatprep.subr.bf16.mxu0 0
        %11606 = vmatpush1.bf16.msra.mxu0 0
        %11607 = vmatprep.subr.bf16.mxu0 0
        %11608 = vmatpush1.bf16.msra.mxu0 0
        %11609 = vmatprep.subr.bf16.mxu0 0
        %11610 = vmatpush1.bf16.msra.mxu0 0
        %11611 = vmatprep.subr.bf16.mxu0 0
        %11612 = vmatpush1.bf16.msra.mxu0 0
        %11613 = vmatprep.subr.bf16.mxu0 0
        %11614 = vmatpush1.bf16.msra.mxu0 0
        %11615 = vmatprep.subr.bf16.mxu0 0
        %11616 = vmatpush1.bf16.msra.mxu0 0
        %11617 = vmatprep.subr.bf16.mxu0 0
        %11618 = vmatpush1.bf16.msra.mxu0 0
        %11619 = vmatprep.mubr.bf16.mxu0 0
        %11620 = vmatmul.mubr.bf16.gmra.mrb[0].mxu0 %v11582
        %v11621 = vpop.f32.mrb[0].mxu0
        %v11622 = vadd.f32 0.0, %v11621
        %v11623 = vpop.f32.mrb[0].mxu0
        %v11624 = vpop.f32.mrb[0].mxu0
        %v11625 = vpop.f32.mrb[0].mxu0
        %11626 = vdwg.mxu0
        %s11627 = scalar_lea.vmem %s9, 4
        %v11628 = vld [vmem:[%s11627] sm:$0x7]
        %v11630 = vsel %vm11580, %v11628, 0
        %11632 = vmatprep.subr.bf16.mxu0 0
        %11633 = vmatpush1.bf16.msra.mxu0 %v11585
        %11634 = vmatprep.subr.bf16.mxu0 0
        %11635 = vmatpush1.bf16.msra.mxu0 0
        %11636 = vmatprep.subr.bf16.mxu0 0
        %11637 = vmatpush1.bf16.msra.mxu0 0
        %11638 = vmatprep.subr.bf16.mxu0 0
        %11639 = vmatpush1.bf16.msra.mxu0 0
        %11640 = vmatprep.subr.bf16.mxu0 0
        %11641 = vmatpush1.bf16.msra.mxu0 0
        %11642 = vmatprep.subr.bf16.mxu0 0
        %11643 = vmatpush1.bf16.msra.mxu0 0
        %11644 = vmatprep.subr.bf16.mxu0 0
        %11645 = vmatpush1.bf16.msra.mxu0 0
        %11646 = vmatprep.subr.bf16.mxu0 0
        %11647 = vmatpush1.bf16.msra.mxu0 0
        %11648 = vmatprep.subr.bf16.mxu0 0
        %11649 = vmatpush1.bf16.msra.mxu0 0
        %11650 = vmatprep.subr.bf16.mxu0 0
        %11651 = vmatpush1.bf16.msra.mxu0 0
        %11652 = vmatprep.subr.bf16.mxu0 0
        %11653 = vmatpush1.bf16.msra.mxu0 0
        %11654 = vmatprep.subr.bf16.mxu0 0
        %11655 = vmatpush1.bf16.msra.mxu0 0
        %11656 = vmatprep.subr.bf16.mxu0 0
        %11657 = vmatpush1.bf16.msra.mxu0 0
        %11658 = vmatprep.subr.bf16.mxu0 0
        %11659 = vmatpush1.bf16.msra.mxu0 0
        %11660 = vmatprep.subr.bf16.mxu0 0
        %11661 = vmatpush1.bf16.msra.mxu0 0
        %11662 = vmatprep.subr.bf16.mxu0 0
        %11663 = vmatpush1.bf16.msra.mxu0 0
        %11664 = vmatprep.mubr.bf16.mxu0 0
        %11665 = vmatmul.mubr.bf16.gmra.mrb[0].mxu0 %v11630
        %v11666 = vpop.f32.mrb[0].mxu0
        %v11667 = vadd.f32 0.0, %v11666
        %v11668 = vpop.f32.mrb[0].mxu0
        %v11669 = vpop.f32.mrb[0].mxu0
        %v11670 = vpop.f32.mrb[0].mxu0
        %11671 = vdwg.mxu0
        %v11672 = vmax.f32 %v11622, %v11667
        %v11673 = vpack.c.bf16 %v11672, %v11672
        %v11674 = vld [vmem:[%s10] sm:$0xf]
        %v11675 = vld [vmem:[%s10 + $0x4] sm:$0xf]
        %v11676 = vld [vmem:[%s10 + $0x8] sm:$0xf]
        %s11677 = scalar_lea.vmem %s10, 12
        %v11678 = vld [vmem:[%s11677] sm:$0xf]
        %v11679 = vld [vmem:[%s11677 + $0x4] sm:$0xf]
        %v11680 = vld [vmem:[%s11677 + $0x8] sm:$0xf]
        %v11682 = vshrl.u32 %v11673, 16
        %v11684 = vshll.u32 %v11673, 16
        %v11686 = vrot.slane %v11684, 1
        %v11687 = vor.u32 %v11682, %v11686
        %v11691 = vunpack.c.l.b16 %v11678
        %v11692 = vunpack.c.l.b16 %v11679
        %v11693 = vunpack.c.l.b16 %v11680
        %v11694 = vpack.c.b16 %v11692, %v11691
        %v11695 = vpack.c.b16 %v11693, %v11693
        %vm11697 = vcmask 195584
        %v11699 = vsel %vm11697, %v11687, 0
        %v11702 = vsel %vm817, %v11695, 0
        %11704 = vmatprep.subr.bf16.mxu0 0
        %11705 = vmatpush1.bf16.msra.mxu0 %v11694
        %11706 = vmatprep.subr.bf16.mxu0 0
        %11707 = vmatpush1.bf16.msra.mxu0 %v11702
        %11708 = vmatprep.subr.bf16.mxu0 0
        %11709 = vmatpush1.bf16.msra.mxu0 0
        %11710 = vmatprep.subr.bf16.mxu0 0
        %11711 = vmatpush1.bf16.msra.mxu0 0
        %11712 = vmatprep.subr.bf16.mxu0 0
        %11713 = vmatpush1.bf16.msra.mxu0 0
        %11714 = vmatprep.subr.bf16.mxu0 0
        %11715 = vmatpush1.bf16.msra.mxu0 0
        %11716 = vmatprep.subr.bf16.mxu0 0
        %11717 = vmatpush1.bf16.msra.mxu0 0
        %11718 = vmatprep.subr.bf16.mxu0 0
        %11719 = vmatpush1.bf16.msra.mxu0 0
        %11720 = vmatprep.subr.bf16.mxu0 0
        %11721 = vmatpush1.bf16.msra.mxu0 0
        %11722 = vmatprep.subr.bf16.mxu0 0
        %11723 = vmatpush1.bf16.msra.mxu0 0
        %11724 = vmatprep.subr.bf16.mxu0 0
        %11725 = vmatpush1.bf16.msra.mxu0 0
        %11726 = vmatprep.subr.bf16.mxu0 0
        %11727 = vmatpush1.bf16.msra.mxu0 0
        %11728 = vmatprep.subr.bf16.mxu0 0
        %11729 = vmatpush1.bf16.msra.mxu0 0
        %11730 = vmatprep.subr.bf16.mxu0 0
        %11731 = vmatpush1.bf16.msra.mxu0 0
        %11732 = vmatprep.subr.bf16.mxu0 0
        %11733 = vmatpush1.bf16.msra.mxu0 0
        %11734 = vmatprep.subr.bf16.mxu0 0
        %11735 = vmatpush1.bf16.msra.mxu0 0
        %11736 = vmatprep.mubr.bf16.mxu0 0
        %11737 = vmatmul.mubr.bf16.gmra.mrb[0].mxu0 %v11699
        %v11738 = vpop.f32.mrb[0].mxu0
        %v11739 = vadd.f32 0.0, %v11738
        %v11740 = vpop.f32.mrb[0].mxu0
        %v11741 = vpop.f32.mrb[0].mxu0
        %v11742 = vpop.f32.mrb[0].mxu0
        %11743 = vdwg.mxu0
        %v11747 = vunpack.c.l.b16 %v11674
        %v11748 = vunpack.c.l.b16 %v11675
        %v11749 = vunpack.c.l.b16 %v11676
        %v11750 = vpack.c.b16 %v11748, %v11747
        %v11751 = vpack.c.b16 %v11749, %v11749
        %v11753 = vsel %vm11697, %v11673, 0
        %v11756 = vsel %vm817, %v11751, 0
        %11758 = vmatprep.subr.bf16.mxu0 0
        %11759 = vmatpush1.bf16.msra.mxu0 %v11750
        %11760 = vmatprep.subr.bf16.mxu0 0
        %11761 = vmatpush1.bf16.msra.mxu0 %v11756
        %11762 = vmatprep.subr.bf16.mxu0 0
        %11763 = vmatpush1.bf16.msra.mxu0 0
        %11764 = vmatprep.subr.bf16.mxu0 0
        %11765 = vmatpush1.bf16.msra.mxu0 0
        %11766 = vmatprep.subr.bf16.mxu0 0
        %11767 = vmatpush1.bf16.msra.mxu0 0
        %11768 = vmatprep.subr.bf16.mxu0 0
        %11769 = vmatpush1.bf16.msra.mxu0 0
        %11770 = vmatprep.subr.bf16.mxu0 0
        %11771 = vmatpush1.bf16.msra.mxu0 0
        %11772 = vmatprep.subr.bf16.mxu0 0
        %11773 = vmatpush1.bf16.msra.mxu0 0
        %11774 = vmatprep.subr.bf16.mxu0 0
        %11775 = vmatpush1.bf16.msra.mxu0 0
        %11776 = vmatprep.subr.bf16.mxu0 0
        %11777 = vmatpush1.bf16.msra.mxu0 0
        %11778 = vmatprep.subr.bf16.mxu0 0
        %11779 = vmatpush1.bf16.msra.mxu0 0
        %11780 = vmatprep.subr.bf16.mxu0 0
        %11781 = vmatpush1.bf16.msra.mxu0 0
        %11782 = vmatprep.subr.bf16.mxu0 0
        %11783 = vmatpush1.bf16.msra.mxu0 0
        %11784 = vmatprep.subr.bf16.mxu0 0
        %11785 = vmatpush1.bf16.msra.mxu0 0
        %11786 = vmatprep.subr.bf16.mxu0 0
        %11787 = vmatpush1.bf16.msra.mxu0 0
        %11788 = vmatprep.subr.bf16.mxu0 0
        %11789 = vmatpush1.bf16.msra.mxu0 0
        %11790 = vmatprep.mubr.bf16.mxu0 0
        %11791 = vmatmul.mubr.bf16.gmra.mrb[0].mxu0 %v11753
        %v11792 = vpop.f32.mrb[0].mxu0
        %v11793 = vadd.f32 %v11739, %v11792
        %v11794 = vpop.f32.mrb[0].mxu0
        %v11795 = vpop.f32.mrb[0].mxu0
        %v11796 = vpop.f32.mrb[0].mxu0
        %11797 = vdwg.mxu0
        %s11798 = scalar_lea.vmem %s10, 24
        %v11799 = vld [vmem:[%s11798] sm:$0xf]
        %v11800 = vld [vmem:[%s11798 + $0x4] sm:$0xf]
        %v11801 = vld [vmem:[%s11798 + $0x8] sm:$0xf]
        %v11803 = vrot.slane %v11673, 1
        %v11807 = vunpack.c.l.b16 %v11799
        %v11808 = vunpack.c.l.b16 %v11800
        %v11809 = vunpack.c.l.b16 %v11801
        %v11810 = vpack.c.b16 %v11808, %v11807
        %v11811 = vpack.c.b16 %v11809, %v11809
        %v11814 = vsel %vm11697, %v11803, 0
        %v11817 = vsel %vm817, %v11811, 0
        %11819 = vmatprep.subr.bf16.mxu0 0
        %11820 = vmatpush1.bf16.msra.mxu0 %v11810
        %11821 = vmatprep.subr.bf16.mxu0 0
        %11822 = vmatpush1.bf16.msra.mxu0 %v11817
        %11823 = vmatprep.subr.bf16.mxu0 0
        %11824 = vmatpush1.bf16.msra.mxu0 0
        %11825 = vmatprep.subr.bf16.mxu0 0
        %11826 = vmatpush1.bf16.msra.mxu0 0
        %11827 = vmatprep.subr.bf16.mxu0 0
        %11828 = vmatpush1.bf16.msra.mxu0 0
        %11829 = vmatprep.subr.bf16.mxu0 0
        %11830 = vmatpush1.bf16.msra.mxu0 0
        %11831 = vmatprep.subr.bf16.mxu0 0
        %11832 = vmatpush1.bf16.msra.mxu0 0
        %11833 = vmatprep.subr.bf16.mxu0 0
        %11834 = vmatpush1.bf16.msra.mxu0 0
        %11835 = vmatprep.subr.bf16.mxu0 0
        %11836 = vmatpush1.bf16.msra.mxu0 0
        %11837 = vmatprep.subr.bf16.mxu0 0
        %11838 = vmatpush1.bf16.msra.mxu0 0
        %11839 = vmatprep.subr.bf16.mxu0 0
        %11840 = vmatpush1.bf16.msra.mxu0 0
        %11841 = vmatprep.subr.bf16.mxu0 0
        %11842 = vmatpush1.bf16.msra.mxu0 0
        %11843 = vmatprep.subr.bf16.mxu0 0
        %11844 = vmatpush1.bf16.msra.mxu0 0
        %11845 = vmatprep.subr.bf16.mxu0 0
        %11846 = vmatpush1.bf16.msra.mxu0 0
        %11847 = vmatprep.subr.bf16.mxu0 0
        %11848 = vmatpush1.bf16.msra.mxu0 0
        %11849 = vmatprep.subr.bf16.mxu0 0
        %11850 = vmatpush1.bf16.msra.mxu0 0
        %11851 = vmatprep.mubr.bf16.mxu0 0
        %11852 = vmatmul.mubr.bf16.gmra.mrb[0].mxu0 %v11814
        %v11853 = vpop.f32.mrb[0].mxu0
        %v11854 = vadd.f32 0.0, %v11853
        %v11855 = vpop.f32.mrb[0].mxu0
        %v11856 = vpop.f32.mrb[0].mxu0
        %v11857 = vpop.f32.mrb[0].mxu0
        %11858 = vdwg.mxu0
        %v11859 = vadd.f32 %v11793, %v11854
        %v11860 = vld [vmem:[%s11] sm:$0x1]
        %v11862 = vlaneseq
        %v11863 = vshrl.u32 %v11862, 7
        %v11864 = vsub.s32 0, %v11863
        %v11865 = vrot.slane %v11860, %v11864
        %v11867 = vadd.f32 %v11859, %v11865
        %v11868 = vmax.f32 %v11867, 0.0
        %v11869 = vld [vmem:[%s12] sm:$0xf]
        %s11870 = scalar_lea.vmem %s12, 4
        %v11871 = vld [vmem:[%s11870] sm:$0xf]
        %v11873 = vrot.slane %v11868, 1
        %vm11874 = vcmask 31744
        %v11875 = vsel %vm11874, %v11873, 0
        %v11878 = vsel %vm817, %v11871, 0
        %11880 = vmatprep.subr.mxu0 0.0
        %11881 = vmatpush1.msra.mxu0 %v11878
        %11882 = vmatprep.subr.mxu0 0.0
        %11883 = vmatpush1.msra.mxu0 0.0
        %11884 = vmatprep.subr.mxu0 0.0
        %11885 = vmatpush1.msra.mxu0 0.0
        %11886 = vmatprep.subr.mxu0 0.0
        %11887 = vmatpush1.msra.mxu0 0.0
        %11888 = vmatprep.subr.mxu0 0.0
        %11889 = vmatpush1.msra.mxu0 0.0
        %11890 = vmatprep.subr.mxu0 0.0
        %11891 = vmatpush1.msra.mxu0 0.0
        %11892 = vmatprep.subr.mxu0 0.0
        %11893 = vmatpush1.msra.mxu0 0.0
        %11894 = vmatprep.subr.mxu0 0.0
        %11895 = vmatpush1.msra.mxu0 0.0
        %11896 = vmatprep.subr.mxu0 0.0
        %11897 = vmatpush1.msra.mxu0 0.0
        %11898 = vmatprep.subr.mxu0 0.0
        %11899 = vmatpush1.msra.mxu0 0.0
        %11900 = vmatprep.subr.mxu0 0.0
        %11901 = vmatpush1.msra.mxu0 0.0
        %11902 = vmatprep.subr.mxu0 0.0
        %11903 = vmatpush1.msra.mxu0 0.0
        %11904 = vmatprep.subr.mxu0 0.0
        %11905 = vmatpush1.msra.mxu0 0.0
        %11906 = vmatprep.subr.mxu0 0.0
        %11907 = vmatpush1.msra.mxu0 0.0
        %11908 = vmatprep.subr.mxu0 0.0
        %11909 = vmatpush1.msra.mxu0 0.0
        %11910 = vmatprep.subr.mxu0 0.0
        %11911 = vmatpush1.msra.mxu0 0.0
        %11912 = vmatprep.subr.mxu0 0.0
        %11913 = vmatpush1.msra.mxu0 0.0
        %11914 = vmatprep.subr.mxu0 0.0
        %11915 = vmatpush1.msra.mxu0 0.0
        %11916 = vmatprep.subr.mxu0 0.0
        %11917 = vmatpush1.msra.mxu0 0.0
        %11918 = vmatprep.subr.mxu0 0.0
        %11919 = vmatpush1.msra.mxu0 0.0
        %11920 = vmatprep.subr.mxu0 0.0
        %11921 = vmatpush1.msra.mxu0 0.0
        %11922 = vmatprep.subr.mxu0 0.0
        %11923 = vmatpush1.msra.mxu0 0.0
        %11924 = vmatprep.subr.mxu0 0.0
        %11925 = vmatpush1.msra.mxu0 0.0
        %11926 = vmatprep.subr.mxu0 0.0
        %11927 = vmatpush1.msra.mxu0 0.0
        %11928 = vmatprep.subr.mxu0 0.0
        %11929 = vmatpush1.msra.mxu0 0.0
        %11930 = vmatprep.subr.mxu0 0.0
        %11931 = vmatpush1.msra.mxu0 0.0
        %11932 = vmatprep.subr.mxu0 0.0
        %11933 = vmatpush1.msra.mxu0 0.0
        %11934 = vmatprep.subr.mxu0 0.0
        %11935 = vmatpush1.msra.mxu0 0.0
        %11936 = vmatprep.subr.mxu0 0.0
        %11937 = vmatpush1.msra.mxu0 0.0
        %11938 = vmatprep.subr.mxu0 0.0
        %11939 = vmatpush1.msra.mxu0 0.0
        %11940 = vmatprep.subr.mxu0 0.0
        %11941 = vmatpush1.msra.mxu0 0.0
        %11942 = vmatprep.subr.mxu0 0.0
        %11943 = vmatpush1.msra.mxu0 0.0
        %11944 = vmatprep.mubr.f32.mxu0 0.0
        %11945 = vmatmul.mubr.f32.gmra.mrb[0].mxu0 %v11875
        %v11946 = vpop.f32.mrb[0].mxu0
        %v11947 = vadd.f32 0.0, %v11946
        %v11948 = vpop.f32.mrb[0].mxu0
        %11949 = vdwg.mxu0
        %v11950 = vsel %vm11874, %v11868, 0
        %v11953 = vsel %vm817, %v11869, 0
        %11955 = vmatprep.subr.mxu0 0.0
        %11956 = vmatpush1.msra.mxu0 %v11953
        %11957 = vmatprep.subr.mxu0 0.0
        %11958 = vmatpush1.msra.mxu0 0.0
        %11959 = vmatprep.subr.mxu0 0.0
        %11960 = vmatpush1.msra.mxu0 0.0
        %11961 = vmatprep.subr.mxu0 0.0
        %11962 = vmatpush1.msra.mxu0 0.0
        %11963 = vmatprep.subr.mxu0 0.0
        %11964 = vmatpush1.msra.mxu0 0.0
        %11965 = vmatprep.subr.mxu0 0.0
        %11966 = vmatpush1.msra.mxu0 0.0
        %11967 = vmatprep.subr.mxu0 0.0
        %11968 = vmatpush1.msra.mxu0 0.0
        %11969 = vmatprep.subr.mxu0 0.0
        %11970 = vmatpush1.msra.mxu0 0.0
        %11971 = vmatprep.subr.mxu0 0.0
        %11972 = vmatpush1.msra.mxu0 0.0
        %11973 = vmatprep.subr.mxu0 0.0
        %11974 = vmatpush1.msra.mxu0 0.0
        %11975 = vmatprep.subr.mxu0 0.0
        %11976 = vmatpush1.msra.mxu0 0.0
        %11977 = vmatprep.subr.mxu0 0.0
        %11978 = vmatpush1.msra.mxu0 0.0
        %11979 = vmatprep.subr.mxu0 0.0
        %11980 = vmatpush1.msra.mxu0 0.0
        %11981 = vmatprep.subr.mxu0 0.0
        %11982 = vmatpush1.msra.mxu0 0.0
        %11983 = vmatprep.subr.mxu0 0.0
        %11984 = vmatpush1.msra.mxu0 0.0
        %11985 = vmatprep.subr.mxu0 0.0
        %11986 = vmatpush1.msra.mxu0 0.0
        %11987 = vmatprep.subr.mxu0 0.0
        %11988 = vmatpush1.msra.mxu0 0.0
        %11989 = vmatprep.subr.mxu0 0.0
        %11990 = vmatpush1.msra.mxu0 0.0
        %11991 = vmatprep.subr.mxu0 0.0
        %11992 = vmatpush1.msra.mxu0 0.0
        %11993 = vmatprep.subr.mxu0 0.0
        %11994 = vmatpush1.msra.mxu0 0.0
        %11995 = vmatprep.subr.mxu0 0.0
        %11996 = vmatpush1.msra.mxu0 0.0
        %11997 = vmatprep.subr.mxu0 0.0
        %11998 = vmatpush1.msra.mxu0 0.0
        %11999 = vmatprep.subr.mxu0 0.0
        %12000 = vmatpush1.msra.mxu0 0.0
        %12001 = vmatprep.subr.mxu0 0.0
        %12002 = vmatpush1.msra.mxu0 0.0
        %12003 = vmatprep.subr.mxu0 0.0
        %12004 = vmatpush1.msra.mxu0 0.0
        %12005 = vmatprep.subr.mxu0 0.0
        %12006 = vmatpush1.msra.mxu0 0.0
        %12007 = vmatprep.subr.mxu0 0.0
        %12008 = vmatpush1.msra.mxu0 0.0
        %12009 = vmatprep.subr.mxu0 0.0
        %12010 = vmatpush1.msra.mxu0 0.0
        %12011 = vmatprep.subr.mxu0 0.0
        %12012 = vmatpush1.msra.mxu0 0.0
        %12013 = vmatprep.subr.mxu0 0.0
        %12014 = vmatpush1.msra.mxu0 0.0
        %12015 = vmatprep.subr.mxu0 0.0
        %12016 = vmatpush1.msra.mxu0 0.0
        %12017 = vmatprep.subr.mxu0 0.0
        %12018 = vmatpush1.msra.mxu0 0.0
        %12019 = vmatprep.mubr.f32.mxu0 0.0
        %12020 = vmatmul.mubr.f32.gmra.mrb[0].mxu0 %v11950
        %v12021 = vpop.f32.mrb[0].mxu0
        %v12022 = vadd.f32 %v11947, %v12021
        %v12023 = vpop.f32.mrb[0].mxu0
        %12024 = vdwg.mxu0
        %s12025 = scalar_lea.vmem %s12, 8
        %v12026 = vld [vmem:[%s12025] sm:$0xf]
        %v12027 = vrot.slane %v11868, 2
        %v12028 = vsel %vm11874, %v12027, 0
        %v12031 = vsel %vm817, %v12026, 0
        %12033 = vmatprep.subr.mxu0 0.0
        %12034 = vmatpush1.msra.mxu0 %v12031
        %12035 = vmatprep.subr.mxu0 0.0
        %12036 = vmatpush1.msra.mxu0 0.0
        %12037 = vmatprep.subr.mxu0 0.0
        %12038 = vmatpush1.msra.mxu0 0.0
        %12039 = vmatprep.subr.mxu0 0.0
        %12040 = vmatpush1.msra.mxu0 0.0
        %12041 = vmatprep.subr.mxu0 0.0
        %12042 = vmatpush1.msra.mxu0 0.0
        %12043 = vmatprep.subr.mxu0 0.0
        %12044 = vmatpush1.msra.mxu0 0.0
        %12045 = vmatprep.subr.mxu0 0.0
        %12046 = vmatpush1.msra.mxu0 0.0
        %12047 = vmatprep.subr.mxu0 0.0
        %12048 = vmatpush1.msra.mxu0 0.0
        %12049 = vmatprep.subr.mxu0 0.0
        %12050 = vmatpush1.msra.mxu0 0.0
        %12051 = vmatprep.subr.mxu0 0.0
        %12052 = vmatpush1.msra.mxu0 0.0
        %12053 = vmatprep.subr.mxu0 0.0
        %12054 = vmatpush1.msra.mxu0 0.0
        %12055 = vmatprep.subr.mxu0 0.0
        %12056 = vmatpush1.msra.mxu0 0.0
        %12057 = vmatprep.subr.mxu0 0.0
        %12058 = vmatpush1.msra.mxu0 0.0
        %12059 = vmatprep.subr.mxu0 0.0
        %12060 = vmatpush1.msra.mxu0 0.0
        %12061 = vmatprep.subr.mxu0 0.0
        %12062 = vmatpush1.msra.mxu0 0.0
        %12063 = vmatprep.subr.mxu0 0.0
        %12064 = vmatpush1.msra.mxu0 0.0
        %12065 = vmatprep.subr.mxu0 0.0
        %12066 = vmatpush1.msra.mxu0 0.0
        %12067 = vmatprep.subr.mxu0 0.0
        %12068 = vmatpush1.msra.mxu0 0.0
        %12069 = vmatprep.subr.mxu0 0.0
        %12070 = vmatpush1.msra.mxu0 0.0
        %12071 = vmatprep.subr.mxu0 0.0
        %12072 = vmatpush1.msra.mxu0 0.0
        %12073 = vmatprep.subr.mxu0 0.0
        %12074 = vmatpush1.msra.mxu0 0.0
        %12075 = vmatprep.subr.mxu0 0.0
        %12076 = vmatpush1.msra.mxu0 0.0
        %12077 = vmatprep.subr.mxu0 0.0
        %12078 = vmatpush1.msra.mxu0 0.0
        %12079 = vmatprep.subr.mxu0 0.0
        %12080 = vmatpush1.msra.mxu0 0.0
        %12081 = vmatprep.subr.mxu0 0.0
        %12082 = vmatpush1.msra.mxu0 0.0
        %12083 = vmatprep.subr.mxu0 0.0
        %12084 = vmatpush1.msra.mxu0 0.0
        %12085 = vmatprep.subr.mxu0 0.0
        %12086 = vmatpush1.msra.mxu0 0.0
        %12087 = vmatprep.subr.mxu0 0.0
        %12088 = vmatpush1.msra.mxu0 0.0
        %12089 = vmatprep.subr.mxu0 0.0
        %12090 = vmatpush1.msra.mxu0 0.0
        %12091 = vmatprep.subr.mxu0 0.0
        %12092 = vmatpush1.msra.mxu0 0.0
        %12093 = vmatprep.subr.mxu0 0.0
        %12094 = vmatpush1.msra.mxu0 0.0
        %12095 = vmatprep.subr.mxu0 0.0
        %12096 = vmatpush1.msra.mxu0 0.0
        %12097 = vmatprep.mubr.f32.mxu0 0.0
        %12098 = vmatmul.mubr.f32.gmra.mrb[0].mxu0 %v12028
        %v12099 = vpop.f32.mrb[0].mxu0
        %v12100 = vadd.f32 0.0, %v12099
        %v12101 = vpop.f32.mrb[0].mxu0
        %12102 = vdwg.mxu0
        %v12103 = vadd.f32 %v12022, %v12100
        %s12104 = scalar_lea.vmem %s12, 12
        %v12105 = vld [vmem:[%s12104] sm:$0xf]
        %v12106 = vrot.slane %v11868, 3
        %v12107 = vsel %vm11874, %v12106, 0
        %v12110 = vsel %vm817, %v12105, 0
        %12112 = vmatprep.subr.mxu0 0.0
        %12113 = vmatpush1.msra.mxu0 %v12110
        %12114 = vmatprep.subr.mxu0 0.0
        %12115 = vmatpush1.msra.mxu0 0.0
        %12116 = vmatprep.subr.mxu0 0.0
        %12117 = vmatpush1.msra.mxu0 0.0
        %12118 = vmatprep.subr.mxu0 0.0
        %12119 = vmatpush1.msra.mxu0 0.0
        %12120 = vmatprep.subr.mxu0 0.0
        %12121 = vmatpush1.msra.mxu0 0.0
        %12122 = vmatprep.subr.mxu0 0.0
        %12123 = vmatpush1.msra.mxu0 0.0
        %12124 = vmatprep.subr.mxu0 0.0
        %12125 = vmatpush1.msra.mxu0 0.0
        %12126 = vmatprep.subr.mxu0 0.0
        %12127 = vmatpush1.msra.mxu0 0.0
        %12128 = vmatprep.subr.mxu0 0.0
        %12129 = vmatpush1.msra.mxu0 0.0
        %12130 = vmatprep.subr.mxu0 0.0
        %12131 = vmatpush1.msra.mxu0 0.0
        %12132 = vmatprep.subr.mxu0 0.0
        %12133 = vmatpush1.msra.mxu0 0.0
        %12134 = vmatprep.subr.mxu0 0.0
        %12135 = vmatpush1.msra.mxu0 0.0
        %12136 = vmatprep.subr.mxu0 0.0
        %12137 = vmatpush1.msra.mxu0 0.0
        %12138 = vmatprep.subr.mxu0 0.0
        %12139 = vmatpush1.msra.mxu0 0.0
        %12140 = vmatprep.subr.mxu0 0.0
        %12141 = vmatpush1.msra.mxu0 0.0
        %12142 = vmatprep.subr.mxu0 0.0
        %12143 = vmatpush1.msra.mxu0 0.0
        %12144 = vmatprep.subr.mxu0 0.0
        %12145 = vmatpush1.msra.mxu0 0.0
        %12146 = vmatprep.subr.mxu0 0.0
        %12147 = vmatpush1.msra.mxu0 0.0
        %12148 = vmatprep.subr.mxu0 0.0
        %12149 = vmatpush1.msra.mxu0 0.0
        %12150 = vmatprep.subr.mxu0 0.0
        %12151 = vmatpush1.msra.mxu0 0.0
        %12152 = vmatprep.subr.mxu0 0.0
        %12153 = vmatpush1.msra.mxu0 0.0
        %12154 = vmatprep.subr.mxu0 0.0
        %12155 = vmatpush1.msra.mxu0 0.0
        %12156 = vmatprep.subr.mxu0 0.0
        %12157 = vmatpush1.msra.mxu0 0.0
        %12158 = vmatprep.subr.mxu0 0.0
        %12159 = vmatpush1.msra.mxu0 0.0
        %12160 = vmatprep.subr.mxu0 0.0
        %12161 = vmatpush1.msra.mxu0 0.0
        %12162 = vmatprep.subr.mxu0 0.0
        %12163 = vmatpush1.msra.mxu0 0.0
        %12164 = vmatprep.subr.mxu0 0.0
        %12165 = vmatpush1.msra.mxu0 0.0
        %12166 = vmatprep.subr.mxu0 0.0
        %12167 = vmatpush1.msra.mxu0 0.0
        %12168 = vmatprep.subr.mxu0 0.0
        %12169 = vmatpush1.msra.mxu0 0.0
        %12170 = vmatprep.subr.mxu0 0.0
        %12171 = vmatpush1.msra.mxu0 0.0
        %12172 = vmatprep.subr.mxu0 0.0
        %12173 = vmatpush1.msra.mxu0 0.0
        %12174 = vmatprep.subr.mxu0 0.0
        %12175 = vmatpush1.msra.mxu0 0.0
        %12176 = vmatprep.mubr.f32.mxu0 0.0
        %12177 = vmatmul.mubr.f32.gmra.mrb[0].mxu0 %v12107
        %v12178 = vpop.f32.mrb[0].mxu0
        %v12179 = vadd.f32 0.0, %v12178
        %v12180 = vpop.f32.mrb[0].mxu0
        %12181 = vdwg.mxu0
        %v12182 = vadd.f32 %v12103, %v12179
        %v12183 = vld [vmem:[%s13] sm:$0x1]
        %v12184 = vadd.f32 %v12182, %v12183
        %v12185 = vmax.f32 %v12184, 0.0
        %vm12186 = vcmask 8192
        %12187 = vst.msk [vmem:[%s459] sm:$0x1] %vm12186, %v12185
        %s12188 = sand.u32 %s335, 1
        %s12189 = scalar_lea.sflag [#allocation3], %s12188
        %s12190 = sand.u32 %s335, 1
        %s12191 = scalar_lea.vmem [#allocation2], %s12190
        // Predicated region
        $region77: #{m_model_forward_fn.1} parent=75 // pred_check
          %p12192 = pneg %p345
        $region78: #{m_model_forward_fn.1} parent=75 // pred_check_branch
          %12194 = sbr.rel (%p12192) target = $region80
        $region79: #{m_model_forward_fn.1} parent=75 // pred_region
          %s12196 = ssub.s32 16, 16
          %12197 = vsyncadd %s12189, %s12196
          %s12198 = smul.addr %s28, 16
          %s12199 = scalar_lea.hbm %s14, %s12198
          %s12201 = sshll.u32 %s12191, 4
          %s12202 = int_to_ptr.vmem [resolvable:$true] %s12201
          %12204 = dma.vmem_to_hbm [thread:$0]  %s12202, 16, %s12199, %s12189
        $region80: #{m_model_forward_fn.1} parent=75 // pred_fallthru
          _
      $region76: #{m_model_forward_fn.1} parent=5 // pred_fallthru
        _
      %p12205 = scmp.le.s32.totalorder 2, %s23
      // Predicated region
      $region81: #{m_model_forward_fn.1} parent=5 // pred_check
        %p12206 = pneg %p12205
      $region82: #{m_model_forward_fn.1} parent=5 // pred_check_branch
        %12208 = sbr.rel (%p12206) target = $region84
      $region83: #{m_model_forward_fn.1} parent=5 // pred_region
        %s12209 = ssub.s32 %s23, 2
        // Predicated region
        $region85: #{m_model_forward_fn.1} parent=83 // pred_check
          %p12210 = pneg %p351
        $region86: #{m_model_forward_fn.1} parent=83 // pred_check_branch
          %12212 = sbr.rel (%p12210) target = $region88
        $region87: #{m_model_forward_fn.1} parent=83 // pred_region
          %s12213 = sand.u32 %s336, 1
          %s12214 = scalar_lea.sflag [#allocation3], %s12213
          %s12215 = sand.u32 %s336, 1
          %s12216 = scalar_lea.vmem [#allocation2], %s12215
          %12217 = dma.done %s12214, 16
        $region88: #{m_model_forward_fn.1} parent=83 // pred_fallthru
          _
      $region84: #{m_model_forward_fn.1} parent=5 // pred_fallthru
        _
    $region6: #{m_model_forward_fn.1} parent=1 // loop_footer
      %s27 = sadd.s32 1, %s23
    $region7: #{m_model_forward_fn.1} parent=1 // loop_footer_branch
      %22 = sbr.rel target = $region3
    $region8: #{m_model_forward_fn.1} parent=1 // loop_exit
      _
    %12218 = vsyncpa [#allocation3], 1
    %s12219 = scalar_lea.sflag [#allocation3], 1
    %12220 = vsyncpa %s12219, 1

</llo_original>
